<compile_context>
chip_gen: v7x
topology: tpu7x:2x2x1
jax: 0.10.0
libtpu: 0.0.40
codegen_flags: <defaults>
</compile_context>

<pallas_src>
import jax
import jax.numpy as jnp
import numpy as np
from jax.experimental import pallas as pl
from jax.experimental.pallas import tpu as pltpu

NEG_SLOPE = 0.01            # nn.LeakyReLU default negative_slope
KSIZE, STRIDE, PAD = 3, 2, 1


def _conv_out(n):
    return (n + 2 * PAD - KSIZE) // STRIDE + 1


# ------------------------------ fused kernel -------------------------------

def _fused_kernel(x_ref, y_ref, w1_ref, b1_ref, w2_ref, b2_ref,
                  fcw_ref, fcb_ref, w2a_ref, wy_ref, by_ref, o_ref):
    f32, bf16 = jnp.float32, jnp.bfloat16

    # Conv2d(C, 28, 3, s=2, p=1) + LeakyReLU (Dropout2d = id): one dense matmul.
    h1 = jnp.dot(x_ref[...], w1_ref[...], preferred_element_type=f32) + b1_ref[...]
    h1 = jnp.where(h1 >= 0, h1, NEG_SLOPE * h1)                       # (B, 28*P1)

    # Conv2d(28, 64, 3, s=2, p=1) + LeakyReLU (Dropout2d = id).
    h2 = jnp.dot(h1.astype(bf16), w2_ref[...], preferred_element_type=f32) + b2_ref[...]
    h2 = jnp.where(h2 >= 0, h2, NEG_SLOPE * h2)                       # (B, 64*P2)

    # h2 columns are already in NCHW-flatten order (oc, oy, ox), so
    # Flatten + Linear(64*16, 256) + ReLU is a single matmul.
    a1 = jnp.dot(h2.astype(bf16), fcw_ref[...], preferred_element_type=f32) + fcb_ref[...]
    a1 = jnp.maximum(a1, 0.0)                                         # (B, 256)

    # fc2(concat([a1, fc1(y)])) with the activation-free fc1 branch folded
    # offline into (wy, by).
    o_ref[...] = (jnp.dot(a1, w2a_ref[...], preferred_element_type=f32)
                  + jnp.dot(y_ref[...], wy_ref[...], preferred_element_type=f32)
                  + by_ref[...])


# ------------------------------ parameters ---------------------------------

def init_params(key, n_channels, intermediate_size=256, action_num=4):
    ks = jax.random.split(key, 10)
    s = 0.05
    return {
        # conv weights in PyTorch OIHW layout
        "conv1_w": s * jax.random.normal(ks[0], (28, n_channels, 3, 3), jnp.float32),
        "conv1_b": s * jax.random.normal(ks[1], (28,), jnp.float32),
        "conv2_w": s * jax.random.normal(ks[2], (64, 28, 3, 3), jnp.float32),
        "conv2_b": s * jax.random.normal(ks[3], (64,), jnp.float32),
        # linear weights stored matmul-ready as (K, N) == torch weight.T
        "fc_w":  s * jax.random.normal(ks[4], (64 * 16, intermediate_size), jnp.float32),
        "fc_b":  s * jax.random.normal(ks[5], (intermediate_size,), jnp.float32),
        "fc1_w": s * jax.random.normal(ks[6], (7, intermediate_size), jnp.float32),
        "fc1_b": s * jax.random.normal(ks[7], (intermediate_size,), jnp.float32),
        "fc2_w": s * jax.random.normal(ks[8], (2 * intermediate_size, action_num), jnp.float32),
        "fc2_b": s * jax.random.normal(ks[9], (action_num,), jnp.float32),
    }


def _conv_dense_matrix(w_oihw, hi, wi):
    """Dense (ic*hi*wi, oc*ho*wo) matrix of a 3x3 / stride-2 / pad-1 conv.

    Column oc*ho*wo + oy*wo + ox holds, at row ic*hi*wi + iy*wi + ix, the tap
    weight w[oc, ic, kh, kw] with kh = iy - 2*oy + 1, kw = ix - 2*ox + 1 (zero
    when the tap falls in the zero padding).  Built once offline.
    """
    w = np.asarray(w_oihw, np.float32)
    oc, ic = w.shape[:2]
    ho, wo = _conv_out(hi), _conv_out(wi)
    mat = np.zeros((ic * hi * wi, oc * ho * wo), np.float32)
    ic_off = np.arange(ic) * (hi * wi)
    oc_off = np.arange(oc) * (ho * wo)
    for kh in range(KSIZE):
        for kw in range(KSIZE):
            tap = w[:, :, kh, kw].T                       # (ic, oc)
            for oy in range(ho):
                iy = STRIDE * oy + kh - PAD
                if not 0 <= iy < hi:
                    continue
                for ox in range(wo):
                    ix = STRIDE * ox + kw - PAD
                    if not 0 <= ix < wi:
                        continue
                    mat[np.ix_(ic_off + iy * wi + ix, oc_off + oy * wo + ox)] = tap
    return mat


def prepare_params(params, n_channels, in_dim, intermediate_size=256):
    """One-time packing of PyTorch-layout weights into fused-kernel operands."""
    H = W = in_dim
    Ho1, Wo1 = _conv_out(H), _conv_out(W)
    Ho2, Wo2 = _conv_out(Ho1), _conv_out(Wo1)
    P1, P2 = Ho1 * Wo1, Ho2 * Wo2
    IS = intermediate_size
    C1 = params["conv1_b"].shape[0]
    C2 = params["conv2_b"].shape[0]
    assert C2 * P2 == params["fc_w"].shape[0], "in_dim inconsistent with fc (64*16)"

    w1 = _conv_dense_matrix(params["conv1_w"], H, W)        # (C*H*W, 28*P1)
    w2 = _conv_dense_matrix(params["conv2_w"], Ho1, Wo1)    # (28*P1, 64*P2)

    fc1_w = np.asarray(params["fc1_w"], np.float32)         # (7, IS)
    fc1_b = np.asarray(params["fc1_b"], np.float32)         # (IS,)
    fc2_w = np.asarray(params["fc2_w"], np.float32)         # (2*IS, A)
    fc2_b = np.asarray(params["fc2_b"], np.float32)         # (A,)
    w2a = fc2_w[:IS]                                        # (IS, A)
    w2b = fc2_w[IS:]                                        # (IS, A)
    wy = fc1_w @ w2b                                        # (7, A)  folded fc1->fc2
    by = fc1_b @ w2b + fc2_b                                # (A,)

    return {
        "w1": jnp.asarray(w1, jnp.bfloat16),
        "b1": jnp.asarray(np.repeat(np.asarray(params["conv1_b"], np.float32), P1)[None, :]),
        "w2": jnp.asarray(w2, jnp.bfloat16),
        "b2": jnp.asarray(np.repeat(np.asarray(params["conv2_b"], np.float32), P2)[None, :]),
        "fcw": jnp.asarray(np.asarray(params["fc_w"], np.float32), jnp.bfloat16),
        "fcb": jnp.asarray(np.asarray(params["fc_b"], np.float32)[None, :]),
        "w2a": jnp.asarray(w2a, jnp.float32),
        "wy": jnp.asarray(wy, jnp.float32),
        "by": jnp.asarray(by[None, :], jnp.float32),
        "dims": (n_channels, H, W, C1, P1, C2, P2, IS, int(fc2_w.shape[1])),
    }


# -------------------------------- forward ----------------------------------

def low_action_forward(prep, x, y):
    C, H, W, C1, P1, C2, P2, IS, A = prep["dims"]
    B = x.shape[0]
    assert x.shape == (B, C, H, W), x.shape
    assert y.shape == (B, 7), y.shape

    # Contiguous NCHW flatten (free, no transpose); bf16 for single-pass MXU.
    x2 = x.astype(jnp.bfloat16).reshape(B, C * H * W)
    y2 = y.astype(jnp.float32)

    args = (x2, y2, prep["w1"], prep["b1"], prep["w2"], prep["b2"],
            prep["fcw"], prep["fcb"], prep["w2a"], prep["wy"], prep["by"])

    in_specs = [pl.BlockSpec(a.shape, lambda i: (0, 0)) for a in args]

    flops = 2 * B * (C * H * W * C1 * P1 + C1 * P1 * C2 * P2 + C2 * P2 * IS
                     + IS * A + 7 * A)
    bytes_accessed = sum(int(a.size) * a.dtype.itemsize for a in args) + B * A * 4

    return pl.pallas_call(
        _fused_kernel,
        out_shape=jax.ShapeDtypeStruct((B, A), jnp.float32),
        grid=(1,),
        in_specs=in_specs,
        out_specs=pl.BlockSpec((B, A), lambda i: (0, 0)),
        compiler_params=pltpu.CompilerParams(
            dimension_semantics=("arbitrary",),
            vmem_limit_bytes=40 * 1024 * 1024),
        cost_estimate=pl.CostEstimate(flops=flops, transcendentals=0,
                                      bytes_accessed=bytes_accessed),
    )(*args)


# ------------------------ pure-JAX reference check -------------------------

def reference_forward(params, x, y):
    x = x.astype(jnp.float32)
    y = y.astype(jnp.float32)
    h = jax.lax.conv_general_dilated(
        x, params["conv1_w"], (STRIDE, STRIDE), ((PAD, PAD), (PAD, PAD)),
        dimension_numbers=("NCHW", "OIHW", "NCHW"))
    h = h + params["conv1_b"][None, :, None, None]
    h = jnp.where(h >= 0, h, NEG_SLOPE * h)
    h = jax.lax.conv_general_dilated(
        h, params["conv2_w"], (STRIDE, STRIDE), ((PAD, PAD), (PAD, PAD)),
        dimension_numbers=("NCHW", "OIHW", "NCHW"))
    h = h + params["conv2_b"][None, :, None, None]
    h = jnp.where(h >= 0, h, NEG_SLOPE * h)
    flat = h.reshape(x.shape[0], -1)
    a1 = jnp.maximum(jnp.dot(flat, params["fc_w"]) + params["fc_b"], 0.0)
    a2 = jnp.dot(y, params["fc1_w"]) + params["fc1_b"]
    cat = jnp.concatenate([a1, a2], axis=1)
    return jnp.dot(cat, params["fc2_w"]) + params["fc2_b"]


if __name__ == "__main__":
    key = jax.random.PRNGKey(0)
    kx, ky, kp = jax.random.split(key, 3)

    B, C, H = 2, 4, 16          # in_dim=16: 16 -> 8 -> 4, so 64*4*4 == 64*16
    x = jax.random.normal(kx, (B, C, H, H), jnp.float32)
    y = jax.random.normal(ky, (B, 7), jnp.float32)

    params = init_params(kp, n_channels=C, intermediate_size=256, action_num=4)
    prep = prepare_params(params, n_channels=C, in_dim=H, intermediate_size=256)

    out = jax.block_until_ready(low_action_forward(prep, x, y))
    ref = jax.block_until_ready(reference_forward(params, x, y))

    assert out.shape == (B, 4), out.shape
    max_err = float(jnp.max(jnp.abs(out - ref)))
    assert jnp.allclose(out, ref, rtol=2e-2, atol=2e-2), (max_err, out, ref)

    print("KERNEL_OK")
</pallas_src>

<mosaic_0001>
module attributes {stable_mosaic.version = 11 : i64} {
  func.func @_fused_kernel(%arg0: i32, %arg1: memref<2x1024xbf16, #tpu.memory_space<vmem>>, %arg2: memref<2x7xf32, #tpu.memory_space<vmem>>, %arg3: memref<1024x1792xbf16, #tpu.memory_space<vmem>>, %arg4: memref<1x1792xf32, #tpu.memory_space<vmem>>, %arg5: memref<1792x1024xbf16, #tpu.memory_space<vmem>>, %arg6: memref<1x1024xf32, #tpu.memory_space<vmem>>, %arg7: memref<1024x256xbf16, #tpu.memory_space<vmem>>, %arg8: memref<1x256xf32, #tpu.memory_space<vmem>>, %arg9: memref<256x4xf32, #tpu.memory_space<vmem>>, %arg10: memref<7x4xf32, #tpu.memory_space<vmem>>, %arg11: memref<1x4xf32, #tpu.memory_space<vmem>>, %arg12: memref<2x4xf32, #tpu.memory_space<vmem>>) attributes {dimension_semantics = [#tpu.dimension_semantics<arbitrary>], iteration_bounds = array<i64: 1>, scalar_prefetch = 0 : i64, scratch_operands = 0 : i64, tpu.core_type = #tpu.core_type<tc>, window_params = [{pipeline_mode = #tpu.pipeline_mode<synchronous>, transform_indices = @transform_0, window_bounds = array<i64: 2, 1024>}, {pipeline_mode = #tpu.pipeline_mode<synchronous>, transform_indices = @transform_1, window_bounds = array<i64: 2, 7>}, {pipeline_mode = #tpu.pipeline_mode<synchronous>, transform_indices = @transform_2, window_bounds = array<i64: 1024, 1792>}, {pipeline_mode = #tpu.pipeline_mode<synchronous>, transform_indices = @transform_3, window_bounds = array<i64: 1, 1792>}, {pipeline_mode = #tpu.pipeline_mode<synchronous>, transform_indices = @transform_4, window_bounds = array<i64: 1792, 1024>}, {pipeline_mode = #tpu.pipeline_mode<synchronous>, transform_indices = @transform_5, window_bounds = array<i64: 1, 1024>}, {pipeline_mode = #tpu.pipeline_mode<synchronous>, transform_indices = @transform_6, window_bounds = array<i64: 1024, 256>}, {pipeline_mode = #tpu.pipeline_mode<synchronous>, transform_indices = @transform_7, window_bounds = array<i64: 1, 256>}, {pipeline_mode = #tpu.pipeline_mode<synchronous>, transform_indices = @transform_8, window_bounds = array<i64: 256, 4>}, {pipeline_mode = #tpu.pipeline_mode<synchronous>, transform_indices = @transform_9, window_bounds = array<i64: 7, 4>}, {pipeline_mode = #tpu.pipeline_mode<synchronous>, transform_indices = @transform_10, window_bounds = array<i64: 1, 4>}, {pipeline_mode = #tpu.pipeline_mode<synchronous>, transform_indices = @transform_11, window_bounds = array<i64: 2, 4>}]} {
    %c0 = arith.constant 0 : index
    %c0_0 = arith.constant 0 : index
    %0 = vector.load %arg1[%c0, %c0_0] : memref<2x1024xbf16, #tpu.memory_space<vmem>>, vector<2x1024xbf16>
    %c0_1 = arith.constant 0 : index
    %c0_2 = arith.constant 0 : index
    %1 = vector.load %arg3[%c0_1, %c0_2] : memref<1024x1792xbf16, #tpu.memory_space<vmem>>, vector<1024x1792xbf16>
    %cst = arith.constant dense<0.000000e+00> : vector<2x1792xf32>
    %2 = tpu.matmul %0, %1, %cst {dimension_numbers = #tpu.dot_dimension_numbers<[1], [0], [0], [1], [0, 0, 1, 1], [], []>} : vector<2x1024xbf16>, vector<1024x1792xbf16>, vector<2x1792xf32> -> vector<2x1792xf32>
    %c0_3 = arith.constant 0 : index
    %c0_4 = arith.constant 0 : index
    %3 = vector.load %arg4[%c0_3, %c0_4] : memref<1x1792xf32, #tpu.memory_space<vmem>>, vector<1x1792xf32>
    %4 = vector.broadcast %3 : vector<1x1792xf32> to vector<2x1792xf32>
    %5 = arith.addf %2, %4 : vector<2x1792xf32>
    %cst_5 = arith.constant 0.000000e+00 : f32
    %6 = vector.broadcast %cst_5 : f32 to vector<2x1792xf32>
    %7 = arith.cmpf oge, %5, %6 : vector<2x1792xf32>
    %cst_6 = arith.constant 0.00999999977 : f32
    %8 = vector.broadcast %cst_6 : f32 to vector<2x1792xf32>
    %9 = arith.mulf %8, %5 : vector<2x1792xf32>
    %10 = arith.select %7, %5, %9 : vector<2x1792xi1>, vector<2x1792xf32>
    %11 = arith.truncf %10 : vector<2x1792xf32> to vector<2x1792xbf16>
    %c0_7 = arith.constant 0 : index
    %c0_8 = arith.constant 0 : index
    %12 = vector.load %arg5[%c0_7, %c0_8] : memref<1792x1024xbf16, #tpu.memory_space<vmem>>, vector<1792x1024xbf16>
    %cst_9 = arith.constant dense<0.000000e+00> : vector<2x1024xf32>
    %13 = tpu.matmul %11, %12, %cst_9 {dimension_numbers = #tpu.dot_dimension_numbers<[1], [0], [0], [1], [0, 0, 1, 1], [], []>} : vector<2x1792xbf16>, vector<1792x1024xbf16>, vector<2x1024xf32> -> vector<2x1024xf32>
    %c0_10 = arith.constant 0 : index
    %c0_11 = arith.constant 0 : index
    %14 = vector.load %arg6[%c0_10, %c0_11] : memref<1x1024xf32, #tpu.memory_space<vmem>>, vector<1x1024xf32>
    %15 = vector.broadcast %14 : vector<1x1024xf32> to vector<2x1024xf32>
    %16 = arith.addf %13, %15 : vector<2x1024xf32>
    %cst_12 = arith.constant 0.000000e+00 : f32
    %17 = vector.broadcast %cst_12 : f32 to vector<2x1024xf32>
    %18 = arith.cmpf oge, %16, %17 : vector<2x1024xf32>
    %cst_13 = arith.constant 0.00999999977 : f32
    %19 = vector.broadcast %cst_13 : f32 to vector<2x1024xf32>
    %20 = arith.mulf %19, %16 : vector<2x1024xf32>
    %21 = arith.select %18, %16, %20 : vector<2x1024xi1>, vector<2x1024xf32>
    %22 = arith.truncf %21 : vector<2x1024xf32> to vector<2x1024xbf16>
    %c0_14 = arith.constant 0 : index
    %c0_15 = arith.constant 0 : index
    %23 = vector.load %arg7[%c0_14, %c0_15] : memref<1024x256xbf16, #tpu.memory_space<vmem>>, vector<1024x256xbf16>
    %cst_16 = arith.constant dense<0.000000e+00> : vector<2x256xf32>
    %24 = tpu.matmul %22, %23, %cst_16 {dimension_numbers = #tpu.dot_dimension_numbers<[1], [0], [0], [1], [0, 0, 1, 1], [], []>} : vector<2x1024xbf16>, vector<1024x256xbf16>, vector<2x256xf32> -> vector<2x256xf32>
    %c0_17 = arith.constant 0 : index
    %c0_18 = arith.constant 0 : index
    %25 = vector.load %arg8[%c0_17, %c0_18] : memref<1x256xf32, #tpu.memory_space<vmem>>, vector<1x256xf32>
    %26 = vector.broadcast %25 : vector<1x256xf32> to vector<2x256xf32>
    %27 = arith.addf %24, %26 : vector<2x256xf32>
    %cst_19 = arith.constant 0.000000e+00 : f32
    %28 = vector.broadcast %cst_19 : f32 to vector<2x256xf32>
    %29 = arith.maximumf %27, %28 : vector<2x256xf32>
    %c0_20 = arith.constant 0 : index
    %c0_21 = arith.constant 0 : index
    %30 = vector.load %arg9[%c0_20, %c0_21] : memref<256x4xf32, #tpu.memory_space<vmem>>, vector<256x4xf32>
    %cst_22 = arith.constant dense<0.000000e+00> : vector<2x4xf32>
    %31 = tpu.matmul %29, %30, %cst_22 {dimension_numbers = #tpu.dot_dimension_numbers<[1], [0], [0], [1], [0, 0, 1, 1], [], []>} : vector<2x256xf32>, vector<256x4xf32>, vector<2x4xf32> -> vector<2x4xf32>
    %c0_23 = arith.constant 0 : index
    %c0_24 = arith.constant 0 : index
    %32 = vector.load %arg2[%c0_23, %c0_24] : memref<2x7xf32, #tpu.memory_space<vmem>>, vector<2x7xf32>
    %c0_25 = arith.constant 0 : index
    %c0_26 = arith.constant 0 : index
    %33 = vector.load %arg10[%c0_25, %c0_26] : memref<7x4xf32, #tpu.memory_space<vmem>>, vector<7x4xf32>
    %cst_27 = arith.constant dense<0.000000e+00> : vector<2x4xf32>
    %34 = tpu.matmul %32, %33, %cst_27 {dimension_numbers = #tpu.dot_dimension_numbers<[1], [0], [0], [1], [0, 0, 1, 1], [], []>} : vector<2x7xf32>, vector<7x4xf32>, vector<2x4xf32> -> vector<2x4xf32>
    %35 = arith.addf %31, %34 : vector<2x4xf32>
    %c0_28 = arith.constant 0 : index
    %c0_29 = arith.constant 0 : index
    %36 = vector.load %arg11[%c0_28, %c0_29] : memref<1x4xf32, #tpu.memory_space<vmem>>, vector<1x4xf32>
    %37 = vector.broadcast %36 : vector<1x4xf32> to vector<2x4xf32>
    %38 = arith.addf %35, %37 : vector<2x4xf32>
    %c0_30 = arith.constant 0 : index
    %c0_31 = arith.constant 0 : index
    %39 = vector.load %arg12[%c0_30, %c0_31] : memref<2x4xf32, #tpu.memory_space<vmem>>, vector<2x4xf32>
    tpu.vector_store %arg12[%c0_30, %c0_31], %38 {strides = array<i32>} : memref<2x4xf32, #tpu.memory_space<vmem>>, vector<2x4xf32>,
    return
  }
  func.func @transform_0(%arg0: i32) -> (i32, i32) {
    %c0_i32 = arith.constant 0 : i32
    %c0_i32_0 = arith.constant 0 : i32
    %c0_i32_1 = arith.constant 0 : i32
    return %c0_i32, %c0_i32_0 : i32, i32
  }
  func.func @transform_1(%arg0: i32) -> (i32, i32) {
    %c0_i32 = arith.constant 0 : i32
    %c0_i32_0 = arith.constant 0 : i32
    %c0_i32_1 = arith.constant 0 : i32
    return %c0_i32, %c0_i32_0 : i32, i32
  }
  func.func @transform_2(%arg0: i32) -> (i32, i32) {
    %c0_i32 = arith.constant 0 : i32
    %c0_i32_0 = arith.constant 0 : i32
    %c0_i32_1 = arith.constant 0 : i32
    return %c0_i32, %c0_i32_0 : i32, i32
  }
  func.func @transform_3(%arg0: i32) -> (i32, i32) {
    %c0_i32 = arith.constant 0 : i32
    %c0_i32_0 = arith.constant 0 : i32
    %c0_i32_1 = arith.constant 0 : i32
    return %c0_i32, %c0_i32_0 : i32, i32
  }
  func.func @transform_4(%arg0: i32) -> (i32, i32) {
    %c0_i32 = arith.constant 0 : i32
    %c0_i32_0 = arith.constant 0 : i32
    %c0_i32_1 = arith.constant 0 : i32
    return %c0_i32, %c0_i32_0 : i32, i32
  }
  func.func @transform_5(%arg0: i32) -> (i32, i32) {
    %c0_i32 = arith.constant 0 : i32
    %c0_i32_0 = arith.constant 0 : i32
    %c0_i32_1 = arith.constant 0 : i32
    return %c0_i32, %c0_i32_0 : i32, i32
  }
  func.func @transform_6(%arg0: i32) -> (i32, i32) {
    %c0_i32 = arith.constant 0 : i32
    %c0_i32_0 = arith.constant 0 : i32
    %c0_i32_1 = arith.constant 0 : i32
    return %c0_i32, %c0_i32_0 : i32, i32
  }
  func.func @transform_7(%arg0: i32) -> (i32, i32) {
    %c0_i32 = arith.constant 0 : i32
    %c0_i32_0 = arith.constant 0 : i32
    %c0_i32_1 = arith.constant 0 : i32
    return %c0_i32, %c0_i32_0 : i32, i32
  }
  func.func @transform_8(%arg0: i32) -> (i32, i32) {
    %c0_i32 = arith.constant 0 : i32
    %c0_i32_0 = arith.constant 0 : i32
    %c0_i32_1 = arith.constant 0 : i32
    return %c0_i32, %c0_i32_0 : i32, i32
  }
  func.func @transform_9(%arg0: i32) -> (i32, i32) {
    %c0_i32 = arith.constant 0 : i32
    %c0_i32_0 = arith.constant 0 : i32
    %c0_i32_1 = arith.constant 0 : i32
    return %c0_i32, %c0_i32_0 : i32, i32
  }
  func.func @transform_10(%arg0: i32) -> (i32, i32) {
    %c0_i32 = arith.constant 0 : i32
    %c0_i32_0 = arith.constant 0 : i32
    %c0_i32_1 = arith.constant 0 : i32
    return %c0_i32, %c0_i32_0 : i32, i32
  }
  func.func @transform_11(%arg0: i32) -> (i32, i32) {
    %c0_i32 = arith.constant 0 : i32
    %c0_i32_0 = arith.constant 0 : i32
    %c0_i32_1 = arith.constant 0 : i32
    return %c0_i32, %c0_i32_0 : i32, i32
  }
}

</mosaic_0001>

<llo_original>
// kernel: tpu_custom_call.1
$region0: #{tpu_custom_call.1}
  #allocation0 [shape = 'u32[]', space=smem, size = 0x4, offset = 0x4, fixed_abs, tag = 'smem constant byte address 0x4 - core index']
  #allocation1 [shape = 'u32[144,128]{1,0:T(1,128)}', space=vmem, size = 0x12000, scoped, tag = 'internal scratch']
  %s0 = inlined_call_operand.hbm [shape: bf16[2,1024], index: 0, kind: input, shape index: {}]
  %s1 = inlined_call_operand.hbm [shape: f32[2,7], index: 1, kind: input, shape index: {}]
  %s2 = inlined_call_operand.hbm [shape: bf16[1024,1792], index: 2, kind: input, shape index: {}]
  %s3 = inlined_call_operand.hbm [shape: f32[1,1792], index: 3, kind: input, shape index: {}]
  %s4 = inlined_call_operand.hbm [shape: bf16[1792,1024], index: 4, kind: input, shape index: {}]
  %s5 = inlined_call_operand.hbm [shape: f32[1,1024], index: 5, kind: input, shape index: {}]
  %s6 = inlined_call_operand.hbm [shape: bf16[1024,256], index: 6, kind: input, shape index: {}]
  %s7 = inlined_call_operand.hbm [shape: f32[1,256], index: 7, kind: input, shape index: {}]
  %s8 = inlined_call_operand.vmem [shape: f32[256,4], index: 8, kind: input, shape index: {}]
  %s9 = inlined_call_operand.vmem [shape: f32[7,4], index: 9, kind: input, shape index: {}]
  %s10 = inlined_call_operand.hbm [shape: f32[1,4], index: 10, kind: input, shape index: {}]
  %s11 = inlined_call_operand.hbm [shape: f32[2,4], index: 11, kind: output, shape index: {}]
  %s12 = sld [smem:[#allocation0]]
  $region90: #{tpu_custom_call.1} parent=0
    _
  %s14 = ssub.s32 1, %s12
  %s15 = scalar_select 0, %s14, %s12
  $region1: #{tpu_custom_call.1} parent=0
    #allocation2 [shape = 'u8[4096]{0}', space=vmem, size = 0x1000, scoped, tag = 'input window, operand 0, single buffered']
    #allocation3 [shape = 's32[1]{0}', space=sflag, size = 0x4, scoped, tag = 'scoped memory for tpu_custom_call.1']
    #allocation4 [shape = 's32[1]{0}', space=sflag, size = 0x4, scoped, tag = 'scoped memory for tpu_custom_call.1']
    #allocation5 [shape = 'u8[1024]{0}', space=vmem, size = 0x400, scoped, tag = 'input window, operand 1, single buffered']
    #allocation6 [shape = 's32[1]{0}', space=sflag, size = 0x4, scoped, tag = 'scoped memory for tpu_custom_call.1']
    #allocation7 [shape = 'u8[3670016]{0}', space=vmem, size = 0x380000, scoped, tag = 'input window, operand 2, single buffered']
    #allocation8 [shape = 'u8[7168]{0}', space=vmem, size = 0x1c00, scoped, tag = 'input window, operand 3, single buffered']
    #allocation9 [shape = 's32[1]{0}', space=sflag, size = 0x4, scoped, tag = 'scoped memory for tpu_custom_call.1']
    #allocation10 [shape = 'u8[3670016]{0}', space=vmem, size = 0x380000, scoped, tag = 'input window, operand 4, single buffered']
    #allocation11 [shape = 'u8[4096]{0}', space=vmem, size = 0x1000, scoped, tag = 'input window, operand 5, single buffered']
    #allocation12 [shape = 's32[1]{0}', space=sflag, size = 0x4, scoped, tag = 'scoped memory for tpu_custom_call.1']
    #allocation13 [shape = 'u8[524288]{0}', space=vmem, size = 0x80000, scoped, tag = 'input window, operand 6, single buffered']
    #allocation14 [shape = 'u8[1024]{0}', space=vmem, size = 0x400, scoped, tag = 'input window, operand 7, single buffered']
    #allocation15 [shape = 's32[1]{0}', space=sflag, size = 0x4, scoped, tag = 'scoped memory for tpu_custom_call.1']
    #allocation16 [shape = 'u8[512]{0}', space=vmem, size = 0x400, scoped, tag = 'input window, operand 10, single buffered']
    #allocation17 [shape = 'u8[1024]{0}', space=vmem, size = 0x400, scoped, tag = 'output window, operand 0, single buffered']
    %16 = vsyncpa [#allocation3], 0
    %17 = vsyncpa [#allocation6], 0
    %18 = vsyncpa [#allocation9], 0
    %19 = vsyncpa [#allocation12], 0
    %20 = vsyncpa [#allocation15], 0
    %21 = vsyncpa [#allocation4], 0
    // Predicated region
    $region2: #{tpu_custom_call.1} parent=1 // pred_check
      _
    $region3: #{tpu_custom_call.1} parent=1 // pred_check_branch
      %23 = sbr.rel (0) target = $region5
    $region4: #{tpu_custom_call.1} parent=1 // pred_region
      %s25 = ssub.s32 128, 128
      %26 = vsyncadd [#allocation3], %s25
      %s28 = sshll.u32 [#allocation2], 4
      %s29 = int_to_ptr.vmem [resolvable:$true] %s28
      %31 = dma.hbm_to_vmem [thread:$0]  %s0, 128, %s29, [#allocation3]
    $region5: #{tpu_custom_call.1} parent=1 // pred_fallthru
      _
    // Predicated region
    $region6: #{tpu_custom_call.1} parent=1 // pred_check
      _
    $region7: #{tpu_custom_call.1} parent=1 // pred_check_branch
      %33 = sbr.rel (0) target = $region9
    $region8: #{tpu_custom_call.1} parent=1 // pred_region
      %s35 = ssub.s32 32, 32
      %36 = vsyncadd [#allocation6], %s35
      %s38 = sshll.u32 [#allocation5], 4
      %s39 = int_to_ptr.vmem [resolvable:$true] %s38
      %41 = dma.hbm_to_vmem [thread:$0]  %s1, 32, %s39, [#allocation6]
    $region9: #{tpu_custom_call.1} parent=1 // pred_fallthru
      _
    // Predicated region
    $region10: #{tpu_custom_call.1} parent=1 // pred_check
      _
    $region11: #{tpu_custom_call.1} parent=1 // pred_check_branch
      %43 = sbr.rel (0) target = $region13
    $region12: #{tpu_custom_call.1} parent=1 // pred_region
      %s45 = ssub.s32 114688, 114688
      %46 = vsyncadd [#allocation6], %s45
      %s47 = sshll.u32 [#allocation7], 4
      %s48 = int_to_ptr.vmem [resolvable:$true] %s47
      %53 = dma.hbm_to_vmem [thread:$0]  %s2, 114688, %s48, [#allocation6], 896, 896, 56
    $region13: #{tpu_custom_call.1} parent=1 // pred_fallthru
      _
    // Predicated region
    $region14: #{tpu_custom_call.1} parent=1 // pred_check
      _
    $region15: #{tpu_custom_call.1} parent=1 // pred_check_branch
      %55 = sbr.rel (0) target = $region17
    $region16: #{tpu_custom_call.1} parent=1 // pred_region
      %s57 = ssub.s32 224, 224
      %58 = vsyncadd [#allocation9], %s57
      %s60 = sshll.u32 [#allocation8], 4
      %s61 = int_to_ptr.vmem [resolvable:$true] %s60
      %63 = dma.hbm_to_vmem [thread:$0]  %s3, 224, %s61, [#allocation9]
    $region17: #{tpu_custom_call.1} parent=1 // pred_fallthru
      _
    // Predicated region
    $region18: #{tpu_custom_call.1} parent=1 // pred_check
      _
    $region19: #{tpu_custom_call.1} parent=1 // pred_check_branch
      %65 = sbr.rel (0) target = $region21
    $region20: #{tpu_custom_call.1} parent=1 // pred_region
      %s67 = ssub.s32 114688, 114688
      %68 = vsyncadd [#allocation9], %s67
      %s69 = sshll.u32 [#allocation10], 4
      %s70 = int_to_ptr.vmem [resolvable:$true] %s69
      %75 = dma.hbm_to_vmem [thread:$0]  %s4, 114688, %s70, [#allocation9], 512, 512, 32
    $region21: #{tpu_custom_call.1} parent=1 // pred_fallthru
      _
    // Predicated region
    $region22: #{tpu_custom_call.1} parent=1 // pred_check
      _
    $region23: #{tpu_custom_call.1} parent=1 // pred_check_branch
      %77 = sbr.rel (0) target = $region25
    $region24: #{tpu_custom_call.1} parent=1 // pred_region
      %s79 = ssub.s32 128, 128
      %80 = vsyncadd [#allocation12], %s79
      %s82 = sshll.u32 [#allocation11], 4
      %s83 = int_to_ptr.vmem [resolvable:$true] %s82
      %85 = dma.hbm_to_vmem [thread:$0]  %s5, 128, %s83, [#allocation12]
    $region25: #{tpu_custom_call.1} parent=1 // pred_fallthru
      _
    // Predicated region
    $region26: #{tpu_custom_call.1} parent=1 // pred_check
      _
    $region27: #{tpu_custom_call.1} parent=1 // pred_check_branch
      %87 = sbr.rel (0) target = $region29
    $region28: #{tpu_custom_call.1} parent=1 // pred_region
      %s89 = ssub.s32 16384, 16384
      %90 = vsyncadd [#allocation12], %s89
      %s91 = sshll.u32 [#allocation13], 4
      %s92 = int_to_ptr.vmem [resolvable:$true] %s91
      %97 = dma.hbm_to_vmem [thread:$0]  %s6, 16384, %s92, [#allocation12], 128, 128, 8
    $region29: #{tpu_custom_call.1} parent=1 // pred_fallthru
      _
    // Predicated region
    $region30: #{tpu_custom_call.1} parent=1 // pred_check
      _
    $region31: #{tpu_custom_call.1} parent=1 // pred_check_branch
      %99 = sbr.rel (0) target = $region33
    $region32: #{tpu_custom_call.1} parent=1 // pred_region
      %s101 = ssub.s32 32, 32
      %102 = vsyncadd [#allocation15], %s101
      %s104 = sshll.u32 [#allocation14], 4
      %s105 = int_to_ptr.vmem [resolvable:$true] %s104
      %107 = dma.hbm_to_vmem [thread:$0]  %s7, 32, %s105, [#allocation15]
    $region33: #{tpu_custom_call.1} parent=1 // pred_fallthru
      _
    // Predicated region
    $region34: #{tpu_custom_call.1} parent=1 // pred_check
      _
    $region35: #{tpu_custom_call.1} parent=1 // pred_check_branch
      %109 = sbr.rel (0) target = $region37
    $region36: #{tpu_custom_call.1} parent=1 // pred_region
      _
    $region37: #{tpu_custom_call.1} parent=1 // pred_fallthru
      _
    // Predicated region
    $region38: #{tpu_custom_call.1} parent=1 // pred_check
      _
    $region39: #{tpu_custom_call.1} parent=1 // pred_check_branch
      %111 = sbr.rel (0) target = $region41
    $region40: #{tpu_custom_call.1} parent=1 // pred_region
      _
    $region41: #{tpu_custom_call.1} parent=1 // pred_fallthru
      _
    // Predicated region
    $region42: #{tpu_custom_call.1} parent=1 // pred_check
      _
    $region43: #{tpu_custom_call.1} parent=1 // pred_check_branch
      %113 = sbr.rel (0) target = $region45
    $region44: #{tpu_custom_call.1} parent=1 // pred_region
      %s115 = ssub.s32 16, 16
      %116 = vsyncadd [#allocation15], %s115
      %s118 = sshll.u32 [#allocation16], 4
      %s119 = int_to_ptr.vmem [resolvable:$true] %s118
      %121 = dma.hbm_to_vmem [thread:$0]  %s10, 16, %s119, [#allocation15]
    $region45: #{tpu_custom_call.1} parent=1 // pred_fallthru
      _
    // Predicated region
    $region46: #{tpu_custom_call.1} parent=1 // pred_check
      _
    $region47: #{tpu_custom_call.1} parent=1 // pred_check_branch
      %123 = sbr.rel (0) target = $region49
    $region48: #{tpu_custom_call.1} parent=1 // pred_region
      %124 = dma.done [#allocation3], 128
    $region49: #{tpu_custom_call.1} parent=1 // pred_fallthru
      _
    // Predicated region
    $region50: #{tpu_custom_call.1} parent=1 // pred_check
      _
    $region51: #{tpu_custom_call.1} parent=1 // pred_check_branch
      %126 = sbr.rel (0) target = $region53
    $region52: #{tpu_custom_call.1} parent=1 // pred_region
      %127 = dma.done [#allocation6], 32
    $region53: #{tpu_custom_call.1} parent=1 // pred_fallthru
      _
    // Predicated region
    $region54: #{tpu_custom_call.1} parent=1 // pred_check
      _
    $region55: #{tpu_custom_call.1} parent=1 // pred_check_branch
      %129 = sbr.rel (0) target = $region57
    $region56: #{tpu_custom_call.1} parent=1 // pred_region
      %130 = dma.done [#allocation6], 114688
    $region57: #{tpu_custom_call.1} parent=1 // pred_fallthru
      _
    // Predicated region
    $region58: #{tpu_custom_call.1} parent=1 // pred_check
      _
    $region59: #{tpu_custom_call.1} parent=1 // pred_check_branch
      %132 = sbr.rel (0) target = $region61
    $region60: #{tpu_custom_call.1} parent=1 // pred_region
      %133 = dma.done [#allocation9], 224
    $region61: #{tpu_custom_call.1} parent=1 // pred_fallthru
      _
    // Predicated region
    $region62: #{tpu_custom_call.1} parent=1 // pred_check
      _
    $region63: #{tpu_custom_call.1} parent=1 // pred_check_branch
      %135 = sbr.rel (0) target = $region65
    $region64: #{tpu_custom_call.1} parent=1 // pred_region
      %136 = dma.done [#allocation9], 114688
    $region65: #{tpu_custom_call.1} parent=1 // pred_fallthru
      _
    // Predicated region
    $region66: #{tpu_custom_call.1} parent=1 // pred_check
      _
    $region67: #{tpu_custom_call.1} parent=1 // pred_check_branch
      %138 = sbr.rel (0) target = $region69
    $region68: #{tpu_custom_call.1} parent=1 // pred_region
      %139 = dma.done [#allocation12], 128
    $region69: #{tpu_custom_call.1} parent=1 // pred_fallthru
      _
    // Predicated region
    $region70: #{tpu_custom_call.1} parent=1 // pred_check
      _
    $region71: #{tpu_custom_call.1} parent=1 // pred_check_branch
      %141 = sbr.rel (0) target = $region73
    $region72: #{tpu_custom_call.1} parent=1 // pred_region
      %142 = dma.done [#allocation12], 16384
    $region73: #{tpu_custom_call.1} parent=1 // pred_fallthru
      _
    // Predicated region
    $region74: #{tpu_custom_call.1} parent=1 // pred_check
      _
    $region75: #{tpu_custom_call.1} parent=1 // pred_check_branch
      %144 = sbr.rel (0) target = $region77
    $region76: #{tpu_custom_call.1} parent=1 // pred_region
      %145 = dma.done [#allocation15], 32
    $region77: #{tpu_custom_call.1} parent=1 // pred_fallthru
      _
    // Predicated region
    $region78: #{tpu_custom_call.1} parent=1 // pred_check
      _
    $region79: #{tpu_custom_call.1} parent=1 // pred_check_branch
      %147 = sbr.rel (0) target = $region81
    $region80: #{tpu_custom_call.1} parent=1 // pred_region
      %148 = dma.done [#allocation15], 16
    $region81: #{tpu_custom_call.1} parent=1 // pred_fallthru
      _
    %v149 = vld [vmem:[#allocation2] sm:$0xff]
    %v150 = vld [vmem:[#allocation7] sm:$0xff]
    %v151 = vld [vmem:[#allocation7 + $0x8] sm:$0xff]
    %v152 = vld [vmem:[#allocation7 + $0x10] sm:$0xff]
    %v153 = vld [vmem:[#allocation7 + $0x18] sm:$0xff]
    %v154 = vld [vmem:[#allocation7 + $0x20] sm:$0xff]
    %v155 = vld [vmem:[#allocation7 + $0x28] sm:$0xff]
    %v156 = vld [vmem:[#allocation7 + $0x30] sm:$0xff]
    %v157 = vld [vmem:[#allocation7 + $0x38] sm:$0xff]
    %v158 = vld [vmem:[#allocation7 + $0x40] sm:$0xff]
    %v159 = vld [vmem:[#allocation7 + $0x48] sm:$0xff]
    %v160 = vld [vmem:[#allocation7 + $0x50] sm:$0xff]
    %v161 = vld [vmem:[#allocation7 + $0x58] sm:$0xff]
    %v162 = vld [vmem:[#allocation7 + $0x60] sm:$0xff]
    %v163 = vld [vmem:[#allocation7 + $0x68] sm:$0xff]
    %v164 = vld [vmem:[#allocation7 + $0x70] sm:$0xff]
    %v165 = vld [vmem:[#allocation7 + $0x78] sm:$0xff]
    %v166 = vld [vmem:[#allocation7 + $0x80] sm:$0xff]
    %v167 = vld [vmem:[#allocation7 + $0x88] sm:$0xff]
    %v168 = vld [vmem:[#allocation7 + $0x90] sm:$0xff]
    %v169 = vld [vmem:[#allocation7 + $0x98] sm:$0xff]
    %v170 = vld [vmem:[#allocation7 + $0xa0] sm:$0xff]
    %v171 = vld [vmem:[#allocation7 + $0xa8] sm:$0xff]
    %v172 = vld [vmem:[#allocation7 + $0xb0] sm:$0xff]
    %v173 = vld [vmem:[#allocation7 + $0xb8] sm:$0xff]
    %v174 = vld [vmem:[#allocation7 + $0xc0] sm:$0xff]
    %v175 = vld [vmem:[#allocation7 + $0xc8] sm:$0xff]
    %v176 = vld [vmem:[#allocation7 + $0xd0] sm:$0xff]
    %v177 = vld [vmem:[#allocation7 + $0xd8] sm:$0xff]
    %v178 = vld [vmem:[#allocation7 + $0xe0] sm:$0xff]
    %v179 = vld [vmem:[#allocation7 + $0xe8] sm:$0xff]
    %v180 = vld [vmem:[#allocation7 + $0xf0] sm:$0xff]
    %v181 = vld [vmem:[#allocation7 + $0xf8] sm:$0xff]
    %v182 = vld [vmem:[#allocation7 + $0x100] sm:$0xff]
    %v183 = vld [vmem:[#allocation7 + $0x108] sm:$0xff]
    %v184 = vld [vmem:[#allocation7 + $0x110] sm:$0xff]
    %v185 = vld [vmem:[#allocation7 + $0x118] sm:$0xff]
    %v186 = vld [vmem:[#allocation7 + $0x120] sm:$0xff]
    %v187 = vld [vmem:[#allocation7 + $0x128] sm:$0xff]
    %v188 = vld [vmem:[#allocation7 + $0x130] sm:$0xff]
    %v189 = vld [vmem:[#allocation7 + $0x138] sm:$0xff]
    %v190 = vld [vmem:[#allocation7 + $0x140] sm:$0xff]
    %v191 = vld [vmem:[#allocation7 + $0x148] sm:$0xff]
    %v192 = vld [vmem:[#allocation7 + $0x150] sm:$0xff]
    %v193 = vld [vmem:[#allocation7 + $0x158] sm:$0xff]
    %v194 = vld [vmem:[#allocation7 + $0x160] sm:$0xff]
    %v195 = vld [vmem:[#allocation7 + $0x168] sm:$0xff]
    %v196 = vld [vmem:[#allocation7 + $0x170] sm:$0xff]
    %v197 = vld [vmem:[#allocation7 + $0x178] sm:$0xff]
    %v198 = vld [vmem:[#allocation7 + $0x180] sm:$0xff]
    %v199 = vld [vmem:[#allocation7 + $0x188] sm:$0xff]
    %v200 = vld [vmem:[#allocation7 + $0x190] sm:$0xff]
    %v201 = vld [vmem:[#allocation7 + $0x198] sm:$0xff]
    %v202 = vld [vmem:[#allocation7 + $0x1a0] sm:$0xff]
    %v203 = vld [vmem:[#allocation7 + $0x1a8] sm:$0xff]
    %v204 = vld [vmem:[#allocation7 + $0x1b0] sm:$0xff]
    %v205 = vld [vmem:[#allocation7 + $0x1b8] sm:$0xff]
    %v206 = vld [vmem:[#allocation7 + $0x1c0] sm:$0xff]
    %v207 = vld [vmem:[#allocation7 + $0x1c8] sm:$0xff]
    %v208 = vld [vmem:[#allocation7 + $0x1d0] sm:$0xff]
    %v209 = vld [vmem:[#allocation7 + $0x1d8] sm:$0xff]
    %v210 = vld [vmem:[#allocation7 + $0x1e0] sm:$0xff]
    %v211 = vld [vmem:[#allocation7 + $0x1e8] sm:$0xff]
    %v212 = vld [vmem:[#allocation7 + $0x1f0] sm:$0xff]
    %v213 = vld [vmem:[#allocation7 + $0x1f8] sm:$0xff]
    %v214 = vld [vmem:[#allocation7 + $0x200] sm:$0xff]
    %v215 = vld [vmem:[#allocation7 + $0x208] sm:$0xff]
    %v216 = vld [vmem:[#allocation7 + $0x210] sm:$0xff]
    %v217 = vld [vmem:[#allocation7 + $0x218] sm:$0xff]
    %v218 = vld [vmem:[#allocation7 + $0x220] sm:$0xff]
    %v219 = vld [vmem:[#allocation7 + $0x228] sm:$0xff]
    %v220 = vld [vmem:[#allocation7 + $0x230] sm:$0xff]
    %v221 = vld [vmem:[#allocation7 + $0x238] sm:$0xff]
    %v222 = vld [vmem:[#allocation7 + $0x240] sm:$0xff]
    %v223 = vld [vmem:[#allocation7 + $0x248] sm:$0xff]
    %v224 = vld [vmem:[#allocation7 + $0x250] sm:$0xff]
    %v225 = vld [vmem:[#allocation7 + $0x258] sm:$0xff]
    %v226 = vld [vmem:[#allocation7 + $0x260] sm:$0xff]
    %v227 = vld [vmem:[#allocation7 + $0x268] sm:$0xff]
    %v228 = vld [vmem:[#allocation7 + $0x270] sm:$0xff]
    %v229 = vld [vmem:[#allocation7 + $0x278] sm:$0xff]
    %v230 = vld [vmem:[#allocation7 + $0x280] sm:$0xff]
    %v231 = vld [vmem:[#allocation7 + $0x288] sm:$0xff]
    %v232 = vld [vmem:[#allocation7 + $0x290] sm:$0xff]
    %v233 = vld [vmem:[#allocation7 + $0x298] sm:$0xff]
    %v234 = vld [vmem:[#allocation7 + $0x2a0] sm:$0xff]
    %v235 = vld [vmem:[#allocation7 + $0x2a8] sm:$0xff]
    %v236 = vld [vmem:[#allocation7 + $0x2b0] sm:$0xff]
    %v237 = vld [vmem:[#allocation7 + $0x2b8] sm:$0xff]
    %v238 = vld [vmem:[#allocation7 + $0x2c0] sm:$0xff]
    %v239 = vld [vmem:[#allocation7 + $0x2c8] sm:$0xff]
    %v240 = vld [vmem:[#allocation7 + $0x2d0] sm:$0xff]
    %v241 = vld [vmem:[#allocation7 + $0x2d8] sm:$0xff]
    %v242 = vld [vmem:[#allocation7 + $0x2e0] sm:$0xff]
    %v243 = vld [vmem:[#allocation7 + $0x2e8] sm:$0xff]
    %v244 = vld [vmem:[#allocation7 + $0x2f0] sm:$0xff]
    %v245 = vld [vmem:[#allocation7 + $0x2f8] sm:$0xff]
    %v246 = vld [vmem:[#allocation7 + $0x300] sm:$0xff]
    %v247 = vld [vmem:[#allocation7 + $0x308] sm:$0xff]
    %v248 = vld [vmem:[#allocation7 + $0x310] sm:$0xff]
    %v249 = vld [vmem:[#allocation7 + $0x318] sm:$0xff]
    %v250 = vld [vmem:[#allocation7 + $0x320] sm:$0xff]
    %v251 = vld [vmem:[#allocation7 + $0x328] sm:$0xff]
    %v252 = vld [vmem:[#allocation7 + $0x330] sm:$0xff]
    %v253 = vld [vmem:[#allocation7 + $0x338] sm:$0xff]
    %v254 = vld [vmem:[#allocation7 + $0x340] sm:$0xff]
    %v255 = vld [vmem:[#allocation7 + $0x348] sm:$0xff]
    %v256 = vld [vmem:[#allocation7 + $0x350] sm:$0xff]
    %v257 = vld [vmem:[#allocation7 + $0x358] sm:$0xff]
    %v258 = vld [vmem:[#allocation7 + $0x360] sm:$0xff]
    %v259 = vld [vmem:[#allocation7 + $0x368] sm:$0xff]
    %v260 = vld [vmem:[#allocation7 + $0x370] sm:$0xff]
    %v261 = vld [vmem:[#allocation7 + $0x378] sm:$0xff]
    %v262 = vld [vmem:[#allocation7 + $0x380] sm:$0xff]
    %v263 = vld [vmem:[#allocation7 + $0x388] sm:$0xff]
    %v264 = vld [vmem:[#allocation7 + $0x390] sm:$0xff]
    %v265 = vld [vmem:[#allocation7 + $0x398] sm:$0xff]
    %v266 = vld [vmem:[#allocation7 + $0x3a0] sm:$0xff]
    %v267 = vld [vmem:[#allocation7 + $0x3a8] sm:$0xff]
    %v268 = vld [vmem:[#allocation7 + $0x3b0] sm:$0xff]
    %v269 = vld [vmem:[#allocation7 + $0x3b8] sm:$0xff]
    %v270 = vld [vmem:[#allocation7 + $0x3c0] sm:$0xff]
    %v271 = vld [vmem:[#allocation7 + $0x3c8] sm:$0xff]
    %v272 = vld [vmem:[#allocation7 + $0x3d0] sm:$0xff]
    %v273 = vld [vmem:[#allocation7 + $0x3d8] sm:$0xff]
    %v274 = vld [vmem:[#allocation7 + $0x3e0] sm:$0xff]
    %v275 = vld [vmem:[#allocation7 + $0x3e8] sm:$0xff]
    %v276 = vld [vmem:[#allocation7 + $0x3f0] sm:$0xff]
    %v277 = vld [vmem:[#allocation7 + $0x3f8] sm:$0xff]
    %v278 = vld [vmem:[#allocation7 + $0x400] sm:$0xff]
    %v279 = vld [vmem:[#allocation7 + $0x408] sm:$0xff]
    %v280 = vld [vmem:[#allocation7 + $0x410] sm:$0xff]
    %v281 = vld [vmem:[#allocation7 + $0x418] sm:$0xff]
    %v282 = vld [vmem:[#allocation7 + $0x420] sm:$0xff]
    %v283 = vld [vmem:[#allocation7 + $0x428] sm:$0xff]
    %v284 = vld [vmem:[#allocation7 + $0x430] sm:$0xff]
    %v285 = vld [vmem:[#allocation7 + $0x438] sm:$0xff]
    %v286 = vld [vmem:[#allocation7 + $0x440] sm:$0xff]
    %v287 = vld [vmem:[#allocation7 + $0x448] sm:$0xff]
    %v288 = vld [vmem:[#allocation7 + $0x450] sm:$0xff]
    %v289 = vld [vmem:[#allocation7 + $0x458] sm:$0xff]
    %v290 = vld [vmem:[#allocation7 + $0x460] sm:$0xff]
    %v291 = vld [vmem:[#allocation7 + $0x468] sm:$0xff]
    %v292 = vld [vmem:[#allocation7 + $0x470] sm:$0xff]
    %v293 = vld [vmem:[#allocation7 + $0x478] sm:$0xff]
    %v294 = vld [vmem:[#allocation7 + $0x480] sm:$0xff]
    %v295 = vld [vmem:[#allocation7 + $0x488] sm:$0xff]
    %v296 = vld [vmem:[#allocation7 + $0x490] sm:$0xff]
    %v297 = vld [vmem:[#allocation7 + $0x498] sm:$0xff]
    %v298 = vld [vmem:[#allocation7 + $0x4a0] sm:$0xff]
    %v299 = vld [vmem:[#allocation7 + $0x4a8] sm:$0xff]
    %v300 = vld [vmem:[#allocation7 + $0x4b0] sm:$0xff]
    %v301 = vld [vmem:[#allocation7 + $0x4b8] sm:$0xff]
    %v302 = vld [vmem:[#allocation7 + $0x4c0] sm:$0xff]
    %v303 = vld [vmem:[#allocation7 + $0x4c8] sm:$0xff]
    %v304 = vld [vmem:[#allocation7 + $0x4d0] sm:$0xff]
    %v305 = vld [vmem:[#allocation7 + $0x4d8] sm:$0xff]
    %v306 = vld [vmem:[#allocation7 + $0x4e0] sm:$0xff]
    %v307 = vld [vmem:[#allocation7 + $0x4e8] sm:$0xff]
    %v308 = vld [vmem:[#allocation7 + $0x4f0] sm:$0xff]
    %v309 = vld [vmem:[#allocation7 + $0x4f8] sm:$0xff]
    %v310 = vld [vmem:[#allocation7 + $0x500] sm:$0xff]
    %v311 = vld [vmem:[#allocation7 + $0x508] sm:$0xff]
    %v312 = vld [vmem:[#allocation7 + $0x510] sm:$0xff]
    %v313 = vld [vmem:[#allocation7 + $0x518] sm:$0xff]
    %v314 = vld [vmem:[#allocation7 + $0x520] sm:$0xff]
    %v315 = vld [vmem:[#allocation7 + $0x528] sm:$0xff]
    %v316 = vld [vmem:[#allocation7 + $0x530] sm:$0xff]
    %v317 = vld [vmem:[#allocation7 + $0x538] sm:$0xff]
    %v318 = vld [vmem:[#allocation7 + $0x540] sm:$0xff]
    %v319 = vld [vmem:[#allocation7 + $0x548] sm:$0xff]
    %v320 = vld [vmem:[#allocation7 + $0x550] sm:$0xff]
    %v321 = vld [vmem:[#allocation7 + $0x558] sm:$0xff]
    %v322 = vld [vmem:[#allocation7 + $0x560] sm:$0xff]
    %v323 = vld [vmem:[#allocation7 + $0x568] sm:$0xff]
    %v324 = vld [vmem:[#allocation7 + $0x570] sm:$0xff]
    %v325 = vld [vmem:[#allocation7 + $0x578] sm:$0xff]
    %v326 = vld [vmem:[#allocation7 + $0x580] sm:$0xff]
    %v327 = vld [vmem:[#allocation7 + $0x588] sm:$0xff]
    %v328 = vld [vmem:[#allocation7 + $0x590] sm:$0xff]
    %v329 = vld [vmem:[#allocation7 + $0x598] sm:$0xff]
    %v330 = vld [vmem:[#allocation7 + $0x5a0] sm:$0xff]
    %v331 = vld [vmem:[#allocation7 + $0x5a8] sm:$0xff]
    %v332 = vld [vmem:[#allocation7 + $0x5b0] sm:$0xff]
    %v333 = vld [vmem:[#allocation7 + $0x5b8] sm:$0xff]
    %v334 = vld [vmem:[#allocation7 + $0x5c0] sm:$0xff]
    %v335 = vld [vmem:[#allocation7 + $0x5c8] sm:$0xff]
    %v336 = vld [vmem:[#allocation7 + $0x5d0] sm:$0xff]
    %v337 = vld [vmem:[#allocation7 + $0x5d8] sm:$0xff]
    %v338 = vld [vmem:[#allocation7 + $0x5e0] sm:$0xff]
    %v339 = vld [vmem:[#allocation7 + $0x5e8] sm:$0xff]
    %v340 = vld [vmem:[#allocation7 + $0x5f0] sm:$0xff]
    %v341 = vld [vmem:[#allocation7 + $0x5f8] sm:$0xff]
    %v342 = vld [vmem:[#allocation7 + $0x600] sm:$0xff]
    %v343 = vld [vmem:[#allocation7 + $0x608] sm:$0xff]
    %v344 = vld [vmem:[#allocation7 + $0x610] sm:$0xff]
    %v345 = vld [vmem:[#allocation7 + $0x618] sm:$0xff]
    %v346 = vld [vmem:[#allocation7 + $0x620] sm:$0xff]
    %v347 = vld [vmem:[#allocation7 + $0x628] sm:$0xff]
    %v348 = vld [vmem:[#allocation7 + $0x630] sm:$0xff]
    %v349 = vld [vmem:[#allocation7 + $0x638] sm:$0xff]
    %v350 = vld [vmem:[#allocation7 + $0x640] sm:$0xff]
    %v351 = vld [vmem:[#allocation7 + $0x648] sm:$0xff]
    %v352 = vld [vmem:[#allocation7 + $0x650] sm:$0xff]
    %v353 = vld [vmem:[#allocation7 + $0x658] sm:$0xff]
    %v354 = vld [vmem:[#allocation7 + $0x660] sm:$0xff]
    %v355 = vld [vmem:[#allocation7 + $0x668] sm:$0xff]
    %v356 = vld [vmem:[#allocation7 + $0x670] sm:$0xff]
    %v357 = vld [vmem:[#allocation7 + $0x678] sm:$0xff]
    %v358 = vld [vmem:[#allocation7 + $0x680] sm:$0xff]
    %v359 = vld [vmem:[#allocation7 + $0x688] sm:$0xff]
    %v360 = vld [vmem:[#allocation7 + $0x690] sm:$0xff]
    %v361 = vld [vmem:[#allocation7 + $0x698] sm:$0xff]
    %v362 = vld [vmem:[#allocation7 + $0x6a0] sm:$0xff]
    %v363 = vld [vmem:[#allocation7 + $0x6a8] sm:$0xff]
    %v364 = vld [vmem:[#allocation7 + $0x6b0] sm:$0xff]
    %v365 = vld [vmem:[#allocation7 + $0x6b8] sm:$0xff]
    %v366 = vld [vmem:[#allocation7 + $0x6c0] sm:$0xff]
    %v367 = vld [vmem:[#allocation7 + $0x6c8] sm:$0xff]
    %v368 = vld [vmem:[#allocation7 + $0x6d0] sm:$0xff]
    %v369 = vld [vmem:[#allocation7 + $0x6d8] sm:$0xff]
    %v370 = vld [vmem:[#allocation7 + $0x6e0] sm:$0xff]
    %v371 = vld [vmem:[#allocation7 + $0x6e8] sm:$0xff]
    %v372 = vld [vmem:[#allocation7 + $0x6f0] sm:$0xff]
    %v373 = vld [vmem:[#allocation7 + $0x6f8] sm:$0xff]
    %v374 = vld [vmem:[#allocation7 + $0x700] sm:$0xff]
    %v375 = vld [vmem:[#allocation7 + $0x708] sm:$0xff]
    %v376 = vld [vmem:[#allocation7 + $0x710] sm:$0xff]
    %v377 = vld [vmem:[#allocation7 + $0x718] sm:$0xff]
    %v378 = vld [vmem:[#allocation7 + $0x720] sm:$0xff]
    %v379 = vld [vmem:[#allocation7 + $0x728] sm:$0xff]
    %v380 = vld [vmem:[#allocation7 + $0x730] sm:$0xff]
    %v381 = vld [vmem:[#allocation7 + $0x738] sm:$0xff]
    %v382 = vld [vmem:[#allocation7 + $0x740] sm:$0xff]
    %v383 = vld [vmem:[#allocation7 + $0x748] sm:$0xff]
    %v384 = vld [vmem:[#allocation7 + $0x750] sm:$0xff]
    %v385 = vld [vmem:[#allocation7 + $0x758] sm:$0xff]
    %v386 = vld [vmem:[#allocation7 + $0x760] sm:$0xff]
    %v387 = vld [vmem:[#allocation7 + $0x768] sm:$0xff]
    %v388 = vld [vmem:[#allocation7 + $0x770] sm:$0xff]
    %v389 = vld [vmem:[#allocation7 + $0x778] sm:$0xff]
    %v390 = vld [vmem:[#allocation7 + $0x780] sm:$0xff]
    %v391 = vld [vmem:[#allocation7 + $0x788] sm:$0xff]
    %v392 = vld [vmem:[#allocation7 + $0x790] sm:$0xff]
    %v393 = vld [vmem:[#allocation7 + $0x798] sm:$0xff]
    %v394 = vld [vmem:[#allocation7 + $0x7a0] sm:$0xff]
    %v395 = vld [vmem:[#allocation7 + $0x7a8] sm:$0xff]
    %v396 = vld [vmem:[#allocation7 + $0x7b0] sm:$0xff]
    %v397 = vld [vmem:[#allocation7 + $0x7b8] sm:$0xff]
    %v398 = vld [vmem:[#allocation7 + $0x7c0] sm:$0xff]
    %v399 = vld [vmem:[#allocation7 + $0x7c8] sm:$0xff]
    %v400 = vld [vmem:[#allocation7 + $0x7d0] sm:$0xff]
    %v401 = vld [vmem:[#allocation7 + $0x7d8] sm:$0xff]
    %v402 = vld [vmem:[#allocation7 + $0x7e0] sm:$0xff]
    %v403 = vld [vmem:[#allocation7 + $0x7e8] sm:$0xff]
    %v404 = vld [vmem:[#allocation7 + $0x7f0] sm:$0xff]
    %v405 = vld [vmem:[#allocation7 + $0x7f8] sm:$0xff]
    %v406 = vld [vmem:[#allocation7 + $0x800] sm:$0xff]
    %v407 = vld [vmem:[#allocation7 + $0x808] sm:$0xff]
    %v408 = vld [vmem:[#allocation7 + $0x810] sm:$0xff]
    %v409 = vld [vmem:[#allocation7 + $0x818] sm:$0xff]
    %v410 = vld [vmem:[#allocation7 + $0x820] sm:$0xff]
    %v411 = vld [vmem:[#allocation7 + $0x828] sm:$0xff]
    %v412 = vld [vmem:[#allocation7 + $0x830] sm:$0xff]
    %v413 = vld [vmem:[#allocation7 + $0x838] sm:$0xff]
    %v414 = vld [vmem:[#allocation7 + $0x840] sm:$0xff]
    %v415 = vld [vmem:[#allocation7 + $0x848] sm:$0xff]
    %v416 = vld [vmem:[#allocation7 + $0x850] sm:$0xff]
    %v417 = vld [vmem:[#allocation7 + $0x858] sm:$0xff]
    %v418 = vld [vmem:[#allocation7 + $0x860] sm:$0xff]
    %v419 = vld [vmem:[#allocation7 + $0x868] sm:$0xff]
    %v420 = vld [vmem:[#allocation7 + $0x870] sm:$0xff]
    %v421 = vld [vmem:[#allocation7 + $0x878] sm:$0xff]
    %v422 = vld [vmem:[#allocation7 + $0x880] sm:$0xff]
    %v423 = vld [vmem:[#allocation7 + $0x888] sm:$0xff]
    %v424 = vld [vmem:[#allocation7 + $0x890] sm:$0xff]
    %v425 = vld [vmem:[#allocation7 + $0x898] sm:$0xff]
    %v426 = vld [vmem:[#allocation7 + $0x8a0] sm:$0xff]
    %v427 = vld [vmem:[#allocation7 + $0x8a8] sm:$0xff]
    %v428 = vld [vmem:[#allocation7 + $0x8b0] sm:$0xff]
    %v429 = vld [vmem:[#allocation7 + $0x8b8] sm:$0xff]
    %v430 = vld [vmem:[#allocation7 + $0x8c0] sm:$0xff]
    %v431 = vld [vmem:[#allocation7 + $0x8c8] sm:$0xff]
    %v432 = vld [vmem:[#allocation7 + $0x8d0] sm:$0xff]
    %v433 = vld [vmem:[#allocation7 + $0x8d8] sm:$0xff]
    %v434 = vld [vmem:[#allocation7 + $0x8e0] sm:$0xff]
    %v435 = vld [vmem:[#allocation7 + $0x8e8] sm:$0xff]
    %v436 = vld [vmem:[#allocation7 + $0x8f0] sm:$0xff]
    %v437 = vld [vmem:[#allocation7 + $0x8f8] sm:$0xff]
    %v438 = vld [vmem:[#allocation7 + $0x900] sm:$0xff]
    %v439 = vld [vmem:[#allocation7 + $0x908] sm:$0xff]
    %v440 = vld [vmem:[#allocation7 + $0x910] sm:$0xff]
    %v441 = vld [vmem:[#allocation7 + $0x918] sm:$0xff]
    %v442 = vld [vmem:[#allocation7 + $0x920] sm:$0xff]
    %v443 = vld [vmem:[#allocation7 + $0x928] sm:$0xff]
    %v444 = vld [vmem:[#allocation7 + $0x930] sm:$0xff]
    %v445 = vld [vmem:[#allocation7 + $0x938] sm:$0xff]
    %v446 = vld [vmem:[#allocation7 + $0x940] sm:$0xff]
    %v447 = vld [vmem:[#allocation7 + $0x948] sm:$0xff]
    %v448 = vld [vmem:[#allocation7 + $0x950] sm:$0xff]
    %v449 = vld [vmem:[#allocation7 + $0x958] sm:$0xff]
    %v450 = vld [vmem:[#allocation7 + $0x960] sm:$0xff]
    %v451 = vld [vmem:[#allocation7 + $0x968] sm:$0xff]
    %v452 = vld [vmem:[#allocation7 + $0x970] sm:$0xff]
    %v453 = vld [vmem:[#allocation7 + $0x978] sm:$0xff]
    %v454 = vld [vmem:[#allocation7 + $0x980] sm:$0xff]
    %v455 = vld [vmem:[#allocation7 + $0x988] sm:$0xff]
    %v456 = vld [vmem:[#allocation7 + $0x990] sm:$0xff]
    %v457 = vld [vmem:[#allocation7 + $0x998] sm:$0xff]
    %v458 = vld [vmem:[#allocation7 + $0x9a0] sm:$0xff]
    %v459 = vld [vmem:[#allocation7 + $0x9a8] sm:$0xff]
    %v460 = vld [vmem:[#allocation7 + $0x9b0] sm:$0xff]
    %v461 = vld [vmem:[#allocation7 + $0x9b8] sm:$0xff]
    %v462 = vld [vmem:[#allocation7 + $0x9c0] sm:$0xff]
    %v463 = vld [vmem:[#allocation7 + $0x9c8] sm:$0xff]
    %v464 = vld [vmem:[#allocation7 + $0x9d0] sm:$0xff]
    %v465 = vld [vmem:[#allocation7 + $0x9d8] sm:$0xff]
    %v466 = vld [vmem:[#allocation7 + $0x9e0] sm:$0xff]
    %v467 = vld [vmem:[#allocation7 + $0x9e8] sm:$0xff]
    %v468 = vld [vmem:[#allocation7 + $0x9f0] sm:$0xff]
    %v469 = vld [vmem:[#allocation7 + $0x9f8] sm:$0xff]
    %v470 = vld [vmem:[#allocation7 + $0xa00] sm:$0xff]
    %v471 = vld [vmem:[#allocation7 + $0xa08] sm:$0xff]
    %v472 = vld [vmem:[#allocation7 + $0xa10] sm:$0xff]
    %v473 = vld [vmem:[#allocation7 + $0xa18] sm:$0xff]
    %v474 = vld [vmem:[#allocation7 + $0xa20] sm:$0xff]
    %v475 = vld [vmem:[#allocation7 + $0xa28] sm:$0xff]
    %v476 = vld [vmem:[#allocation7 + $0xa30] sm:$0xff]
    %v477 = vld [vmem:[#allocation7 + $0xa38] sm:$0xff]
    %v478 = vld [vmem:[#allocation7 + $0xa40] sm:$0xff]
    %v479 = vld [vmem:[#allocation7 + $0xa48] sm:$0xff]
    %v480 = vld [vmem:[#allocation7 + $0xa50] sm:$0xff]
    %v481 = vld [vmem:[#allocation7 + $0xa58] sm:$0xff]
    %v482 = vld [vmem:[#allocation7 + $0xa60] sm:$0xff]
    %v483 = vld [vmem:[#allocation7 + $0xa68] sm:$0xff]
    %v484 = vld [vmem:[#allocation7 + $0xa70] sm:$0xff]
    %v485 = vld [vmem:[#allocation7 + $0xa78] sm:$0xff]
    %v486 = vld [vmem:[#allocation7 + $0xa80] sm:$0xff]
    %v487 = vld [vmem:[#allocation7 + $0xa88] sm:$0xff]
    %v488 = vld [vmem:[#allocation7 + $0xa90] sm:$0xff]
    %v489 = vld [vmem:[#allocation7 + $0xa98] sm:$0xff]
    %v490 = vld [vmem:[#allocation7 + $0xaa0] sm:$0xff]
    %v491 = vld [vmem:[#allocation7 + $0xaa8] sm:$0xff]
    %v492 = vld [vmem:[#allocation7 + $0xab0] sm:$0xff]
    %v493 = vld [vmem:[#allocation7 + $0xab8] sm:$0xff]
    %v494 = vld [vmem:[#allocation7 + $0xac0] sm:$0xff]
    %v495 = vld [vmem:[#allocation7 + $0xac8] sm:$0xff]
    %v496 = vld [vmem:[#allocation7 + $0xad0] sm:$0xff]
    %v497 = vld [vmem:[#allocation7 + $0xad8] sm:$0xff]
    %v498 = vld [vmem:[#allocation7 + $0xae0] sm:$0xff]
    %v499 = vld [vmem:[#allocation7 + $0xae8] sm:$0xff]
    %v500 = vld [vmem:[#allocation7 + $0xaf0] sm:$0xff]
    %v501 = vld [vmem:[#allocation7 + $0xaf8] sm:$0xff]
    %v502 = vld [vmem:[#allocation7 + $0xb00] sm:$0xff]
    %v503 = vld [vmem:[#allocation7 + $0xb08] sm:$0xff]
    %v504 = vld [vmem:[#allocation7 + $0xb10] sm:$0xff]
    %v505 = vld [vmem:[#allocation7 + $0xb18] sm:$0xff]
    %v506 = vld [vmem:[#allocation7 + $0xb20] sm:$0xff]
    %v507 = vld [vmem:[#allocation7 + $0xb28] sm:$0xff]
    %v508 = vld [vmem:[#allocation7 + $0xb30] sm:$0xff]
    %v509 = vld [vmem:[#allocation7 + $0xb38] sm:$0xff]
    %v510 = vld [vmem:[#allocation7 + $0xb40] sm:$0xff]
    %v511 = vld [vmem:[#allocation7 + $0xb48] sm:$0xff]
    %v512 = vld [vmem:[#allocation7 + $0xb50] sm:$0xff]
    %v513 = vld [vmem:[#allocation7 + $0xb58] sm:$0xff]
    %v514 = vld [vmem:[#allocation7 + $0xb60] sm:$0xff]
    %v515 = vld [vmem:[#allocation7 + $0xb68] sm:$0xff]
    %v516 = vld [vmem:[#allocation7 + $0xb70] sm:$0xff]
    %v517 = vld [vmem:[#allocation7 + $0xb78] sm:$0xff]
    %v518 = vld [vmem:[#allocation7 + $0xb80] sm:$0xff]
    %v519 = vld [vmem:[#allocation7 + $0xb88] sm:$0xff]
    %v520 = vld [vmem:[#allocation7 + $0xb90] sm:$0xff]
    %v521 = vld [vmem:[#allocation7 + $0xb98] sm:$0xff]
    %v522 = vld [vmem:[#allocation7 + $0xba0] sm:$0xff]
    %v523 = vld [vmem:[#allocation7 + $0xba8] sm:$0xff]
    %v524 = vld [vmem:[#allocation7 + $0xbb0] sm:$0xff]
    %v525 = vld [vmem:[#allocation7 + $0xbb8] sm:$0xff]
    %v526 = vld [vmem:[#allocation7 + $0xbc0] sm:$0xff]
    %v527 = vld [vmem:[#allocation7 + $0xbc8] sm:$0xff]
    %v528 = vld [vmem:[#allocation7 + $0xbd0] sm:$0xff]
    %v529 = vld [vmem:[#allocation7 + $0xbd8] sm:$0xff]
    %v530 = vld [vmem:[#allocation7 + $0xbe0] sm:$0xff]
    %v531 = vld [vmem:[#allocation7 + $0xbe8] sm:$0xff]
    %v532 = vld [vmem:[#allocation7 + $0xbf0] sm:$0xff]
    %v533 = vld [vmem:[#allocation7 + $0xbf8] sm:$0xff]
    %v534 = vld [vmem:[#allocation7 + $0xc00] sm:$0xff]
    %v535 = vld [vmem:[#allocation7 + $0xc08] sm:$0xff]
    %v536 = vld [vmem:[#allocation7 + $0xc10] sm:$0xff]
    %v537 = vld [vmem:[#allocation7 + $0xc18] sm:$0xff]
    %v538 = vld [vmem:[#allocation7 + $0xc20] sm:$0xff]
    %v539 = vld [vmem:[#allocation7 + $0xc28] sm:$0xff]
    %v540 = vld [vmem:[#allocation7 + $0xc30] sm:$0xff]
    %v541 = vld [vmem:[#allocation7 + $0xc38] sm:$0xff]
    %v542 = vld [vmem:[#allocation7 + $0xc40] sm:$0xff]
    %v543 = vld [vmem:[#allocation7 + $0xc48] sm:$0xff]
    %v544 = vld [vmem:[#allocation7 + $0xc50] sm:$0xff]
    %v545 = vld [vmem:[#allocation7 + $0xc58] sm:$0xff]
    %v546 = vld [vmem:[#allocation7 + $0xc60] sm:$0xff]
    %v547 = vld [vmem:[#allocation7 + $0xc68] sm:$0xff]
    %v548 = vld [vmem:[#allocation7 + $0xc70] sm:$0xff]
    %v549 = vld [vmem:[#allocation7 + $0xc78] sm:$0xff]
    %v550 = vld [vmem:[#allocation7 + $0xc80] sm:$0xff]
    %v551 = vld [vmem:[#allocation7 + $0xc88] sm:$0xff]
    %v552 = vld [vmem:[#allocation7 + $0xc90] sm:$0xff]
    %v553 = vld [vmem:[#allocation7 + $0xc98] sm:$0xff]
    %v554 = vld [vmem:[#allocation7 + $0xca0] sm:$0xff]
    %v555 = vld [vmem:[#allocation7 + $0xca8] sm:$0xff]
    %v556 = vld [vmem:[#allocation7 + $0xcb0] sm:$0xff]
    %v557 = vld [vmem:[#allocation7 + $0xcb8] sm:$0xff]
    %v558 = vld [vmem:[#allocation7 + $0xcc0] sm:$0xff]
    %v559 = vld [vmem:[#allocation7 + $0xcc8] sm:$0xff]
    %v560 = vld [vmem:[#allocation7 + $0xcd0] sm:$0xff]
    %v561 = vld [vmem:[#allocation7 + $0xcd8] sm:$0xff]
    %v562 = vld [vmem:[#allocation7 + $0xce0] sm:$0xff]
    %v563 = vld [vmem:[#allocation7 + $0xce8] sm:$0xff]
    %v564 = vld [vmem:[#allocation7 + $0xcf0] sm:$0xff]
    %v565 = vld [vmem:[#allocation7 + $0xcf8] sm:$0xff]
    %v566 = vld [vmem:[#allocation7 + $0xd00] sm:$0xff]
    %v567 = vld [vmem:[#allocation7 + $0xd08] sm:$0xff]
    %v568 = vld [vmem:[#allocation7 + $0xd10] sm:$0xff]
    %v569 = vld [vmem:[#allocation7 + $0xd18] sm:$0xff]
    %v570 = vld [vmem:[#allocation7 + $0xd20] sm:$0xff]
    %v571 = vld [vmem:[#allocation7 + $0xd28] sm:$0xff]
    %v572 = vld [vmem:[#allocation7 + $0xd30] sm:$0xff]
    %v573 = vld [vmem:[#allocation7 + $0xd38] sm:$0xff]
    %v574 = vld [vmem:[#allocation7 + $0xd40] sm:$0xff]
    %v575 = vld [vmem:[#allocation7 + $0xd48] sm:$0xff]
    %v576 = vld [vmem:[#allocation7 + $0xd50] sm:$0xff]
    %v577 = vld [vmem:[#allocation7 + $0xd58] sm:$0xff]
    %v578 = vld [vmem:[#allocation7 + $0xd60] sm:$0xff]
    %v579 = vld [vmem:[#allocation7 + $0xd68] sm:$0xff]
    %v580 = vld [vmem:[#allocation7 + $0xd70] sm:$0xff]
    %v581 = vld [vmem:[#allocation7 + $0xd78] sm:$0xff]
    %v582 = vld [vmem:[#allocation7 + $0xd80] sm:$0xff]
    %v583 = vld [vmem:[#allocation7 + $0xd88] sm:$0xff]
    %v584 = vld [vmem:[#allocation7 + $0xd90] sm:$0xff]
    %v585 = vld [vmem:[#allocation7 + $0xd98] sm:$0xff]
    %v586 = vld [vmem:[#allocation7 + $0xda0] sm:$0xff]
    %v587 = vld [vmem:[#allocation7 + $0xda8] sm:$0xff]
    %v588 = vld [vmem:[#allocation7 + $0xdb0] sm:$0xff]
    %v589 = vld [vmem:[#allocation7 + $0xdb8] sm:$0xff]
    %v590 = vld [vmem:[#allocation7 + $0xdc0] sm:$0xff]
    %v591 = vld [vmem:[#allocation7 + $0xdc8] sm:$0xff]
    %v592 = vld [vmem:[#allocation7 + $0xdd0] sm:$0xff]
    %v593 = vld [vmem:[#allocation7 + $0xdd8] sm:$0xff]
    %v594 = vld [vmem:[#allocation7 + $0xde0] sm:$0xff]
    %v595 = vld [vmem:[#allocation7 + $0xde8] sm:$0xff]
    %v596 = vld [vmem:[#allocation7 + $0xdf0] sm:$0xff]
    %v597 = vld [vmem:[#allocation7 + $0xdf8] sm:$0xff]
    %v598 = vld [vmem:[#allocation7 + $0xe00] sm:$0xff]
    %v599 = vld [vmem:[#allocation7 + $0xe08] sm:$0xff]
    %v600 = vld [vmem:[#allocation7 + $0xe10] sm:$0xff]
    %v601 = vld [vmem:[#allocation7 + $0xe18] sm:$0xff]
    %v602 = vld [vmem:[#allocation7 + $0xe20] sm:$0xff]
    %v603 = vld [vmem:[#allocation7 + $0xe28] sm:$0xff]
    %v604 = vld [vmem:[#allocation7 + $0xe30] sm:$0xff]
    %v605 = vld [vmem:[#allocation7 + $0xe38] sm:$0xff]
    %v606 = vld [vmem:[#allocation7 + $0xe40] sm:$0xff]
    %v607 = vld [vmem:[#allocation7 + $0xe48] sm:$0xff]
    %v608 = vld [vmem:[#allocation7 + $0xe50] sm:$0xff]
    %v609 = vld [vmem:[#allocation7 + $0xe58] sm:$0xff]
    %v610 = vld [vmem:[#allocation7 + $0xe60] sm:$0xff]
    %v611 = vld [vmem:[#allocation7 + $0xe68] sm:$0xff]
    %v612 = vld [vmem:[#allocation7 + $0xe70] sm:$0xff]
    %v613 = vld [vmem:[#allocation7 + $0xe78] sm:$0xff]
    %v614 = vld [vmem:[#allocation7 + $0xe80] sm:$0xff]
    %v615 = vld [vmem:[#allocation7 + $0xe88] sm:$0xff]
    %v616 = vld [vmem:[#allocation7 + $0xe90] sm:$0xff]
    %v617 = vld [vmem:[#allocation7 + $0xe98] sm:$0xff]
    %v618 = vld [vmem:[#allocation7 + $0xea0] sm:$0xff]
    %v619 = vld [vmem:[#allocation7 + $0xea8] sm:$0xff]
    %v620 = vld [vmem:[#allocation7 + $0xeb0] sm:$0xff]
    %v621 = vld [vmem:[#allocation7 + $0xeb8] sm:$0xff]
    %v622 = vld [vmem:[#allocation7 + $0xec0] sm:$0xff]
    %v623 = vld [vmem:[#allocation7 + $0xec8] sm:$0xff]
    %v624 = vld [vmem:[#allocation7 + $0xed0] sm:$0xff]
    %v625 = vld [vmem:[#allocation7 + $0xed8] sm:$0xff]
    %v626 = vld [vmem:[#allocation7 + $0xee0] sm:$0xff]
    %v627 = vld [vmem:[#allocation7 + $0xee8] sm:$0xff]
    %v628 = vld [vmem:[#allocation7 + $0xef0] sm:$0xff]
    %v629 = vld [vmem:[#allocation7 + $0xef8] sm:$0xff]
    %v630 = vld [vmem:[#allocation7 + $0xf00] sm:$0xff]
    %v631 = vld [vmem:[#allocation7 + $0xf08] sm:$0xff]
    %v632 = vld [vmem:[#allocation7 + $0xf10] sm:$0xff]
    %v633 = vld [vmem:[#allocation7 + $0xf18] sm:$0xff]
    %v634 = vld [vmem:[#allocation7 + $0xf20] sm:$0xff]
    %v635 = vld [vmem:[#allocation7 + $0xf28] sm:$0xff]
    %v636 = vld [vmem:[#allocation7 + $0xf30] sm:$0xff]
    %v637 = vld [vmem:[#allocation7 + $0xf38] sm:$0xff]
    %v638 = vld [vmem:[#allocation7 + $0xf40] sm:$0xff]
    %v639 = vld [vmem:[#allocation7 + $0xf48] sm:$0xff]
    %v640 = vld [vmem:[#allocation7 + $0xf50] sm:$0xff]
    %v641 = vld [vmem:[#allocation7 + $0xf58] sm:$0xff]
    %v642 = vld [vmem:[#allocation7 + $0xf60] sm:$0xff]
    %v643 = vld [vmem:[#allocation7 + $0xf68] sm:$0xff]
    %v644 = vld [vmem:[#allocation7 + $0xf70] sm:$0xff]
    %v645 = vld [vmem:[#allocation7 + $0xf78] sm:$0xff]
    %v646 = vld [vmem:[#allocation7 + $0xf80] sm:$0xff]
    %v647 = vld [vmem:[#allocation7 + $0xf88] sm:$0xff]
    %v648 = vld [vmem:[#allocation7 + $0xf90] sm:$0xff]
    %v649 = vld [vmem:[#allocation7 + $0xf98] sm:$0xff]
    %v650 = vld [vmem:[#allocation7 + $0xfa0] sm:$0xff]
    %v651 = vld [vmem:[#allocation7 + $0xfa8] sm:$0xff]
    %v652 = vld [vmem:[#allocation7 + $0xfb0] sm:$0xff]
    %v653 = vld [vmem:[#allocation7 + $0xfb8] sm:$0xff]
    %v654 = vld [vmem:[#allocation7 + $0xfc0] sm:$0xff]
    %v655 = vld [vmem:[#allocation7 + $0xfc8] sm:$0xff]
    %v656 = vld [vmem:[#allocation7 + $0xfd0] sm:$0xff]
    %v657 = vld [vmem:[#allocation7 + $0xfd8] sm:$0xff]
    %v658 = vld [vmem:[#allocation7 + $0xfe0] sm:$0xff]
    %v659 = vld [vmem:[#allocation7 + $0xfe8] sm:$0xff]
    %v660 = vld [vmem:[#allocation7 + $0xff0] sm:$0xff]
    %v661 = vld [vmem:[#allocation7 + $0xff8] sm:$0xff]
    %v662 = vld [vmem:[#allocation7 + $0x1000] sm:$0xff]
    %v663 = vld [vmem:[#allocation7 + $0x1008] sm:$0xff]
    %v664 = vld [vmem:[#allocation7 + $0x1010] sm:$0xff]
    %v665 = vld [vmem:[#allocation7 + $0x1018] sm:$0xff]
    %v666 = vld [vmem:[#allocation7 + $0x1020] sm:$0xff]
    %v667 = vld [vmem:[#allocation7 + $0x1028] sm:$0xff]
    %v668 = vld [vmem:[#allocation7 + $0x1030] sm:$0xff]
    %v669 = vld [vmem:[#allocation7 + $0x1038] sm:$0xff]
    %v670 = vld [vmem:[#allocation7 + $0x1040] sm:$0xff]
    %v671 = vld [vmem:[#allocation7 + $0x1048] sm:$0xff]
    %v672 = vld [vmem:[#allocation7 + $0x1050] sm:$0xff]
    %v673 = vld [vmem:[#allocation7 + $0x1058] sm:$0xff]
    %v674 = vld [vmem:[#allocation7 + $0x1060] sm:$0xff]
    %v675 = vld [vmem:[#allocation7 + $0x1068] sm:$0xff]
    %v676 = vld [vmem:[#allocation7 + $0x1070] sm:$0xff]
    %v677 = vld [vmem:[#allocation7 + $0x1078] sm:$0xff]
    %v678 = vld [vmem:[#allocation7 + $0x1080] sm:$0xff]
    %v679 = vld [vmem:[#allocation7 + $0x1088] sm:$0xff]
    %v680 = vld [vmem:[#allocation7 + $0x1090] sm:$0xff]
    %v681 = vld [vmem:[#allocation7 + $0x1098] sm:$0xff]
    %v682 = vld [vmem:[#allocation7 + $0x10a0] sm:$0xff]
    %v683 = vld [vmem:[#allocation7 + $0x10a8] sm:$0xff]
    %v684 = vld [vmem:[#allocation7 + $0x10b0] sm:$0xff]
    %v685 = vld [vmem:[#allocation7 + $0x10b8] sm:$0xff]
    %v686 = vld [vmem:[#allocation7 + $0x10c0] sm:$0xff]
    %v687 = vld [vmem:[#allocation7 + $0x10c8] sm:$0xff]
    %v688 = vld [vmem:[#allocation7 + $0x10d0] sm:$0xff]
    %v689 = vld [vmem:[#allocation7 + $0x10d8] sm:$0xff]
    %v690 = vld [vmem:[#allocation7 + $0x10e0] sm:$0xff]
    %v691 = vld [vmem:[#allocation7 + $0x10e8] sm:$0xff]
    %v692 = vld [vmem:[#allocation7 + $0x10f0] sm:$0xff]
    %v693 = vld [vmem:[#allocation7 + $0x10f8] sm:$0xff]
    %v694 = vld [vmem:[#allocation7 + $0x1100] sm:$0xff]
    %v695 = vld [vmem:[#allocation7 + $0x1108] sm:$0xff]
    %v696 = vld [vmem:[#allocation7 + $0x1110] sm:$0xff]
    %v697 = vld [vmem:[#allocation7 + $0x1118] sm:$0xff]
    %v698 = vld [vmem:[#allocation7 + $0x1120] sm:$0xff]
    %v699 = vld [vmem:[#allocation7 + $0x1128] sm:$0xff]
    %v700 = vld [vmem:[#allocation7 + $0x1130] sm:$0xff]
    %v701 = vld [vmem:[#allocation7 + $0x1138] sm:$0xff]
    %v702 = vld [vmem:[#allocation7 + $0x1140] sm:$0xff]
    %v703 = vld [vmem:[#allocation7 + $0x1148] sm:$0xff]
    %v704 = vld [vmem:[#allocation7 + $0x1150] sm:$0xff]
    %v705 = vld [vmem:[#allocation7 + $0x1158] sm:$0xff]
    %v706 = vld [vmem:[#allocation7 + $0x1160] sm:$0xff]
    %v707 = vld [vmem:[#allocation7 + $0x1168] sm:$0xff]
    %v708 = vld [vmem:[#allocation7 + $0x1170] sm:$0xff]
    %v709 = vld [vmem:[#allocation7 + $0x1178] sm:$0xff]
    %v710 = vld [vmem:[#allocation7 + $0x1180] sm:$0xff]
    %v711 = vld [vmem:[#allocation7 + $0x1188] sm:$0xff]
    %v712 = vld [vmem:[#allocation7 + $0x1190] sm:$0xff]
    %v713 = vld [vmem:[#allocation7 + $0x1198] sm:$0xff]
    %v714 = vld [vmem:[#allocation7 + $0x11a0] sm:$0xff]
    %v715 = vld [vmem:[#allocation7 + $0x11a8] sm:$0xff]
    %v716 = vld [vmem:[#allocation7 + $0x11b0] sm:$0xff]
    %v717 = vld [vmem:[#allocation7 + $0x11b8] sm:$0xff]
    %v718 = vld [vmem:[#allocation7 + $0x11c0] sm:$0xff]
    %v719 = vld [vmem:[#allocation7 + $0x11c8] sm:$0xff]
    %v720 = vld [vmem:[#allocation7 + $0x11d0] sm:$0xff]
    %v721 = vld [vmem:[#allocation7 + $0x11d8] sm:$0xff]
    %v722 = vld [vmem:[#allocation7 + $0x11e0] sm:$0xff]
    %v723 = vld [vmem:[#allocation7 + $0x11e8] sm:$0xff]
    %v724 = vld [vmem:[#allocation7 + $0x11f0] sm:$0xff]
    %v725 = vld [vmem:[#allocation7 + $0x11f8] sm:$0xff]
    %v726 = vld [vmem:[#allocation7 + $0x1200] sm:$0xff]
    %v727 = vld [vmem:[#allocation7 + $0x1208] sm:$0xff]
    %v728 = vld [vmem:[#allocation7 + $0x1210] sm:$0xff]
    %v729 = vld [vmem:[#allocation7 + $0x1218] sm:$0xff]
    %v730 = vld [vmem:[#allocation7 + $0x1220] sm:$0xff]
    %v731 = vld [vmem:[#allocation7 + $0x1228] sm:$0xff]
    %v732 = vld [vmem:[#allocation7 + $0x1230] sm:$0xff]
    %v733 = vld [vmem:[#allocation7 + $0x1238] sm:$0xff]
    %v734 = vld [vmem:[#allocation7 + $0x1240] sm:$0xff]
    %v735 = vld [vmem:[#allocation7 + $0x1248] sm:$0xff]
    %v736 = vld [vmem:[#allocation7 + $0x1250] sm:$0xff]
    %v737 = vld [vmem:[#allocation7 + $0x1258] sm:$0xff]
    %v738 = vld [vmem:[#allocation7 + $0x1260] sm:$0xff]
    %v739 = vld [vmem:[#allocation7 + $0x1268] sm:$0xff]
    %v740 = vld [vmem:[#allocation7 + $0x1270] sm:$0xff]
    %v741 = vld [vmem:[#allocation7 + $0x1278] sm:$0xff]
    %v742 = vld [vmem:[#allocation7 + $0x1280] sm:$0xff]
    %v743 = vld [vmem:[#allocation7 + $0x1288] sm:$0xff]
    %v744 = vld [vmem:[#allocation7 + $0x1290] sm:$0xff]
    %v745 = vld [vmem:[#allocation7 + $0x1298] sm:$0xff]
    %v746 = vld [vmem:[#allocation7 + $0x12a0] sm:$0xff]
    %v747 = vld [vmem:[#allocation7 + $0x12a8] sm:$0xff]
    %v748 = vld [vmem:[#allocation7 + $0x12b0] sm:$0xff]
    %v749 = vld [vmem:[#allocation7 + $0x12b8] sm:$0xff]
    %v750 = vld [vmem:[#allocation7 + $0x12c0] sm:$0xff]
    %v751 = vld [vmem:[#allocation7 + $0x12c8] sm:$0xff]
    %v752 = vld [vmem:[#allocation7 + $0x12d0] sm:$0xff]
    %v753 = vld [vmem:[#allocation7 + $0x12d8] sm:$0xff]
    %v754 = vld [vmem:[#allocation7 + $0x12e0] sm:$0xff]
    %v755 = vld [vmem:[#allocation7 + $0x12e8] sm:$0xff]
    %v756 = vld [vmem:[#allocation7 + $0x12f0] sm:$0xff]
    %v757 = vld [vmem:[#allocation7 + $0x12f8] sm:$0xff]
    %v758 = vld [vmem:[#allocation7 + $0x1300] sm:$0xff]
    %v759 = vld [vmem:[#allocation7 + $0x1308] sm:$0xff]
    %v760 = vld [vmem:[#allocation7 + $0x1310] sm:$0xff]
    %v761 = vld [vmem:[#allocation7 + $0x1318] sm:$0xff]
    %v762 = vld [vmem:[#allocation7 + $0x1320] sm:$0xff]
    %v763 = vld [vmem:[#allocation7 + $0x1328] sm:$0xff]
    %v764 = vld [vmem:[#allocation7 + $0x1330] sm:$0xff]
    %v765 = vld [vmem:[#allocation7 + $0x1338] sm:$0xff]
    %v766 = vld [vmem:[#allocation7 + $0x1340] sm:$0xff]
    %v767 = vld [vmem:[#allocation7 + $0x1348] sm:$0xff]
    %v768 = vld [vmem:[#allocation7 + $0x1350] sm:$0xff]
    %v769 = vld [vmem:[#allocation7 + $0x1358] sm:$0xff]
    %v770 = vld [vmem:[#allocation7 + $0x1360] sm:$0xff]
    %v771 = vld [vmem:[#allocation7 + $0x1368] sm:$0xff]
    %v772 = vld [vmem:[#allocation7 + $0x1370] sm:$0xff]
    %v773 = vld [vmem:[#allocation7 + $0x1378] sm:$0xff]
    %v774 = vld [vmem:[#allocation7 + $0x1380] sm:$0xff]
    %v775 = vld [vmem:[#allocation7 + $0x1388] sm:$0xff]
    %v776 = vld [vmem:[#allocation7 + $0x1390] sm:$0xff]
    %v777 = vld [vmem:[#allocation7 + $0x1398] sm:$0xff]
    %v778 = vld [vmem:[#allocation7 + $0x13a0] sm:$0xff]
    %v779 = vld [vmem:[#allocation7 + $0x13a8] sm:$0xff]
    %v780 = vld [vmem:[#allocation7 + $0x13b0] sm:$0xff]
    %v781 = vld [vmem:[#allocation7 + $0x13b8] sm:$0xff]
    %v782 = vld [vmem:[#allocation7 + $0x13c0] sm:$0xff]
    %v783 = vld [vmem:[#allocation7 + $0x13c8] sm:$0xff]
    %v784 = vld [vmem:[#allocation7 + $0x13d0] sm:$0xff]
    %v785 = vld [vmem:[#allocation7 + $0x13d8] sm:$0xff]
    %v786 = vld [vmem:[#allocation7 + $0x13e0] sm:$0xff]
    %v787 = vld [vmem:[#allocation7 + $0x13e8] sm:$0xff]
    %v788 = vld [vmem:[#allocation7 + $0x13f0] sm:$0xff]
    %v789 = vld [vmem:[#allocation7 + $0x13f8] sm:$0xff]
    %v790 = vld [vmem:[#allocation7 + $0x1400] sm:$0xff]
    %v791 = vld [vmem:[#allocation7 + $0x1408] sm:$0xff]
    %v792 = vld [vmem:[#allocation7 + $0x1410] sm:$0xff]
    %v793 = vld [vmem:[#allocation7 + $0x1418] sm:$0xff]
    %v794 = vld [vmem:[#allocation7 + $0x1420] sm:$0xff]
    %v795 = vld [vmem:[#allocation7 + $0x1428] sm:$0xff]
    %v796 = vld [vmem:[#allocation7 + $0x1430] sm:$0xff]
    %v797 = vld [vmem:[#allocation7 + $0x1438] sm:$0xff]
    %v798 = vld [vmem:[#allocation7 + $0x1440] sm:$0xff]
    %v799 = vld [vmem:[#allocation7 + $0x1448] sm:$0xff]
    %v800 = vld [vmem:[#allocation7 + $0x1450] sm:$0xff]
    %v801 = vld [vmem:[#allocation7 + $0x1458] sm:$0xff]
    %v802 = vld [vmem:[#allocation7 + $0x1460] sm:$0xff]
    %v803 = vld [vmem:[#allocation7 + $0x1468] sm:$0xff]
    %v804 = vld [vmem:[#allocation7 + $0x1470] sm:$0xff]
    %v805 = vld [vmem:[#allocation7 + $0x1478] sm:$0xff]
    %v806 = vld [vmem:[#allocation7 + $0x1480] sm:$0xff]
    %v807 = vld [vmem:[#allocation7 + $0x1488] sm:$0xff]
    %v808 = vld [vmem:[#allocation7 + $0x1490] sm:$0xff]
    %v809 = vld [vmem:[#allocation7 + $0x1498] sm:$0xff]
    %v810 = vld [vmem:[#allocation7 + $0x14a0] sm:$0xff]
    %v811 = vld [vmem:[#allocation7 + $0x14a8] sm:$0xff]
    %v812 = vld [vmem:[#allocation7 + $0x14b0] sm:$0xff]
    %v813 = vld [vmem:[#allocation7 + $0x14b8] sm:$0xff]
    %v814 = vld [vmem:[#allocation7 + $0x14c0] sm:$0xff]
    %v815 = vld [vmem:[#allocation7 + $0x14c8] sm:$0xff]
    %v816 = vld [vmem:[#allocation7 + $0x14d0] sm:$0xff]
    %v817 = vld [vmem:[#allocation7 + $0x14d8] sm:$0xff]
    %v818 = vld [vmem:[#allocation7 + $0x14e0] sm:$0xff]
    %v819 = vld [vmem:[#allocation7 + $0x14e8] sm:$0xff]
    %v820 = vld [vmem:[#allocation7 + $0x14f0] sm:$0xff]
    %v821 = vld [vmem:[#allocation7 + $0x14f8] sm:$0xff]
    %v822 = vld [vmem:[#allocation7 + $0x1500] sm:$0xff]
    %v823 = vld [vmem:[#allocation7 + $0x1508] sm:$0xff]
    %v824 = vld [vmem:[#allocation7 + $0x1510] sm:$0xff]
    %v825 = vld [vmem:[#allocation7 + $0x1518] sm:$0xff]
    %v826 = vld [vmem:[#allocation7 + $0x1520] sm:$0xff]
    %v827 = vld [vmem:[#allocation7 + $0x1528] sm:$0xff]
    %v828 = vld [vmem:[#allocation7 + $0x1530] sm:$0xff]
    %v829 = vld [vmem:[#allocation7 + $0x1538] sm:$0xff]
    %v830 = vld [vmem:[#allocation7 + $0x1540] sm:$0xff]
    %v831 = vld [vmem:[#allocation7 + $0x1548] sm:$0xff]
    %v832 = vld [vmem:[#allocation7 + $0x1550] sm:$0xff]
    %v833 = vld [vmem:[#allocation7 + $0x1558] sm:$0xff]
    %v834 = vld [vmem:[#allocation7 + $0x1560] sm:$0xff]
    %v835 = vld [vmem:[#allocation7 + $0x1568] sm:$0xff]
    %v836 = vld [vmem:[#allocation7 + $0x1570] sm:$0xff]
    %v837 = vld [vmem:[#allocation7 + $0x1578] sm:$0xff]
    %v838 = vld [vmem:[#allocation7 + $0x1580] sm:$0xff]
    %v839 = vld [vmem:[#allocation7 + $0x1588] sm:$0xff]
    %v840 = vld [vmem:[#allocation7 + $0x1590] sm:$0xff]
    %v841 = vld [vmem:[#allocation7 + $0x1598] sm:$0xff]
    %v842 = vld [vmem:[#allocation7 + $0x15a0] sm:$0xff]
    %v843 = vld [vmem:[#allocation7 + $0x15a8] sm:$0xff]
    %v844 = vld [vmem:[#allocation7 + $0x15b0] sm:$0xff]
    %v845 = vld [vmem:[#allocation7 + $0x15b8] sm:$0xff]
    %v846 = vld [vmem:[#allocation7 + $0x15c0] sm:$0xff]
    %v847 = vld [vmem:[#allocation7 + $0x15c8] sm:$0xff]
    %v848 = vld [vmem:[#allocation7 + $0x15d0] sm:$0xff]
    %v849 = vld [vmem:[#allocation7 + $0x15d8] sm:$0xff]
    %v850 = vld [vmem:[#allocation7 + $0x15e0] sm:$0xff]
    %v851 = vld [vmem:[#allocation7 + $0x15e8] sm:$0xff]
    %v852 = vld [vmem:[#allocation7 + $0x15f0] sm:$0xff]
    %v853 = vld [vmem:[#allocation7 + $0x15f8] sm:$0xff]
    %v854 = vld [vmem:[#allocation7 + $0x1600] sm:$0xff]
    %v855 = vld [vmem:[#allocation7 + $0x1608] sm:$0xff]
    %v856 = vld [vmem:[#allocation7 + $0x1610] sm:$0xff]
    %v857 = vld [vmem:[#allocation7 + $0x1618] sm:$0xff]
    %v858 = vld [vmem:[#allocation7 + $0x1620] sm:$0xff]
    %v859 = vld [vmem:[#allocation7 + $0x1628] sm:$0xff]
    %v860 = vld [vmem:[#allocation7 + $0x1630] sm:$0xff]
    %v861 = vld [vmem:[#allocation7 + $0x1638] sm:$0xff]
    %v862 = vld [vmem:[#allocation7 + $0x1640] sm:$0xff]
    %v863 = vld [vmem:[#allocation7 + $0x1648] sm:$0xff]
    %v864 = vld [vmem:[#allocation7 + $0x1650] sm:$0xff]
    %v865 = vld [vmem:[#allocation7 + $0x1658] sm:$0xff]
    %v866 = vld [vmem:[#allocation7 + $0x1660] sm:$0xff]
    %v867 = vld [vmem:[#allocation7 + $0x1668] sm:$0xff]
    %v868 = vld [vmem:[#allocation7 + $0x1670] sm:$0xff]
    %v869 = vld [vmem:[#allocation7 + $0x1678] sm:$0xff]
    %v870 = vld [vmem:[#allocation7 + $0x1680] sm:$0xff]
    %v871 = vld [vmem:[#allocation7 + $0x1688] sm:$0xff]
    %v872 = vld [vmem:[#allocation7 + $0x1690] sm:$0xff]
    %v873 = vld [vmem:[#allocation7 + $0x1698] sm:$0xff]
    %v874 = vld [vmem:[#allocation7 + $0x16a0] sm:$0xff]
    %v875 = vld [vmem:[#allocation7 + $0x16a8] sm:$0xff]
    %v876 = vld [vmem:[#allocation7 + $0x16b0] sm:$0xff]
    %v877 = vld [vmem:[#allocation7 + $0x16b8] sm:$0xff]
    %v878 = vld [vmem:[#allocation7 + $0x16c0] sm:$0xff]
    %v879 = vld [vmem:[#allocation7 + $0x16c8] sm:$0xff]
    %v880 = vld [vmem:[#allocation7 + $0x16d0] sm:$0xff]
    %v881 = vld [vmem:[#allocation7 + $0x16d8] sm:$0xff]
    %v882 = vld [vmem:[#allocation7 + $0x16e0] sm:$0xff]
    %v883 = vld [vmem:[#allocation7 + $0x16e8] sm:$0xff]
    %v884 = vld [vmem:[#allocation7 + $0x16f0] sm:$0xff]
    %v885 = vld [vmem:[#allocation7 + $0x16f8] sm:$0xff]
    %v886 = vld [vmem:[#allocation7 + $0x1700] sm:$0xff]
    %v887 = vld [vmem:[#allocation7 + $0x1708] sm:$0xff]
    %v888 = vld [vmem:[#allocation7 + $0x1710] sm:$0xff]
    %v889 = vld [vmem:[#allocation7 + $0x1718] sm:$0xff]
    %v890 = vld [vmem:[#allocation7 + $0x1720] sm:$0xff]
    %v891 = vld [vmem:[#allocation7 + $0x1728] sm:$0xff]
    %v892 = vld [vmem:[#allocation7 + $0x1730] sm:$0xff]
    %v893 = vld [vmem:[#allocation7 + $0x1738] sm:$0xff]
    %v894 = vld [vmem:[#allocation7 + $0x1740] sm:$0xff]
    %v895 = vld [vmem:[#allocation7 + $0x1748] sm:$0xff]
    %v896 = vld [vmem:[#allocation7 + $0x1750] sm:$0xff]
    %v897 = vld [vmem:[#allocation7 + $0x1758] sm:$0xff]
    %v898 = vld [vmem:[#allocation7 + $0x1760] sm:$0xff]
    %v899 = vld [vmem:[#allocation7 + $0x1768] sm:$0xff]
    %v900 = vld [vmem:[#allocation7 + $0x1770] sm:$0xff]
    %v901 = vld [vmem:[#allocation7 + $0x1778] sm:$0xff]
    %v902 = vld [vmem:[#allocation7 + $0x1780] sm:$0xff]
    %v903 = vld [vmem:[#allocation7 + $0x1788] sm:$0xff]
    %v904 = vld [vmem:[#allocation7 + $0x1790] sm:$0xff]
    %v905 = vld [vmem:[#allocation7 + $0x1798] sm:$0xff]
    %v906 = vld [vmem:[#allocation7 + $0x17a0] sm:$0xff]
    %v907 = vld [vmem:[#allocation7 + $0x17a8] sm:$0xff]
    %v908 = vld [vmem:[#allocation7 + $0x17b0] sm:$0xff]
    %v909 = vld [vmem:[#allocation7 + $0x17b8] sm:$0xff]
    %v910 = vld [vmem:[#allocation7 + $0x17c0] sm:$0xff]
    %v911 = vld [vmem:[#allocation7 + $0x17c8] sm:$0xff]
    %v912 = vld [vmem:[#allocation7 + $0x17d0] sm:$0xff]
    %v913 = vld [vmem:[#allocation7 + $0x17d8] sm:$0xff]
    %v914 = vld [vmem:[#allocation7 + $0x17e0] sm:$0xff]
    %v915 = vld [vmem:[#allocation7 + $0x17e8] sm:$0xff]
    %v916 = vld [vmem:[#allocation7 + $0x17f0] sm:$0xff]
    %v917 = vld [vmem:[#allocation7 + $0x17f8] sm:$0xff]
    %v918 = vld [vmem:[#allocation7 + $0x1800] sm:$0xff]
    %v919 = vld [vmem:[#allocation7 + $0x1808] sm:$0xff]
    %v920 = vld [vmem:[#allocation7 + $0x1810] sm:$0xff]
    %v921 = vld [vmem:[#allocation7 + $0x1818] sm:$0xff]
    %v922 = vld [vmem:[#allocation7 + $0x1820] sm:$0xff]
    %v923 = vld [vmem:[#allocation7 + $0x1828] sm:$0xff]
    %v924 = vld [vmem:[#allocation7 + $0x1830] sm:$0xff]
    %v925 = vld [vmem:[#allocation7 + $0x1838] sm:$0xff]
    %v926 = vld [vmem:[#allocation7 + $0x1840] sm:$0xff]
    %v927 = vld [vmem:[#allocation7 + $0x1848] sm:$0xff]
    %v928 = vld [vmem:[#allocation7 + $0x1850] sm:$0xff]
    %v929 = vld [vmem:[#allocation7 + $0x1858] sm:$0xff]
    %v930 = vld [vmem:[#allocation7 + $0x1860] sm:$0xff]
    %v931 = vld [vmem:[#allocation7 + $0x1868] sm:$0xff]
    %v932 = vld [vmem:[#allocation7 + $0x1870] sm:$0xff]
    %v933 = vld [vmem:[#allocation7 + $0x1878] sm:$0xff]
    %v934 = vld [vmem:[#allocation7 + $0x1880] sm:$0xff]
    %v935 = vld [vmem:[#allocation7 + $0x1888] sm:$0xff]
    %v936 = vld [vmem:[#allocation7 + $0x1890] sm:$0xff]
    %v937 = vld [vmem:[#allocation7 + $0x1898] sm:$0xff]
    %v938 = vld [vmem:[#allocation7 + $0x18a0] sm:$0xff]
    %v939 = vld [vmem:[#allocation7 + $0x18a8] sm:$0xff]
    %v940 = vld [vmem:[#allocation7 + $0x18b0] sm:$0xff]
    %v941 = vld [vmem:[#allocation7 + $0x18b8] sm:$0xff]
    %v942 = vld [vmem:[#allocation7 + $0x18c0] sm:$0xff]
    %v943 = vld [vmem:[#allocation7 + $0x18c8] sm:$0xff]
    %v944 = vld [vmem:[#allocation7 + $0x18d0] sm:$0xff]
    %v945 = vld [vmem:[#allocation7 + $0x18d8] sm:$0xff]
    %v946 = vld [vmem:[#allocation7 + $0x18e0] sm:$0xff]
    %v947 = vld [vmem:[#allocation7 + $0x18e8] sm:$0xff]
    %v948 = vld [vmem:[#allocation7 + $0x18f0] sm:$0xff]
    %v949 = vld [vmem:[#allocation7 + $0x18f8] sm:$0xff]
    %v950 = vld [vmem:[#allocation7 + $0x1900] sm:$0xff]
    %v951 = vld [vmem:[#allocation7 + $0x1908] sm:$0xff]
    %v952 = vld [vmem:[#allocation7 + $0x1910] sm:$0xff]
    %v953 = vld [vmem:[#allocation7 + $0x1918] sm:$0xff]
    %v954 = vld [vmem:[#allocation7 + $0x1920] sm:$0xff]
    %v955 = vld [vmem:[#allocation7 + $0x1928] sm:$0xff]
    %v956 = vld [vmem:[#allocation7 + $0x1930] sm:$0xff]
    %v957 = vld [vmem:[#allocation7 + $0x1938] sm:$0xff]
    %v958 = vld [vmem:[#allocation7 + $0x1940] sm:$0xff]
    %v959 = vld [vmem:[#allocation7 + $0x1948] sm:$0xff]
    %v960 = vld [vmem:[#allocation7 + $0x1950] sm:$0xff]
    %v961 = vld [vmem:[#allocation7 + $0x1958] sm:$0xff]
    %v962 = vld [vmem:[#allocation7 + $0x1960] sm:$0xff]
    %v963 = vld [vmem:[#allocation7 + $0x1968] sm:$0xff]
    %v964 = vld [vmem:[#allocation7 + $0x1970] sm:$0xff]
    %v965 = vld [vmem:[#allocation7 + $0x1978] sm:$0xff]
    %v966 = vld [vmem:[#allocation7 + $0x1980] sm:$0xff]
    %v967 = vld [vmem:[#allocation7 + $0x1988] sm:$0xff]
    %v968 = vld [vmem:[#allocation7 + $0x1990] sm:$0xff]
    %v969 = vld [vmem:[#allocation7 + $0x1998] sm:$0xff]
    %v970 = vld [vmem:[#allocation7 + $0x19a0] sm:$0xff]
    %v971 = vld [vmem:[#allocation7 + $0x19a8] sm:$0xff]
    %v972 = vld [vmem:[#allocation7 + $0x19b0] sm:$0xff]
    %v973 = vld [vmem:[#allocation7 + $0x19b8] sm:$0xff]
    %v974 = vld [vmem:[#allocation7 + $0x19c0] sm:$0xff]
    %v975 = vld [vmem:[#allocation7 + $0x19c8] sm:$0xff]
    %v976 = vld [vmem:[#allocation7 + $0x19d0] sm:$0xff]
    %v977 = vld [vmem:[#allocation7 + $0x19d8] sm:$0xff]
    %v978 = vld [vmem:[#allocation7 + $0x19e0] sm:$0xff]
    %v979 = vld [vmem:[#allocation7 + $0x19e8] sm:$0xff]
    %v980 = vld [vmem:[#allocation7 + $0x19f0] sm:$0xff]
    %v981 = vld [vmem:[#allocation7 + $0x19f8] sm:$0xff]
    %v982 = vld [vmem:[#allocation7 + $0x1a00] sm:$0xff]
    %v983 = vld [vmem:[#allocation7 + $0x1a08] sm:$0xff]
    %v984 = vld [vmem:[#allocation7 + $0x1a10] sm:$0xff]
    %v985 = vld [vmem:[#allocation7 + $0x1a18] sm:$0xff]
    %v986 = vld [vmem:[#allocation7 + $0x1a20] sm:$0xff]
    %v987 = vld [vmem:[#allocation7 + $0x1a28] sm:$0xff]
    %v988 = vld [vmem:[#allocation7 + $0x1a30] sm:$0xff]
    %v989 = vld [vmem:[#allocation7 + $0x1a38] sm:$0xff]
    %v990 = vld [vmem:[#allocation7 + $0x1a40] sm:$0xff]
    %v991 = vld [vmem:[#allocation7 + $0x1a48] sm:$0xff]
    %v992 = vld [vmem:[#allocation7 + $0x1a50] sm:$0xff]
    %v993 = vld [vmem:[#allocation7 + $0x1a58] sm:$0xff]
    %v994 = vld [vmem:[#allocation7 + $0x1a60] sm:$0xff]
    %v995 = vld [vmem:[#allocation7 + $0x1a68] sm:$0xff]
    %v996 = vld [vmem:[#allocation7 + $0x1a70] sm:$0xff]
    %v997 = vld [vmem:[#allocation7 + $0x1a78] sm:$0xff]
    %v998 = vld [vmem:[#allocation7 + $0x1a80] sm:$0xff]
    %v999 = vld [vmem:[#allocation7 + $0x1a88] sm:$0xff]
    %v1000 = vld [vmem:[#allocation7 + $0x1a90] sm:$0xff]
    %v1001 = vld [vmem:[#allocation7 + $0x1a98] sm:$0xff]
    %v1002 = vld [vmem:[#allocation7 + $0x1aa0] sm:$0xff]
    %v1003 = vld [vmem:[#allocation7 + $0x1aa8] sm:$0xff]
    %v1004 = vld [vmem:[#allocation7 + $0x1ab0] sm:$0xff]
    %v1005 = vld [vmem:[#allocation7 + $0x1ab8] sm:$0xff]
    %v1006 = vld [vmem:[#allocation7 + $0x1ac0] sm:$0xff]
    %v1007 = vld [vmem:[#allocation7 + $0x1ac8] sm:$0xff]
    %v1008 = vld [vmem:[#allocation7 + $0x1ad0] sm:$0xff]
    %v1009 = vld [vmem:[#allocation7 + $0x1ad8] sm:$0xff]
    %v1010 = vld [vmem:[#allocation7 + $0x1ae0] sm:$0xff]
    %v1011 = vld [vmem:[#allocation7 + $0x1ae8] sm:$0xff]
    %v1012 = vld [vmem:[#allocation7 + $0x1af0] sm:$0xff]
    %v1013 = vld [vmem:[#allocation7 + $0x1af8] sm:$0xff]
    %v1014 = vld [vmem:[#allocation7 + $0x1b00] sm:$0xff]
    %v1015 = vld [vmem:[#allocation7 + $0x1b08] sm:$0xff]
    %v1016 = vld [vmem:[#allocation7 + $0x1b10] sm:$0xff]
    %v1017 = vld [vmem:[#allocation7 + $0x1b18] sm:$0xff]
    %v1018 = vld [vmem:[#allocation7 + $0x1b20] sm:$0xff]
    %v1019 = vld [vmem:[#allocation7 + $0x1b28] sm:$0xff]
    %v1020 = vld [vmem:[#allocation7 + $0x1b30] sm:$0xff]
    %v1021 = vld [vmem:[#allocation7 + $0x1b38] sm:$0xff]
    %v1022 = vld [vmem:[#allocation7 + $0x1b40] sm:$0xff]
    %v1023 = vld [vmem:[#allocation7 + $0x1b48] sm:$0xff]
    %v1024 = vld [vmem:[#allocation7 + $0x1b50] sm:$0xff]
    %v1025 = vld [vmem:[#allocation7 + $0x1b58] sm:$0xff]
    %v1026 = vld [vmem:[#allocation7 + $0x1b60] sm:$0xff]
    %v1027 = vld [vmem:[#allocation7 + $0x1b68] sm:$0xff]
    %v1028 = vld [vmem:[#allocation7 + $0x1b70] sm:$0xff]
    %v1029 = vld [vmem:[#allocation7 + $0x1b78] sm:$0xff]
    %v1030 = vld [vmem:[#allocation7 + $0x1b80] sm:$0xff]
    %v1031 = vld [vmem:[#allocation7 + $0x1b88] sm:$0xff]
    %v1032 = vld [vmem:[#allocation7 + $0x1b90] sm:$0xff]
    %v1033 = vld [vmem:[#allocation7 + $0x1b98] sm:$0xff]
    %v1034 = vld [vmem:[#allocation7 + $0x1ba0] sm:$0xff]
    %v1035 = vld [vmem:[#allocation7 + $0x1ba8] sm:$0xff]
    %v1036 = vld [vmem:[#allocation7 + $0x1bb0] sm:$0xff]
    %v1037 = vld [vmem:[#allocation7 + $0x1bb8] sm:$0xff]
    %v1038 = vld [vmem:[#allocation7 + $0x1bc0] sm:$0xff]
    %v1039 = vld [vmem:[#allocation7 + $0x1bc8] sm:$0xff]
    %v1040 = vld [vmem:[#allocation7 + $0x1bd0] sm:$0xff]
    %v1041 = vld [vmem:[#allocation7 + $0x1bd8] sm:$0xff]
    %v1042 = vld [vmem:[#allocation7 + $0x1be0] sm:$0xff]
    %v1043 = vld [vmem:[#allocation7 + $0x1be8] sm:$0xff]
    %v1044 = vld [vmem:[#allocation7 + $0x1bf0] sm:$0xff]
    %v1045 = vld [vmem:[#allocation7 + $0x1bf8] sm:$0xff]
    %v1046 = vld [vmem:[#allocation8] sm:$0xff]
    %v1047 = vld [vmem:[#allocation8 + $0x8] sm:$0x3f]
    %v1050 = vlaneseq
    %v1051 = vshrl.u32 %v1050, 7
    %v1052 = vsub.s32 0, %v1051
    %v1053 = vrot.slane %v1046, %v1052
    %v1054 = vlaneseq
    %v1055 = vshrl.u32 %v1054, 7
    %v1056 = vsub.s32 1, %v1055
    %v1057 = vrot.slane %v1046, %v1056
    %v1058 = vlaneseq
    %v1059 = vshrl.u32 %v1058, 7
    %v1060 = vsub.s32 2, %v1059
    %v1061 = vrot.slane %v1046, %v1060
    %v1062 = vlaneseq
    %v1063 = vshrl.u32 %v1062, 7
    %v1064 = vsub.s32 3, %v1063
    %v1065 = vrot.slane %v1046, %v1064
    %v1066 = vlaneseq
    %v1067 = vshrl.u32 %v1066, 7
    %v1068 = vsub.s32 4, %v1067
    %v1069 = vrot.slane %v1046, %v1068
    %v1070 = vlaneseq
    %v1071 = vshrl.u32 %v1070, 7
    %v1072 = vsub.s32 5, %v1071
    %v1073 = vrot.slane %v1046, %v1072
    %v1074 = vlaneseq
    %v1075 = vshrl.u32 %v1074, 7
    %v1076 = vsub.s32 6, %v1075
    %v1077 = vrot.slane %v1046, %v1076
    %v1078 = vlaneseq
    %v1079 = vshrl.u32 %v1078, 7
    %v1080 = vsub.s32 7, %v1079
    %v1081 = vrot.slane %v1046, %v1080
    %v1082 = vlaneseq
    %v1083 = vshrl.u32 %v1082, 7
    %v1084 = vsub.s32 0, %v1083
    %v1085 = vrot.slane %v1047, %v1084
    %v1086 = vlaneseq
    %v1087 = vshrl.u32 %v1086, 7
    %v1088 = vsub.s32 1, %v1087
    %v1089 = vrot.slane %v1047, %v1088
    %v1090 = vlaneseq
    %v1091 = vshrl.u32 %v1090, 7
    %v1092 = vsub.s32 2, %v1091
    %v1093 = vrot.slane %v1047, %v1092
    %v1094 = vlaneseq
    %v1095 = vshrl.u32 %v1094, 7
    %v1096 = vsub.s32 3, %v1095
    %v1097 = vrot.slane %v1047, %v1096
    %v1098 = vlaneseq
    %v1099 = vshrl.u32 %v1098, 7
    %v1100 = vsub.s32 4, %v1099
    %v1101 = vrot.slane %v1047, %v1100
    %v1102 = vlaneseq
    %v1103 = vshrl.u32 %v1102, 7
    %v1104 = vsub.s32 5, %v1103
    %v1105 = vrot.slane %v1047, %v1104
    %v1121 = vcombine.high %v149, %v149
    %v1123 = vunpack.c.l.s4 1966171168
    %v1124 = vunpack.c.0.s8 %v1123
    %v1125 = vlaneseq
    %v1126 = vshrl.u32 %v1125, 7
    %v1127 = vsub.s32 %v1124, %v1126
    %v1128 = vrot.slane %v149, %v1127
    %v1130 = vunpack.c.l.s4 1966171168
    %v1131 = vunpack.c.0.s8 %v1130
    %v1132 = vlaneseq
    %v1133 = vshrl.u32 %v1132, 7
    %v1134 = vsub.s32 %v1131, %v1133
    %v1135 = vrot.slane %v1121, %v1134
    %v1136 = vcombine.high %v1128, %v1128
    %v1137 = vcombine.high %v1135, %v1135
    %v1139 = vunpack.c.l.s4 1966171168
    %v1140 = vunpack.c.0.s8 %v1139
    %v1141 = vlaneseq
    %v1142 = vshrl.u32 %v1141, 7
    %v1143 = vsub.s32 %v1140, %v1142
    %v1144 = vrot.slane %v1128, %v1143
    %v1146 = vunpack.c.l.s4 1966171168
    %v1147 = vunpack.c.0.s8 %v1146
    %v1148 = vlaneseq
    %v1149 = vshrl.u32 %v1148, 7
    %v1150 = vsub.s32 %v1147, %v1149
    %v1151 = vrot.slane %v1135, %v1150
    %v1153 = vunpack.c.l.s4 1966171168
    %v1154 = vunpack.c.0.s8 %v1153
    %v1155 = vlaneseq
    %v1156 = vshrl.u32 %v1155, 7
    %v1157 = vsub.s32 %v1154, %v1156
    %v1158 = vrot.slane %v1136, %v1157
    %v1160 = vunpack.c.l.s4 1966171168
    %v1161 = vunpack.c.0.s8 %v1160
    %v1162 = vlaneseq
    %v1163 = vshrl.u32 %v1162, 7
    %v1164 = vsub.s32 %v1161, %v1163
    %v1165 = vrot.slane %v1137, %v1164
    %v1166 = vcombine.high %v1144, %v1144
    %v1167 = vcombine.high %v1151, %v1151
    %v1168 = vcombine.high %v1158, %v1158
    %v1169 = vcombine.high %v1165, %v1165
    %v2074 = vunpack.c.l.b16 %v150
    %v2075 = vunpack.c.h.b16 %v150
    %v2076 = vunpack.c.l.b16 %v151
    %v2077 = vunpack.c.h.b16 %v151
    %v2078 = vunpack.c.l.b16 %v152
    %v2079 = vunpack.c.h.b16 %v152
    %v2080 = vunpack.c.l.b16 %v153
    %v2081 = vunpack.c.h.b16 %v153
    %v2082 = vunpack.c.l.b16 %v154
    %v2083 = vunpack.c.h.b16 %v154
    %v2084 = vunpack.c.l.b16 %v155
    %v2085 = vunpack.c.h.b16 %v155
    %v2086 = vunpack.c.l.b16 %v156
    %v2087 = vunpack.c.h.b16 %v156
    %v2088 = vunpack.c.l.b16 %v157
    %v2089 = vunpack.c.h.b16 %v157
    %v2090 = vunpack.c.l.b16 %v158
    %v2091 = vunpack.c.h.b16 %v158
    %v2092 = vunpack.c.l.b16 %v159
    %v2093 = vunpack.c.h.b16 %v159
    %v2094 = vunpack.c.l.b16 %v160
    %v2095 = vunpack.c.h.b16 %v160
    %v2096 = vunpack.c.l.b16 %v161
    %v2097 = vunpack.c.h.b16 %v161
    %v2098 = vunpack.c.l.b16 %v162
    %v2099 = vunpack.c.h.b16 %v162
    %v2100 = vunpack.c.l.b16 %v163
    %v2101 = vunpack.c.h.b16 %v163
    %v2102 = vunpack.c.l.b16 %v164
    %v2103 = vunpack.c.h.b16 %v164
    %v2104 = vunpack.c.l.b16 %v165
    %v2105 = vunpack.c.h.b16 %v165
    %v2106 = vunpack.c.l.b16 %v166
    %v2107 = vunpack.c.h.b16 %v166
    %v2108 = vunpack.c.l.b16 %v167
    %v2109 = vunpack.c.h.b16 %v167
    %v2110 = vunpack.c.l.b16 %v168
    %v2111 = vunpack.c.h.b16 %v168
    %v2112 = vunpack.c.l.b16 %v169
    %v2113 = vunpack.c.h.b16 %v169
    %v2114 = vunpack.c.l.b16 %v170
    %v2115 = vunpack.c.h.b16 %v170
    %v2116 = vunpack.c.l.b16 %v171
    %v2117 = vunpack.c.h.b16 %v171
    %v2118 = vunpack.c.l.b16 %v172
    %v2119 = vunpack.c.h.b16 %v172
    %v2120 = vunpack.c.l.b16 %v173
    %v2121 = vunpack.c.h.b16 %v173
    %v2122 = vunpack.c.l.b16 %v174
    %v2123 = vunpack.c.h.b16 %v174
    %v2124 = vunpack.c.l.b16 %v175
    %v2125 = vunpack.c.h.b16 %v175
    %v2126 = vunpack.c.l.b16 %v176
    %v2127 = vunpack.c.h.b16 %v176
    %v2128 = vunpack.c.l.b16 %v177
    %v2129 = vunpack.c.h.b16 %v177
    %v2130 = vunpack.c.l.b16 %v178
    %v2131 = vunpack.c.h.b16 %v178
    %v2132 = vunpack.c.l.b16 %v179
    %v2133 = vunpack.c.h.b16 %v179
    %v2134 = vunpack.c.l.b16 %v180
    %v2135 = vunpack.c.h.b16 %v180
    %v2136 = vunpack.c.l.b16 %v181
    %v2137 = vunpack.c.h.b16 %v181
    %v2138 = vunpack.c.l.b16 %v182
    %v2139 = vunpack.c.h.b16 %v182
    %v2140 = vunpack.c.l.b16 %v183
    %v2141 = vunpack.c.h.b16 %v183
    %v2142 = vunpack.c.l.b16 %v184
    %v2143 = vunpack.c.h.b16 %v184
    %v2144 = vunpack.c.l.b16 %v185
    %v2145 = vunpack.c.h.b16 %v185
    %v2146 = vunpack.c.l.b16 %v186
    %v2147 = vunpack.c.h.b16 %v186
    %v2148 = vunpack.c.l.b16 %v187
    %v2149 = vunpack.c.h.b16 %v187
    %v2150 = vunpack.c.l.b16 %v188
    %v2151 = vunpack.c.h.b16 %v188
    %v2152 = vunpack.c.l.b16 %v189
    %v2153 = vunpack.c.h.b16 %v189
    %v2154 = vunpack.c.l.b16 %v190
    %v2155 = vunpack.c.h.b16 %v190
    %v2156 = vunpack.c.l.b16 %v191
    %v2157 = vunpack.c.h.b16 %v191
    %v2158 = vunpack.c.l.b16 %v192
    %v2159 = vunpack.c.h.b16 %v192
    %v2160 = vunpack.c.l.b16 %v193
    %v2161 = vunpack.c.h.b16 %v193
    %v2162 = vunpack.c.l.b16 %v194
    %v2163 = vunpack.c.h.b16 %v194
    %v2164 = vunpack.c.l.b16 %v195
    %v2165 = vunpack.c.h.b16 %v195
    %v2166 = vunpack.c.l.b16 %v196
    %v2167 = vunpack.c.h.b16 %v196
    %v2168 = vunpack.c.l.b16 %v197
    %v2169 = vunpack.c.h.b16 %v197
    %v2170 = vunpack.c.l.b16 %v198
    %v2171 = vunpack.c.h.b16 %v198
    %v2172 = vunpack.c.l.b16 %v199
    %v2173 = vunpack.c.h.b16 %v199
    %v2174 = vunpack.c.l.b16 %v200
    %v2175 = vunpack.c.h.b16 %v200
    %v2176 = vunpack.c.l.b16 %v201
    %v2177 = vunpack.c.h.b16 %v201
    %v2178 = vunpack.c.l.b16 %v202
    %v2179 = vunpack.c.h.b16 %v202
    %v2180 = vunpack.c.l.b16 %v203
    %v2181 = vunpack.c.h.b16 %v203
    %v2182 = vunpack.c.l.b16 %v204
    %v2183 = vunpack.c.h.b16 %v204
    %v2184 = vunpack.c.l.b16 %v205
    %v2185 = vunpack.c.h.b16 %v205
    %v2186 = vunpack.c.l.b16 %v206
    %v2187 = vunpack.c.h.b16 %v206
    %v2188 = vunpack.c.l.b16 %v207
    %v2189 = vunpack.c.h.b16 %v207
    %v2190 = vunpack.c.l.b16 %v208
    %v2191 = vunpack.c.h.b16 %v208
    %v2192 = vunpack.c.l.b16 %v209
    %v2193 = vunpack.c.h.b16 %v209
    %v2194 = vunpack.c.l.b16 %v210
    %v2195 = vunpack.c.h.b16 %v210
    %v2196 = vunpack.c.l.b16 %v211
    %v2197 = vunpack.c.h.b16 %v211
    %v2198 = vunpack.c.l.b16 %v212
    %v2199 = vunpack.c.h.b16 %v212
    %v2200 = vunpack.c.l.b16 %v213
    %v2201 = vunpack.c.h.b16 %v213
    %v2202 = vunpack.c.l.b16 %v214
    %v2203 = vunpack.c.h.b16 %v214
    %v2204 = vunpack.c.l.b16 %v215
    %v2205 = vunpack.c.h.b16 %v215
    %v2206 = vunpack.c.l.b16 %v216
    %v2207 = vunpack.c.h.b16 %v216
    %v2208 = vunpack.c.l.b16 %v217
    %v2209 = vunpack.c.h.b16 %v217
    %v2210 = vunpack.c.l.b16 %v218
    %v2211 = vunpack.c.h.b16 %v218
    %v2212 = vunpack.c.l.b16 %v219
    %v2213 = vunpack.c.h.b16 %v219
    %v2214 = vunpack.c.l.b16 %v220
    %v2215 = vunpack.c.h.b16 %v220
    %v2216 = vunpack.c.l.b16 %v221
    %v2217 = vunpack.c.h.b16 %v221
    %v2218 = vunpack.c.l.b16 %v222
    %v2219 = vunpack.c.h.b16 %v222
    %v2220 = vunpack.c.l.b16 %v223
    %v2221 = vunpack.c.h.b16 %v223
    %v2222 = vunpack.c.l.b16 %v224
    %v2223 = vunpack.c.h.b16 %v224
    %v2224 = vunpack.c.l.b16 %v225
    %v2225 = vunpack.c.h.b16 %v225
    %v2226 = vunpack.c.l.b16 %v226
    %v2227 = vunpack.c.h.b16 %v226
    %v2228 = vunpack.c.l.b16 %v227
    %v2229 = vunpack.c.h.b16 %v227
    %v2230 = vunpack.c.l.b16 %v228
    %v2231 = vunpack.c.h.b16 %v228
    %v2232 = vunpack.c.l.b16 %v229
    %v2233 = vunpack.c.h.b16 %v229
    %v2234 = vunpack.c.l.b16 %v230
    %v2235 = vunpack.c.h.b16 %v230
    %v2236 = vunpack.c.l.b16 %v231
    %v2237 = vunpack.c.h.b16 %v231
    %v2238 = vunpack.c.l.b16 %v232
    %v2239 = vunpack.c.h.b16 %v232
    %v2240 = vunpack.c.l.b16 %v233
    %v2241 = vunpack.c.h.b16 %v233
    %v2242 = vunpack.c.l.b16 %v234
    %v2243 = vunpack.c.h.b16 %v234
    %v2244 = vunpack.c.l.b16 %v235
    %v2245 = vunpack.c.h.b16 %v235
    %v2246 = vunpack.c.l.b16 %v236
    %v2247 = vunpack.c.h.b16 %v236
    %v2248 = vunpack.c.l.b16 %v237
    %v2249 = vunpack.c.h.b16 %v237
    %v2250 = vunpack.c.l.b16 %v238
    %v2251 = vunpack.c.h.b16 %v238
    %v2252 = vunpack.c.l.b16 %v239
    %v2253 = vunpack.c.h.b16 %v239
    %v2254 = vunpack.c.l.b16 %v240
    %v2255 = vunpack.c.h.b16 %v240
    %v2256 = vunpack.c.l.b16 %v241
    %v2257 = vunpack.c.h.b16 %v241
    %v2258 = vunpack.c.l.b16 %v242
    %v2259 = vunpack.c.h.b16 %v242
    %v2260 = vunpack.c.l.b16 %v243
    %v2261 = vunpack.c.h.b16 %v243
    %v2262 = vunpack.c.l.b16 %v244
    %v2263 = vunpack.c.h.b16 %v244
    %v2264 = vunpack.c.l.b16 %v245
    %v2265 = vunpack.c.h.b16 %v245
    %v2266 = vunpack.c.l.b16 %v246
    %v2267 = vunpack.c.h.b16 %v246
    %v2268 = vunpack.c.l.b16 %v247
    %v2269 = vunpack.c.h.b16 %v247
    %v2270 = vunpack.c.l.b16 %v248
    %v2271 = vunpack.c.h.b16 %v248
    %v2272 = vunpack.c.l.b16 %v249
    %v2273 = vunpack.c.h.b16 %v249
    %v2274 = vunpack.c.l.b16 %v250
    %v2275 = vunpack.c.h.b16 %v250
    %v2276 = vunpack.c.l.b16 %v251
    %v2277 = vunpack.c.h.b16 %v251
    %v2278 = vunpack.c.l.b16 %v252
    %v2279 = vunpack.c.h.b16 %v252
    %v2280 = vunpack.c.l.b16 %v253
    %v2281 = vunpack.c.h.b16 %v253
    %v2282 = vunpack.c.l.b16 %v254
    %v2283 = vunpack.c.h.b16 %v254
    %v2284 = vunpack.c.l.b16 %v255
    %v2285 = vunpack.c.h.b16 %v255
    %v2286 = vunpack.c.l.b16 %v256
    %v2287 = vunpack.c.h.b16 %v256
    %v2288 = vunpack.c.l.b16 %v257
    %v2289 = vunpack.c.h.b16 %v257
    %v2290 = vunpack.c.l.b16 %v258
    %v2291 = vunpack.c.h.b16 %v258
    %v2292 = vunpack.c.l.b16 %v259
    %v2293 = vunpack.c.h.b16 %v259
    %v2294 = vunpack.c.l.b16 %v260
    %v2295 = vunpack.c.h.b16 %v260
    %v2296 = vunpack.c.l.b16 %v261
    %v2297 = vunpack.c.h.b16 %v261
    %v2298 = vunpack.c.l.b16 %v262
    %v2299 = vunpack.c.h.b16 %v262
    %v2300 = vunpack.c.l.b16 %v263
    %v2301 = vunpack.c.h.b16 %v263
    %v2302 = vunpack.c.l.b16 %v264
    %v2303 = vunpack.c.h.b16 %v264
    %v2304 = vunpack.c.l.b16 %v265
    %v2305 = vunpack.c.h.b16 %v265
    %v2306 = vunpack.c.l.b16 %v266
    %v2307 = vunpack.c.h.b16 %v266
    %v2308 = vunpack.c.l.b16 %v267
    %v2309 = vunpack.c.h.b16 %v267
    %v2310 = vunpack.c.l.b16 %v268
    %v2311 = vunpack.c.h.b16 %v268
    %v2312 = vunpack.c.l.b16 %v269
    %v2313 = vunpack.c.h.b16 %v269
    %v2314 = vunpack.c.l.b16 %v270
    %v2315 = vunpack.c.h.b16 %v270
    %v2316 = vunpack.c.l.b16 %v271
    %v2317 = vunpack.c.h.b16 %v271
    %v2318 = vunpack.c.l.b16 %v272
    %v2319 = vunpack.c.h.b16 %v272
    %v2320 = vunpack.c.l.b16 %v273
    %v2321 = vunpack.c.h.b16 %v273
    %v2322 = vunpack.c.l.b16 %v274
    %v2323 = vunpack.c.h.b16 %v274
    %v2324 = vunpack.c.l.b16 %v275
    %v2325 = vunpack.c.h.b16 %v275
    %v2326 = vunpack.c.l.b16 %v276
    %v2327 = vunpack.c.h.b16 %v276
    %v2328 = vunpack.c.l.b16 %v277
    %v2329 = vunpack.c.h.b16 %v277
    %v2330 = vunpack.c.l.b16 %v278
    %v2331 = vunpack.c.h.b16 %v278
    %v2332 = vunpack.c.l.b16 %v279
    %v2333 = vunpack.c.h.b16 %v279
    %v2334 = vunpack.c.l.b16 %v280
    %v2335 = vunpack.c.h.b16 %v280
    %v2336 = vunpack.c.l.b16 %v281
    %v2337 = vunpack.c.h.b16 %v281
    %v2338 = vunpack.c.l.b16 %v282
    %v2339 = vunpack.c.h.b16 %v282
    %v2340 = vunpack.c.l.b16 %v283
    %v2341 = vunpack.c.h.b16 %v283
    %v2342 = vunpack.c.l.b16 %v284
    %v2343 = vunpack.c.h.b16 %v284
    %v2344 = vunpack.c.l.b16 %v285
    %v2345 = vunpack.c.h.b16 %v285
    %v2346 = vunpack.c.l.b16 %v286
    %v2347 = vunpack.c.h.b16 %v286
    %v2348 = vunpack.c.l.b16 %v287
    %v2349 = vunpack.c.h.b16 %v287
    %v2350 = vunpack.c.l.b16 %v288
    %v2351 = vunpack.c.h.b16 %v288
    %v2352 = vunpack.c.l.b16 %v289
    %v2353 = vunpack.c.h.b16 %v289
    %v2354 = vunpack.c.l.b16 %v290
    %v2355 = vunpack.c.h.b16 %v290
    %v2356 = vunpack.c.l.b16 %v291
    %v2357 = vunpack.c.h.b16 %v291
    %v2358 = vunpack.c.l.b16 %v292
    %v2359 = vunpack.c.h.b16 %v292
    %v2360 = vunpack.c.l.b16 %v293
    %v2361 = vunpack.c.h.b16 %v293
    %v2362 = vunpack.c.l.b16 %v294
    %v2363 = vunpack.c.h.b16 %v294
    %v2364 = vunpack.c.l.b16 %v295
    %v2365 = vunpack.c.h.b16 %v295
    %v2366 = vunpack.c.l.b16 %v296
    %v2367 = vunpack.c.h.b16 %v296
    %v2368 = vunpack.c.l.b16 %v297
    %v2369 = vunpack.c.h.b16 %v297
    %v2370 = vunpack.c.l.b16 %v298
    %v2371 = vunpack.c.h.b16 %v298
    %v2372 = vunpack.c.l.b16 %v299
    %v2373 = vunpack.c.h.b16 %v299
    %v2374 = vunpack.c.l.b16 %v300
    %v2375 = vunpack.c.h.b16 %v300
    %v2376 = vunpack.c.l.b16 %v301
    %v2377 = vunpack.c.h.b16 %v301
    %v2378 = vunpack.c.l.b16 %v302
    %v2379 = vunpack.c.h.b16 %v302
    %v2380 = vunpack.c.l.b16 %v303
    %v2381 = vunpack.c.h.b16 %v303
    %v2382 = vunpack.c.l.b16 %v304
    %v2383 = vunpack.c.h.b16 %v304
    %v2384 = vunpack.c.l.b16 %v305
    %v2385 = vunpack.c.h.b16 %v305
    %v2386 = vunpack.c.l.b16 %v306
    %v2387 = vunpack.c.h.b16 %v306
    %v2388 = vunpack.c.l.b16 %v307
    %v2389 = vunpack.c.h.b16 %v307
    %v2390 = vunpack.c.l.b16 %v308
    %v2391 = vunpack.c.h.b16 %v308
    %v2392 = vunpack.c.l.b16 %v309
    %v2393 = vunpack.c.h.b16 %v309
    %v2394 = vunpack.c.l.b16 %v310
    %v2395 = vunpack.c.h.b16 %v310
    %v2396 = vunpack.c.l.b16 %v311
    %v2397 = vunpack.c.h.b16 %v311
    %v2398 = vunpack.c.l.b16 %v312
    %v2399 = vunpack.c.h.b16 %v312
    %v2400 = vunpack.c.l.b16 %v313
    %v2401 = vunpack.c.h.b16 %v313
    %v2402 = vunpack.c.l.b16 %v314
    %v2403 = vunpack.c.h.b16 %v314
    %v2404 = vunpack.c.l.b16 %v315
    %v2405 = vunpack.c.h.b16 %v315
    %v2406 = vunpack.c.l.b16 %v316
    %v2407 = vunpack.c.h.b16 %v316
    %v2408 = vunpack.c.l.b16 %v317
    %v2409 = vunpack.c.h.b16 %v317
    %v2410 = vunpack.c.l.b16 %v318
    %v2411 = vunpack.c.h.b16 %v318
    %v2412 = vunpack.c.l.b16 %v319
    %v2413 = vunpack.c.h.b16 %v319
    %v2414 = vunpack.c.l.b16 %v320
    %v2415 = vunpack.c.h.b16 %v320
    %v2416 = vunpack.c.l.b16 %v321
    %v2417 = vunpack.c.h.b16 %v321
    %v2418 = vunpack.c.l.b16 %v322
    %v2419 = vunpack.c.h.b16 %v322
    %v2420 = vunpack.c.l.b16 %v323
    %v2421 = vunpack.c.h.b16 %v323
    %v2422 = vunpack.c.l.b16 %v324
    %v2423 = vunpack.c.h.b16 %v324
    %v2424 = vunpack.c.l.b16 %v325
    %v2425 = vunpack.c.h.b16 %v325
    %v2426 = vunpack.c.l.b16 %v326
    %v2427 = vunpack.c.h.b16 %v326
    %v2428 = vunpack.c.l.b16 %v327
    %v2429 = vunpack.c.h.b16 %v327
    %v2430 = vunpack.c.l.b16 %v328
    %v2431 = vunpack.c.h.b16 %v328
    %v2432 = vunpack.c.l.b16 %v329
    %v2433 = vunpack.c.h.b16 %v329
    %v2434 = vunpack.c.l.b16 %v330
    %v2435 = vunpack.c.h.b16 %v330
    %v2436 = vunpack.c.l.b16 %v331
    %v2437 = vunpack.c.h.b16 %v331
    %v2438 = vunpack.c.l.b16 %v332
    %v2439 = vunpack.c.h.b16 %v332
    %v2440 = vunpack.c.l.b16 %v333
    %v2441 = vunpack.c.h.b16 %v333
    %v2442 = vunpack.c.l.b16 %v334
    %v2443 = vunpack.c.h.b16 %v334
    %v2444 = vunpack.c.l.b16 %v335
    %v2445 = vunpack.c.h.b16 %v335
    %v2446 = vunpack.c.l.b16 %v336
    %v2447 = vunpack.c.h.b16 %v336
    %v2448 = vunpack.c.l.b16 %v337
    %v2449 = vunpack.c.h.b16 %v337
    %v2450 = vunpack.c.l.b16 %v338
    %v2451 = vunpack.c.h.b16 %v338
    %v2452 = vunpack.c.l.b16 %v339
    %v2453 = vunpack.c.h.b16 %v339
    %v2454 = vunpack.c.l.b16 %v340
    %v2455 = vunpack.c.h.b16 %v340
    %v2456 = vunpack.c.l.b16 %v341
    %v2457 = vunpack.c.h.b16 %v341
    %v2458 = vunpack.c.l.b16 %v342
    %v2459 = vunpack.c.h.b16 %v342
    %v2460 = vunpack.c.l.b16 %v343
    %v2461 = vunpack.c.h.b16 %v343
    %v2462 = vunpack.c.l.b16 %v344
    %v2463 = vunpack.c.h.b16 %v344
    %v2464 = vunpack.c.l.b16 %v345
    %v2465 = vunpack.c.h.b16 %v345
    %v2466 = vunpack.c.l.b16 %v346
    %v2467 = vunpack.c.h.b16 %v346
    %v2468 = vunpack.c.l.b16 %v347
    %v2469 = vunpack.c.h.b16 %v347
    %v2470 = vunpack.c.l.b16 %v348
    %v2471 = vunpack.c.h.b16 %v348
    %v2472 = vunpack.c.l.b16 %v349
    %v2473 = vunpack.c.h.b16 %v349
    %v2474 = vunpack.c.l.b16 %v350
    %v2475 = vunpack.c.h.b16 %v350
    %v2476 = vunpack.c.l.b16 %v351
    %v2477 = vunpack.c.h.b16 %v351
    %v2478 = vunpack.c.l.b16 %v352
    %v2479 = vunpack.c.h.b16 %v352
    %v2480 = vunpack.c.l.b16 %v353
    %v2481 = vunpack.c.h.b16 %v353
    %v2482 = vunpack.c.l.b16 %v354
    %v2483 = vunpack.c.h.b16 %v354
    %v2484 = vunpack.c.l.b16 %v355
    %v2485 = vunpack.c.h.b16 %v355
    %v2486 = vunpack.c.l.b16 %v356
    %v2487 = vunpack.c.h.b16 %v356
    %v2488 = vunpack.c.l.b16 %v357
    %v2489 = vunpack.c.h.b16 %v357
    %v2490 = vunpack.c.l.b16 %v358
    %v2491 = vunpack.c.h.b16 %v358
    %v2492 = vunpack.c.l.b16 %v359
    %v2493 = vunpack.c.h.b16 %v359
    %v2494 = vunpack.c.l.b16 %v360
    %v2495 = vunpack.c.h.b16 %v360
    %v2496 = vunpack.c.l.b16 %v361
    %v2497 = vunpack.c.h.b16 %v361
    %v2498 = vunpack.c.l.b16 %v362
    %v2499 = vunpack.c.h.b16 %v362
    %v2500 = vunpack.c.l.b16 %v363
    %v2501 = vunpack.c.h.b16 %v363
    %v2502 = vunpack.c.l.b16 %v364
    %v2503 = vunpack.c.h.b16 %v364
    %v2504 = vunpack.c.l.b16 %v365
    %v2505 = vunpack.c.h.b16 %v365
    %v2506 = vunpack.c.l.b16 %v366
    %v2507 = vunpack.c.h.b16 %v366
    %v2508 = vunpack.c.l.b16 %v367
    %v2509 = vunpack.c.h.b16 %v367
    %v2510 = vunpack.c.l.b16 %v368
    %v2511 = vunpack.c.h.b16 %v368
    %v2512 = vunpack.c.l.b16 %v369
    %v2513 = vunpack.c.h.b16 %v369
    %v2514 = vunpack.c.l.b16 %v370
    %v2515 = vunpack.c.h.b16 %v370
    %v2516 = vunpack.c.l.b16 %v371
    %v2517 = vunpack.c.h.b16 %v371
    %v2518 = vunpack.c.l.b16 %v372
    %v2519 = vunpack.c.h.b16 %v372
    %v2520 = vunpack.c.l.b16 %v373
    %v2521 = vunpack.c.h.b16 %v373
    %v2522 = vunpack.c.l.b16 %v374
    %v2523 = vunpack.c.h.b16 %v374
    %v2524 = vunpack.c.l.b16 %v375
    %v2525 = vunpack.c.h.b16 %v375
    %v2526 = vunpack.c.l.b16 %v376
    %v2527 = vunpack.c.h.b16 %v376
    %v2528 = vunpack.c.l.b16 %v377
    %v2529 = vunpack.c.h.b16 %v377
    %v2530 = vunpack.c.l.b16 %v378
    %v2531 = vunpack.c.h.b16 %v378
    %v2532 = vunpack.c.l.b16 %v379
    %v2533 = vunpack.c.h.b16 %v379
    %v2534 = vunpack.c.l.b16 %v380
    %v2535 = vunpack.c.h.b16 %v380
    %v2536 = vunpack.c.l.b16 %v381
    %v2537 = vunpack.c.h.b16 %v381
    %v2538 = vunpack.c.l.b16 %v382
    %v2539 = vunpack.c.h.b16 %v382
    %v2540 = vunpack.c.l.b16 %v383
    %v2541 = vunpack.c.h.b16 %v383
    %v2542 = vunpack.c.l.b16 %v384
    %v2543 = vunpack.c.h.b16 %v384
    %v2544 = vunpack.c.l.b16 %v385
    %v2545 = vunpack.c.h.b16 %v385
    %v2546 = vunpack.c.l.b16 %v386
    %v2547 = vunpack.c.h.b16 %v386
    %v2548 = vunpack.c.l.b16 %v387
    %v2549 = vunpack.c.h.b16 %v387
    %v2550 = vunpack.c.l.b16 %v388
    %v2551 = vunpack.c.h.b16 %v388
    %v2552 = vunpack.c.l.b16 %v389
    %v2553 = vunpack.c.h.b16 %v389
    %v2554 = vunpack.c.l.b16 %v390
    %v2555 = vunpack.c.h.b16 %v390
    %v2556 = vunpack.c.l.b16 %v391
    %v2557 = vunpack.c.h.b16 %v391
    %v2558 = vunpack.c.l.b16 %v392
    %v2559 = vunpack.c.h.b16 %v392
    %v2560 = vunpack.c.l.b16 %v393
    %v2561 = vunpack.c.h.b16 %v393
    %v2562 = vunpack.c.l.b16 %v394
    %v2563 = vunpack.c.h.b16 %v394
    %v2564 = vunpack.c.l.b16 %v395
    %v2565 = vunpack.c.h.b16 %v395
    %v2566 = vunpack.c.l.b16 %v396
    %v2567 = vunpack.c.h.b16 %v396
    %v2568 = vunpack.c.l.b16 %v397
    %v2569 = vunpack.c.h.b16 %v397
    %v2570 = vunpack.c.l.b16 %v398
    %v2571 = vunpack.c.h.b16 %v398
    %v2572 = vunpack.c.l.b16 %v399
    %v2573 = vunpack.c.h.b16 %v399
    %v2574 = vunpack.c.l.b16 %v400
    %v2575 = vunpack.c.h.b16 %v400
    %v2576 = vunpack.c.l.b16 %v401
    %v2577 = vunpack.c.h.b16 %v401
    %v2578 = vunpack.c.l.b16 %v402
    %v2579 = vunpack.c.h.b16 %v402
    %v2580 = vunpack.c.l.b16 %v403
    %v2581 = vunpack.c.h.b16 %v403
    %v2582 = vunpack.c.l.b16 %v404
    %v2583 = vunpack.c.h.b16 %v404
    %v2584 = vunpack.c.l.b16 %v405
    %v2585 = vunpack.c.h.b16 %v405
    %v2586 = vunpack.c.l.b16 %v406
    %v2587 = vunpack.c.h.b16 %v406
    %v2588 = vunpack.c.l.b16 %v407
    %v2589 = vunpack.c.h.b16 %v407
    %v2590 = vunpack.c.l.b16 %v408
    %v2591 = vunpack.c.h.b16 %v408
    %v2592 = vunpack.c.l.b16 %v409
    %v2593 = vunpack.c.h.b16 %v409
    %v2594 = vunpack.c.l.b16 %v410
    %v2595 = vunpack.c.h.b16 %v410
    %v2596 = vunpack.c.l.b16 %v411
    %v2597 = vunpack.c.h.b16 %v411
    %v2598 = vunpack.c.l.b16 %v412
    %v2599 = vunpack.c.h.b16 %v412
    %v2600 = vunpack.c.l.b16 %v413
    %v2601 = vunpack.c.h.b16 %v413
    %v2602 = vunpack.c.l.b16 %v414
    %v2603 = vunpack.c.h.b16 %v414
    %v2604 = vunpack.c.l.b16 %v415
    %v2605 = vunpack.c.h.b16 %v415
    %v2606 = vunpack.c.l.b16 %v416
    %v2607 = vunpack.c.h.b16 %v416
    %v2608 = vunpack.c.l.b16 %v417
    %v2609 = vunpack.c.h.b16 %v417
    %v2610 = vunpack.c.l.b16 %v418
    %v2611 = vunpack.c.h.b16 %v418
    %v2612 = vunpack.c.l.b16 %v419
    %v2613 = vunpack.c.h.b16 %v419
    %v2614 = vunpack.c.l.b16 %v420
    %v2615 = vunpack.c.h.b16 %v420
    %v2616 = vunpack.c.l.b16 %v421
    %v2617 = vunpack.c.h.b16 %v421
    %v2618 = vunpack.c.l.b16 %v422
    %v2619 = vunpack.c.h.b16 %v422
    %v2620 = vunpack.c.l.b16 %v423
    %v2621 = vunpack.c.h.b16 %v423
    %v2622 = vunpack.c.l.b16 %v424
    %v2623 = vunpack.c.h.b16 %v424
    %v2624 = vunpack.c.l.b16 %v425
    %v2625 = vunpack.c.h.b16 %v425
    %v2626 = vunpack.c.l.b16 %v426
    %v2627 = vunpack.c.h.b16 %v426
    %v2628 = vunpack.c.l.b16 %v427
    %v2629 = vunpack.c.h.b16 %v427
    %v2630 = vunpack.c.l.b16 %v428
    %v2631 = vunpack.c.h.b16 %v428
    %v2632 = vunpack.c.l.b16 %v429
    %v2633 = vunpack.c.h.b16 %v429
    %v2634 = vunpack.c.l.b16 %v430
    %v2635 = vunpack.c.h.b16 %v430
    %v2636 = vunpack.c.l.b16 %v431
    %v2637 = vunpack.c.h.b16 %v431
    %v2638 = vunpack.c.l.b16 %v432
    %v2639 = vunpack.c.h.b16 %v432
    %v2640 = vunpack.c.l.b16 %v433
    %v2641 = vunpack.c.h.b16 %v433
    %v2642 = vunpack.c.l.b16 %v434
    %v2643 = vunpack.c.h.b16 %v434
    %v2644 = vunpack.c.l.b16 %v435
    %v2645 = vunpack.c.h.b16 %v435
    %v2646 = vunpack.c.l.b16 %v436
    %v2647 = vunpack.c.h.b16 %v436
    %v2648 = vunpack.c.l.b16 %v437
    %v2649 = vunpack.c.h.b16 %v437
    %v2650 = vunpack.c.l.b16 %v438
    %v2651 = vunpack.c.h.b16 %v438
    %v2652 = vunpack.c.l.b16 %v439
    %v2653 = vunpack.c.h.b16 %v439
    %v2654 = vunpack.c.l.b16 %v440
    %v2655 = vunpack.c.h.b16 %v440
    %v2656 = vunpack.c.l.b16 %v441
    %v2657 = vunpack.c.h.b16 %v441
    %v2658 = vunpack.c.l.b16 %v442
    %v2659 = vunpack.c.h.b16 %v442
    %v2660 = vunpack.c.l.b16 %v443
    %v2661 = vunpack.c.h.b16 %v443
    %v2662 = vunpack.c.l.b16 %v444
    %v2663 = vunpack.c.h.b16 %v444
    %v2664 = vunpack.c.l.b16 %v445
    %v2665 = vunpack.c.h.b16 %v445
    %v2666 = vunpack.c.l.b16 %v446
    %v2667 = vunpack.c.h.b16 %v446
    %v2668 = vunpack.c.l.b16 %v447
    %v2669 = vunpack.c.h.b16 %v447
    %v2670 = vunpack.c.l.b16 %v448
    %v2671 = vunpack.c.h.b16 %v448
    %v2672 = vunpack.c.l.b16 %v449
    %v2673 = vunpack.c.h.b16 %v449
    %v2674 = vunpack.c.l.b16 %v450
    %v2675 = vunpack.c.h.b16 %v450
    %v2676 = vunpack.c.l.b16 %v451
    %v2677 = vunpack.c.h.b16 %v451
    %v2678 = vunpack.c.l.b16 %v452
    %v2679 = vunpack.c.h.b16 %v452
    %v2680 = vunpack.c.l.b16 %v453
    %v2681 = vunpack.c.h.b16 %v453
    %v2682 = vunpack.c.l.b16 %v454
    %v2683 = vunpack.c.h.b16 %v454
    %v2684 = vunpack.c.l.b16 %v455
    %v2685 = vunpack.c.h.b16 %v455
    %v2686 = vunpack.c.l.b16 %v456
    %v2687 = vunpack.c.h.b16 %v456
    %v2688 = vunpack.c.l.b16 %v457
    %v2689 = vunpack.c.h.b16 %v457
    %v2690 = vunpack.c.l.b16 %v458
    %v2691 = vunpack.c.h.b16 %v458
    %v2692 = vunpack.c.l.b16 %v459
    %v2693 = vunpack.c.h.b16 %v459
    %v2694 = vunpack.c.l.b16 %v460
    %v2695 = vunpack.c.h.b16 %v460
    %v2696 = vunpack.c.l.b16 %v461
    %v2697 = vunpack.c.h.b16 %v461
    %v2698 = vunpack.c.l.b16 %v462
    %v2699 = vunpack.c.h.b16 %v462
    %v2700 = vunpack.c.l.b16 %v463
    %v2701 = vunpack.c.h.b16 %v463
    %v2702 = vunpack.c.l.b16 %v464
    %v2703 = vunpack.c.h.b16 %v464
    %v2704 = vunpack.c.l.b16 %v465
    %v2705 = vunpack.c.h.b16 %v465
    %v2706 = vunpack.c.l.b16 %v466
    %v2707 = vunpack.c.h.b16 %v466
    %v2708 = vunpack.c.l.b16 %v467
    %v2709 = vunpack.c.h.b16 %v467
    %v2710 = vunpack.c.l.b16 %v468
    %v2711 = vunpack.c.h.b16 %v468
    %v2712 = vunpack.c.l.b16 %v469
    %v2713 = vunpack.c.h.b16 %v469
    %v2714 = vunpack.c.l.b16 %v470
    %v2715 = vunpack.c.h.b16 %v470
    %v2716 = vunpack.c.l.b16 %v471
    %v2717 = vunpack.c.h.b16 %v471
    %v2718 = vunpack.c.l.b16 %v472
    %v2719 = vunpack.c.h.b16 %v472
    %v2720 = vunpack.c.l.b16 %v473
    %v2721 = vunpack.c.h.b16 %v473
    %v2722 = vunpack.c.l.b16 %v474
    %v2723 = vunpack.c.h.b16 %v474
    %v2724 = vunpack.c.l.b16 %v475
    %v2725 = vunpack.c.h.b16 %v475
    %v2726 = vunpack.c.l.b16 %v476
    %v2727 = vunpack.c.h.b16 %v476
    %v2728 = vunpack.c.l.b16 %v477
    %v2729 = vunpack.c.h.b16 %v477
    %v2730 = vunpack.c.l.b16 %v478
    %v2731 = vunpack.c.h.b16 %v478
    %v2732 = vunpack.c.l.b16 %v479
    %v2733 = vunpack.c.h.b16 %v479
    %v2734 = vunpack.c.l.b16 %v480
    %v2735 = vunpack.c.h.b16 %v480
    %v2736 = vunpack.c.l.b16 %v481
    %v2737 = vunpack.c.h.b16 %v481
    %v2738 = vunpack.c.l.b16 %v482
    %v2739 = vunpack.c.h.b16 %v482
    %v2740 = vunpack.c.l.b16 %v483
    %v2741 = vunpack.c.h.b16 %v483
    %v2742 = vunpack.c.l.b16 %v484
    %v2743 = vunpack.c.h.b16 %v484
    %v2744 = vunpack.c.l.b16 %v485
    %v2745 = vunpack.c.h.b16 %v485
    %v2746 = vunpack.c.l.b16 %v486
    %v2747 = vunpack.c.h.b16 %v486
    %v2748 = vunpack.c.l.b16 %v487
    %v2749 = vunpack.c.h.b16 %v487
    %v2750 = vunpack.c.l.b16 %v488
    %v2751 = vunpack.c.h.b16 %v488
    %v2752 = vunpack.c.l.b16 %v489
    %v2753 = vunpack.c.h.b16 %v489
    %v2754 = vunpack.c.l.b16 %v490
    %v2755 = vunpack.c.h.b16 %v490
    %v2756 = vunpack.c.l.b16 %v491
    %v2757 = vunpack.c.h.b16 %v491
    %v2758 = vunpack.c.l.b16 %v492
    %v2759 = vunpack.c.h.b16 %v492
    %v2760 = vunpack.c.l.b16 %v493
    %v2761 = vunpack.c.h.b16 %v493
    %v2762 = vunpack.c.l.b16 %v494
    %v2763 = vunpack.c.h.b16 %v494
    %v2764 = vunpack.c.l.b16 %v495
    %v2765 = vunpack.c.h.b16 %v495
    %v2766 = vunpack.c.l.b16 %v496
    %v2767 = vunpack.c.h.b16 %v496
    %v2768 = vunpack.c.l.b16 %v497
    %v2769 = vunpack.c.h.b16 %v497
    %v2770 = vunpack.c.l.b16 %v498
    %v2771 = vunpack.c.h.b16 %v498
    %v2772 = vunpack.c.l.b16 %v499
    %v2773 = vunpack.c.h.b16 %v499
    %v2774 = vunpack.c.l.b16 %v500
    %v2775 = vunpack.c.h.b16 %v500
    %v2776 = vunpack.c.l.b16 %v501
    %v2777 = vunpack.c.h.b16 %v501
    %v2778 = vunpack.c.l.b16 %v502
    %v2779 = vunpack.c.h.b16 %v502
    %v2780 = vunpack.c.l.b16 %v503
    %v2781 = vunpack.c.h.b16 %v503
    %v2782 = vunpack.c.l.b16 %v504
    %v2783 = vunpack.c.h.b16 %v504
    %v2784 = vunpack.c.l.b16 %v505
    %v2785 = vunpack.c.h.b16 %v505
    %v2786 = vunpack.c.l.b16 %v506
    %v2787 = vunpack.c.h.b16 %v506
    %v2788 = vunpack.c.l.b16 %v507
    %v2789 = vunpack.c.h.b16 %v507
    %v2790 = vunpack.c.l.b16 %v508
    %v2791 = vunpack.c.h.b16 %v508
    %v2792 = vunpack.c.l.b16 %v509
    %v2793 = vunpack.c.h.b16 %v509
    %v2794 = vunpack.c.l.b16 %v510
    %v2795 = vunpack.c.h.b16 %v510
    %v2796 = vunpack.c.l.b16 %v511
    %v2797 = vunpack.c.h.b16 %v511
    %v2798 = vunpack.c.l.b16 %v512
    %v2799 = vunpack.c.h.b16 %v512
    %v2800 = vunpack.c.l.b16 %v513
    %v2801 = vunpack.c.h.b16 %v513
    %v2802 = vunpack.c.l.b16 %v514
    %v2803 = vunpack.c.h.b16 %v514
    %v2804 = vunpack.c.l.b16 %v515
    %v2805 = vunpack.c.h.b16 %v515
    %v2806 = vunpack.c.l.b16 %v516
    %v2807 = vunpack.c.h.b16 %v516
    %v2808 = vunpack.c.l.b16 %v517
    %v2809 = vunpack.c.h.b16 %v517
    %v2810 = vunpack.c.l.b16 %v518
    %v2811 = vunpack.c.h.b16 %v518
    %v2812 = vunpack.c.l.b16 %v519
    %v2813 = vunpack.c.h.b16 %v519
    %v2814 = vunpack.c.l.b16 %v520
    %v2815 = vunpack.c.h.b16 %v520
    %v2816 = vunpack.c.l.b16 %v521
    %v2817 = vunpack.c.h.b16 %v521
    %v2818 = vunpack.c.l.b16 %v522
    %v2819 = vunpack.c.h.b16 %v522
    %v2820 = vunpack.c.l.b16 %v523
    %v2821 = vunpack.c.h.b16 %v523
    %v2822 = vunpack.c.l.b16 %v524
    %v2823 = vunpack.c.h.b16 %v524
    %v2824 = vunpack.c.l.b16 %v525
    %v2825 = vunpack.c.h.b16 %v525
    %v2826 = vunpack.c.l.b16 %v526
    %v2827 = vunpack.c.h.b16 %v526
    %v2828 = vunpack.c.l.b16 %v527
    %v2829 = vunpack.c.h.b16 %v527
    %v2830 = vunpack.c.l.b16 %v528
    %v2831 = vunpack.c.h.b16 %v528
    %v2832 = vunpack.c.l.b16 %v529
    %v2833 = vunpack.c.h.b16 %v529
    %v2834 = vunpack.c.l.b16 %v530
    %v2835 = vunpack.c.h.b16 %v530
    %v2836 = vunpack.c.l.b16 %v531
    %v2837 = vunpack.c.h.b16 %v531
    %v2838 = vunpack.c.l.b16 %v532
    %v2839 = vunpack.c.h.b16 %v532
    %v2840 = vunpack.c.l.b16 %v533
    %v2841 = vunpack.c.h.b16 %v533
    %v2842 = vunpack.c.l.b16 %v534
    %v2843 = vunpack.c.h.b16 %v534
    %v2844 = vunpack.c.l.b16 %v535
    %v2845 = vunpack.c.h.b16 %v535
    %v2846 = vunpack.c.l.b16 %v536
    %v2847 = vunpack.c.h.b16 %v536
    %v2848 = vunpack.c.l.b16 %v537
    %v2849 = vunpack.c.h.b16 %v537
    %v2850 = vunpack.c.l.b16 %v538
    %v2851 = vunpack.c.h.b16 %v538
    %v2852 = vunpack.c.l.b16 %v539
    %v2853 = vunpack.c.h.b16 %v539
    %v2854 = vunpack.c.l.b16 %v540
    %v2855 = vunpack.c.h.b16 %v540
    %v2856 = vunpack.c.l.b16 %v541
    %v2857 = vunpack.c.h.b16 %v541
    %v2858 = vunpack.c.l.b16 %v542
    %v2859 = vunpack.c.h.b16 %v542
    %v2860 = vunpack.c.l.b16 %v543
    %v2861 = vunpack.c.h.b16 %v543
    %v2862 = vunpack.c.l.b16 %v544
    %v2863 = vunpack.c.h.b16 %v544
    %v2864 = vunpack.c.l.b16 %v545
    %v2865 = vunpack.c.h.b16 %v545
    %v2866 = vunpack.c.l.b16 %v546
    %v2867 = vunpack.c.h.b16 %v546
    %v2868 = vunpack.c.l.b16 %v547
    %v2869 = vunpack.c.h.b16 %v547
    %v2870 = vunpack.c.l.b16 %v548
    %v2871 = vunpack.c.h.b16 %v548
    %v2872 = vunpack.c.l.b16 %v549
    %v2873 = vunpack.c.h.b16 %v549
    %v2874 = vunpack.c.l.b16 %v550
    %v2875 = vunpack.c.h.b16 %v550
    %v2876 = vunpack.c.l.b16 %v551
    %v2877 = vunpack.c.h.b16 %v551
    %v2878 = vunpack.c.l.b16 %v552
    %v2879 = vunpack.c.h.b16 %v552
    %v2880 = vunpack.c.l.b16 %v553
    %v2881 = vunpack.c.h.b16 %v553
    %v2882 = vunpack.c.l.b16 %v554
    %v2883 = vunpack.c.h.b16 %v554
    %v2884 = vunpack.c.l.b16 %v555
    %v2885 = vunpack.c.h.b16 %v555
    %v2886 = vunpack.c.l.b16 %v556
    %v2887 = vunpack.c.h.b16 %v556
    %v2888 = vunpack.c.l.b16 %v557
    %v2889 = vunpack.c.h.b16 %v557
    %v2890 = vunpack.c.l.b16 %v558
    %v2891 = vunpack.c.h.b16 %v558
    %v2892 = vunpack.c.l.b16 %v559
    %v2893 = vunpack.c.h.b16 %v559
    %v2894 = vunpack.c.l.b16 %v560
    %v2895 = vunpack.c.h.b16 %v560
    %v2896 = vunpack.c.l.b16 %v561
    %v2897 = vunpack.c.h.b16 %v561
    %v2898 = vunpack.c.l.b16 %v562
    %v2899 = vunpack.c.h.b16 %v562
    %v2900 = vunpack.c.l.b16 %v563
    %v2901 = vunpack.c.h.b16 %v563
    %v2902 = vunpack.c.l.b16 %v564
    %v2903 = vunpack.c.h.b16 %v564
    %v2904 = vunpack.c.l.b16 %v565
    %v2905 = vunpack.c.h.b16 %v565
    %v2906 = vunpack.c.l.b16 %v566
    %v2907 = vunpack.c.h.b16 %v566
    %v2908 = vunpack.c.l.b16 %v567
    %v2909 = vunpack.c.h.b16 %v567
    %v2910 = vunpack.c.l.b16 %v568
    %v2911 = vunpack.c.h.b16 %v568
    %v2912 = vunpack.c.l.b16 %v569
    %v2913 = vunpack.c.h.b16 %v569
    %v2914 = vunpack.c.l.b16 %v570
    %v2915 = vunpack.c.h.b16 %v570
    %v2916 = vunpack.c.l.b16 %v571
    %v2917 = vunpack.c.h.b16 %v571
    %v2918 = vunpack.c.l.b16 %v572
    %v2919 = vunpack.c.h.b16 %v572
    %v2920 = vunpack.c.l.b16 %v573
    %v2921 = vunpack.c.h.b16 %v573
    %v2922 = vunpack.c.l.b16 %v574
    %v2923 = vunpack.c.h.b16 %v574
    %v2924 = vunpack.c.l.b16 %v575
    %v2925 = vunpack.c.h.b16 %v575
    %v2926 = vunpack.c.l.b16 %v576
    %v2927 = vunpack.c.h.b16 %v576
    %v2928 = vunpack.c.l.b16 %v577
    %v2929 = vunpack.c.h.b16 %v577
    %v2930 = vunpack.c.l.b16 %v578
    %v2931 = vunpack.c.h.b16 %v578
    %v2932 = vunpack.c.l.b16 %v579
    %v2933 = vunpack.c.h.b16 %v579
    %v2934 = vunpack.c.l.b16 %v580
    %v2935 = vunpack.c.h.b16 %v580
    %v2936 = vunpack.c.l.b16 %v581
    %v2937 = vunpack.c.h.b16 %v581
    %v2938 = vunpack.c.l.b16 %v582
    %v2939 = vunpack.c.h.b16 %v582
    %v2940 = vunpack.c.l.b16 %v583
    %v2941 = vunpack.c.h.b16 %v583
    %v2942 = vunpack.c.l.b16 %v584
    %v2943 = vunpack.c.h.b16 %v584
    %v2944 = vunpack.c.l.b16 %v585
    %v2945 = vunpack.c.h.b16 %v585
    %v2946 = vunpack.c.l.b16 %v586
    %v2947 = vunpack.c.h.b16 %v586
    %v2948 = vunpack.c.l.b16 %v587
    %v2949 = vunpack.c.h.b16 %v587
    %v2950 = vunpack.c.l.b16 %v588
    %v2951 = vunpack.c.h.b16 %v588
    %v2952 = vunpack.c.l.b16 %v589
    %v2953 = vunpack.c.h.b16 %v589
    %v2954 = vunpack.c.l.b16 %v590
    %v2955 = vunpack.c.h.b16 %v590
    %v2956 = vunpack.c.l.b16 %v591
    %v2957 = vunpack.c.h.b16 %v591
    %v2958 = vunpack.c.l.b16 %v592
    %v2959 = vunpack.c.h.b16 %v592
    %v2960 = vunpack.c.l.b16 %v593
    %v2961 = vunpack.c.h.b16 %v593
    %v2962 = vunpack.c.l.b16 %v594
    %v2963 = vunpack.c.h.b16 %v594
    %v2964 = vunpack.c.l.b16 %v595
    %v2965 = vunpack.c.h.b16 %v595
    %v2966 = vunpack.c.l.b16 %v596
    %v2967 = vunpack.c.h.b16 %v596
    %v2968 = vunpack.c.l.b16 %v597
    %v2969 = vunpack.c.h.b16 %v597
    %v2970 = vunpack.c.l.b16 %v598
    %v2971 = vunpack.c.h.b16 %v598
    %v2972 = vunpack.c.l.b16 %v599
    %v2973 = vunpack.c.h.b16 %v599
    %v2974 = vunpack.c.l.b16 %v600
    %v2975 = vunpack.c.h.b16 %v600
    %v2976 = vunpack.c.l.b16 %v601
    %v2977 = vunpack.c.h.b16 %v601
    %v2978 = vunpack.c.l.b16 %v602
    %v2979 = vunpack.c.h.b16 %v602
    %v2980 = vunpack.c.l.b16 %v603
    %v2981 = vunpack.c.h.b16 %v603
    %v2982 = vunpack.c.l.b16 %v604
    %v2983 = vunpack.c.h.b16 %v604
    %v2984 = vunpack.c.l.b16 %v605
    %v2985 = vunpack.c.h.b16 %v605
    %v2986 = vunpack.c.l.b16 %v606
    %v2987 = vunpack.c.h.b16 %v606
    %v2988 = vunpack.c.l.b16 %v607
    %v2989 = vunpack.c.h.b16 %v607
    %v2990 = vunpack.c.l.b16 %v608
    %v2991 = vunpack.c.h.b16 %v608
    %v2992 = vunpack.c.l.b16 %v609
    %v2993 = vunpack.c.h.b16 %v609
    %v2994 = vunpack.c.l.b16 %v610
    %v2995 = vunpack.c.h.b16 %v610
    %v2996 = vunpack.c.l.b16 %v611
    %v2997 = vunpack.c.h.b16 %v611
    %v2998 = vunpack.c.l.b16 %v612
    %v2999 = vunpack.c.h.b16 %v612
    %v3000 = vunpack.c.l.b16 %v613
    %v3001 = vunpack.c.h.b16 %v613
    %v3002 = vunpack.c.l.b16 %v614
    %v3003 = vunpack.c.h.b16 %v614
    %v3004 = vunpack.c.l.b16 %v615
    %v3005 = vunpack.c.h.b16 %v615
    %v3006 = vunpack.c.l.b16 %v616
    %v3007 = vunpack.c.h.b16 %v616
    %v3008 = vunpack.c.l.b16 %v617
    %v3009 = vunpack.c.h.b16 %v617
    %v3010 = vunpack.c.l.b16 %v618
    %v3011 = vunpack.c.h.b16 %v618
    %v3012 = vunpack.c.l.b16 %v619
    %v3013 = vunpack.c.h.b16 %v619
    %v3014 = vunpack.c.l.b16 %v620
    %v3015 = vunpack.c.h.b16 %v620
    %v3016 = vunpack.c.l.b16 %v621
    %v3017 = vunpack.c.h.b16 %v621
    %v3018 = vunpack.c.l.b16 %v622
    %v3019 = vunpack.c.h.b16 %v622
    %v3020 = vunpack.c.l.b16 %v623
    %v3021 = vunpack.c.h.b16 %v623
    %v3022 = vunpack.c.l.b16 %v624
    %v3023 = vunpack.c.h.b16 %v624
    %v3024 = vunpack.c.l.b16 %v625
    %v3025 = vunpack.c.h.b16 %v625
    %v3026 = vunpack.c.l.b16 %v626
    %v3027 = vunpack.c.h.b16 %v626
    %v3028 = vunpack.c.l.b16 %v627
    %v3029 = vunpack.c.h.b16 %v627
    %v3030 = vunpack.c.l.b16 %v628
    %v3031 = vunpack.c.h.b16 %v628
    %v3032 = vunpack.c.l.b16 %v629
    %v3033 = vunpack.c.h.b16 %v629
    %v3034 = vunpack.c.l.b16 %v630
    %v3035 = vunpack.c.h.b16 %v630
    %v3036 = vunpack.c.l.b16 %v631
    %v3037 = vunpack.c.h.b16 %v631
    %v3038 = vunpack.c.l.b16 %v632
    %v3039 = vunpack.c.h.b16 %v632
    %v3040 = vunpack.c.l.b16 %v633
    %v3041 = vunpack.c.h.b16 %v633
    %v3042 = vunpack.c.l.b16 %v634
    %v3043 = vunpack.c.h.b16 %v634
    %v3044 = vunpack.c.l.b16 %v635
    %v3045 = vunpack.c.h.b16 %v635
    %v3046 = vunpack.c.l.b16 %v636
    %v3047 = vunpack.c.h.b16 %v636
    %v3048 = vunpack.c.l.b16 %v637
    %v3049 = vunpack.c.h.b16 %v637
    %v3050 = vunpack.c.l.b16 %v638
    %v3051 = vunpack.c.h.b16 %v638
    %v3052 = vunpack.c.l.b16 %v639
    %v3053 = vunpack.c.h.b16 %v639
    %v3054 = vunpack.c.l.b16 %v640
    %v3055 = vunpack.c.h.b16 %v640
    %v3056 = vunpack.c.l.b16 %v641
    %v3057 = vunpack.c.h.b16 %v641
    %v3058 = vunpack.c.l.b16 %v642
    %v3059 = vunpack.c.h.b16 %v642
    %v3060 = vunpack.c.l.b16 %v643
    %v3061 = vunpack.c.h.b16 %v643
    %v3062 = vunpack.c.l.b16 %v644
    %v3063 = vunpack.c.h.b16 %v644
    %v3064 = vunpack.c.l.b16 %v645
    %v3065 = vunpack.c.h.b16 %v645
    %v3066 = vunpack.c.l.b16 %v646
    %v3067 = vunpack.c.h.b16 %v646
    %v3068 = vunpack.c.l.b16 %v647
    %v3069 = vunpack.c.h.b16 %v647
    %v3070 = vunpack.c.l.b16 %v648
    %v3071 = vunpack.c.h.b16 %v648
    %v3072 = vunpack.c.l.b16 %v649
    %v3073 = vunpack.c.h.b16 %v649
    %v3074 = vunpack.c.l.b16 %v650
    %v3075 = vunpack.c.h.b16 %v650
    %v3076 = vunpack.c.l.b16 %v651
    %v3077 = vunpack.c.h.b16 %v651
    %v3078 = vunpack.c.l.b16 %v652
    %v3079 = vunpack.c.h.b16 %v652
    %v3080 = vunpack.c.l.b16 %v653
    %v3081 = vunpack.c.h.b16 %v653
    %v3082 = vunpack.c.l.b16 %v654
    %v3083 = vunpack.c.h.b16 %v654
    %v3084 = vunpack.c.l.b16 %v655
    %v3085 = vunpack.c.h.b16 %v655
    %v3086 = vunpack.c.l.b16 %v656
    %v3087 = vunpack.c.h.b16 %v656
    %v3088 = vunpack.c.l.b16 %v657
    %v3089 = vunpack.c.h.b16 %v657
    %v3090 = vunpack.c.l.b16 %v658
    %v3091 = vunpack.c.h.b16 %v658
    %v3092 = vunpack.c.l.b16 %v659
    %v3093 = vunpack.c.h.b16 %v659
    %v3094 = vunpack.c.l.b16 %v660
    %v3095 = vunpack.c.h.b16 %v660
    %v3096 = vunpack.c.l.b16 %v661
    %v3097 = vunpack.c.h.b16 %v661
    %v3098 = vunpack.c.l.b16 %v662
    %v3099 = vunpack.c.h.b16 %v662
    %v3100 = vunpack.c.l.b16 %v663
    %v3101 = vunpack.c.h.b16 %v663
    %v3102 = vunpack.c.l.b16 %v664
    %v3103 = vunpack.c.h.b16 %v664
    %v3104 = vunpack.c.l.b16 %v665
    %v3105 = vunpack.c.h.b16 %v665
    %v3106 = vunpack.c.l.b16 %v666
    %v3107 = vunpack.c.h.b16 %v666
    %v3108 = vunpack.c.l.b16 %v667
    %v3109 = vunpack.c.h.b16 %v667
    %v3110 = vunpack.c.l.b16 %v668
    %v3111 = vunpack.c.h.b16 %v668
    %v3112 = vunpack.c.l.b16 %v669
    %v3113 = vunpack.c.h.b16 %v669
    %v3114 = vunpack.c.l.b16 %v670
    %v3115 = vunpack.c.h.b16 %v670
    %v3116 = vunpack.c.l.b16 %v671
    %v3117 = vunpack.c.h.b16 %v671
    %v3118 = vunpack.c.l.b16 %v672
    %v3119 = vunpack.c.h.b16 %v672
    %v3120 = vunpack.c.l.b16 %v673
    %v3121 = vunpack.c.h.b16 %v673
    %v3122 = vunpack.c.l.b16 %v674
    %v3123 = vunpack.c.h.b16 %v674
    %v3124 = vunpack.c.l.b16 %v675
    %v3125 = vunpack.c.h.b16 %v675
    %v3126 = vunpack.c.l.b16 %v676
    %v3127 = vunpack.c.h.b16 %v676
    %v3128 = vunpack.c.l.b16 %v677
    %v3129 = vunpack.c.h.b16 %v677
    %v3130 = vunpack.c.l.b16 %v678
    %v3131 = vunpack.c.h.b16 %v678
    %v3132 = vunpack.c.l.b16 %v679
    %v3133 = vunpack.c.h.b16 %v679
    %v3134 = vunpack.c.l.b16 %v680
    %v3135 = vunpack.c.h.b16 %v680
    %v3136 = vunpack.c.l.b16 %v681
    %v3137 = vunpack.c.h.b16 %v681
    %v3138 = vunpack.c.l.b16 %v682
    %v3139 = vunpack.c.h.b16 %v682
    %v3140 = vunpack.c.l.b16 %v683
    %v3141 = vunpack.c.h.b16 %v683
    %v3142 = vunpack.c.l.b16 %v684
    %v3143 = vunpack.c.h.b16 %v684
    %v3144 = vunpack.c.l.b16 %v685
    %v3145 = vunpack.c.h.b16 %v685
    %v3146 = vunpack.c.l.b16 %v686
    %v3147 = vunpack.c.h.b16 %v686
    %v3148 = vunpack.c.l.b16 %v687
    %v3149 = vunpack.c.h.b16 %v687
    %v3150 = vunpack.c.l.b16 %v688
    %v3151 = vunpack.c.h.b16 %v688
    %v3152 = vunpack.c.l.b16 %v689
    %v3153 = vunpack.c.h.b16 %v689
    %v3154 = vunpack.c.l.b16 %v690
    %v3155 = vunpack.c.h.b16 %v690
    %v3156 = vunpack.c.l.b16 %v691
    %v3157 = vunpack.c.h.b16 %v691
    %v3158 = vunpack.c.l.b16 %v692
    %v3159 = vunpack.c.h.b16 %v692
    %v3160 = vunpack.c.l.b16 %v693
    %v3161 = vunpack.c.h.b16 %v693
    %v3162 = vunpack.c.l.b16 %v694
    %v3163 = vunpack.c.h.b16 %v694
    %v3164 = vunpack.c.l.b16 %v695
    %v3165 = vunpack.c.h.b16 %v695
    %v3166 = vunpack.c.l.b16 %v696
    %v3167 = vunpack.c.h.b16 %v696
    %v3168 = vunpack.c.l.b16 %v697
    %v3169 = vunpack.c.h.b16 %v697
    %v3170 = vunpack.c.l.b16 %v698
    %v3171 = vunpack.c.h.b16 %v698
    %v3172 = vunpack.c.l.b16 %v699
    %v3173 = vunpack.c.h.b16 %v699
    %v3174 = vunpack.c.l.b16 %v700
    %v3175 = vunpack.c.h.b16 %v700
    %v3176 = vunpack.c.l.b16 %v701
    %v3177 = vunpack.c.h.b16 %v701
    %v3178 = vunpack.c.l.b16 %v702
    %v3179 = vunpack.c.h.b16 %v702
    %v3180 = vunpack.c.l.b16 %v703
    %v3181 = vunpack.c.h.b16 %v703
    %v3182 = vunpack.c.l.b16 %v704
    %v3183 = vunpack.c.h.b16 %v704
    %v3184 = vunpack.c.l.b16 %v705
    %v3185 = vunpack.c.h.b16 %v705
    %v3186 = vunpack.c.l.b16 %v706
    %v3187 = vunpack.c.h.b16 %v706
    %v3188 = vunpack.c.l.b16 %v707
    %v3189 = vunpack.c.h.b16 %v707
    %v3190 = vunpack.c.l.b16 %v708
    %v3191 = vunpack.c.h.b16 %v708
    %v3192 = vunpack.c.l.b16 %v709
    %v3193 = vunpack.c.h.b16 %v709
    %v3194 = vunpack.c.l.b16 %v710
    %v3195 = vunpack.c.h.b16 %v710
    %v3196 = vunpack.c.l.b16 %v711
    %v3197 = vunpack.c.h.b16 %v711
    %v3198 = vunpack.c.l.b16 %v712
    %v3199 = vunpack.c.h.b16 %v712
    %v3200 = vunpack.c.l.b16 %v713
    %v3201 = vunpack.c.h.b16 %v713
    %v3202 = vunpack.c.l.b16 %v714
    %v3203 = vunpack.c.h.b16 %v714
    %v3204 = vunpack.c.l.b16 %v715
    %v3205 = vunpack.c.h.b16 %v715
    %v3206 = vunpack.c.l.b16 %v716
    %v3207 = vunpack.c.h.b16 %v716
    %v3208 = vunpack.c.l.b16 %v717
    %v3209 = vunpack.c.h.b16 %v717
    %v3210 = vunpack.c.l.b16 %v718
    %v3211 = vunpack.c.h.b16 %v718
    %v3212 = vunpack.c.l.b16 %v719
    %v3213 = vunpack.c.h.b16 %v719
    %v3214 = vunpack.c.l.b16 %v720
    %v3215 = vunpack.c.h.b16 %v720
    %v3216 = vunpack.c.l.b16 %v721
    %v3217 = vunpack.c.h.b16 %v721
    %v3218 = vunpack.c.l.b16 %v722
    %v3219 = vunpack.c.h.b16 %v722
    %v3220 = vunpack.c.l.b16 %v723
    %v3221 = vunpack.c.h.b16 %v723
    %v3222 = vunpack.c.l.b16 %v724
    %v3223 = vunpack.c.h.b16 %v724
    %v3224 = vunpack.c.l.b16 %v725
    %v3225 = vunpack.c.h.b16 %v725
    %v3226 = vunpack.c.l.b16 %v726
    %v3227 = vunpack.c.h.b16 %v726
    %v3228 = vunpack.c.l.b16 %v727
    %v3229 = vunpack.c.h.b16 %v727
    %v3230 = vunpack.c.l.b16 %v728
    %v3231 = vunpack.c.h.b16 %v728
    %v3232 = vunpack.c.l.b16 %v729
    %v3233 = vunpack.c.h.b16 %v729
    %v3234 = vunpack.c.l.b16 %v730
    %v3235 = vunpack.c.h.b16 %v730
    %v3236 = vunpack.c.l.b16 %v731
    %v3237 = vunpack.c.h.b16 %v731
    %v3238 = vunpack.c.l.b16 %v732
    %v3239 = vunpack.c.h.b16 %v732
    %v3240 = vunpack.c.l.b16 %v733
    %v3241 = vunpack.c.h.b16 %v733
    %v3242 = vunpack.c.l.b16 %v734
    %v3243 = vunpack.c.h.b16 %v734
    %v3244 = vunpack.c.l.b16 %v735
    %v3245 = vunpack.c.h.b16 %v735
    %v3246 = vunpack.c.l.b16 %v736
    %v3247 = vunpack.c.h.b16 %v736
    %v3248 = vunpack.c.l.b16 %v737
    %v3249 = vunpack.c.h.b16 %v737
    %v3250 = vunpack.c.l.b16 %v738
    %v3251 = vunpack.c.h.b16 %v738
    %v3252 = vunpack.c.l.b16 %v739
    %v3253 = vunpack.c.h.b16 %v739
    %v3254 = vunpack.c.l.b16 %v740
    %v3255 = vunpack.c.h.b16 %v740
    %v3256 = vunpack.c.l.b16 %v741
    %v3257 = vunpack.c.h.b16 %v741
    %v3258 = vunpack.c.l.b16 %v742
    %v3259 = vunpack.c.h.b16 %v742
    %v3260 = vunpack.c.l.b16 %v743
    %v3261 = vunpack.c.h.b16 %v743
    %v3262 = vunpack.c.l.b16 %v744
    %v3263 = vunpack.c.h.b16 %v744
    %v3264 = vunpack.c.l.b16 %v745
    %v3265 = vunpack.c.h.b16 %v745
    %v3266 = vunpack.c.l.b16 %v746
    %v3267 = vunpack.c.h.b16 %v746
    %v3268 = vunpack.c.l.b16 %v747
    %v3269 = vunpack.c.h.b16 %v747
    %v3270 = vunpack.c.l.b16 %v748
    %v3271 = vunpack.c.h.b16 %v748
    %v3272 = vunpack.c.l.b16 %v749
    %v3273 = vunpack.c.h.b16 %v749
    %v3274 = vunpack.c.l.b16 %v750
    %v3275 = vunpack.c.h.b16 %v750
    %v3276 = vunpack.c.l.b16 %v751
    %v3277 = vunpack.c.h.b16 %v751
    %v3278 = vunpack.c.l.b16 %v752
    %v3279 = vunpack.c.h.b16 %v752
    %v3280 = vunpack.c.l.b16 %v753
    %v3281 = vunpack.c.h.b16 %v753
    %v3282 = vunpack.c.l.b16 %v754
    %v3283 = vunpack.c.h.b16 %v754
    %v3284 = vunpack.c.l.b16 %v755
    %v3285 = vunpack.c.h.b16 %v755
    %v3286 = vunpack.c.l.b16 %v756
    %v3287 = vunpack.c.h.b16 %v756
    %v3288 = vunpack.c.l.b16 %v757
    %v3289 = vunpack.c.h.b16 %v757
    %v3290 = vunpack.c.l.b16 %v758
    %v3291 = vunpack.c.h.b16 %v758
    %v3292 = vunpack.c.l.b16 %v759
    %v3293 = vunpack.c.h.b16 %v759
    %v3294 = vunpack.c.l.b16 %v760
    %v3295 = vunpack.c.h.b16 %v760
    %v3296 = vunpack.c.l.b16 %v761
    %v3297 = vunpack.c.h.b16 %v761
    %v3298 = vunpack.c.l.b16 %v762
    %v3299 = vunpack.c.h.b16 %v762
    %v3300 = vunpack.c.l.b16 %v763
    %v3301 = vunpack.c.h.b16 %v763
    %v3302 = vunpack.c.l.b16 %v764
    %v3303 = vunpack.c.h.b16 %v764
    %v3304 = vunpack.c.l.b16 %v765
    %v3305 = vunpack.c.h.b16 %v765
    %v3306 = vunpack.c.l.b16 %v766
    %v3307 = vunpack.c.h.b16 %v766
    %v3308 = vunpack.c.l.b16 %v767
    %v3309 = vunpack.c.h.b16 %v767
    %v3310 = vunpack.c.l.b16 %v768
    %v3311 = vunpack.c.h.b16 %v768
    %v3312 = vunpack.c.l.b16 %v769
    %v3313 = vunpack.c.h.b16 %v769
    %v3314 = vunpack.c.l.b16 %v770
    %v3315 = vunpack.c.h.b16 %v770
    %v3316 = vunpack.c.l.b16 %v771
    %v3317 = vunpack.c.h.b16 %v771
    %v3318 = vunpack.c.l.b16 %v772
    %v3319 = vunpack.c.h.b16 %v772
    %v3320 = vunpack.c.l.b16 %v773
    %v3321 = vunpack.c.h.b16 %v773
    %v3322 = vunpack.c.l.b16 %v774
    %v3323 = vunpack.c.h.b16 %v774
    %v3324 = vunpack.c.l.b16 %v775
    %v3325 = vunpack.c.h.b16 %v775
    %v3326 = vunpack.c.l.b16 %v776
    %v3327 = vunpack.c.h.b16 %v776
    %v3328 = vunpack.c.l.b16 %v777
    %v3329 = vunpack.c.h.b16 %v777
    %v3330 = vunpack.c.l.b16 %v778
    %v3331 = vunpack.c.h.b16 %v778
    %v3332 = vunpack.c.l.b16 %v779
    %v3333 = vunpack.c.h.b16 %v779
    %v3334 = vunpack.c.l.b16 %v780
    %v3335 = vunpack.c.h.b16 %v780
    %v3336 = vunpack.c.l.b16 %v781
    %v3337 = vunpack.c.h.b16 %v781
    %v3338 = vunpack.c.l.b16 %v782
    %v3339 = vunpack.c.h.b16 %v782
    %v3340 = vunpack.c.l.b16 %v783
    %v3341 = vunpack.c.h.b16 %v783
    %v3342 = vunpack.c.l.b16 %v784
    %v3343 = vunpack.c.h.b16 %v784
    %v3344 = vunpack.c.l.b16 %v785
    %v3345 = vunpack.c.h.b16 %v785
    %v3346 = vunpack.c.l.b16 %v786
    %v3347 = vunpack.c.h.b16 %v786
    %v3348 = vunpack.c.l.b16 %v787
    %v3349 = vunpack.c.h.b16 %v787
    %v3350 = vunpack.c.l.b16 %v788
    %v3351 = vunpack.c.h.b16 %v788
    %v3352 = vunpack.c.l.b16 %v789
    %v3353 = vunpack.c.h.b16 %v789
    %v3354 = vunpack.c.l.b16 %v790
    %v3355 = vunpack.c.h.b16 %v790
    %v3356 = vunpack.c.l.b16 %v791
    %v3357 = vunpack.c.h.b16 %v791
    %v3358 = vunpack.c.l.b16 %v792
    %v3359 = vunpack.c.h.b16 %v792
    %v3360 = vunpack.c.l.b16 %v793
    %v3361 = vunpack.c.h.b16 %v793
    %v3362 = vunpack.c.l.b16 %v794
    %v3363 = vunpack.c.h.b16 %v794
    %v3364 = vunpack.c.l.b16 %v795
    %v3365 = vunpack.c.h.b16 %v795
    %v3366 = vunpack.c.l.b16 %v796
    %v3367 = vunpack.c.h.b16 %v796
    %v3368 = vunpack.c.l.b16 %v797
    %v3369 = vunpack.c.h.b16 %v797
    %v3370 = vunpack.c.l.b16 %v798
    %v3371 = vunpack.c.h.b16 %v798
    %v3372 = vunpack.c.l.b16 %v799
    %v3373 = vunpack.c.h.b16 %v799
    %v3374 = vunpack.c.l.b16 %v800
    %v3375 = vunpack.c.h.b16 %v800
    %v3376 = vunpack.c.l.b16 %v801
    %v3377 = vunpack.c.h.b16 %v801
    %v3378 = vunpack.c.l.b16 %v802
    %v3379 = vunpack.c.h.b16 %v802
    %v3380 = vunpack.c.l.b16 %v803
    %v3381 = vunpack.c.h.b16 %v803
    %v3382 = vunpack.c.l.b16 %v804
    %v3383 = vunpack.c.h.b16 %v804
    %v3384 = vunpack.c.l.b16 %v805
    %v3385 = vunpack.c.h.b16 %v805
    %v3386 = vunpack.c.l.b16 %v806
    %v3387 = vunpack.c.h.b16 %v806
    %v3388 = vunpack.c.l.b16 %v807
    %v3389 = vunpack.c.h.b16 %v807
    %v3390 = vunpack.c.l.b16 %v808
    %v3391 = vunpack.c.h.b16 %v808
    %v3392 = vunpack.c.l.b16 %v809
    %v3393 = vunpack.c.h.b16 %v809
    %v3394 = vunpack.c.l.b16 %v810
    %v3395 = vunpack.c.h.b16 %v810
    %v3396 = vunpack.c.l.b16 %v811
    %v3397 = vunpack.c.h.b16 %v811
    %v3398 = vunpack.c.l.b16 %v812
    %v3399 = vunpack.c.h.b16 %v812
    %v3400 = vunpack.c.l.b16 %v813
    %v3401 = vunpack.c.h.b16 %v813
    %v3402 = vunpack.c.l.b16 %v814
    %v3403 = vunpack.c.h.b16 %v814
    %v3404 = vunpack.c.l.b16 %v815
    %v3405 = vunpack.c.h.b16 %v815
    %v3406 = vunpack.c.l.b16 %v816
    %v3407 = vunpack.c.h.b16 %v816
    %v3408 = vunpack.c.l.b16 %v817
    %v3409 = vunpack.c.h.b16 %v817
    %v3410 = vunpack.c.l.b16 %v818
    %v3411 = vunpack.c.h.b16 %v818
    %v3412 = vunpack.c.l.b16 %v819
    %v3413 = vunpack.c.h.b16 %v819
    %v3414 = vunpack.c.l.b16 %v820
    %v3415 = vunpack.c.h.b16 %v820
    %v3416 = vunpack.c.l.b16 %v821
    %v3417 = vunpack.c.h.b16 %v821
    %v3418 = vunpack.c.l.b16 %v822
    %v3419 = vunpack.c.h.b16 %v822
    %v3420 = vunpack.c.l.b16 %v823
    %v3421 = vunpack.c.h.b16 %v823
    %v3422 = vunpack.c.l.b16 %v824
    %v3423 = vunpack.c.h.b16 %v824
    %v3424 = vunpack.c.l.b16 %v825
    %v3425 = vunpack.c.h.b16 %v825
    %v3426 = vunpack.c.l.b16 %v826
    %v3427 = vunpack.c.h.b16 %v826
    %v3428 = vunpack.c.l.b16 %v827
    %v3429 = vunpack.c.h.b16 %v827
    %v3430 = vunpack.c.l.b16 %v828
    %v3431 = vunpack.c.h.b16 %v828
    %v3432 = vunpack.c.l.b16 %v829
    %v3433 = vunpack.c.h.b16 %v829
    %v3434 = vunpack.c.l.b16 %v830
    %v3435 = vunpack.c.h.b16 %v830
    %v3436 = vunpack.c.l.b16 %v831
    %v3437 = vunpack.c.h.b16 %v831
    %v3438 = vunpack.c.l.b16 %v832
    %v3439 = vunpack.c.h.b16 %v832
    %v3440 = vunpack.c.l.b16 %v833
    %v3441 = vunpack.c.h.b16 %v833
    %v3442 = vunpack.c.l.b16 %v834
    %v3443 = vunpack.c.h.b16 %v834
    %v3444 = vunpack.c.l.b16 %v835
    %v3445 = vunpack.c.h.b16 %v835
    %v3446 = vunpack.c.l.b16 %v836
    %v3447 = vunpack.c.h.b16 %v836
    %v3448 = vunpack.c.l.b16 %v837
    %v3449 = vunpack.c.h.b16 %v837
    %v3450 = vunpack.c.l.b16 %v838
    %v3451 = vunpack.c.h.b16 %v838
    %v3452 = vunpack.c.l.b16 %v839
    %v3453 = vunpack.c.h.b16 %v839
    %v3454 = vunpack.c.l.b16 %v840
    %v3455 = vunpack.c.h.b16 %v840
    %v3456 = vunpack.c.l.b16 %v841
    %v3457 = vunpack.c.h.b16 %v841
    %v3458 = vunpack.c.l.b16 %v842
    %v3459 = vunpack.c.h.b16 %v842
    %v3460 = vunpack.c.l.b16 %v843
    %v3461 = vunpack.c.h.b16 %v843
    %v3462 = vunpack.c.l.b16 %v844
    %v3463 = vunpack.c.h.b16 %v844
    %v3464 = vunpack.c.l.b16 %v845
    %v3465 = vunpack.c.h.b16 %v845
    %v3466 = vunpack.c.l.b16 %v846
    %v3467 = vunpack.c.h.b16 %v846
    %v3468 = vunpack.c.l.b16 %v847
    %v3469 = vunpack.c.h.b16 %v847
    %v3470 = vunpack.c.l.b16 %v848
    %v3471 = vunpack.c.h.b16 %v848
    %v3472 = vunpack.c.l.b16 %v849
    %v3473 = vunpack.c.h.b16 %v849
    %v3474 = vunpack.c.l.b16 %v850
    %v3475 = vunpack.c.h.b16 %v850
    %v3476 = vunpack.c.l.b16 %v851
    %v3477 = vunpack.c.h.b16 %v851
    %v3478 = vunpack.c.l.b16 %v852
    %v3479 = vunpack.c.h.b16 %v852
    %v3480 = vunpack.c.l.b16 %v853
    %v3481 = vunpack.c.h.b16 %v853
    %v3482 = vunpack.c.l.b16 %v854
    %v3483 = vunpack.c.h.b16 %v854
    %v3484 = vunpack.c.l.b16 %v855
    %v3485 = vunpack.c.h.b16 %v855
    %v3486 = vunpack.c.l.b16 %v856
    %v3487 = vunpack.c.h.b16 %v856
    %v3488 = vunpack.c.l.b16 %v857
    %v3489 = vunpack.c.h.b16 %v857
    %v3490 = vunpack.c.l.b16 %v858
    %v3491 = vunpack.c.h.b16 %v858
    %v3492 = vunpack.c.l.b16 %v859
    %v3493 = vunpack.c.h.b16 %v859
    %v3494 = vunpack.c.l.b16 %v860
    %v3495 = vunpack.c.h.b16 %v860
    %v3496 = vunpack.c.l.b16 %v861
    %v3497 = vunpack.c.h.b16 %v861
    %v3498 = vunpack.c.l.b16 %v862
    %v3499 = vunpack.c.h.b16 %v862
    %v3500 = vunpack.c.l.b16 %v863
    %v3501 = vunpack.c.h.b16 %v863
    %v3502 = vunpack.c.l.b16 %v864
    %v3503 = vunpack.c.h.b16 %v864
    %v3504 = vunpack.c.l.b16 %v865
    %v3505 = vunpack.c.h.b16 %v865
    %v3506 = vunpack.c.l.b16 %v866
    %v3507 = vunpack.c.h.b16 %v866
    %v3508 = vunpack.c.l.b16 %v867
    %v3509 = vunpack.c.h.b16 %v867
    %v3510 = vunpack.c.l.b16 %v868
    %v3511 = vunpack.c.h.b16 %v868
    %v3512 = vunpack.c.l.b16 %v869
    %v3513 = vunpack.c.h.b16 %v869
    %v3514 = vunpack.c.l.b16 %v870
    %v3515 = vunpack.c.h.b16 %v870
    %v3516 = vunpack.c.l.b16 %v871
    %v3517 = vunpack.c.h.b16 %v871
    %v3518 = vunpack.c.l.b16 %v872
    %v3519 = vunpack.c.h.b16 %v872
    %v3520 = vunpack.c.l.b16 %v873
    %v3521 = vunpack.c.h.b16 %v873
    %v3522 = vunpack.c.l.b16 %v874
    %v3523 = vunpack.c.h.b16 %v874
    %v3524 = vunpack.c.l.b16 %v875
    %v3525 = vunpack.c.h.b16 %v875
    %v3526 = vunpack.c.l.b16 %v876
    %v3527 = vunpack.c.h.b16 %v876
    %v3528 = vunpack.c.l.b16 %v877
    %v3529 = vunpack.c.h.b16 %v877
    %v3530 = vunpack.c.l.b16 %v878
    %v3531 = vunpack.c.h.b16 %v878
    %v3532 = vunpack.c.l.b16 %v879
    %v3533 = vunpack.c.h.b16 %v879
    %v3534 = vunpack.c.l.b16 %v880
    %v3535 = vunpack.c.h.b16 %v880
    %v3536 = vunpack.c.l.b16 %v881
    %v3537 = vunpack.c.h.b16 %v881
    %v3538 = vunpack.c.l.b16 %v882
    %v3539 = vunpack.c.h.b16 %v882
    %v3540 = vunpack.c.l.b16 %v883
    %v3541 = vunpack.c.h.b16 %v883
    %v3542 = vunpack.c.l.b16 %v884
    %v3543 = vunpack.c.h.b16 %v884
    %v3544 = vunpack.c.l.b16 %v885
    %v3545 = vunpack.c.h.b16 %v885
    %v3546 = vunpack.c.l.b16 %v886
    %v3547 = vunpack.c.h.b16 %v886
    %v3548 = vunpack.c.l.b16 %v887
    %v3549 = vunpack.c.h.b16 %v887
    %v3550 = vunpack.c.l.b16 %v888
    %v3551 = vunpack.c.h.b16 %v888
    %v3552 = vunpack.c.l.b16 %v889
    %v3553 = vunpack.c.h.b16 %v889
    %v3554 = vunpack.c.l.b16 %v890
    %v3555 = vunpack.c.h.b16 %v890
    %v3556 = vunpack.c.l.b16 %v891
    %v3557 = vunpack.c.h.b16 %v891
    %v3558 = vunpack.c.l.b16 %v892
    %v3559 = vunpack.c.h.b16 %v892
    %v3560 = vunpack.c.l.b16 %v893
    %v3561 = vunpack.c.h.b16 %v893
    %v3562 = vunpack.c.l.b16 %v894
    %v3563 = vunpack.c.h.b16 %v894
    %v3564 = vunpack.c.l.b16 %v895
    %v3565 = vunpack.c.h.b16 %v895
    %v3566 = vunpack.c.l.b16 %v896
    %v3567 = vunpack.c.h.b16 %v896
    %v3568 = vunpack.c.l.b16 %v897
    %v3569 = vunpack.c.h.b16 %v897
    %v3570 = vunpack.c.l.b16 %v898
    %v3571 = vunpack.c.h.b16 %v898
    %v3572 = vunpack.c.l.b16 %v899
    %v3573 = vunpack.c.h.b16 %v899
    %v3574 = vunpack.c.l.b16 %v900
    %v3575 = vunpack.c.h.b16 %v900
    %v3576 = vunpack.c.l.b16 %v901
    %v3577 = vunpack.c.h.b16 %v901
    %v3578 = vunpack.c.l.b16 %v902
    %v3579 = vunpack.c.h.b16 %v902
    %v3580 = vunpack.c.l.b16 %v903
    %v3581 = vunpack.c.h.b16 %v903
    %v3582 = vunpack.c.l.b16 %v904
    %v3583 = vunpack.c.h.b16 %v904
    %v3584 = vunpack.c.l.b16 %v905
    %v3585 = vunpack.c.h.b16 %v905
    %v3586 = vunpack.c.l.b16 %v906
    %v3587 = vunpack.c.h.b16 %v906
    %v3588 = vunpack.c.l.b16 %v907
    %v3589 = vunpack.c.h.b16 %v907
    %v3590 = vunpack.c.l.b16 %v908
    %v3591 = vunpack.c.h.b16 %v908
    %v3592 = vunpack.c.l.b16 %v909
    %v3593 = vunpack.c.h.b16 %v909
    %v3594 = vunpack.c.l.b16 %v910
    %v3595 = vunpack.c.h.b16 %v910
    %v3596 = vunpack.c.l.b16 %v911
    %v3597 = vunpack.c.h.b16 %v911
    %v3598 = vunpack.c.l.b16 %v912
    %v3599 = vunpack.c.h.b16 %v912
    %v3600 = vunpack.c.l.b16 %v913
    %v3601 = vunpack.c.h.b16 %v913
    %v3602 = vunpack.c.l.b16 %v914
    %v3603 = vunpack.c.h.b16 %v914
    %v3604 = vunpack.c.l.b16 %v915
    %v3605 = vunpack.c.h.b16 %v915
    %v3606 = vunpack.c.l.b16 %v916
    %v3607 = vunpack.c.h.b16 %v916
    %v3608 = vunpack.c.l.b16 %v917
    %v3609 = vunpack.c.h.b16 %v917
    %v3610 = vunpack.c.l.b16 %v918
    %v3611 = vunpack.c.h.b16 %v918
    %v3612 = vunpack.c.l.b16 %v919
    %v3613 = vunpack.c.h.b16 %v919
    %v3614 = vunpack.c.l.b16 %v920
    %v3615 = vunpack.c.h.b16 %v920
    %v3616 = vunpack.c.l.b16 %v921
    %v3617 = vunpack.c.h.b16 %v921
    %v3618 = vunpack.c.l.b16 %v922
    %v3619 = vunpack.c.h.b16 %v922
    %v3620 = vunpack.c.l.b16 %v923
    %v3621 = vunpack.c.h.b16 %v923
    %v3622 = vunpack.c.l.b16 %v924
    %v3623 = vunpack.c.h.b16 %v924
    %v3624 = vunpack.c.l.b16 %v925
    %v3625 = vunpack.c.h.b16 %v925
    %v3626 = vunpack.c.l.b16 %v926
    %v3627 = vunpack.c.h.b16 %v926
    %v3628 = vunpack.c.l.b16 %v927
    %v3629 = vunpack.c.h.b16 %v927
    %v3630 = vunpack.c.l.b16 %v928
    %v3631 = vunpack.c.h.b16 %v928
    %v3632 = vunpack.c.l.b16 %v929
    %v3633 = vunpack.c.h.b16 %v929
    %v3634 = vunpack.c.l.b16 %v930
    %v3635 = vunpack.c.h.b16 %v930
    %v3636 = vunpack.c.l.b16 %v931
    %v3637 = vunpack.c.h.b16 %v931
    %v3638 = vunpack.c.l.b16 %v932
    %v3639 = vunpack.c.h.b16 %v932
    %v3640 = vunpack.c.l.b16 %v933
    %v3641 = vunpack.c.h.b16 %v933
    %v3642 = vunpack.c.l.b16 %v934
    %v3643 = vunpack.c.h.b16 %v934
    %v3644 = vunpack.c.l.b16 %v935
    %v3645 = vunpack.c.h.b16 %v935
    %v3646 = vunpack.c.l.b16 %v936
    %v3647 = vunpack.c.h.b16 %v936
    %v3648 = vunpack.c.l.b16 %v937
    %v3649 = vunpack.c.h.b16 %v937
    %v3650 = vunpack.c.l.b16 %v938
    %v3651 = vunpack.c.h.b16 %v938
    %v3652 = vunpack.c.l.b16 %v939
    %v3653 = vunpack.c.h.b16 %v939
    %v3654 = vunpack.c.l.b16 %v940
    %v3655 = vunpack.c.h.b16 %v940
    %v3656 = vunpack.c.l.b16 %v941
    %v3657 = vunpack.c.h.b16 %v941
    %v3658 = vunpack.c.l.b16 %v942
    %v3659 = vunpack.c.h.b16 %v942
    %v3660 = vunpack.c.l.b16 %v943
    %v3661 = vunpack.c.h.b16 %v943
    %v3662 = vunpack.c.l.b16 %v944
    %v3663 = vunpack.c.h.b16 %v944
    %v3664 = vunpack.c.l.b16 %v945
    %v3665 = vunpack.c.h.b16 %v945
    %v3666 = vunpack.c.l.b16 %v946
    %v3667 = vunpack.c.h.b16 %v946
    %v3668 = vunpack.c.l.b16 %v947
    %v3669 = vunpack.c.h.b16 %v947
    %v3670 = vunpack.c.l.b16 %v948
    %v3671 = vunpack.c.h.b16 %v948
    %v3672 = vunpack.c.l.b16 %v949
    %v3673 = vunpack.c.h.b16 %v949
    %v3674 = vunpack.c.l.b16 %v950
    %v3675 = vunpack.c.h.b16 %v950
    %v3676 = vunpack.c.l.b16 %v951
    %v3677 = vunpack.c.h.b16 %v951
    %v3678 = vunpack.c.l.b16 %v952
    %v3679 = vunpack.c.h.b16 %v952
    %v3680 = vunpack.c.l.b16 %v953
    %v3681 = vunpack.c.h.b16 %v953
    %v3682 = vunpack.c.l.b16 %v954
    %v3683 = vunpack.c.h.b16 %v954
    %v3684 = vunpack.c.l.b16 %v955
    %v3685 = vunpack.c.h.b16 %v955
    %v3686 = vunpack.c.l.b16 %v956
    %v3687 = vunpack.c.h.b16 %v956
    %v3688 = vunpack.c.l.b16 %v957
    %v3689 = vunpack.c.h.b16 %v957
    %v3690 = vunpack.c.l.b16 %v958
    %v3691 = vunpack.c.h.b16 %v958
    %v3692 = vunpack.c.l.b16 %v959
    %v3693 = vunpack.c.h.b16 %v959
    %v3694 = vunpack.c.l.b16 %v960
    %v3695 = vunpack.c.h.b16 %v960
    %v3696 = vunpack.c.l.b16 %v961
    %v3697 = vunpack.c.h.b16 %v961
    %v3698 = vunpack.c.l.b16 %v962
    %v3699 = vunpack.c.h.b16 %v962
    %v3700 = vunpack.c.l.b16 %v963
    %v3701 = vunpack.c.h.b16 %v963
    %v3702 = vunpack.c.l.b16 %v964
    %v3703 = vunpack.c.h.b16 %v964
    %v3704 = vunpack.c.l.b16 %v965
    %v3705 = vunpack.c.h.b16 %v965
    %v3706 = vunpack.c.l.b16 %v966
    %v3707 = vunpack.c.h.b16 %v966
    %v3708 = vunpack.c.l.b16 %v967
    %v3709 = vunpack.c.h.b16 %v967
    %v3710 = vunpack.c.l.b16 %v968
    %v3711 = vunpack.c.h.b16 %v968
    %v3712 = vunpack.c.l.b16 %v969
    %v3713 = vunpack.c.h.b16 %v969
    %v3714 = vunpack.c.l.b16 %v970
    %v3715 = vunpack.c.h.b16 %v970
    %v3716 = vunpack.c.l.b16 %v971
    %v3717 = vunpack.c.h.b16 %v971
    %v3718 = vunpack.c.l.b16 %v972
    %v3719 = vunpack.c.h.b16 %v972
    %v3720 = vunpack.c.l.b16 %v973
    %v3721 = vunpack.c.h.b16 %v973
    %v3722 = vunpack.c.l.b16 %v974
    %v3723 = vunpack.c.h.b16 %v974
    %v3724 = vunpack.c.l.b16 %v975
    %v3725 = vunpack.c.h.b16 %v975
    %v3726 = vunpack.c.l.b16 %v976
    %v3727 = vunpack.c.h.b16 %v976
    %v3728 = vunpack.c.l.b16 %v977
    %v3729 = vunpack.c.h.b16 %v977
    %v3730 = vunpack.c.l.b16 %v978
    %v3731 = vunpack.c.h.b16 %v978
    %v3732 = vunpack.c.l.b16 %v979
    %v3733 = vunpack.c.h.b16 %v979
    %v3734 = vunpack.c.l.b16 %v980
    %v3735 = vunpack.c.h.b16 %v980
    %v3736 = vunpack.c.l.b16 %v981
    %v3737 = vunpack.c.h.b16 %v981
    %v3738 = vunpack.c.l.b16 %v982
    %v3739 = vunpack.c.h.b16 %v982
    %v3740 = vunpack.c.l.b16 %v983
    %v3741 = vunpack.c.h.b16 %v983
    %v3742 = vunpack.c.l.b16 %v984
    %v3743 = vunpack.c.h.b16 %v984
    %v3744 = vunpack.c.l.b16 %v985
    %v3745 = vunpack.c.h.b16 %v985
    %v3746 = vunpack.c.l.b16 %v986
    %v3747 = vunpack.c.h.b16 %v986
    %v3748 = vunpack.c.l.b16 %v987
    %v3749 = vunpack.c.h.b16 %v987
    %v3750 = vunpack.c.l.b16 %v988
    %v3751 = vunpack.c.h.b16 %v988
    %v3752 = vunpack.c.l.b16 %v989
    %v3753 = vunpack.c.h.b16 %v989
    %v3754 = vunpack.c.l.b16 %v990
    %v3755 = vunpack.c.h.b16 %v990
    %v3756 = vunpack.c.l.b16 %v991
    %v3757 = vunpack.c.h.b16 %v991
    %v3758 = vunpack.c.l.b16 %v992
    %v3759 = vunpack.c.h.b16 %v992
    %v3760 = vunpack.c.l.b16 %v993
    %v3761 = vunpack.c.h.b16 %v993
    %v3762 = vunpack.c.l.b16 %v994
    %v3763 = vunpack.c.h.b16 %v994
    %v3764 = vunpack.c.l.b16 %v995
    %v3765 = vunpack.c.h.b16 %v995
    %v3766 = vunpack.c.l.b16 %v996
    %v3767 = vunpack.c.h.b16 %v996
    %v3768 = vunpack.c.l.b16 %v997
    %v3769 = vunpack.c.h.b16 %v997
    %v3770 = vunpack.c.l.b16 %v998
    %v3771 = vunpack.c.h.b16 %v998
    %v3772 = vunpack.c.l.b16 %v999
    %v3773 = vunpack.c.h.b16 %v999
    %v3774 = vunpack.c.l.b16 %v1000
    %v3775 = vunpack.c.h.b16 %v1000
    %v3776 = vunpack.c.l.b16 %v1001
    %v3777 = vunpack.c.h.b16 %v1001
    %v3778 = vunpack.c.l.b16 %v1002
    %v3779 = vunpack.c.h.b16 %v1002
    %v3780 = vunpack.c.l.b16 %v1003
    %v3781 = vunpack.c.h.b16 %v1003
    %v3782 = vunpack.c.l.b16 %v1004
    %v3783 = vunpack.c.h.b16 %v1004
    %v3784 = vunpack.c.l.b16 %v1005
    %v3785 = vunpack.c.h.b16 %v1005
    %v3786 = vunpack.c.l.b16 %v1006
    %v3787 = vunpack.c.h.b16 %v1006
    %v3788 = vunpack.c.l.b16 %v1007
    %v3789 = vunpack.c.h.b16 %v1007
    %v3790 = vunpack.c.l.b16 %v1008
    %v3791 = vunpack.c.h.b16 %v1008
    %v3792 = vunpack.c.l.b16 %v1009
    %v3793 = vunpack.c.h.b16 %v1009
    %v3794 = vunpack.c.l.b16 %v1010
    %v3795 = vunpack.c.h.b16 %v1010
    %v3796 = vunpack.c.l.b16 %v1011
    %v3797 = vunpack.c.h.b16 %v1011
    %v3798 = vunpack.c.l.b16 %v1012
    %v3799 = vunpack.c.h.b16 %v1012
    %v3800 = vunpack.c.l.b16 %v1013
    %v3801 = vunpack.c.h.b16 %v1013
    %v3802 = vunpack.c.l.b16 %v1014
    %v3803 = vunpack.c.h.b16 %v1014
    %v3804 = vunpack.c.l.b16 %v1015
    %v3805 = vunpack.c.h.b16 %v1015
    %v3806 = vunpack.c.l.b16 %v1016
    %v3807 = vunpack.c.h.b16 %v1016
    %v3808 = vunpack.c.l.b16 %v1017
    %v3809 = vunpack.c.h.b16 %v1017
    %v3810 = vunpack.c.l.b16 %v1018
    %v3811 = vunpack.c.h.b16 %v1018
    %v3812 = vunpack.c.l.b16 %v1019
    %v3813 = vunpack.c.h.b16 %v1019
    %v3814 = vunpack.c.l.b16 %v1020
    %v3815 = vunpack.c.h.b16 %v1020
    %v3816 = vunpack.c.l.b16 %v1021
    %v3817 = vunpack.c.h.b16 %v1021
    %v3818 = vunpack.c.l.b16 %v1022
    %v3819 = vunpack.c.h.b16 %v1022
    %v3820 = vunpack.c.l.b16 %v1023
    %v3821 = vunpack.c.h.b16 %v1023
    %v3822 = vunpack.c.l.b16 %v1024
    %v3823 = vunpack.c.h.b16 %v1024
    %v3824 = vunpack.c.l.b16 %v1025
    %v3825 = vunpack.c.h.b16 %v1025
    %v3826 = vunpack.c.l.b16 %v1026
    %v3827 = vunpack.c.h.b16 %v1026
    %v3828 = vunpack.c.l.b16 %v1027
    %v3829 = vunpack.c.h.b16 %v1027
    %v3830 = vunpack.c.l.b16 %v1028
    %v3831 = vunpack.c.h.b16 %v1028
    %v3832 = vunpack.c.l.b16 %v1029
    %v3833 = vunpack.c.h.b16 %v1029
    %v3834 = vunpack.c.l.b16 %v1030
    %v3835 = vunpack.c.h.b16 %v1030
    %v3836 = vunpack.c.l.b16 %v1031
    %v3837 = vunpack.c.h.b16 %v1031
    %v3838 = vunpack.c.l.b16 %v1032
    %v3839 = vunpack.c.h.b16 %v1032
    %v3840 = vunpack.c.l.b16 %v1033
    %v3841 = vunpack.c.h.b16 %v1033
    %v3842 = vunpack.c.l.b16 %v1034
    %v3843 = vunpack.c.h.b16 %v1034
    %v3844 = vunpack.c.l.b16 %v1035
    %v3845 = vunpack.c.h.b16 %v1035
    %v3846 = vunpack.c.l.b16 %v1036
    %v3847 = vunpack.c.h.b16 %v1036
    %v3848 = vunpack.c.l.b16 %v1037
    %v3849 = vunpack.c.h.b16 %v1037
    %v3850 = vunpack.c.l.b16 %v1038
    %v3851 = vunpack.c.h.b16 %v1038
    %v3852 = vunpack.c.l.b16 %v1039
    %v3853 = vunpack.c.h.b16 %v1039
    %v3854 = vunpack.c.l.b16 %v1040
    %v3855 = vunpack.c.h.b16 %v1040
    %v3856 = vunpack.c.l.b16 %v1041
    %v3857 = vunpack.c.h.b16 %v1041
    %v3858 = vunpack.c.l.b16 %v1042
    %v3859 = vunpack.c.h.b16 %v1042
    %v3860 = vunpack.c.l.b16 %v1043
    %v3861 = vunpack.c.h.b16 %v1043
    %v3862 = vunpack.c.l.b16 %v1044
    %v3863 = vunpack.c.h.b16 %v1044
    %v3864 = vunpack.c.l.b16 %v1045
    %v3865 = vunpack.c.h.b16 %v1045
    %v3866 = vpack.c.b16 %v2088, %v2074
    %v3867 = vpack.c.b16 %v2089, %v2075
    %v3868 = vpack.c.b16 %v2090, %v2076
    %v3869 = vpack.c.b16 %v2091, %v2077
    %v3870 = vpack.c.b16 %v2092, %v2078
    %v3871 = vpack.c.b16 %v2093, %v2079
    %v3872 = vpack.c.b16 %v2094, %v2080
    %v3873 = vpack.c.b16 %v2095, %v2081
    %v3874 = vpack.c.b16 %v2096, %v2082
    %v3875 = vpack.c.b16 %v2097, %v2083
    %v3876 = vpack.c.b16 %v2098, %v2084
    %v3877 = vpack.c.b16 %v2099, %v2085
    %v3878 = vpack.c.b16 %v2100, %v2086
    %v3879 = vpack.c.b16 %v2101, %v2087
    %v3880 = vpack.c.b16 %v2116, %v2102
    %v3881 = vpack.c.b16 %v2117, %v2103
    %v3882 = vpack.c.b16 %v2118, %v2104
    %v3883 = vpack.c.b16 %v2119, %v2105
    %v3884 = vpack.c.b16 %v2120, %v2106
    %v3885 = vpack.c.b16 %v2121, %v2107
    %v3886 = vpack.c.b16 %v2122, %v2108
    %v3887 = vpack.c.b16 %v2123, %v2109
    %v3888 = vpack.c.b16 %v2124, %v2110
    %v3889 = vpack.c.b16 %v2125, %v2111
    %v3890 = vpack.c.b16 %v2126, %v2112
    %v3891 = vpack.c.b16 %v2127, %v2113
    %v3892 = vpack.c.b16 %v2128, %v2114
    %v3893 = vpack.c.b16 %v2129, %v2115
    %v3894 = vpack.c.b16 %v2144, %v2130
    %v3895 = vpack.c.b16 %v2145, %v2131
    %v3896 = vpack.c.b16 %v2146, %v2132
    %v3897 = vpack.c.b16 %v2147, %v2133
    %v3898 = vpack.c.b16 %v2148, %v2134
    %v3899 = vpack.c.b16 %v2149, %v2135
    %v3900 = vpack.c.b16 %v2150, %v2136
    %v3901 = vpack.c.b16 %v2151, %v2137
    %v3902 = vpack.c.b16 %v2152, %v2138
    %v3903 = vpack.c.b16 %v2153, %v2139
    %v3904 = vpack.c.b16 %v2154, %v2140
    %v3905 = vpack.c.b16 %v2155, %v2141
    %v3906 = vpack.c.b16 %v2156, %v2142
    %v3907 = vpack.c.b16 %v2157, %v2143
    %v3908 = vpack.c.b16 %v2172, %v2158
    %v3909 = vpack.c.b16 %v2173, %v2159
    %v3910 = vpack.c.b16 %v2174, %v2160
    %v3911 = vpack.c.b16 %v2175, %v2161
    %v3912 = vpack.c.b16 %v2176, %v2162
    %v3913 = vpack.c.b16 %v2177, %v2163
    %v3914 = vpack.c.b16 %v2178, %v2164
    %v3915 = vpack.c.b16 %v2179, %v2165
    %v3916 = vpack.c.b16 %v2180, %v2166
    %v3917 = vpack.c.b16 %v2181, %v2167
    %v3918 = vpack.c.b16 %v2182, %v2168
    %v3919 = vpack.c.b16 %v2183, %v2169
    %v3920 = vpack.c.b16 %v2184, %v2170
    %v3921 = vpack.c.b16 %v2185, %v2171
    %v3922 = vpack.c.b16 %v2200, %v2186
    %v3923 = vpack.c.b16 %v2201, %v2187
    %v3924 = vpack.c.b16 %v2202, %v2188
    %v3925 = vpack.c.b16 %v2203, %v2189
    %v3926 = vpack.c.b16 %v2204, %v2190
    %v3927 = vpack.c.b16 %v2205, %v2191
    %v3928 = vpack.c.b16 %v2206, %v2192
    %v3929 = vpack.c.b16 %v2207, %v2193
    %v3930 = vpack.c.b16 %v2208, %v2194
    %v3931 = vpack.c.b16 %v2209, %v2195
    %v3932 = vpack.c.b16 %v2210, %v2196
    %v3933 = vpack.c.b16 %v2211, %v2197
    %v3934 = vpack.c.b16 %v2212, %v2198
    %v3935 = vpack.c.b16 %v2213, %v2199
    %v3936 = vpack.c.b16 %v2228, %v2214
    %v3937 = vpack.c.b16 %v2229, %v2215
    %v3938 = vpack.c.b16 %v2230, %v2216
    %v3939 = vpack.c.b16 %v2231, %v2217
    %v3940 = vpack.c.b16 %v2232, %v2218
    %v3941 = vpack.c.b16 %v2233, %v2219
    %v3942 = vpack.c.b16 %v2234, %v2220
    %v3943 = vpack.c.b16 %v2235, %v2221
    %v3944 = vpack.c.b16 %v2236, %v2222
    %v3945 = vpack.c.b16 %v2237, %v2223
    %v3946 = vpack.c.b16 %v2238, %v2224
    %v3947 = vpack.c.b16 %v2239, %v2225
    %v3948 = vpack.c.b16 %v2240, %v2226
    %v3949 = vpack.c.b16 %v2241, %v2227
    %v3950 = vpack.c.b16 %v2256, %v2242
    %v3951 = vpack.c.b16 %v2257, %v2243
    %v3952 = vpack.c.b16 %v2258, %v2244
    %v3953 = vpack.c.b16 %v2259, %v2245
    %v3954 = vpack.c.b16 %v2260, %v2246
    %v3955 = vpack.c.b16 %v2261, %v2247
    %v3956 = vpack.c.b16 %v2262, %v2248
    %v3957 = vpack.c.b16 %v2263, %v2249
    %v3958 = vpack.c.b16 %v2264, %v2250
    %v3959 = vpack.c.b16 %v2265, %v2251
    %v3960 = vpack.c.b16 %v2266, %v2252
    %v3961 = vpack.c.b16 %v2267, %v2253
    %v3962 = vpack.c.b16 %v2268, %v2254
    %v3963 = vpack.c.b16 %v2269, %v2255
    %v3964 = vpack.c.b16 %v2284, %v2270
    %v3965 = vpack.c.b16 %v2285, %v2271
    %v3966 = vpack.c.b16 %v2286, %v2272
    %v3967 = vpack.c.b16 %v2287, %v2273
    %v3968 = vpack.c.b16 %v2288, %v2274
    %v3969 = vpack.c.b16 %v2289, %v2275
    %v3970 = vpack.c.b16 %v2290, %v2276
    %v3971 = vpack.c.b16 %v2291, %v2277
    %v3972 = vpack.c.b16 %v2292, %v2278
    %v3973 = vpack.c.b16 %v2293, %v2279
    %v3974 = vpack.c.b16 %v2294, %v2280
    %v3975 = vpack.c.b16 %v2295, %v2281
    %v3976 = vpack.c.b16 %v2296, %v2282
    %v3977 = vpack.c.b16 %v2297, %v2283
    %v3978 = vpack.c.b16 %v2312, %v2298
    %v3979 = vpack.c.b16 %v2313, %v2299
    %v3980 = vpack.c.b16 %v2314, %v2300
    %v3981 = vpack.c.b16 %v2315, %v2301
    %v3982 = vpack.c.b16 %v2316, %v2302
    %v3983 = vpack.c.b16 %v2317, %v2303
    %v3984 = vpack.c.b16 %v2318, %v2304
    %v3985 = vpack.c.b16 %v2319, %v2305
    %v3986 = vpack.c.b16 %v2320, %v2306
    %v3987 = vpack.c.b16 %v2321, %v2307
    %v3988 = vpack.c.b16 %v2322, %v2308
    %v3989 = vpack.c.b16 %v2323, %v2309
    %v3990 = vpack.c.b16 %v2324, %v2310
    %v3991 = vpack.c.b16 %v2325, %v2311
    %v3992 = vpack.c.b16 %v2340, %v2326
    %v3993 = vpack.c.b16 %v2341, %v2327
    %v3994 = vpack.c.b16 %v2342, %v2328
    %v3995 = vpack.c.b16 %v2343, %v2329
    %v3996 = vpack.c.b16 %v2344, %v2330
    %v3997 = vpack.c.b16 %v2345, %v2331
    %v3998 = vpack.c.b16 %v2346, %v2332
    %v3999 = vpack.c.b16 %v2347, %v2333
    %v4000 = vpack.c.b16 %v2348, %v2334
    %v4001 = vpack.c.b16 %v2349, %v2335
    %v4002 = vpack.c.b16 %v2350, %v2336
    %v4003 = vpack.c.b16 %v2351, %v2337
    %v4004 = vpack.c.b16 %v2352, %v2338
    %v4005 = vpack.c.b16 %v2353, %v2339
    %v4006 = vpack.c.b16 %v2368, %v2354
    %v4007 = vpack.c.b16 %v2369, %v2355
    %v4008 = vpack.c.b16 %v2370, %v2356
    %v4009 = vpack.c.b16 %v2371, %v2357
    %v4010 = vpack.c.b16 %v2372, %v2358
    %v4011 = vpack.c.b16 %v2373, %v2359
    %v4012 = vpack.c.b16 %v2374, %v2360
    %v4013 = vpack.c.b16 %v2375, %v2361
    %v4014 = vpack.c.b16 %v2376, %v2362
    %v4015 = vpack.c.b16 %v2377, %v2363
    %v4016 = vpack.c.b16 %v2378, %v2364
    %v4017 = vpack.c.b16 %v2379, %v2365
    %v4018 = vpack.c.b16 %v2380, %v2366
    %v4019 = vpack.c.b16 %v2381, %v2367
    %v4020 = vpack.c.b16 %v2396, %v2382
    %v4021 = vpack.c.b16 %v2397, %v2383
    %v4022 = vpack.c.b16 %v2398, %v2384
    %v4023 = vpack.c.b16 %v2399, %v2385
    %v4024 = vpack.c.b16 %v2400, %v2386
    %v4025 = vpack.c.b16 %v2401, %v2387
    %v4026 = vpack.c.b16 %v2402, %v2388
    %v4027 = vpack.c.b16 %v2403, %v2389
    %v4028 = vpack.c.b16 %v2404, %v2390
    %v4029 = vpack.c.b16 %v2405, %v2391
    %v4030 = vpack.c.b16 %v2406, %v2392
    %v4031 = vpack.c.b16 %v2407, %v2393
    %v4032 = vpack.c.b16 %v2408, %v2394
    %v4033 = vpack.c.b16 %v2409, %v2395
    %v4034 = vpack.c.b16 %v2424, %v2410
    %v4035 = vpack.c.b16 %v2425, %v2411
    %v4036 = vpack.c.b16 %v2426, %v2412
    %v4037 = vpack.c.b16 %v2427, %v2413
    %v4038 = vpack.c.b16 %v2428, %v2414
    %v4039 = vpack.c.b16 %v2429, %v2415
    %v4040 = vpack.c.b16 %v2430, %v2416
    %v4041 = vpack.c.b16 %v2431, %v2417
    %v4042 = vpack.c.b16 %v2432, %v2418
    %v4043 = vpack.c.b16 %v2433, %v2419
    %v4044 = vpack.c.b16 %v2434, %v2420
    %v4045 = vpack.c.b16 %v2435, %v2421
    %v4046 = vpack.c.b16 %v2436, %v2422
    %v4047 = vpack.c.b16 %v2437, %v2423
    %v4048 = vpack.c.b16 %v2452, %v2438
    %v4049 = vpack.c.b16 %v2453, %v2439
    %v4050 = vpack.c.b16 %v2454, %v2440
    %v4051 = vpack.c.b16 %v2455, %v2441
    %v4052 = vpack.c.b16 %v2456, %v2442
    %v4053 = vpack.c.b16 %v2457, %v2443
    %v4054 = vpack.c.b16 %v2458, %v2444
    %v4055 = vpack.c.b16 %v2459, %v2445
    %v4056 = vpack.c.b16 %v2460, %v2446
    %v4057 = vpack.c.b16 %v2461, %v2447
    %v4058 = vpack.c.b16 %v2462, %v2448
    %v4059 = vpack.c.b16 %v2463, %v2449
    %v4060 = vpack.c.b16 %v2464, %v2450
    %v4061 = vpack.c.b16 %v2465, %v2451
    %v4062 = vpack.c.b16 %v2480, %v2466
    %v4063 = vpack.c.b16 %v2481, %v2467
    %v4064 = vpack.c.b16 %v2482, %v2468
    %v4065 = vpack.c.b16 %v2483, %v2469
    %v4066 = vpack.c.b16 %v2484, %v2470
    %v4067 = vpack.c.b16 %v2485, %v2471
    %v4068 = vpack.c.b16 %v2486, %v2472
    %v4069 = vpack.c.b16 %v2487, %v2473
    %v4070 = vpack.c.b16 %v2488, %v2474
    %v4071 = vpack.c.b16 %v2489, %v2475
    %v4072 = vpack.c.b16 %v2490, %v2476
    %v4073 = vpack.c.b16 %v2491, %v2477
    %v4074 = vpack.c.b16 %v2492, %v2478
    %v4075 = vpack.c.b16 %v2493, %v2479
    %v4076 = vpack.c.b16 %v2508, %v2494
    %v4077 = vpack.c.b16 %v2509, %v2495
    %v4078 = vpack.c.b16 %v2510, %v2496
    %v4079 = vpack.c.b16 %v2511, %v2497
    %v4080 = vpack.c.b16 %v2512, %v2498
    %v4081 = vpack.c.b16 %v2513, %v2499
    %v4082 = vpack.c.b16 %v2514, %v2500
    %v4083 = vpack.c.b16 %v2515, %v2501
    %v4084 = vpack.c.b16 %v2516, %v2502
    %v4085 = vpack.c.b16 %v2517, %v2503
    %v4086 = vpack.c.b16 %v2518, %v2504
    %v4087 = vpack.c.b16 %v2519, %v2505
    %v4088 = vpack.c.b16 %v2520, %v2506
    %v4089 = vpack.c.b16 %v2521, %v2507
    %v4090 = vpack.c.b16 %v2536, %v2522
    %v4091 = vpack.c.b16 %v2537, %v2523
    %v4092 = vpack.c.b16 %v2538, %v2524
    %v4093 = vpack.c.b16 %v2539, %v2525
    %v4094 = vpack.c.b16 %v2540, %v2526
    %v4095 = vpack.c.b16 %v2541, %v2527
    %v4096 = vpack.c.b16 %v2542, %v2528
    %v4097 = vpack.c.b16 %v2543, %v2529
    %v4098 = vpack.c.b16 %v2544, %v2530
    %v4099 = vpack.c.b16 %v2545, %v2531
    %v4100 = vpack.c.b16 %v2546, %v2532
    %v4101 = vpack.c.b16 %v2547, %v2533
    %v4102 = vpack.c.b16 %v2548, %v2534
    %v4103 = vpack.c.b16 %v2549, %v2535
    %v4104 = vpack.c.b16 %v2564, %v2550
    %v4105 = vpack.c.b16 %v2565, %v2551
    %v4106 = vpack.c.b16 %v2566, %v2552
    %v4107 = vpack.c.b16 %v2567, %v2553
    %v4108 = vpack.c.b16 %v2568, %v2554
    %v4109 = vpack.c.b16 %v2569, %v2555
    %v4110 = vpack.c.b16 %v2570, %v2556
    %v4111 = vpack.c.b16 %v2571, %v2557
    %v4112 = vpack.c.b16 %v2572, %v2558
    %v4113 = vpack.c.b16 %v2573, %v2559
    %v4114 = vpack.c.b16 %v2574, %v2560
    %v4115 = vpack.c.b16 %v2575, %v2561
    %v4116 = vpack.c.b16 %v2576, %v2562
    %v4117 = vpack.c.b16 %v2577, %v2563
    %v4118 = vpack.c.b16 %v2592, %v2578
    %v4119 = vpack.c.b16 %v2593, %v2579
    %v4120 = vpack.c.b16 %v2594, %v2580
    %v4121 = vpack.c.b16 %v2595, %v2581
    %v4122 = vpack.c.b16 %v2596, %v2582
    %v4123 = vpack.c.b16 %v2597, %v2583
    %v4124 = vpack.c.b16 %v2598, %v2584
    %v4125 = vpack.c.b16 %v2599, %v2585
    %v4126 = vpack.c.b16 %v2600, %v2586
    %v4127 = vpack.c.b16 %v2601, %v2587
    %v4128 = vpack.c.b16 %v2602, %v2588
    %v4129 = vpack.c.b16 %v2603, %v2589
    %v4130 = vpack.c.b16 %v2604, %v2590
    %v4131 = vpack.c.b16 %v2605, %v2591
    %v4132 = vpack.c.b16 %v2620, %v2606
    %v4133 = vpack.c.b16 %v2621, %v2607
    %v4134 = vpack.c.b16 %v2622, %v2608
    %v4135 = vpack.c.b16 %v2623, %v2609
    %v4136 = vpack.c.b16 %v2624, %v2610
    %v4137 = vpack.c.b16 %v2625, %v2611
    %v4138 = vpack.c.b16 %v2626, %v2612
    %v4139 = vpack.c.b16 %v2627, %v2613
    %v4140 = vpack.c.b16 %v2628, %v2614
    %v4141 = vpack.c.b16 %v2629, %v2615
    %v4142 = vpack.c.b16 %v2630, %v2616
    %v4143 = vpack.c.b16 %v2631, %v2617
    %v4144 = vpack.c.b16 %v2632, %v2618
    %v4145 = vpack.c.b16 %v2633, %v2619
    %v4146 = vpack.c.b16 %v2648, %v2634
    %v4147 = vpack.c.b16 %v2649, %v2635
    %v4148 = vpack.c.b16 %v2650, %v2636
    %v4149 = vpack.c.b16 %v2651, %v2637
    %v4150 = vpack.c.b16 %v2652, %v2638
    %v4151 = vpack.c.b16 %v2653, %v2639
    %v4152 = vpack.c.b16 %v2654, %v2640
    %v4153 = vpack.c.b16 %v2655, %v2641
    %v4154 = vpack.c.b16 %v2656, %v2642
    %v4155 = vpack.c.b16 %v2657, %v2643
    %v4156 = vpack.c.b16 %v2658, %v2644
    %v4157 = vpack.c.b16 %v2659, %v2645
    %v4158 = vpack.c.b16 %v2660, %v2646
    %v4159 = vpack.c.b16 %v2661, %v2647
    %v4160 = vpack.c.b16 %v2676, %v2662
    %v4161 = vpack.c.b16 %v2677, %v2663
    %v4162 = vpack.c.b16 %v2678, %v2664
    %v4163 = vpack.c.b16 %v2679, %v2665
    %v4164 = vpack.c.b16 %v2680, %v2666
    %v4165 = vpack.c.b16 %v2681, %v2667
    %v4166 = vpack.c.b16 %v2682, %v2668
    %v4167 = vpack.c.b16 %v2683, %v2669
    %v4168 = vpack.c.b16 %v2684, %v2670
    %v4169 = vpack.c.b16 %v2685, %v2671
    %v4170 = vpack.c.b16 %v2686, %v2672
    %v4171 = vpack.c.b16 %v2687, %v2673
    %v4172 = vpack.c.b16 %v2688, %v2674
    %v4173 = vpack.c.b16 %v2689, %v2675
    %v4174 = vpack.c.b16 %v2704, %v2690
    %v4175 = vpack.c.b16 %v2705, %v2691
    %v4176 = vpack.c.b16 %v2706, %v2692
    %v4177 = vpack.c.b16 %v2707, %v2693
    %v4178 = vpack.c.b16 %v2708, %v2694
    %v4179 = vpack.c.b16 %v2709, %v2695
    %v4180 = vpack.c.b16 %v2710, %v2696
    %v4181 = vpack.c.b16 %v2711, %v2697
    %v4182 = vpack.c.b16 %v2712, %v2698
    %v4183 = vpack.c.b16 %v2713, %v2699
    %v4184 = vpack.c.b16 %v2714, %v2700
    %v4185 = vpack.c.b16 %v2715, %v2701
    %v4186 = vpack.c.b16 %v2716, %v2702
    %v4187 = vpack.c.b16 %v2717, %v2703
    %v4188 = vpack.c.b16 %v2732, %v2718
    %v4189 = vpack.c.b16 %v2733, %v2719
    %v4190 = vpack.c.b16 %v2734, %v2720
    %v4191 = vpack.c.b16 %v2735, %v2721
    %v4192 = vpack.c.b16 %v2736, %v2722
    %v4193 = vpack.c.b16 %v2737, %v2723
    %v4194 = vpack.c.b16 %v2738, %v2724
    %v4195 = vpack.c.b16 %v2739, %v2725
    %v4196 = vpack.c.b16 %v2740, %v2726
    %v4197 = vpack.c.b16 %v2741, %v2727
    %v4198 = vpack.c.b16 %v2742, %v2728
    %v4199 = vpack.c.b16 %v2743, %v2729
    %v4200 = vpack.c.b16 %v2744, %v2730
    %v4201 = vpack.c.b16 %v2745, %v2731
    %v4202 = vpack.c.b16 %v2760, %v2746
    %v4203 = vpack.c.b16 %v2761, %v2747
    %v4204 = vpack.c.b16 %v2762, %v2748
    %v4205 = vpack.c.b16 %v2763, %v2749
    %v4206 = vpack.c.b16 %v2764, %v2750
    %v4207 = vpack.c.b16 %v2765, %v2751
    %v4208 = vpack.c.b16 %v2766, %v2752
    %v4209 = vpack.c.b16 %v2767, %v2753
    %v4210 = vpack.c.b16 %v2768, %v2754
    %v4211 = vpack.c.b16 %v2769, %v2755
    %v4212 = vpack.c.b16 %v2770, %v2756
    %v4213 = vpack.c.b16 %v2771, %v2757
    %v4214 = vpack.c.b16 %v2772, %v2758
    %v4215 = vpack.c.b16 %v2773, %v2759
    %v4216 = vpack.c.b16 %v2788, %v2774
    %v4217 = vpack.c.b16 %v2789, %v2775
    %v4218 = vpack.c.b16 %v2790, %v2776
    %v4219 = vpack.c.b16 %v2791, %v2777
    %v4220 = vpack.c.b16 %v2792, %v2778
    %v4221 = vpack.c.b16 %v2793, %v2779
    %v4222 = vpack.c.b16 %v2794, %v2780
    %v4223 = vpack.c.b16 %v2795, %v2781
    %v4224 = vpack.c.b16 %v2796, %v2782
    %v4225 = vpack.c.b16 %v2797, %v2783
    %v4226 = vpack.c.b16 %v2798, %v2784
    %v4227 = vpack.c.b16 %v2799, %v2785
    %v4228 = vpack.c.b16 %v2800, %v2786
    %v4229 = vpack.c.b16 %v2801, %v2787
    %v4230 = vpack.c.b16 %v2816, %v2802
    %v4231 = vpack.c.b16 %v2817, %v2803
    %v4232 = vpack.c.b16 %v2818, %v2804
    %v4233 = vpack.c.b16 %v2819, %v2805
    %v4234 = vpack.c.b16 %v2820, %v2806
    %v4235 = vpack.c.b16 %v2821, %v2807
    %v4236 = vpack.c.b16 %v2822, %v2808
    %v4237 = vpack.c.b16 %v2823, %v2809
    %v4238 = vpack.c.b16 %v2824, %v2810
    %v4239 = vpack.c.b16 %v2825, %v2811
    %v4240 = vpack.c.b16 %v2826, %v2812
    %v4241 = vpack.c.b16 %v2827, %v2813
    %v4242 = vpack.c.b16 %v2828, %v2814
    %v4243 = vpack.c.b16 %v2829, %v2815
    %v4244 = vpack.c.b16 %v2844, %v2830
    %v4245 = vpack.c.b16 %v2845, %v2831
    %v4246 = vpack.c.b16 %v2846, %v2832
    %v4247 = vpack.c.b16 %v2847, %v2833
    %v4248 = vpack.c.b16 %v2848, %v2834
    %v4249 = vpack.c.b16 %v2849, %v2835
    %v4250 = vpack.c.b16 %v2850, %v2836
    %v4251 = vpack.c.b16 %v2851, %v2837
    %v4252 = vpack.c.b16 %v2852, %v2838
    %v4253 = vpack.c.b16 %v2853, %v2839
    %v4254 = vpack.c.b16 %v2854, %v2840
    %v4255 = vpack.c.b16 %v2855, %v2841
    %v4256 = vpack.c.b16 %v2856, %v2842
    %v4257 = vpack.c.b16 %v2857, %v2843
    %v4258 = vpack.c.b16 %v2872, %v2858
    %v4259 = vpack.c.b16 %v2873, %v2859
    %v4260 = vpack.c.b16 %v2874, %v2860
    %v4261 = vpack.c.b16 %v2875, %v2861
    %v4262 = vpack.c.b16 %v2876, %v2862
    %v4263 = vpack.c.b16 %v2877, %v2863
    %v4264 = vpack.c.b16 %v2878, %v2864
    %v4265 = vpack.c.b16 %v2879, %v2865
    %v4266 = vpack.c.b16 %v2880, %v2866
    %v4267 = vpack.c.b16 %v2881, %v2867
    %v4268 = vpack.c.b16 %v2882, %v2868
    %v4269 = vpack.c.b16 %v2883, %v2869
    %v4270 = vpack.c.b16 %v2884, %v2870
    %v4271 = vpack.c.b16 %v2885, %v2871
    %v4272 = vpack.c.b16 %v2900, %v2886
    %v4273 = vpack.c.b16 %v2901, %v2887
    %v4274 = vpack.c.b16 %v2902, %v2888
    %v4275 = vpack.c.b16 %v2903, %v2889
    %v4276 = vpack.c.b16 %v2904, %v2890
    %v4277 = vpack.c.b16 %v2905, %v2891
    %v4278 = vpack.c.b16 %v2906, %v2892
    %v4279 = vpack.c.b16 %v2907, %v2893
    %v4280 = vpack.c.b16 %v2908, %v2894
    %v4281 = vpack.c.b16 %v2909, %v2895
    %v4282 = vpack.c.b16 %v2910, %v2896
    %v4283 = vpack.c.b16 %v2911, %v2897
    %v4284 = vpack.c.b16 %v2912, %v2898
    %v4285 = vpack.c.b16 %v2913, %v2899
    %v4286 = vpack.c.b16 %v2928, %v2914
    %v4287 = vpack.c.b16 %v2929, %v2915
    %v4288 = vpack.c.b16 %v2930, %v2916
    %v4289 = vpack.c.b16 %v2931, %v2917
    %v4290 = vpack.c.b16 %v2932, %v2918
    %v4291 = vpack.c.b16 %v2933, %v2919
    %v4292 = vpack.c.b16 %v2934, %v2920
    %v4293 = vpack.c.b16 %v2935, %v2921
    %v4294 = vpack.c.b16 %v2936, %v2922
    %v4295 = vpack.c.b16 %v2937, %v2923
    %v4296 = vpack.c.b16 %v2938, %v2924
    %v4297 = vpack.c.b16 %v2939, %v2925
    %v4298 = vpack.c.b16 %v2940, %v2926
    %v4299 = vpack.c.b16 %v2941, %v2927
    %v4300 = vpack.c.b16 %v2956, %v2942
    %v4301 = vpack.c.b16 %v2957, %v2943
    %v4302 = vpack.c.b16 %v2958, %v2944
    %v4303 = vpack.c.b16 %v2959, %v2945
    %v4304 = vpack.c.b16 %v2960, %v2946
    %v4305 = vpack.c.b16 %v2961, %v2947
    %v4306 = vpack.c.b16 %v2962, %v2948
    %v4307 = vpack.c.b16 %v2963, %v2949
    %v4308 = vpack.c.b16 %v2964, %v2950
    %v4309 = vpack.c.b16 %v2965, %v2951
    %v4310 = vpack.c.b16 %v2966, %v2952
    %v4311 = vpack.c.b16 %v2967, %v2953
    %v4312 = vpack.c.b16 %v2968, %v2954
    %v4313 = vpack.c.b16 %v2969, %v2955
    %v4314 = vpack.c.b16 %v2984, %v2970
    %v4315 = vpack.c.b16 %v2985, %v2971
    %v4316 = vpack.c.b16 %v2986, %v2972
    %v4317 = vpack.c.b16 %v2987, %v2973
    %v4318 = vpack.c.b16 %v2988, %v2974
    %v4319 = vpack.c.b16 %v2989, %v2975
    %v4320 = vpack.c.b16 %v2990, %v2976
    %v4321 = vpack.c.b16 %v2991, %v2977
    %v4322 = vpack.c.b16 %v2992, %v2978
    %v4323 = vpack.c.b16 %v2993, %v2979
    %v4324 = vpack.c.b16 %v2994, %v2980
    %v4325 = vpack.c.b16 %v2995, %v2981
    %v4326 = vpack.c.b16 %v2996, %v2982
    %v4327 = vpack.c.b16 %v2997, %v2983
    %v4328 = vpack.c.b16 %v3012, %v2998
    %v4329 = vpack.c.b16 %v3013, %v2999
    %v4330 = vpack.c.b16 %v3014, %v3000
    %v4331 = vpack.c.b16 %v3015, %v3001
    %v4332 = vpack.c.b16 %v3016, %v3002
    %v4333 = vpack.c.b16 %v3017, %v3003
    %v4334 = vpack.c.b16 %v3018, %v3004
    %v4335 = vpack.c.b16 %v3019, %v3005
    %v4336 = vpack.c.b16 %v3020, %v3006
    %v4337 = vpack.c.b16 %v3021, %v3007
    %v4338 = vpack.c.b16 %v3022, %v3008
    %v4339 = vpack.c.b16 %v3023, %v3009
    %v4340 = vpack.c.b16 %v3024, %v3010
    %v4341 = vpack.c.b16 %v3025, %v3011
    %v4342 = vpack.c.b16 %v3040, %v3026
    %v4343 = vpack.c.b16 %v3041, %v3027
    %v4344 = vpack.c.b16 %v3042, %v3028
    %v4345 = vpack.c.b16 %v3043, %v3029
    %v4346 = vpack.c.b16 %v3044, %v3030
    %v4347 = vpack.c.b16 %v3045, %v3031
    %v4348 = vpack.c.b16 %v3046, %v3032
    %v4349 = vpack.c.b16 %v3047, %v3033
    %v4350 = vpack.c.b16 %v3048, %v3034
    %v4351 = vpack.c.b16 %v3049, %v3035
    %v4352 = vpack.c.b16 %v3050, %v3036
    %v4353 = vpack.c.b16 %v3051, %v3037
    %v4354 = vpack.c.b16 %v3052, %v3038
    %v4355 = vpack.c.b16 %v3053, %v3039
    %v4356 = vpack.c.b16 %v3068, %v3054
    %v4357 = vpack.c.b16 %v3069, %v3055
    %v4358 = vpack.c.b16 %v3070, %v3056
    %v4359 = vpack.c.b16 %v3071, %v3057
    %v4360 = vpack.c.b16 %v3072, %v3058
    %v4361 = vpack.c.b16 %v3073, %v3059
    %v4362 = vpack.c.b16 %v3074, %v3060
    %v4363 = vpack.c.b16 %v3075, %v3061
    %v4364 = vpack.c.b16 %v3076, %v3062
    %v4365 = vpack.c.b16 %v3077, %v3063
    %v4366 = vpack.c.b16 %v3078, %v3064
    %v4367 = vpack.c.b16 %v3079, %v3065
    %v4368 = vpack.c.b16 %v3080, %v3066
    %v4369 = vpack.c.b16 %v3081, %v3067
    %v4370 = vpack.c.b16 %v3096, %v3082
    %v4371 = vpack.c.b16 %v3097, %v3083
    %v4372 = vpack.c.b16 %v3098, %v3084
    %v4373 = vpack.c.b16 %v3099, %v3085
    %v4374 = vpack.c.b16 %v3100, %v3086
    %v4375 = vpack.c.b16 %v3101, %v3087
    %v4376 = vpack.c.b16 %v3102, %v3088
    %v4377 = vpack.c.b16 %v3103, %v3089
    %v4378 = vpack.c.b16 %v3104, %v3090
    %v4379 = vpack.c.b16 %v3105, %v3091
    %v4380 = vpack.c.b16 %v3106, %v3092
    %v4381 = vpack.c.b16 %v3107, %v3093
    %v4382 = vpack.c.b16 %v3108, %v3094
    %v4383 = vpack.c.b16 %v3109, %v3095
    %v4384 = vpack.c.b16 %v3124, %v3110
    %v4385 = vpack.c.b16 %v3125, %v3111
    %v4386 = vpack.c.b16 %v3126, %v3112
    %v4387 = vpack.c.b16 %v3127, %v3113
    %v4388 = vpack.c.b16 %v3128, %v3114
    %v4389 = vpack.c.b16 %v3129, %v3115
    %v4390 = vpack.c.b16 %v3130, %v3116
    %v4391 = vpack.c.b16 %v3131, %v3117
    %v4392 = vpack.c.b16 %v3132, %v3118
    %v4393 = vpack.c.b16 %v3133, %v3119
    %v4394 = vpack.c.b16 %v3134, %v3120
    %v4395 = vpack.c.b16 %v3135, %v3121
    %v4396 = vpack.c.b16 %v3136, %v3122
    %v4397 = vpack.c.b16 %v3137, %v3123
    %v4398 = vpack.c.b16 %v3152, %v3138
    %v4399 = vpack.c.b16 %v3153, %v3139
    %v4400 = vpack.c.b16 %v3154, %v3140
    %v4401 = vpack.c.b16 %v3155, %v3141
    %v4402 = vpack.c.b16 %v3156, %v3142
    %v4403 = vpack.c.b16 %v3157, %v3143
    %v4404 = vpack.c.b16 %v3158, %v3144
    %v4405 = vpack.c.b16 %v3159, %v3145
    %v4406 = vpack.c.b16 %v3160, %v3146
    %v4407 = vpack.c.b16 %v3161, %v3147
    %v4408 = vpack.c.b16 %v3162, %v3148
    %v4409 = vpack.c.b16 %v3163, %v3149
    %v4410 = vpack.c.b16 %v3164, %v3150
    %v4411 = vpack.c.b16 %v3165, %v3151
    %v4412 = vpack.c.b16 %v3180, %v3166
    %v4413 = vpack.c.b16 %v3181, %v3167
    %v4414 = vpack.c.b16 %v3182, %v3168
    %v4415 = vpack.c.b16 %v3183, %v3169
    %v4416 = vpack.c.b16 %v3184, %v3170
    %v4417 = vpack.c.b16 %v3185, %v3171
    %v4418 = vpack.c.b16 %v3186, %v3172
    %v4419 = vpack.c.b16 %v3187, %v3173
    %v4420 = vpack.c.b16 %v3188, %v3174
    %v4421 = vpack.c.b16 %v3189, %v3175
    %v4422 = vpack.c.b16 %v3190, %v3176
    %v4423 = vpack.c.b16 %v3191, %v3177
    %v4424 = vpack.c.b16 %v3192, %v3178
    %v4425 = vpack.c.b16 %v3193, %v3179
    %v4426 = vpack.c.b16 %v3208, %v3194
    %v4427 = vpack.c.b16 %v3209, %v3195
    %v4428 = vpack.c.b16 %v3210, %v3196
    %v4429 = vpack.c.b16 %v3211, %v3197
    %v4430 = vpack.c.b16 %v3212, %v3198
    %v4431 = vpack.c.b16 %v3213, %v3199
    %v4432 = vpack.c.b16 %v3214, %v3200
    %v4433 = vpack.c.b16 %v3215, %v3201
    %v4434 = vpack.c.b16 %v3216, %v3202
    %v4435 = vpack.c.b16 %v3217, %v3203
    %v4436 = vpack.c.b16 %v3218, %v3204
    %v4437 = vpack.c.b16 %v3219, %v3205
    %v4438 = vpack.c.b16 %v3220, %v3206
    %v4439 = vpack.c.b16 %v3221, %v3207
    %v4440 = vpack.c.b16 %v3236, %v3222
    %v4441 = vpack.c.b16 %v3237, %v3223
    %v4442 = vpack.c.b16 %v3238, %v3224
    %v4443 = vpack.c.b16 %v3239, %v3225
    %v4444 = vpack.c.b16 %v3240, %v3226
    %v4445 = vpack.c.b16 %v3241, %v3227
    %v4446 = vpack.c.b16 %v3242, %v3228
    %v4447 = vpack.c.b16 %v3243, %v3229
    %v4448 = vpack.c.b16 %v3244, %v3230
    %v4449 = vpack.c.b16 %v3245, %v3231
    %v4450 = vpack.c.b16 %v3246, %v3232
    %v4451 = vpack.c.b16 %v3247, %v3233
    %v4452 = vpack.c.b16 %v3248, %v3234
    %v4453 = vpack.c.b16 %v3249, %v3235
    %v4454 = vpack.c.b16 %v3264, %v3250
    %v4455 = vpack.c.b16 %v3265, %v3251
    %v4456 = vpack.c.b16 %v3266, %v3252
    %v4457 = vpack.c.b16 %v3267, %v3253
    %v4458 = vpack.c.b16 %v3268, %v3254
    %v4459 = vpack.c.b16 %v3269, %v3255
    %v4460 = vpack.c.b16 %v3270, %v3256
    %v4461 = vpack.c.b16 %v3271, %v3257
    %v4462 = vpack.c.b16 %v3272, %v3258
    %v4463 = vpack.c.b16 %v3273, %v3259
    %v4464 = vpack.c.b16 %v3274, %v3260
    %v4465 = vpack.c.b16 %v3275, %v3261
    %v4466 = vpack.c.b16 %v3276, %v3262
    %v4467 = vpack.c.b16 %v3277, %v3263
    %v4468 = vpack.c.b16 %v3292, %v3278
    %v4469 = vpack.c.b16 %v3293, %v3279
    %v4470 = vpack.c.b16 %v3294, %v3280
    %v4471 = vpack.c.b16 %v3295, %v3281
    %v4472 = vpack.c.b16 %v3296, %v3282
    %v4473 = vpack.c.b16 %v3297, %v3283
    %v4474 = vpack.c.b16 %v3298, %v3284
    %v4475 = vpack.c.b16 %v3299, %v3285
    %v4476 = vpack.c.b16 %v3300, %v3286
    %v4477 = vpack.c.b16 %v3301, %v3287
    %v4478 = vpack.c.b16 %v3302, %v3288
    %v4479 = vpack.c.b16 %v3303, %v3289
    %v4480 = vpack.c.b16 %v3304, %v3290
    %v4481 = vpack.c.b16 %v3305, %v3291
    %v4482 = vpack.c.b16 %v3320, %v3306
    %v4483 = vpack.c.b16 %v3321, %v3307
    %v4484 = vpack.c.b16 %v3322, %v3308
    %v4485 = vpack.c.b16 %v3323, %v3309
    %v4486 = vpack.c.b16 %v3324, %v3310
    %v4487 = vpack.c.b16 %v3325, %v3311
    %v4488 = vpack.c.b16 %v3326, %v3312
    %v4489 = vpack.c.b16 %v3327, %v3313
    %v4490 = vpack.c.b16 %v3328, %v3314
    %v4491 = vpack.c.b16 %v3329, %v3315
    %v4492 = vpack.c.b16 %v3330, %v3316
    %v4493 = vpack.c.b16 %v3331, %v3317
    %v4494 = vpack.c.b16 %v3332, %v3318
    %v4495 = vpack.c.b16 %v3333, %v3319
    %v4496 = vpack.c.b16 %v3348, %v3334
    %v4497 = vpack.c.b16 %v3349, %v3335
    %v4498 = vpack.c.b16 %v3350, %v3336
    %v4499 = vpack.c.b16 %v3351, %v3337
    %v4500 = vpack.c.b16 %v3352, %v3338
    %v4501 = vpack.c.b16 %v3353, %v3339
    %v4502 = vpack.c.b16 %v3354, %v3340
    %v4503 = vpack.c.b16 %v3355, %v3341
    %v4504 = vpack.c.b16 %v3356, %v3342
    %v4505 = vpack.c.b16 %v3357, %v3343
    %v4506 = vpack.c.b16 %v3358, %v3344
    %v4507 = vpack.c.b16 %v3359, %v3345
    %v4508 = vpack.c.b16 %v3360, %v3346
    %v4509 = vpack.c.b16 %v3361, %v3347
    %v4510 = vpack.c.b16 %v3376, %v3362
    %v4511 = vpack.c.b16 %v3377, %v3363
    %v4512 = vpack.c.b16 %v3378, %v3364
    %v4513 = vpack.c.b16 %v3379, %v3365
    %v4514 = vpack.c.b16 %v3380, %v3366
    %v4515 = vpack.c.b16 %v3381, %v3367
    %v4516 = vpack.c.b16 %v3382, %v3368
    %v4517 = vpack.c.b16 %v3383, %v3369
    %v4518 = vpack.c.b16 %v3384, %v3370
    %v4519 = vpack.c.b16 %v3385, %v3371
    %v4520 = vpack.c.b16 %v3386, %v3372
    %v4521 = vpack.c.b16 %v3387, %v3373
    %v4522 = vpack.c.b16 %v3388, %v3374
    %v4523 = vpack.c.b16 %v3389, %v3375
    %v4524 = vpack.c.b16 %v3404, %v3390
    %v4525 = vpack.c.b16 %v3405, %v3391
    %v4526 = vpack.c.b16 %v3406, %v3392
    %v4527 = vpack.c.b16 %v3407, %v3393
    %v4528 = vpack.c.b16 %v3408, %v3394
    %v4529 = vpack.c.b16 %v3409, %v3395
    %v4530 = vpack.c.b16 %v3410, %v3396
    %v4531 = vpack.c.b16 %v3411, %v3397
    %v4532 = vpack.c.b16 %v3412, %v3398
    %v4533 = vpack.c.b16 %v3413, %v3399
    %v4534 = vpack.c.b16 %v3414, %v3400
    %v4535 = vpack.c.b16 %v3415, %v3401
    %v4536 = vpack.c.b16 %v3416, %v3402
    %v4537 = vpack.c.b16 %v3417, %v3403
    %v4538 = vpack.c.b16 %v3432, %v3418
    %v4539 = vpack.c.b16 %v3433, %v3419
    %v4540 = vpack.c.b16 %v3434, %v3420
    %v4541 = vpack.c.b16 %v3435, %v3421
    %v4542 = vpack.c.b16 %v3436, %v3422
    %v4543 = vpack.c.b16 %v3437, %v3423
    %v4544 = vpack.c.b16 %v3438, %v3424
    %v4545 = vpack.c.b16 %v3439, %v3425
    %v4546 = vpack.c.b16 %v3440, %v3426
    %v4547 = vpack.c.b16 %v3441, %v3427
    %v4548 = vpack.c.b16 %v3442, %v3428
    %v4549 = vpack.c.b16 %v3443, %v3429
    %v4550 = vpack.c.b16 %v3444, %v3430
    %v4551 = vpack.c.b16 %v3445, %v3431
    %v4552 = vpack.c.b16 %v3460, %v3446
    %v4553 = vpack.c.b16 %v3461, %v3447
    %v4554 = vpack.c.b16 %v3462, %v3448
    %v4555 = vpack.c.b16 %v3463, %v3449
    %v4556 = vpack.c.b16 %v3464, %v3450
    %v4557 = vpack.c.b16 %v3465, %v3451
    %v4558 = vpack.c.b16 %v3466, %v3452
    %v4559 = vpack.c.b16 %v3467, %v3453
    %v4560 = vpack.c.b16 %v3468, %v3454
    %v4561 = vpack.c.b16 %v3469, %v3455
    %v4562 = vpack.c.b16 %v3470, %v3456
    %v4563 = vpack.c.b16 %v3471, %v3457
    %v4564 = vpack.c.b16 %v3472, %v3458
    %v4565 = vpack.c.b16 %v3473, %v3459
    %v4566 = vpack.c.b16 %v3488, %v3474
    %v4567 = vpack.c.b16 %v3489, %v3475
    %v4568 = vpack.c.b16 %v3490, %v3476
    %v4569 = vpack.c.b16 %v3491, %v3477
    %v4570 = vpack.c.b16 %v3492, %v3478
    %v4571 = vpack.c.b16 %v3493, %v3479
    %v4572 = vpack.c.b16 %v3494, %v3480
    %v4573 = vpack.c.b16 %v3495, %v3481
    %v4574 = vpack.c.b16 %v3496, %v3482
    %v4575 = vpack.c.b16 %v3497, %v3483
    %v4576 = vpack.c.b16 %v3498, %v3484
    %v4577 = vpack.c.b16 %v3499, %v3485
    %v4578 = vpack.c.b16 %v3500, %v3486
    %v4579 = vpack.c.b16 %v3501, %v3487
    %v4580 = vpack.c.b16 %v3516, %v3502
    %v4581 = vpack.c.b16 %v3517, %v3503
    %v4582 = vpack.c.b16 %v3518, %v3504
    %v4583 = vpack.c.b16 %v3519, %v3505
    %v4584 = vpack.c.b16 %v3520, %v3506
    %v4585 = vpack.c.b16 %v3521, %v3507
    %v4586 = vpack.c.b16 %v3522, %v3508
    %v4587 = vpack.c.b16 %v3523, %v3509
    %v4588 = vpack.c.b16 %v3524, %v3510
    %v4589 = vpack.c.b16 %v3525, %v3511
    %v4590 = vpack.c.b16 %v3526, %v3512
    %v4591 = vpack.c.b16 %v3527, %v3513
    %v4592 = vpack.c.b16 %v3528, %v3514
    %v4593 = vpack.c.b16 %v3529, %v3515
    %v4594 = vpack.c.b16 %v3544, %v3530
    %v4595 = vpack.c.b16 %v3545, %v3531
    %v4596 = vpack.c.b16 %v3546, %v3532
    %v4597 = vpack.c.b16 %v3547, %v3533
    %v4598 = vpack.c.b16 %v3548, %v3534
    %v4599 = vpack.c.b16 %v3549, %v3535
    %v4600 = vpack.c.b16 %v3550, %v3536
    %v4601 = vpack.c.b16 %v3551, %v3537
    %v4602 = vpack.c.b16 %v3552, %v3538
    %v4603 = vpack.c.b16 %v3553, %v3539
    %v4604 = vpack.c.b16 %v3554, %v3540
    %v4605 = vpack.c.b16 %v3555, %v3541
    %v4606 = vpack.c.b16 %v3556, %v3542
    %v4607 = vpack.c.b16 %v3557, %v3543
    %v4608 = vpack.c.b16 %v3572, %v3558
    %v4609 = vpack.c.b16 %v3573, %v3559
    %v4610 = vpack.c.b16 %v3574, %v3560
    %v4611 = vpack.c.b16 %v3575, %v3561
    %v4612 = vpack.c.b16 %v3576, %v3562
    %v4613 = vpack.c.b16 %v3577, %v3563
    %v4614 = vpack.c.b16 %v3578, %v3564
    %v4615 = vpack.c.b16 %v3579, %v3565
    %v4616 = vpack.c.b16 %v3580, %v3566
    %v4617 = vpack.c.b16 %v3581, %v3567
    %v4618 = vpack.c.b16 %v3582, %v3568
    %v4619 = vpack.c.b16 %v3583, %v3569
    %v4620 = vpack.c.b16 %v3584, %v3570
    %v4621 = vpack.c.b16 %v3585, %v3571
    %v4622 = vpack.c.b16 %v3600, %v3586
    %v4623 = vpack.c.b16 %v3601, %v3587
    %v4624 = vpack.c.b16 %v3602, %v3588
    %v4625 = vpack.c.b16 %v3603, %v3589
    %v4626 = vpack.c.b16 %v3604, %v3590
    %v4627 = vpack.c.b16 %v3605, %v3591
    %v4628 = vpack.c.b16 %v3606, %v3592
    %v4629 = vpack.c.b16 %v3607, %v3593
    %v4630 = vpack.c.b16 %v3608, %v3594
    %v4631 = vpack.c.b16 %v3609, %v3595
    %v4632 = vpack.c.b16 %v3610, %v3596
    %v4633 = vpack.c.b16 %v3611, %v3597
    %v4634 = vpack.c.b16 %v3612, %v3598
    %v4635 = vpack.c.b16 %v3613, %v3599
    %v4636 = vpack.c.b16 %v3628, %v3614
    %v4637 = vpack.c.b16 %v3629, %v3615
    %v4638 = vpack.c.b16 %v3630, %v3616
    %v4639 = vpack.c.b16 %v3631, %v3617
    %v4640 = vpack.c.b16 %v3632, %v3618
    %v4641 = vpack.c.b16 %v3633, %v3619
    %v4642 = vpack.c.b16 %v3634, %v3620
    %v4643 = vpack.c.b16 %v3635, %v3621
    %v4644 = vpack.c.b16 %v3636, %v3622
    %v4645 = vpack.c.b16 %v3637, %v3623
    %v4646 = vpack.c.b16 %v3638, %v3624
    %v4647 = vpack.c.b16 %v3639, %v3625
    %v4648 = vpack.c.b16 %v3640, %v3626
    %v4649 = vpack.c.b16 %v3641, %v3627
    %v4650 = vpack.c.b16 %v3656, %v3642
    %v4651 = vpack.c.b16 %v3657, %v3643
    %v4652 = vpack.c.b16 %v3658, %v3644
    %v4653 = vpack.c.b16 %v3659, %v3645
    %v4654 = vpack.c.b16 %v3660, %v3646
    %v4655 = vpack.c.b16 %v3661, %v3647
    %v4656 = vpack.c.b16 %v3662, %v3648
    %v4657 = vpack.c.b16 %v3663, %v3649
    %v4658 = vpack.c.b16 %v3664, %v3650
    %v4659 = vpack.c.b16 %v3665, %v3651
    %v4660 = vpack.c.b16 %v3666, %v3652
    %v4661 = vpack.c.b16 %v3667, %v3653
    %v4662 = vpack.c.b16 %v3668, %v3654
    %v4663 = vpack.c.b16 %v3669, %v3655
    %v4664 = vpack.c.b16 %v3684, %v3670
    %v4665 = vpack.c.b16 %v3685, %v3671
    %v4666 = vpack.c.b16 %v3686, %v3672
    %v4667 = vpack.c.b16 %v3687, %v3673
    %v4668 = vpack.c.b16 %v3688, %v3674
    %v4669 = vpack.c.b16 %v3689, %v3675
    %v4670 = vpack.c.b16 %v3690, %v3676
    %v4671 = vpack.c.b16 %v3691, %v3677
    %v4672 = vpack.c.b16 %v3692, %v3678
    %v4673 = vpack.c.b16 %v3693, %v3679
    %v4674 = vpack.c.b16 %v3694, %v3680
    %v4675 = vpack.c.b16 %v3695, %v3681
    %v4676 = vpack.c.b16 %v3696, %v3682
    %v4677 = vpack.c.b16 %v3697, %v3683
    %v4678 = vpack.c.b16 %v3712, %v3698
    %v4679 = vpack.c.b16 %v3713, %v3699
    %v4680 = vpack.c.b16 %v3714, %v3700
    %v4681 = vpack.c.b16 %v3715, %v3701
    %v4682 = vpack.c.b16 %v3716, %v3702
    %v4683 = vpack.c.b16 %v3717, %v3703
    %v4684 = vpack.c.b16 %v3718, %v3704
    %v4685 = vpack.c.b16 %v3719, %v3705
    %v4686 = vpack.c.b16 %v3720, %v3706
    %v4687 = vpack.c.b16 %v3721, %v3707
    %v4688 = vpack.c.b16 %v3722, %v3708
    %v4689 = vpack.c.b16 %v3723, %v3709
    %v4690 = vpack.c.b16 %v3724, %v3710
    %v4691 = vpack.c.b16 %v3725, %v3711
    %v4692 = vpack.c.b16 %v3740, %v3726
    %v4693 = vpack.c.b16 %v3741, %v3727
    %v4694 = vpack.c.b16 %v3742, %v3728
    %v4695 = vpack.c.b16 %v3743, %v3729
    %v4696 = vpack.c.b16 %v3744, %v3730
    %v4697 = vpack.c.b16 %v3745, %v3731
    %v4698 = vpack.c.b16 %v3746, %v3732
    %v4699 = vpack.c.b16 %v3747, %v3733
    %v4700 = vpack.c.b16 %v3748, %v3734
    %v4701 = vpack.c.b16 %v3749, %v3735
    %v4702 = vpack.c.b16 %v3750, %v3736
    %v4703 = vpack.c.b16 %v3751, %v3737
    %v4704 = vpack.c.b16 %v3752, %v3738
    %v4705 = vpack.c.b16 %v3753, %v3739
    %v4706 = vpack.c.b16 %v3768, %v3754
    %v4707 = vpack.c.b16 %v3769, %v3755
    %v4708 = vpack.c.b16 %v3770, %v3756
    %v4709 = vpack.c.b16 %v3771, %v3757
    %v4710 = vpack.c.b16 %v3772, %v3758
    %v4711 = vpack.c.b16 %v3773, %v3759
    %v4712 = vpack.c.b16 %v3774, %v3760
    %v4713 = vpack.c.b16 %v3775, %v3761
    %v4714 = vpack.c.b16 %v3776, %v3762
    %v4715 = vpack.c.b16 %v3777, %v3763
    %v4716 = vpack.c.b16 %v3778, %v3764
    %v4717 = vpack.c.b16 %v3779, %v3765
    %v4718 = vpack.c.b16 %v3780, %v3766
    %v4719 = vpack.c.b16 %v3781, %v3767
    %v4720 = vpack.c.b16 %v3796, %v3782
    %v4721 = vpack.c.b16 %v3797, %v3783
    %v4722 = vpack.c.b16 %v3798, %v3784
    %v4723 = vpack.c.b16 %v3799, %v3785
    %v4724 = vpack.c.b16 %v3800, %v3786
    %v4725 = vpack.c.b16 %v3801, %v3787
    %v4726 = vpack.c.b16 %v3802, %v3788
    %v4727 = vpack.c.b16 %v3803, %v3789
    %v4728 = vpack.c.b16 %v3804, %v3790
    %v4729 = vpack.c.b16 %v3805, %v3791
    %v4730 = vpack.c.b16 %v3806, %v3792
    %v4731 = vpack.c.b16 %v3807, %v3793
    %v4732 = vpack.c.b16 %v3808, %v3794
    %v4733 = vpack.c.b16 %v3809, %v3795
    %v4734 = vpack.c.b16 %v3824, %v3810
    %v4735 = vpack.c.b16 %v3825, %v3811
    %v4736 = vpack.c.b16 %v3826, %v3812
    %v4737 = vpack.c.b16 %v3827, %v3813
    %v4738 = vpack.c.b16 %v3828, %v3814
    %v4739 = vpack.c.b16 %v3829, %v3815
    %v4740 = vpack.c.b16 %v3830, %v3816
    %v4741 = vpack.c.b16 %v3831, %v3817
    %v4742 = vpack.c.b16 %v3832, %v3818
    %v4743 = vpack.c.b16 %v3833, %v3819
    %v4744 = vpack.c.b16 %v3834, %v3820
    %v4745 = vpack.c.b16 %v3835, %v3821
    %v4746 = vpack.c.b16 %v3836, %v3822
    %v4747 = vpack.c.b16 %v3837, %v3823
    %v4748 = vpack.c.b16 %v3852, %v3838
    %v4749 = vpack.c.b16 %v3853, %v3839
    %v4750 = vpack.c.b16 %v3854, %v3840
    %v4751 = vpack.c.b16 %v3855, %v3841
    %v4752 = vpack.c.b16 %v3856, %v3842
    %v4753 = vpack.c.b16 %v3857, %v3843
    %v4754 = vpack.c.b16 %v3858, %v3844
    %v4755 = vpack.c.b16 %v3859, %v3845
    %v4756 = vpack.c.b16 %v3860, %v3846
    %v4757 = vpack.c.b16 %v3861, %v3847
    %v4758 = vpack.c.b16 %v3862, %v3848
    %v4759 = vpack.c.b16 %v3863, %v3849
    %v4760 = vpack.c.b16 %v3864, %v3850
    %v4761 = vpack.c.b16 %v3865, %v3851
    %5658 = vmatprep.subr.bf16.mxu0 %v3867
    %5659 = vmatpush1.bf16.msra.mxu0 %v3866
    %5660 = vmatprep.subr.bf16.mxu0 %v3881
    %5661 = vmatpush1.bf16.msra.mxu0 %v3880
    %5662 = vmatprep.subr.bf16.mxu0 %v3895
    %5663 = vmatpush1.bf16.msra.mxu0 %v3894
    %5664 = vmatprep.subr.bf16.mxu0 %v3909
    %5665 = vmatpush1.bf16.msra.mxu0 %v3908
    %5666 = vmatprep.subr.bf16.mxu0 %v3923
    %5667 = vmatpush1.bf16.msra.mxu0 %v3922
    %5668 = vmatprep.subr.bf16.mxu0 %v3937
    %5669 = vmatpush1.bf16.msra.mxu0 %v3936
    %5670 = vmatprep.subr.bf16.mxu0 %v3951
    %5671 = vmatpush1.bf16.msra.mxu0 %v3950
    %5672 = vmatprep.subr.bf16.mxu0 %v3965
    %5673 = vmatpush1.bf16.msra.mxu0 %v3964
    %5674 = vmatprep.subr.bf16.mxu0 %v3979
    %5675 = vmatpush1.bf16.msra.mxu0 %v3978
    %5676 = vmatprep.subr.bf16.mxu0 %v3993
    %5677 = vmatpush1.bf16.msra.mxu0 %v3992
    %5678 = vmatprep.subr.bf16.mxu0 %v4007
    %5679 = vmatpush1.bf16.msra.mxu0 %v4006
    %5680 = vmatprep.subr.bf16.mxu0 %v4021
    %5681 = vmatpush1.bf16.msra.mxu0 %v4020
    %5682 = vmatprep.subr.bf16.mxu0 %v4035
    %5683 = vmatpush1.bf16.msra.mxu0 %v4034
    %5684 = vmatprep.subr.bf16.mxu0 %v4049
    %5685 = vmatpush1.bf16.msra.mxu0 %v4048
    %5686 = vmatprep.subr.bf16.mxu0 %v4063
    %5687 = vmatpush1.bf16.msra.mxu0 %v4062
    %5688 = vmatprep.subr.bf16.mxu0 %v4077
    %5689 = vmatpush1.bf16.msra.mxu0 %v4076
    %5690 = vmatprep.mubr.bf16.mxu0 %v1158
    %5691 = vmatmul.mubr.bf16.gmra.mrb[0].mxu0 %v1144
    %v5692 = vpop.f32.mrb[0].mxu0
    %v5693 = vadd.f32 %v1053, %v5692
    %v5694 = vpop.f32.mrb[0].mxu0
    %v5695 = vadd.f32 %v1057, %v5694
    %v5696 = vpop.f32.mrb[0].mxu0
    %v5697 = vpop.f32.mrb[0].mxu0
    %5698 = vdwg.mxu0
    %5699 = vmatprep.subr.bf16.mxu0 %v4091
    %5700 = vmatpush1.bf16.msra.mxu0 %v4090
    %5701 = vmatprep.subr.bf16.mxu0 %v4105
    %5702 = vmatpush1.bf16.msra.mxu0 %v4104
    %5703 = vmatprep.subr.bf16.mxu0 %v4119
    %5704 = vmatpush1.bf16.msra.mxu0 %v4118
    %5705 = vmatprep.subr.bf16.mxu0 %v4133
    %5706 = vmatpush1.bf16.msra.mxu0 %v4132
    %5707 = vmatprep.subr.bf16.mxu0 %v4147
    %5708 = vmatpush1.bf16.msra.mxu0 %v4146
    %5709 = vmatprep.subr.bf16.mxu0 %v4161
    %5710 = vmatpush1.bf16.msra.mxu0 %v4160
    %5711 = vmatprep.subr.bf16.mxu0 %v4175
    %5712 = vmatpush1.bf16.msra.mxu0 %v4174
    %5713 = vmatprep.subr.bf16.mxu0 %v4189
    %5714 = vmatpush1.bf16.msra.mxu0 %v4188
    %5715 = vmatprep.subr.bf16.mxu0 %v4203
    %5716 = vmatpush1.bf16.msra.mxu0 %v4202
    %5717 = vmatprep.subr.bf16.mxu0 %v4217
    %5718 = vmatpush1.bf16.msra.mxu0 %v4216
    %5719 = vmatprep.subr.bf16.mxu0 %v4231
    %5720 = vmatpush1.bf16.msra.mxu0 %v4230
    %5721 = vmatprep.subr.bf16.mxu0 %v4245
    %5722 = vmatpush1.bf16.msra.mxu0 %v4244
    %5723 = vmatprep.subr.bf16.mxu0 %v4259
    %5724 = vmatpush1.bf16.msra.mxu0 %v4258
    %5725 = vmatprep.subr.bf16.mxu0 %v4273
    %5726 = vmatpush1.bf16.msra.mxu0 %v4272
    %5727 = vmatprep.subr.bf16.mxu0 %v4287
    %5728 = vmatpush1.bf16.msra.mxu0 %v4286
    %5729 = vmatprep.subr.bf16.mxu0 %v4301
    %5730 = vmatpush1.bf16.msra.mxu0 %v4300
    %5731 = vmatprep.mubr.bf16.mxu0 %v1168
    %5732 = vmatmul.mubr.bf16.gmra.mrb[0].mxu0 %v1166
    %v5733 = vpop.f32.mrb[0].mxu0
    %v5734 = vadd.f32 %v5693, %v5733
    %v5735 = vpop.f32.mrb[0].mxu0
    %v5736 = vadd.f32 %v5695, %v5735
    %v5737 = vpop.f32.mrb[0].mxu0
    %v5738 = vpop.f32.mrb[0].mxu0
    %5739 = vdwg.mxu0
    %5740 = vmatprep.subr.bf16.mxu0 %v4315
    %5741 = vmatpush1.bf16.msra.mxu0 %v4314
    %5742 = vmatprep.subr.bf16.mxu0 %v4329
    %5743 = vmatpush1.bf16.msra.mxu0 %v4328
    %5744 = vmatprep.subr.bf16.mxu0 %v4343
    %5745 = vmatpush1.bf16.msra.mxu0 %v4342
    %5746 = vmatprep.subr.bf16.mxu0 %v4357
    %5747 = vmatpush1.bf16.msra.mxu0 %v4356
    %5748 = vmatprep.subr.bf16.mxu0 %v4371
    %5749 = vmatpush1.bf16.msra.mxu0 %v4370
    %5750 = vmatprep.subr.bf16.mxu0 %v4385
    %5751 = vmatpush1.bf16.msra.mxu0 %v4384
    %5752 = vmatprep.subr.bf16.mxu0 %v4399
    %5753 = vmatpush1.bf16.msra.mxu0 %v4398
    %5754 = vmatprep.subr.bf16.mxu0 %v4413
    %5755 = vmatpush1.bf16.msra.mxu0 %v4412
    %5756 = vmatprep.subr.bf16.mxu0 %v4427
    %5757 = vmatpush1.bf16.msra.mxu0 %v4426
    %5758 = vmatprep.subr.bf16.mxu0 %v4441
    %5759 = vmatpush1.bf16.msra.mxu0 %v4440
    %5760 = vmatprep.subr.bf16.mxu0 %v4455
    %5761 = vmatpush1.bf16.msra.mxu0 %v4454
    %5762 = vmatprep.subr.bf16.mxu0 %v4469
    %5763 = vmatpush1.bf16.msra.mxu0 %v4468
    %5764 = vmatprep.subr.bf16.mxu0 %v4483
    %5765 = vmatpush1.bf16.msra.mxu0 %v4482
    %5766 = vmatprep.subr.bf16.mxu0 %v4497
    %5767 = vmatpush1.bf16.msra.mxu0 %v4496
    %5768 = vmatprep.subr.bf16.mxu0 %v4511
    %5769 = vmatpush1.bf16.msra.mxu0 %v4510
    %5770 = vmatprep.subr.bf16.mxu0 %v4525
    %5771 = vmatpush1.bf16.msra.mxu0 %v4524
    %5772 = vmatprep.mubr.bf16.mxu0 %v1165
    %5773 = vmatmul.mubr.bf16.gmra.mrb[0].mxu0 %v1151
    %v5774 = vpop.f32.mrb[0].mxu0
    %v5775 = vadd.f32 %v5734, %v5774
    %v5776 = vpop.f32.mrb[0].mxu0
    %v5777 = vadd.f32 %v5736, %v5776
    %v5778 = vpop.f32.mrb[0].mxu0
    %v5779 = vpop.f32.mrb[0].mxu0
    %5780 = vdwg.mxu0
    %5781 = vmatprep.subr.bf16.mxu0 %v4539
    %5782 = vmatpush1.bf16.msra.mxu0 %v4538
    %5783 = vmatprep.subr.bf16.mxu0 %v4553
    %5784 = vmatpush1.bf16.msra.mxu0 %v4552
    %5785 = vmatprep.subr.bf16.mxu0 %v4567
    %5786 = vmatpush1.bf16.msra.mxu0 %v4566
    %5787 = vmatprep.subr.bf16.mxu0 %v4581
    %5788 = vmatpush1.bf16.msra.mxu0 %v4580
    %5789 = vmatprep.subr.bf16.mxu0 %v4595
    %5790 = vmatpush1.bf16.msra.mxu0 %v4594
    %5791 = vmatprep.subr.bf16.mxu0 %v4609
    %5792 = vmatpush1.bf16.msra.mxu0 %v4608
    %5793 = vmatprep.subr.bf16.mxu0 %v4623
    %5794 = vmatpush1.bf16.msra.mxu0 %v4622
    %5795 = vmatprep.subr.bf16.mxu0 %v4637
    %5796 = vmatpush1.bf16.msra.mxu0 %v4636
    %5797 = vmatprep.subr.bf16.mxu0 %v4651
    %5798 = vmatpush1.bf16.msra.mxu0 %v4650
    %5799 = vmatprep.subr.bf16.mxu0 %v4665
    %5800 = vmatpush1.bf16.msra.mxu0 %v4664
    %5801 = vmatprep.subr.bf16.mxu0 %v4679
    %5802 = vmatpush1.bf16.msra.mxu0 %v4678
    %5803 = vmatprep.subr.bf16.mxu0 %v4693
    %5804 = vmatpush1.bf16.msra.mxu0 %v4692
    %5805 = vmatprep.subr.bf16.mxu0 %v4707
    %5806 = vmatpush1.bf16.msra.mxu0 %v4706
    %5807 = vmatprep.subr.bf16.mxu0 %v4721
    %5808 = vmatpush1.bf16.msra.mxu0 %v4720
    %5809 = vmatprep.subr.bf16.mxu0 %v4735
    %5810 = vmatpush1.bf16.msra.mxu0 %v4734
    %5811 = vmatprep.subr.bf16.mxu0 %v4749
    %5812 = vmatpush1.bf16.msra.mxu0 %v4748
    %5813 = vmatprep.mubr.bf16.mxu0 %v1169
    %5814 = vmatmul.mubr.bf16.gmra.mrb[0].mxu0 %v1167
    %v5815 = vpop.f32.mrb[0].mxu0
    %v5816 = vadd.f32 %v5775, %v5815
    %v5817 = vpop.f32.mrb[0].mxu0
    %v5818 = vadd.f32 %v5777, %v5817
    %v5819 = vpop.f32.mrb[0].mxu0
    %v5820 = vpop.f32.mrb[0].mxu0
    %5821 = vdwg.mxu0
    %5822 = vmatprep.subr.bf16.mxu0 %v3869
    %5823 = vmatpush1.bf16.msra.mxu0 %v3868
    %5824 = vmatprep.subr.bf16.mxu0 %v3883
    %5825 = vmatpush1.bf16.msra.mxu0 %v3882
    %5826 = vmatprep.subr.bf16.mxu0 %v3897
    %5827 = vmatpush1.bf16.msra.mxu0 %v3896
    %5828 = vmatprep.subr.bf16.mxu0 %v3911
    %5829 = vmatpush1.bf16.msra.mxu0 %v3910
    %5830 = vmatprep.subr.bf16.mxu0 %v3925
    %5831 = vmatpush1.bf16.msra.mxu0 %v3924
    %5832 = vmatprep.subr.bf16.mxu0 %v3939
    %5833 = vmatpush1.bf16.msra.mxu0 %v3938
    %5834 = vmatprep.subr.bf16.mxu0 %v3953
    %5835 = vmatpush1.bf16.msra.mxu0 %v3952
    %5836 = vmatprep.subr.bf16.mxu0 %v3967
    %5837 = vmatpush1.bf16.msra.mxu0 %v3966
    %5838 = vmatprep.subr.bf16.mxu0 %v3981
    %5839 = vmatpush1.bf16.msra.mxu0 %v3980
    %5840 = vmatprep.subr.bf16.mxu0 %v3995
    %5841 = vmatpush1.bf16.msra.mxu0 %v3994
    %5842 = vmatprep.subr.bf16.mxu0 %v4009
    %5843 = vmatpush1.bf16.msra.mxu0 %v4008
    %5844 = vmatprep.subr.bf16.mxu0 %v4023
    %5845 = vmatpush1.bf16.msra.mxu0 %v4022
    %5846 = vmatprep.subr.bf16.mxu0 %v4037
    %5847 = vmatpush1.bf16.msra.mxu0 %v4036
    %5848 = vmatprep.subr.bf16.mxu0 %v4051
    %5849 = vmatpush1.bf16.msra.mxu0 %v4050
    %5850 = vmatprep.subr.bf16.mxu0 %v4065
    %5851 = vmatpush1.bf16.msra.mxu0 %v4064
    %5852 = vmatprep.subr.bf16.mxu0 %v4079
    %5853 = vmatpush1.bf16.msra.mxu0 %v4078
    %5854 = vmatprep.mubr.bf16.mxu0 %v1158
    %5855 = vmatmul.mubr.bf16.gmra.mrb[0].mxu0 %v1144
    %v5856 = vpop.f32.mrb[0].mxu0
    %v5857 = vadd.f32 %v1061, %v5856
    %v5858 = vpop.f32.mrb[0].mxu0
    %v5859 = vadd.f32 %v1065, %v5858
    %v5860 = vpop.f32.mrb[0].mxu0
    %v5861 = vpop.f32.mrb[0].mxu0
    %5862 = vdwg.mxu0
    %5863 = vmatprep.subr.bf16.mxu0 %v4093
    %5864 = vmatpush1.bf16.msra.mxu0 %v4092
    %5865 = vmatprep.subr.bf16.mxu0 %v4107
    %5866 = vmatpush1.bf16.msra.mxu0 %v4106
    %5867 = vmatprep.subr.bf16.mxu0 %v4121
    %5868 = vmatpush1.bf16.msra.mxu0 %v4120
    %5869 = vmatprep.subr.bf16.mxu0 %v4135
    %5870 = vmatpush1.bf16.msra.mxu0 %v4134
    %5871 = vmatprep.subr.bf16.mxu0 %v4149
    %5872 = vmatpush1.bf16.msra.mxu0 %v4148
    %5873 = vmatprep.subr.bf16.mxu0 %v4163
    %5874 = vmatpush1.bf16.msra.mxu0 %v4162
    %5875 = vmatprep.subr.bf16.mxu0 %v4177
    %5876 = vmatpush1.bf16.msra.mxu0 %v4176
    %5877 = vmatprep.subr.bf16.mxu0 %v4191
    %5878 = vmatpush1.bf16.msra.mxu0 %v4190
    %5879 = vmatprep.subr.bf16.mxu0 %v4205
    %5880 = vmatpush1.bf16.msra.mxu0 %v4204
    %5881 = vmatprep.subr.bf16.mxu0 %v4219
    %5882 = vmatpush1.bf16.msra.mxu0 %v4218
    %5883 = vmatprep.subr.bf16.mxu0 %v4233
    %5884 = vmatpush1.bf16.msra.mxu0 %v4232
    %5885 = vmatprep.subr.bf16.mxu0 %v4247
    %5886 = vmatpush1.bf16.msra.mxu0 %v4246
    %5887 = vmatprep.subr.bf16.mxu0 %v4261
    %5888 = vmatpush1.bf16.msra.mxu0 %v4260
    %5889 = vmatprep.subr.bf16.mxu0 %v4275
    %5890 = vmatpush1.bf16.msra.mxu0 %v4274
    %5891 = vmatprep.subr.bf16.mxu0 %v4289
    %5892 = vmatpush1.bf16.msra.mxu0 %v4288
    %5893 = vmatprep.subr.bf16.mxu0 %v4303
    %5894 = vmatpush1.bf16.msra.mxu0 %v4302
    %5895 = vmatprep.mubr.bf16.mxu0 %v1168
    %5896 = vmatmul.mubr.bf16.gmra.mrb[0].mxu0 %v1166
    %v5897 = vpop.f32.mrb[0].mxu0
    %v5898 = vadd.f32 %v5857, %v5897
    %v5899 = vpop.f32.mrb[0].mxu0
    %v5900 = vadd.f32 %v5859, %v5899
    %v5901 = vpop.f32.mrb[0].mxu0
    %v5902 = vpop.f32.mrb[0].mxu0
    %5903 = vdwg.mxu0
    %5904 = vmatprep.subr.bf16.mxu0 %v4317
    %5905 = vmatpush1.bf16.msra.mxu0 %v4316
    %5906 = vmatprep.subr.bf16.mxu0 %v4331
    %5907 = vmatpush1.bf16.msra.mxu0 %v4330
    %5908 = vmatprep.subr.bf16.mxu0 %v4345
    %5909 = vmatpush1.bf16.msra.mxu0 %v4344
    %5910 = vmatprep.subr.bf16.mxu0 %v4359
    %5911 = vmatpush1.bf16.msra.mxu0 %v4358
    %5912 = vmatprep.subr.bf16.mxu0 %v4373
    %5913 = vmatpush1.bf16.msra.mxu0 %v4372
    %5914 = vmatprep.subr.bf16.mxu0 %v4387
    %5915 = vmatpush1.bf16.msra.mxu0 %v4386
    %5916 = vmatprep.subr.bf16.mxu0 %v4401
    %5917 = vmatpush1.bf16.msra.mxu0 %v4400
    %5918 = vmatprep.subr.bf16.mxu0 %v4415
    %5919 = vmatpush1.bf16.msra.mxu0 %v4414
    %5920 = vmatprep.subr.bf16.mxu0 %v4429
    %5921 = vmatpush1.bf16.msra.mxu0 %v4428
    %5922 = vmatprep.subr.bf16.mxu0 %v4443
    %5923 = vmatpush1.bf16.msra.mxu0 %v4442
    %5924 = vmatprep.subr.bf16.mxu0 %v4457
    %5925 = vmatpush1.bf16.msra.mxu0 %v4456
    %5926 = vmatprep.subr.bf16.mxu0 %v4471
    %5927 = vmatpush1.bf16.msra.mxu0 %v4470
    %5928 = vmatprep.subr.bf16.mxu0 %v4485
    %5929 = vmatpush1.bf16.msra.mxu0 %v4484
    %5930 = vmatprep.subr.bf16.mxu0 %v4499
    %5931 = vmatpush1.bf16.msra.mxu0 %v4498
    %5932 = vmatprep.subr.bf16.mxu0 %v4513
    %5933 = vmatpush1.bf16.msra.mxu0 %v4512
    %5934 = vmatprep.subr.bf16.mxu0 %v4527
    %5935 = vmatpush1.bf16.msra.mxu0 %v4526
    %5936 = vmatprep.mubr.bf16.mxu0 %v1165
    %5937 = vmatmul.mubr.bf16.gmra.mrb[0].mxu0 %v1151
    %v5938 = vpop.f32.mrb[0].mxu0
    %v5939 = vadd.f32 %v5898, %v5938
    %v5940 = vpop.f32.mrb[0].mxu0
    %v5941 = vadd.f32 %v5900, %v5940
    %v5942 = vpop.f32.mrb[0].mxu0
    %v5943 = vpop.f32.mrb[0].mxu0
    %5944 = vdwg.mxu0
    %5945 = vmatprep.subr.bf16.mxu0 %v4541
    %5946 = vmatpush1.bf16.msra.mxu0 %v4540
    %5947 = vmatprep.subr.bf16.mxu0 %v4555
    %5948 = vmatpush1.bf16.msra.mxu0 %v4554
    %5949 = vmatprep.subr.bf16.mxu0 %v4569
    %5950 = vmatpush1.bf16.msra.mxu0 %v4568
    %5951 = vmatprep.subr.bf16.mxu0 %v4583
    %5952 = vmatpush1.bf16.msra.mxu0 %v4582
    %5953 = vmatprep.subr.bf16.mxu0 %v4597
    %5954 = vmatpush1.bf16.msra.mxu0 %v4596
    %5955 = vmatprep.subr.bf16.mxu0 %v4611
    %5956 = vmatpush1.bf16.msra.mxu0 %v4610
    %5957 = vmatprep.subr.bf16.mxu0 %v4625
    %5958 = vmatpush1.bf16.msra.mxu0 %v4624
    %5959 = vmatprep.subr.bf16.mxu0 %v4639
    %5960 = vmatpush1.bf16.msra.mxu0 %v4638
    %5961 = vmatprep.subr.bf16.mxu0 %v4653
    %5962 = vmatpush1.bf16.msra.mxu0 %v4652
    %5963 = vmatprep.subr.bf16.mxu0 %v4667
    %5964 = vmatpush1.bf16.msra.mxu0 %v4666
    %5965 = vmatprep.subr.bf16.mxu0 %v4681
    %5966 = vmatpush1.bf16.msra.mxu0 %v4680
    %5967 = vmatprep.subr.bf16.mxu0 %v4695
    %5968 = vmatpush1.bf16.msra.mxu0 %v4694
    %5969 = vmatprep.subr.bf16.mxu0 %v4709
    %5970 = vmatpush1.bf16.msra.mxu0 %v4708
    %5971 = vmatprep.subr.bf16.mxu0 %v4723
    %5972 = vmatpush1.bf16.msra.mxu0 %v4722
    %5973 = vmatprep.subr.bf16.mxu0 %v4737
    %5974 = vmatpush1.bf16.msra.mxu0 %v4736
    %5975 = vmatprep.subr.bf16.mxu0 %v4751
    %5976 = vmatpush1.bf16.msra.mxu0 %v4750
    %5977 = vmatprep.mubr.bf16.mxu0 %v1169
    %5978 = vmatmul.mubr.bf16.gmra.mrb[0].mxu0 %v1167
    %v5979 = vpop.f32.mrb[0].mxu0
    %v5980 = vadd.f32 %v5939, %v5979
    %v5981 = vpop.f32.mrb[0].mxu0
    %v5982 = vadd.f32 %v5941, %v5981
    %v5983 = vpop.f32.mrb[0].mxu0
    %v5984 = vpop.f32.mrb[0].mxu0
    %5985 = vdwg.mxu0
    %5986 = vmatprep.subr.bf16.mxu0 %v3871
    %5987 = vmatpush1.bf16.msra.mxu0 %v3870
    %5988 = vmatprep.subr.bf16.mxu0 %v3885
    %5989 = vmatpush1.bf16.msra.mxu0 %v3884
    %5990 = vmatprep.subr.bf16.mxu0 %v3899
    %5991 = vmatpush1.bf16.msra.mxu0 %v3898
    %5992 = vmatprep.subr.bf16.mxu0 %v3913
    %5993 = vmatpush1.bf16.msra.mxu0 %v3912
    %5994 = vmatprep.subr.bf16.mxu0 %v3927
    %5995 = vmatpush1.bf16.msra.mxu0 %v3926
    %5996 = vmatprep.subr.bf16.mxu0 %v3941
    %5997 = vmatpush1.bf16.msra.mxu0 %v3940
    %5998 = vmatprep.subr.bf16.mxu0 %v3955
    %5999 = vmatpush1.bf16.msra.mxu0 %v3954
    %6000 = vmatprep.subr.bf16.mxu0 %v3969
    %6001 = vmatpush1.bf16.msra.mxu0 %v3968
    %6002 = vmatprep.subr.bf16.mxu0 %v3983
    %6003 = vmatpush1.bf16.msra.mxu0 %v3982
    %6004 = vmatprep.subr.bf16.mxu0 %v3997
    %6005 = vmatpush1.bf16.msra.mxu0 %v3996
    %6006 = vmatprep.subr.bf16.mxu0 %v4011
    %6007 = vmatpush1.bf16.msra.mxu0 %v4010
    %6008 = vmatprep.subr.bf16.mxu0 %v4025
    %6009 = vmatpush1.bf16.msra.mxu0 %v4024
    %6010 = vmatprep.subr.bf16.mxu0 %v4039
    %6011 = vmatpush1.bf16.msra.mxu0 %v4038
    %6012 = vmatprep.subr.bf16.mxu0 %v4053
    %6013 = vmatpush1.bf16.msra.mxu0 %v4052
    %6014 = vmatprep.subr.bf16.mxu0 %v4067
    %6015 = vmatpush1.bf16.msra.mxu0 %v4066
    %6016 = vmatprep.subr.bf16.mxu0 %v4081
    %6017 = vmatpush1.bf16.msra.mxu0 %v4080
    %6018 = vmatprep.mubr.bf16.mxu0 %v1158
    %6019 = vmatmul.mubr.bf16.gmra.mrb[0].mxu0 %v1144
    %v6020 = vpop.f32.mrb[0].mxu0
    %v6021 = vadd.f32 %v1069, %v6020
    %v6022 = vpop.f32.mrb[0].mxu0
    %v6023 = vadd.f32 %v1073, %v6022
    %v6024 = vpop.f32.mrb[0].mxu0
    %v6025 = vpop.f32.mrb[0].mxu0
    %6026 = vdwg.mxu0
    %6027 = vmatprep.subr.bf16.mxu0 %v4095
    %6028 = vmatpush1.bf16.msra.mxu0 %v4094
    %6029 = vmatprep.subr.bf16.mxu0 %v4109
    %6030 = vmatpush1.bf16.msra.mxu0 %v4108
    %6031 = vmatprep.subr.bf16.mxu0 %v4123
    %6032 = vmatpush1.bf16.msra.mxu0 %v4122
    %6033 = vmatprep.subr.bf16.mxu0 %v4137
    %6034 = vmatpush1.bf16.msra.mxu0 %v4136
    %6035 = vmatprep.subr.bf16.mxu0 %v4151
    %6036 = vmatpush1.bf16.msra.mxu0 %v4150
    %6037 = vmatprep.subr.bf16.mxu0 %v4165
    %6038 = vmatpush1.bf16.msra.mxu0 %v4164
    %6039 = vmatprep.subr.bf16.mxu0 %v4179
    %6040 = vmatpush1.bf16.msra.mxu0 %v4178
    %6041 = vmatprep.subr.bf16.mxu0 %v4193
    %6042 = vmatpush1.bf16.msra.mxu0 %v4192
    %6043 = vmatprep.subr.bf16.mxu0 %v4207
    %6044 = vmatpush1.bf16.msra.mxu0 %v4206
    %6045 = vmatprep.subr.bf16.mxu0 %v4221
    %6046 = vmatpush1.bf16.msra.mxu0 %v4220
    %6047 = vmatprep.subr.bf16.mxu0 %v4235
    %6048 = vmatpush1.bf16.msra.mxu0 %v4234
    %6049 = vmatprep.subr.bf16.mxu0 %v4249
    %6050 = vmatpush1.bf16.msra.mxu0 %v4248
    %6051 = vmatprep.subr.bf16.mxu0 %v4263
    %6052 = vmatpush1.bf16.msra.mxu0 %v4262
    %6053 = vmatprep.subr.bf16.mxu0 %v4277
    %6054 = vmatpush1.bf16.msra.mxu0 %v4276
    %6055 = vmatprep.subr.bf16.mxu0 %v4291
    %6056 = vmatpush1.bf16.msra.mxu0 %v4290
    %6057 = vmatprep.subr.bf16.mxu0 %v4305
    %6058 = vmatpush1.bf16.msra.mxu0 %v4304
    %6059 = vmatprep.mubr.bf16.mxu0 %v1168
    %6060 = vmatmul.mubr.bf16.gmra.mrb[0].mxu0 %v1166
    %v6061 = vpop.f32.mrb[0].mxu0
    %v6062 = vadd.f32 %v6021, %v6061
    %v6063 = vpop.f32.mrb[0].mxu0
    %v6064 = vadd.f32 %v6023, %v6063
    %v6065 = vpop.f32.mrb[0].mxu0
    %v6066 = vpop.f32.mrb[0].mxu0
    %6067 = vdwg.mxu0
    %6068 = vmatprep.subr.bf16.mxu0 %v4319
    %6069 = vmatpush1.bf16.msra.mxu0 %v4318
    %6070 = vmatprep.subr.bf16.mxu0 %v4333
    %6071 = vmatpush1.bf16.msra.mxu0 %v4332
    %6072 = vmatprep.subr.bf16.mxu0 %v4347
    %6073 = vmatpush1.bf16.msra.mxu0 %v4346
    %6074 = vmatprep.subr.bf16.mxu0 %v4361
    %6075 = vmatpush1.bf16.msra.mxu0 %v4360
    %6076 = vmatprep.subr.bf16.mxu0 %v4375
    %6077 = vmatpush1.bf16.msra.mxu0 %v4374
    %6078 = vmatprep.subr.bf16.mxu0 %v4389
    %6079 = vmatpush1.bf16.msra.mxu0 %v4388
    %6080 = vmatprep.subr.bf16.mxu0 %v4403
    %6081 = vmatpush1.bf16.msra.mxu0 %v4402
    %6082 = vmatprep.subr.bf16.mxu0 %v4417
    %6083 = vmatpush1.bf16.msra.mxu0 %v4416
    %6084 = vmatprep.subr.bf16.mxu0 %v4431
    %6085 = vmatpush1.bf16.msra.mxu0 %v4430
    %6086 = vmatprep.subr.bf16.mxu0 %v4445
    %6087 = vmatpush1.bf16.msra.mxu0 %v4444
    %6088 = vmatprep.subr.bf16.mxu0 %v4459
    %6089 = vmatpush1.bf16.msra.mxu0 %v4458
    %6090 = vmatprep.subr.bf16.mxu0 %v4473
    %6091 = vmatpush1.bf16.msra.mxu0 %v4472
    %6092 = vmatprep.subr.bf16.mxu0 %v4487
    %6093 = vmatpush1.bf16.msra.mxu0 %v4486
    %6094 = vmatprep.subr.bf16.mxu0 %v4501
    %6095 = vmatpush1.bf16.msra.mxu0 %v4500
    %6096 = vmatprep.subr.bf16.mxu0 %v4515
    %6097 = vmatpush1.bf16.msra.mxu0 %v4514
    %6098 = vmatprep.subr.bf16.mxu0 %v4529
    %6099 = vmatpush1.bf16.msra.mxu0 %v4528
    %6100 = vmatprep.mubr.bf16.mxu0 %v1165
    %6101 = vmatmul.mubr.bf16.gmra.mrb[0].mxu0 %v1151
    %v6102 = vpop.f32.mrb[0].mxu0
    %v6103 = vadd.f32 %v6062, %v6102
    %v6104 = vpop.f32.mrb[0].mxu0
    %v6105 = vadd.f32 %v6064, %v6104
    %v6106 = vpop.f32.mrb[0].mxu0
    %v6107 = vpop.f32.mrb[0].mxu0
    %6108 = vdwg.mxu0
    %6109 = vmatprep.subr.bf16.mxu0 %v4543
    %6110 = vmatpush1.bf16.msra.mxu0 %v4542
    %6111 = vmatprep.subr.bf16.mxu0 %v4557
    %6112 = vmatpush1.bf16.msra.mxu0 %v4556
    %6113 = vmatprep.subr.bf16.mxu0 %v4571
    %6114 = vmatpush1.bf16.msra.mxu0 %v4570
    %6115 = vmatprep.subr.bf16.mxu0 %v4585
    %6116 = vmatpush1.bf16.msra.mxu0 %v4584
    %6117 = vmatprep.subr.bf16.mxu0 %v4599
    %6118 = vmatpush1.bf16.msra.mxu0 %v4598
    %6119 = vmatprep.subr.bf16.mxu0 %v4613
    %6120 = vmatpush1.bf16.msra.mxu0 %v4612
    %6121 = vmatprep.subr.bf16.mxu0 %v4627
    %6122 = vmatpush1.bf16.msra.mxu0 %v4626
    %6123 = vmatprep.subr.bf16.mxu0 %v4641
    %6124 = vmatpush1.bf16.msra.mxu0 %v4640
    %6125 = vmatprep.subr.bf16.mxu0 %v4655
    %6126 = vmatpush1.bf16.msra.mxu0 %v4654
    %6127 = vmatprep.subr.bf16.mxu0 %v4669
    %6128 = vmatpush1.bf16.msra.mxu0 %v4668
    %6129 = vmatprep.subr.bf16.mxu0 %v4683
    %6130 = vmatpush1.bf16.msra.mxu0 %v4682
    %6131 = vmatprep.subr.bf16.mxu0 %v4697
    %6132 = vmatpush1.bf16.msra.mxu0 %v4696
    %6133 = vmatprep.subr.bf16.mxu0 %v4711
    %6134 = vmatpush1.bf16.msra.mxu0 %v4710
    %6135 = vmatprep.subr.bf16.mxu0 %v4725
    %6136 = vmatpush1.bf16.msra.mxu0 %v4724
    %6137 = vmatprep.subr.bf16.mxu0 %v4739
    %6138 = vmatpush1.bf16.msra.mxu0 %v4738
    %6139 = vmatprep.subr.bf16.mxu0 %v4753
    %6140 = vmatpush1.bf16.msra.mxu0 %v4752
    %6141 = vmatprep.mubr.bf16.mxu0 %v1169
    %6142 = vmatmul.mubr.bf16.gmra.mrb[0].mxu0 %v1167
    %v6143 = vpop.f32.mrb[0].mxu0
    %v6144 = vadd.f32 %v6103, %v6143
    %v6145 = vpop.f32.mrb[0].mxu0
    %v6146 = vadd.f32 %v6105, %v6145
    %v6147 = vpop.f32.mrb[0].mxu0
    %v6148 = vpop.f32.mrb[0].mxu0
    %6149 = vdwg.mxu0
    %6150 = vmatprep.subr.bf16.mxu0 %v3873
    %6151 = vmatpush1.bf16.msra.mxu0 %v3872
    %6152 = vmatprep.subr.bf16.mxu0 %v3887
    %6153 = vmatpush1.bf16.msra.mxu0 %v3886
    %6154 = vmatprep.subr.bf16.mxu0 %v3901
    %6155 = vmatpush1.bf16.msra.mxu0 %v3900
    %6156 = vmatprep.subr.bf16.mxu0 %v3915
    %6157 = vmatpush1.bf16.msra.mxu0 %v3914
    %6158 = vmatprep.subr.bf16.mxu0 %v3929
    %6159 = vmatpush1.bf16.msra.mxu0 %v3928
    %6160 = vmatprep.subr.bf16.mxu0 %v3943
    %6161 = vmatpush1.bf16.msra.mxu0 %v3942
    %6162 = vmatprep.subr.bf16.mxu0 %v3957
    %6163 = vmatpush1.bf16.msra.mxu0 %v3956
    %6164 = vmatprep.subr.bf16.mxu0 %v3971
    %6165 = vmatpush1.bf16.msra.mxu0 %v3970
    %6166 = vmatprep.subr.bf16.mxu0 %v3985
    %6167 = vmatpush1.bf16.msra.mxu0 %v3984
    %6168 = vmatprep.subr.bf16.mxu0 %v3999
    %6169 = vmatpush1.bf16.msra.mxu0 %v3998
    %6170 = vmatprep.subr.bf16.mxu0 %v4013
    %6171 = vmatpush1.bf16.msra.mxu0 %v4012
    %6172 = vmatprep.subr.bf16.mxu0 %v4027
    %6173 = vmatpush1.bf16.msra.mxu0 %v4026
    %6174 = vmatprep.subr.bf16.mxu0 %v4041
    %6175 = vmatpush1.bf16.msra.mxu0 %v4040
    %6176 = vmatprep.subr.bf16.mxu0 %v4055
    %6177 = vmatpush1.bf16.msra.mxu0 %v4054
    %6178 = vmatprep.subr.bf16.mxu0 %v4069
    %6179 = vmatpush1.bf16.msra.mxu0 %v4068
    %6180 = vmatprep.subr.bf16.mxu0 %v4083
    %6181 = vmatpush1.bf16.msra.mxu0 %v4082
    %6182 = vmatprep.mubr.bf16.mxu0 %v1158
    %6183 = vmatmul.mubr.bf16.gmra.mrb[0].mxu0 %v1144
    %v6184 = vpop.f32.mrb[0].mxu0
    %v6185 = vadd.f32 %v1077, %v6184
    %v6186 = vpop.f32.mrb[0].mxu0
    %v6187 = vadd.f32 %v1081, %v6186
    %v6188 = vpop.f32.mrb[0].mxu0
    %v6189 = vpop.f32.mrb[0].mxu0
    %6190 = vdwg.mxu0
    %6191 = vmatprep.subr.bf16.mxu0 %v4097
    %6192 = vmatpush1.bf16.msra.mxu0 %v4096
    %6193 = vmatprep.subr.bf16.mxu0 %v4111
    %6194 = vmatpush1.bf16.msra.mxu0 %v4110
    %6195 = vmatprep.subr.bf16.mxu0 %v4125
    %6196 = vmatpush1.bf16.msra.mxu0 %v4124
    %6197 = vmatprep.subr.bf16.mxu0 %v4139
    %6198 = vmatpush1.bf16.msra.mxu0 %v4138
    %6199 = vmatprep.subr.bf16.mxu0 %v4153
    %6200 = vmatpush1.bf16.msra.mxu0 %v4152
    %6201 = vmatprep.subr.bf16.mxu0 %v4167
    %6202 = vmatpush1.bf16.msra.mxu0 %v4166
    %6203 = vmatprep.subr.bf16.mxu0 %v4181
    %6204 = vmatpush1.bf16.msra.mxu0 %v4180
    %6205 = vmatprep.subr.bf16.mxu0 %v4195
    %6206 = vmatpush1.bf16.msra.mxu0 %v4194
    %6207 = vmatprep.subr.bf16.mxu0 %v4209
    %6208 = vmatpush1.bf16.msra.mxu0 %v4208
    %6209 = vmatprep.subr.bf16.mxu0 %v4223
    %6210 = vmatpush1.bf16.msra.mxu0 %v4222
    %6211 = vmatprep.subr.bf16.mxu0 %v4237
    %6212 = vmatpush1.bf16.msra.mxu0 %v4236
    %6213 = vmatprep.subr.bf16.mxu0 %v4251
    %6214 = vmatpush1.bf16.msra.mxu0 %v4250
    %6215 = vmatprep.subr.bf16.mxu0 %v4265
    %6216 = vmatpush1.bf16.msra.mxu0 %v4264
    %6217 = vmatprep.subr.bf16.mxu0 %v4279
    %6218 = vmatpush1.bf16.msra.mxu0 %v4278
    %6219 = vmatprep.subr.bf16.mxu0 %v4293
    %6220 = vmatpush1.bf16.msra.mxu0 %v4292
    %6221 = vmatprep.subr.bf16.mxu0 %v4307
    %6222 = vmatpush1.bf16.msra.mxu0 %v4306
    %6223 = vmatprep.mubr.bf16.mxu0 %v1168
    %6224 = vmatmul.mubr.bf16.gmra.mrb[0].mxu0 %v1166
    %v6225 = vpop.f32.mrb[0].mxu0
    %v6226 = vadd.f32 %v6185, %v6225
    %v6227 = vpop.f32.mrb[0].mxu0
    %v6228 = vadd.f32 %v6187, %v6227
    %v6229 = vpop.f32.mrb[0].mxu0
    %v6230 = vpop.f32.mrb[0].mxu0
    %6231 = vdwg.mxu0
    %6232 = vmatprep.subr.bf16.mxu0 %v4321
    %6233 = vmatpush1.bf16.msra.mxu0 %v4320
    %6234 = vmatprep.subr.bf16.mxu0 %v4335
    %6235 = vmatpush1.bf16.msra.mxu0 %v4334
    %6236 = vmatprep.subr.bf16.mxu0 %v4349
    %6237 = vmatpush1.bf16.msra.mxu0 %v4348
    %6238 = vmatprep.subr.bf16.mxu0 %v4363
    %6239 = vmatpush1.bf16.msra.mxu0 %v4362
    %6240 = vmatprep.subr.bf16.mxu0 %v4377
    %6241 = vmatpush1.bf16.msra.mxu0 %v4376
    %6242 = vmatprep.subr.bf16.mxu0 %v4391
    %6243 = vmatpush1.bf16.msra.mxu0 %v4390
    %6244 = vmatprep.subr.bf16.mxu0 %v4405
    %6245 = vmatpush1.bf16.msra.mxu0 %v4404
    %6246 = vmatprep.subr.bf16.mxu0 %v4419
    %6247 = vmatpush1.bf16.msra.mxu0 %v4418
    %6248 = vmatprep.subr.bf16.mxu0 %v4433
    %6249 = vmatpush1.bf16.msra.mxu0 %v4432
    %6250 = vmatprep.subr.bf16.mxu0 %v4447
    %6251 = vmatpush1.bf16.msra.mxu0 %v4446
    %6252 = vmatprep.subr.bf16.mxu0 %v4461
    %6253 = vmatpush1.bf16.msra.mxu0 %v4460
    %6254 = vmatprep.subr.bf16.mxu0 %v4475
    %6255 = vmatpush1.bf16.msra.mxu0 %v4474
    %6256 = vmatprep.subr.bf16.mxu0 %v4489
    %6257 = vmatpush1.bf16.msra.mxu0 %v4488
    %6258 = vmatprep.subr.bf16.mxu0 %v4503
    %6259 = vmatpush1.bf16.msra.mxu0 %v4502
    %6260 = vmatprep.subr.bf16.mxu0 %v4517
    %6261 = vmatpush1.bf16.msra.mxu0 %v4516
    %6262 = vmatprep.subr.bf16.mxu0 %v4531
    %6263 = vmatpush1.bf16.msra.mxu0 %v4530
    %6264 = vmatprep.mubr.bf16.mxu0 %v1165
    %6265 = vmatmul.mubr.bf16.gmra.mrb[0].mxu0 %v1151
    %v6266 = vpop.f32.mrb[0].mxu0
    %v6267 = vadd.f32 %v6226, %v6266
    %v6268 = vpop.f32.mrb[0].mxu0
    %v6269 = vadd.f32 %v6228, %v6268
    %v6270 = vpop.f32.mrb[0].mxu0
    %v6271 = vpop.f32.mrb[0].mxu0
    %6272 = vdwg.mxu0
    %6273 = vmatprep.subr.bf16.mxu0 %v4545
    %6274 = vmatpush1.bf16.msra.mxu0 %v4544
    %6275 = vmatprep.subr.bf16.mxu0 %v4559
    %6276 = vmatpush1.bf16.msra.mxu0 %v4558
    %6277 = vmatprep.subr.bf16.mxu0 %v4573
    %6278 = vmatpush1.bf16.msra.mxu0 %v4572
    %6279 = vmatprep.subr.bf16.mxu0 %v4587
    %6280 = vmatpush1.bf16.msra.mxu0 %v4586
    %6281 = vmatprep.subr.bf16.mxu0 %v4601
    %6282 = vmatpush1.bf16.msra.mxu0 %v4600
    %6283 = vmatprep.subr.bf16.mxu0 %v4615
    %6284 = vmatpush1.bf16.msra.mxu0 %v4614
    %6285 = vmatprep.subr.bf16.mxu0 %v4629
    %6286 = vmatpush1.bf16.msra.mxu0 %v4628
    %6287 = vmatprep.subr.bf16.mxu0 %v4643
    %6288 = vmatpush1.bf16.msra.mxu0 %v4642
    %6289 = vmatprep.subr.bf16.mxu0 %v4657
    %6290 = vmatpush1.bf16.msra.mxu0 %v4656
    %6291 = vmatprep.subr.bf16.mxu0 %v4671
    %6292 = vmatpush1.bf16.msra.mxu0 %v4670
    %6293 = vmatprep.subr.bf16.mxu0 %v4685
    %6294 = vmatpush1.bf16.msra.mxu0 %v4684
    %6295 = vmatprep.subr.bf16.mxu0 %v4699
    %6296 = vmatpush1.bf16.msra.mxu0 %v4698
    %6297 = vmatprep.subr.bf16.mxu0 %v4713
    %6298 = vmatpush1.bf16.msra.mxu0 %v4712
    %6299 = vmatprep.subr.bf16.mxu0 %v4727
    %6300 = vmatpush1.bf16.msra.mxu0 %v4726
    %6301 = vmatprep.subr.bf16.mxu0 %v4741
    %6302 = vmatpush1.bf16.msra.mxu0 %v4740
    %6303 = vmatprep.subr.bf16.mxu0 %v4755
    %6304 = vmatpush1.bf16.msra.mxu0 %v4754
    %6305 = vmatprep.mubr.bf16.mxu0 %v1169
    %6306 = vmatmul.mubr.bf16.gmra.mrb[0].mxu0 %v1167
    %v6307 = vpop.f32.mrb[0].mxu0
    %v6308 = vadd.f32 %v6267, %v6307
    %v6309 = vpop.f32.mrb[0].mxu0
    %v6310 = vadd.f32 %v6269, %v6309
    %v6311 = vpop.f32.mrb[0].mxu0
    %v6312 = vpop.f32.mrb[0].mxu0
    %6313 = vdwg.mxu0
    %6314 = vmatprep.subr.bf16.mxu0 %v3875
    %6315 = vmatpush1.bf16.msra.mxu0 %v3874
    %6316 = vmatprep.subr.bf16.mxu0 %v3889
    %6317 = vmatpush1.bf16.msra.mxu0 %v3888
    %6318 = vmatprep.subr.bf16.mxu0 %v3903
    %6319 = vmatpush1.bf16.msra.mxu0 %v3902
    %6320 = vmatprep.subr.bf16.mxu0 %v3917
    %6321 = vmatpush1.bf16.msra.mxu0 %v3916
    %6322 = vmatprep.subr.bf16.mxu0 %v3931
    %6323 = vmatpush1.bf16.msra.mxu0 %v3930
    %6324 = vmatprep.subr.bf16.mxu0 %v3945
    %6325 = vmatpush1.bf16.msra.mxu0 %v3944
    %6326 = vmatprep.subr.bf16.mxu0 %v3959
    %6327 = vmatpush1.bf16.msra.mxu0 %v3958
    %6328 = vmatprep.subr.bf16.mxu0 %v3973
    %6329 = vmatpush1.bf16.msra.mxu0 %v3972
    %6330 = vmatprep.subr.bf16.mxu0 %v3987
    %6331 = vmatpush1.bf16.msra.mxu0 %v3986
    %6332 = vmatprep.subr.bf16.mxu0 %v4001
    %6333 = vmatpush1.bf16.msra.mxu0 %v4000
    %6334 = vmatprep.subr.bf16.mxu0 %v4015
    %6335 = vmatpush1.bf16.msra.mxu0 %v4014
    %6336 = vmatprep.subr.bf16.mxu0 %v4029
    %6337 = vmatpush1.bf16.msra.mxu0 %v4028
    %6338 = vmatprep.subr.bf16.mxu0 %v4043
    %6339 = vmatpush1.bf16.msra.mxu0 %v4042
    %6340 = vmatprep.subr.bf16.mxu0 %v4057
    %6341 = vmatpush1.bf16.msra.mxu0 %v4056
    %6342 = vmatprep.subr.bf16.mxu0 %v4071
    %6343 = vmatpush1.bf16.msra.mxu0 %v4070
    %6344 = vmatprep.subr.bf16.mxu0 %v4085
    %6345 = vmatpush1.bf16.msra.mxu0 %v4084
    %6346 = vmatprep.mubr.bf16.mxu0 %v1158
    %6347 = vmatmul.mubr.bf16.gmra.mrb[0].mxu0 %v1144
    %v6348 = vpop.f32.mrb[0].mxu0
    %v6349 = vadd.f32 %v1085, %v6348
    %v6350 = vpop.f32.mrb[0].mxu0
    %v6351 = vadd.f32 %v1089, %v6350
    %v6352 = vpop.f32.mrb[0].mxu0
    %v6353 = vpop.f32.mrb[0].mxu0
    %6354 = vdwg.mxu0
    %6355 = vmatprep.subr.bf16.mxu0 %v4099
    %6356 = vmatpush1.bf16.msra.mxu0 %v4098
    %6357 = vmatprep.subr.bf16.mxu0 %v4113
    %6358 = vmatpush1.bf16.msra.mxu0 %v4112
    %6359 = vmatprep.subr.bf16.mxu0 %v4127
    %6360 = vmatpush1.bf16.msra.mxu0 %v4126
    %6361 = vmatprep.subr.bf16.mxu0 %v4141
    %6362 = vmatpush1.bf16.msra.mxu0 %v4140
    %6363 = vmatprep.subr.bf16.mxu0 %v4155
    %6364 = vmatpush1.bf16.msra.mxu0 %v4154
    %6365 = vmatprep.subr.bf16.mxu0 %v4169
    %6366 = vmatpush1.bf16.msra.mxu0 %v4168
    %6367 = vmatprep.subr.bf16.mxu0 %v4183
    %6368 = vmatpush1.bf16.msra.mxu0 %v4182
    %6369 = vmatprep.subr.bf16.mxu0 %v4197
    %6370 = vmatpush1.bf16.msra.mxu0 %v4196
    %6371 = vmatprep.subr.bf16.mxu0 %v4211
    %6372 = vmatpush1.bf16.msra.mxu0 %v4210
    %6373 = vmatprep.subr.bf16.mxu0 %v4225
    %6374 = vmatpush1.bf16.msra.mxu0 %v4224
    %6375 = vmatprep.subr.bf16.mxu0 %v4239
    %6376 = vmatpush1.bf16.msra.mxu0 %v4238
    %6377 = vmatprep.subr.bf16.mxu0 %v4253
    %6378 = vmatpush1.bf16.msra.mxu0 %v4252
    %6379 = vmatprep.subr.bf16.mxu0 %v4267
    %6380 = vmatpush1.bf16.msra.mxu0 %v4266
    %6381 = vmatprep.subr.bf16.mxu0 %v4281
    %6382 = vmatpush1.bf16.msra.mxu0 %v4280
    %6383 = vmatprep.subr.bf16.mxu0 %v4295
    %6384 = vmatpush1.bf16.msra.mxu0 %v4294
    %6385 = vmatprep.subr.bf16.mxu0 %v4309
    %6386 = vmatpush1.bf16.msra.mxu0 %v4308
    %6387 = vmatprep.mubr.bf16.mxu0 %v1168
    %6388 = vmatmul.mubr.bf16.gmra.mrb[0].mxu0 %v1166
    %v6389 = vpop.f32.mrb[0].mxu0
    %v6390 = vadd.f32 %v6349, %v6389
    %v6391 = vpop.f32.mrb[0].mxu0
    %v6392 = vadd.f32 %v6351, %v6391
    %v6393 = vpop.f32.mrb[0].mxu0
    %v6394 = vpop.f32.mrb[0].mxu0
    %6395 = vdwg.mxu0
    %6396 = vmatprep.subr.bf16.mxu0 %v4323
    %6397 = vmatpush1.bf16.msra.mxu0 %v4322
    %6398 = vmatprep.subr.bf16.mxu0 %v4337
    %6399 = vmatpush1.bf16.msra.mxu0 %v4336
    %6400 = vmatprep.subr.bf16.mxu0 %v4351
    %6401 = vmatpush1.bf16.msra.mxu0 %v4350
    %6402 = vmatprep.subr.bf16.mxu0 %v4365
    %6403 = vmatpush1.bf16.msra.mxu0 %v4364
    %6404 = vmatprep.subr.bf16.mxu0 %v4379
    %6405 = vmatpush1.bf16.msra.mxu0 %v4378
    %6406 = vmatprep.subr.bf16.mxu0 %v4393
    %6407 = vmatpush1.bf16.msra.mxu0 %v4392
    %6408 = vmatprep.subr.bf16.mxu0 %v4407
    %6409 = vmatpush1.bf16.msra.mxu0 %v4406
    %6410 = vmatprep.subr.bf16.mxu0 %v4421
    %6411 = vmatpush1.bf16.msra.mxu0 %v4420
    %6412 = vmatprep.subr.bf16.mxu0 %v4435
    %6413 = vmatpush1.bf16.msra.mxu0 %v4434
    %6414 = vmatprep.subr.bf16.mxu0 %v4449
    %6415 = vmatpush1.bf16.msra.mxu0 %v4448
    %6416 = vmatprep.subr.bf16.mxu0 %v4463
    %6417 = vmatpush1.bf16.msra.mxu0 %v4462
    %6418 = vmatprep.subr.bf16.mxu0 %v4477
    %6419 = vmatpush1.bf16.msra.mxu0 %v4476
    %6420 = vmatprep.subr.bf16.mxu0 %v4491
    %6421 = vmatpush1.bf16.msra.mxu0 %v4490
    %6422 = vmatprep.subr.bf16.mxu0 %v4505
    %6423 = vmatpush1.bf16.msra.mxu0 %v4504
    %6424 = vmatprep.subr.bf16.mxu0 %v4519
    %6425 = vmatpush1.bf16.msra.mxu0 %v4518
    %6426 = vmatprep.subr.bf16.mxu0 %v4533
    %6427 = vmatpush1.bf16.msra.mxu0 %v4532
    %6428 = vmatprep.mubr.bf16.mxu0 %v1165
    %6429 = vmatmul.mubr.bf16.gmra.mrb[0].mxu0 %v1151
    %v6430 = vpop.f32.mrb[0].mxu0
    %v6431 = vadd.f32 %v6390, %v6430
    %v6432 = vpop.f32.mrb[0].mxu0
    %v6433 = vadd.f32 %v6392, %v6432
    %v6434 = vpop.f32.mrb[0].mxu0
    %v6435 = vpop.f32.mrb[0].mxu0
    %6436 = vdwg.mxu0
    %6437 = vmatprep.subr.bf16.mxu0 %v4547
    %6438 = vmatpush1.bf16.msra.mxu0 %v4546
    %6439 = vmatprep.subr.bf16.mxu0 %v4561
    %6440 = vmatpush1.bf16.msra.mxu0 %v4560
    %6441 = vmatprep.subr.bf16.mxu0 %v4575
    %6442 = vmatpush1.bf16.msra.mxu0 %v4574
    %6443 = vmatprep.subr.bf16.mxu0 %v4589
    %6444 = vmatpush1.bf16.msra.mxu0 %v4588
    %6445 = vmatprep.subr.bf16.mxu0 %v4603
    %6446 = vmatpush1.bf16.msra.mxu0 %v4602
    %6447 = vmatprep.subr.bf16.mxu0 %v4617
    %6448 = vmatpush1.bf16.msra.mxu0 %v4616
    %6449 = vmatprep.subr.bf16.mxu0 %v4631
    %6450 = vmatpush1.bf16.msra.mxu0 %v4630
    %6451 = vmatprep.subr.bf16.mxu0 %v4645
    %6452 = vmatpush1.bf16.msra.mxu0 %v4644
    %6453 = vmatprep.subr.bf16.mxu0 %v4659
    %6454 = vmatpush1.bf16.msra.mxu0 %v4658
    %6455 = vmatprep.subr.bf16.mxu0 %v4673
    %6456 = vmatpush1.bf16.msra.mxu0 %v4672
    %6457 = vmatprep.subr.bf16.mxu0 %v4687
    %6458 = vmatpush1.bf16.msra.mxu0 %v4686
    %6459 = vmatprep.subr.bf16.mxu0 %v4701
    %6460 = vmatpush1.bf16.msra.mxu0 %v4700
    %6461 = vmatprep.subr.bf16.mxu0 %v4715
    %6462 = vmatpush1.bf16.msra.mxu0 %v4714
    %6463 = vmatprep.subr.bf16.mxu0 %v4729
    %6464 = vmatpush1.bf16.msra.mxu0 %v4728
    %6465 = vmatprep.subr.bf16.mxu0 %v4743
    %6466 = vmatpush1.bf16.msra.mxu0 %v4742
    %6467 = vmatprep.subr.bf16.mxu0 %v4757
    %6468 = vmatpush1.bf16.msra.mxu0 %v4756
    %6469 = vmatprep.mubr.bf16.mxu0 %v1169
    %6470 = vmatmul.mubr.bf16.gmra.mrb[0].mxu0 %v1167
    %v6471 = vpop.f32.mrb[0].mxu0
    %v6472 = vadd.f32 %v6431, %v6471
    %v6473 = vpop.f32.mrb[0].mxu0
    %v6474 = vadd.f32 %v6433, %v6473
    %v6475 = vpop.f32.mrb[0].mxu0
    %v6476 = vpop.f32.mrb[0].mxu0
    %6477 = vdwg.mxu0
    %6478 = vmatprep.subr.bf16.mxu0 %v3877
    %6479 = vmatpush1.bf16.msra.mxu0 %v3876
    %6480 = vmatprep.subr.bf16.mxu0 %v3891
    %6481 = vmatpush1.bf16.msra.mxu0 %v3890
    %6482 = vmatprep.subr.bf16.mxu0 %v3905
    %6483 = vmatpush1.bf16.msra.mxu0 %v3904
    %6484 = vmatprep.subr.bf16.mxu0 %v3919
    %6485 = vmatpush1.bf16.msra.mxu0 %v3918
    %6486 = vmatprep.subr.bf16.mxu0 %v3933
    %6487 = vmatpush1.bf16.msra.mxu0 %v3932
    %6488 = vmatprep.subr.bf16.mxu0 %v3947
    %6489 = vmatpush1.bf16.msra.mxu0 %v3946
    %6490 = vmatprep.subr.bf16.mxu0 %v3961
    %6491 = vmatpush1.bf16.msra.mxu0 %v3960
    %6492 = vmatprep.subr.bf16.mxu0 %v3975
    %6493 = vmatpush1.bf16.msra.mxu0 %v3974
    %6494 = vmatprep.subr.bf16.mxu0 %v3989
    %6495 = vmatpush1.bf16.msra.mxu0 %v3988
    %6496 = vmatprep.subr.bf16.mxu0 %v4003
    %6497 = vmatpush1.bf16.msra.mxu0 %v4002
    %6498 = vmatprep.subr.bf16.mxu0 %v4017
    %6499 = vmatpush1.bf16.msra.mxu0 %v4016
    %6500 = vmatprep.subr.bf16.mxu0 %v4031
    %6501 = vmatpush1.bf16.msra.mxu0 %v4030
    %6502 = vmatprep.subr.bf16.mxu0 %v4045
    %6503 = vmatpush1.bf16.msra.mxu0 %v4044
    %6504 = vmatprep.subr.bf16.mxu0 %v4059
    %6505 = vmatpush1.bf16.msra.mxu0 %v4058
    %6506 = vmatprep.subr.bf16.mxu0 %v4073
    %6507 = vmatpush1.bf16.msra.mxu0 %v4072
    %6508 = vmatprep.subr.bf16.mxu0 %v4087
    %6509 = vmatpush1.bf16.msra.mxu0 %v4086
    %6510 = vmatprep.mubr.bf16.mxu0 %v1158
    %6511 = vmatmul.mubr.bf16.gmra.mrb[0].mxu0 %v1144
    %v6512 = vpop.f32.mrb[0].mxu0
    %v6513 = vadd.f32 %v1093, %v6512
    %v6514 = vpop.f32.mrb[0].mxu0
    %v6515 = vadd.f32 %v1097, %v6514
    %v6516 = vpop.f32.mrb[0].mxu0
    %v6517 = vpop.f32.mrb[0].mxu0
    %6518 = vdwg.mxu0
    %6519 = vmatprep.subr.bf16.mxu0 %v4101
    %6520 = vmatpush1.bf16.msra.mxu0 %v4100
    %6521 = vmatprep.subr.bf16.mxu0 %v4115
    %6522 = vmatpush1.bf16.msra.mxu0 %v4114
    %6523 = vmatprep.subr.bf16.mxu0 %v4129
    %6524 = vmatpush1.bf16.msra.mxu0 %v4128
    %6525 = vmatprep.subr.bf16.mxu0 %v4143
    %6526 = vmatpush1.bf16.msra.mxu0 %v4142
    %6527 = vmatprep.subr.bf16.mxu0 %v4157
    %6528 = vmatpush1.bf16.msra.mxu0 %v4156
    %6529 = vmatprep.subr.bf16.mxu0 %v4171
    %6530 = vmatpush1.bf16.msra.mxu0 %v4170
    %6531 = vmatprep.subr.bf16.mxu0 %v4185
    %6532 = vmatpush1.bf16.msra.mxu0 %v4184
    %6533 = vmatprep.subr.bf16.mxu0 %v4199
    %6534 = vmatpush1.bf16.msra.mxu0 %v4198
    %6535 = vmatprep.subr.bf16.mxu0 %v4213
    %6536 = vmatpush1.bf16.msra.mxu0 %v4212
    %6537 = vmatprep.subr.bf16.mxu0 %v4227
    %6538 = vmatpush1.bf16.msra.mxu0 %v4226
    %6539 = vmatprep.subr.bf16.mxu0 %v4241
    %6540 = vmatpush1.bf16.msra.mxu0 %v4240
    %6541 = vmatprep.subr.bf16.mxu0 %v4255
    %6542 = vmatpush1.bf16.msra.mxu0 %v4254
    %6543 = vmatprep.subr.bf16.mxu0 %v4269
    %6544 = vmatpush1.bf16.msra.mxu0 %v4268
    %6545 = vmatprep.subr.bf16.mxu0 %v4283
    %6546 = vmatpush1.bf16.msra.mxu0 %v4282
    %6547 = vmatprep.subr.bf16.mxu0 %v4297
    %6548 = vmatpush1.bf16.msra.mxu0 %v4296
    %6549 = vmatprep.subr.bf16.mxu0 %v4311
    %6550 = vmatpush1.bf16.msra.mxu0 %v4310
    %6551 = vmatprep.mubr.bf16.mxu0 %v1168
    %6552 = vmatmul.mubr.bf16.gmra.mrb[0].mxu0 %v1166
    %v6553 = vpop.f32.mrb[0].mxu0
    %v6554 = vadd.f32 %v6513, %v6553
    %v6555 = vpop.f32.mrb[0].mxu0
    %v6556 = vadd.f32 %v6515, %v6555
    %v6557 = vpop.f32.mrb[0].mxu0
    %v6558 = vpop.f32.mrb[0].mxu0
    %6559 = vdwg.mxu0
    %6560 = vmatprep.subr.bf16.mxu0 %v4325
    %6561 = vmatpush1.bf16.msra.mxu0 %v4324
    %6562 = vmatprep.subr.bf16.mxu0 %v4339
    %6563 = vmatpush1.bf16.msra.mxu0 %v4338
    %6564 = vmatprep.subr.bf16.mxu0 %v4353
    %6565 = vmatpush1.bf16.msra.mxu0 %v4352
    %6566 = vmatprep.subr.bf16.mxu0 %v4367
    %6567 = vmatpush1.bf16.msra.mxu0 %v4366
    %6568 = vmatprep.subr.bf16.mxu0 %v4381
    %6569 = vmatpush1.bf16.msra.mxu0 %v4380
    %6570 = vmatprep.subr.bf16.mxu0 %v4395
    %6571 = vmatpush1.bf16.msra.mxu0 %v4394
    %6572 = vmatprep.subr.bf16.mxu0 %v4409
    %6573 = vmatpush1.bf16.msra.mxu0 %v4408
    %6574 = vmatprep.subr.bf16.mxu0 %v4423
    %6575 = vmatpush1.bf16.msra.mxu0 %v4422
    %6576 = vmatprep.subr.bf16.mxu0 %v4437
    %6577 = vmatpush1.bf16.msra.mxu0 %v4436
    %6578 = vmatprep.subr.bf16.mxu0 %v4451
    %6579 = vmatpush1.bf16.msra.mxu0 %v4450
    %6580 = vmatprep.subr.bf16.mxu0 %v4465
    %6581 = vmatpush1.bf16.msra.mxu0 %v4464
    %6582 = vmatprep.subr.bf16.mxu0 %v4479
    %6583 = vmatpush1.bf16.msra.mxu0 %v4478
    %6584 = vmatprep.subr.bf16.mxu0 %v4493
    %6585 = vmatpush1.bf16.msra.mxu0 %v4492
    %6586 = vmatprep.subr.bf16.mxu0 %v4507
    %6587 = vmatpush1.bf16.msra.mxu0 %v4506
    %6588 = vmatprep.subr.bf16.mxu0 %v4521
    %6589 = vmatpush1.bf16.msra.mxu0 %v4520
    %6590 = vmatprep.subr.bf16.mxu0 %v4535
    %6591 = vmatpush1.bf16.msra.mxu0 %v4534
    %6592 = vmatprep.mubr.bf16.mxu0 %v1165
    %6593 = vmatmul.mubr.bf16.gmra.mrb[0].mxu0 %v1151
    %v6594 = vpop.f32.mrb[0].mxu0
    %v6595 = vadd.f32 %v6554, %v6594
    %v6596 = vpop.f32.mrb[0].mxu0
    %v6597 = vadd.f32 %v6556, %v6596
    %v6598 = vpop.f32.mrb[0].mxu0
    %v6599 = vpop.f32.mrb[0].mxu0
    %6600 = vdwg.mxu0
    %6601 = vmatprep.subr.bf16.mxu0 %v4549
    %6602 = vmatpush1.bf16.msra.mxu0 %v4548
    %6603 = vmatprep.subr.bf16.mxu0 %v4563
    %6604 = vmatpush1.bf16.msra.mxu0 %v4562
    %6605 = vmatprep.subr.bf16.mxu0 %v4577
    %6606 = vmatpush1.bf16.msra.mxu0 %v4576
    %6607 = vmatprep.subr.bf16.mxu0 %v4591
    %6608 = vmatpush1.bf16.msra.mxu0 %v4590
    %6609 = vmatprep.subr.bf16.mxu0 %v4605
    %6610 = vmatpush1.bf16.msra.mxu0 %v4604
    %6611 = vmatprep.subr.bf16.mxu0 %v4619
    %6612 = vmatpush1.bf16.msra.mxu0 %v4618
    %6613 = vmatprep.subr.bf16.mxu0 %v4633
    %6614 = vmatpush1.bf16.msra.mxu0 %v4632
    %6615 = vmatprep.subr.bf16.mxu0 %v4647
    %6616 = vmatpush1.bf16.msra.mxu0 %v4646
    %6617 = vmatprep.subr.bf16.mxu0 %v4661
    %6618 = vmatpush1.bf16.msra.mxu0 %v4660
    %6619 = vmatprep.subr.bf16.mxu0 %v4675
    %6620 = vmatpush1.bf16.msra.mxu0 %v4674
    %6621 = vmatprep.subr.bf16.mxu0 %v4689
    %6622 = vmatpush1.bf16.msra.mxu0 %v4688
    %6623 = vmatprep.subr.bf16.mxu0 %v4703
    %6624 = vmatpush1.bf16.msra.mxu0 %v4702
    %6625 = vmatprep.subr.bf16.mxu0 %v4717
    %6626 = vmatpush1.bf16.msra.mxu0 %v4716
    %6627 = vmatprep.subr.bf16.mxu0 %v4731
    %6628 = vmatpush1.bf16.msra.mxu0 %v4730
    %6629 = vmatprep.subr.bf16.mxu0 %v4745
    %6630 = vmatpush1.bf16.msra.mxu0 %v4744
    %6631 = vmatprep.subr.bf16.mxu0 %v4759
    %6632 = vmatpush1.bf16.msra.mxu0 %v4758
    %6633 = vmatprep.mubr.bf16.mxu0 %v1169
    %6634 = vmatmul.mubr.bf16.gmra.mrb[0].mxu0 %v1167
    %v6635 = vpop.f32.mrb[0].mxu0
    %v6636 = vadd.f32 %v6595, %v6635
    %v6637 = vpop.f32.mrb[0].mxu0
    %v6638 = vadd.f32 %v6597, %v6637
    %v6639 = vpop.f32.mrb[0].mxu0
    %v6640 = vpop.f32.mrb[0].mxu0
    %6641 = vdwg.mxu0
    %6642 = vmatprep.subr.bf16.mxu0 %v3879
    %6643 = vmatpush1.bf16.msra.mxu0 %v3878
    %6644 = vmatprep.subr.bf16.mxu0 %v3893
    %6645 = vmatpush1.bf16.msra.mxu0 %v3892
    %6646 = vmatprep.subr.bf16.mxu0 %v3907
    %6647 = vmatpush1.bf16.msra.mxu0 %v3906
    %6648 = vmatprep.subr.bf16.mxu0 %v3921
    %6649 = vmatpush1.bf16.msra.mxu0 %v3920
    %6650 = vmatprep.subr.bf16.mxu0 %v3935
    %6651 = vmatpush1.bf16.msra.mxu0 %v3934
    %6652 = vmatprep.subr.bf16.mxu0 %v3949
    %6653 = vmatpush1.bf16.msra.mxu0 %v3948
    %6654 = vmatprep.subr.bf16.mxu0 %v3963
    %6655 = vmatpush1.bf16.msra.mxu0 %v3962
    %6656 = vmatprep.subr.bf16.mxu0 %v3977
    %6657 = vmatpush1.bf16.msra.mxu0 %v3976
    %6658 = vmatprep.subr.bf16.mxu0 %v3991
    %6659 = vmatpush1.bf16.msra.mxu0 %v3990
    %6660 = vmatprep.subr.bf16.mxu0 %v4005
    %6661 = vmatpush1.bf16.msra.mxu0 %v4004
    %6662 = vmatprep.subr.bf16.mxu0 %v4019
    %6663 = vmatpush1.bf16.msra.mxu0 %v4018
    %6664 = vmatprep.subr.bf16.mxu0 %v4033
    %6665 = vmatpush1.bf16.msra.mxu0 %v4032
    %6666 = vmatprep.subr.bf16.mxu0 %v4047
    %6667 = vmatpush1.bf16.msra.mxu0 %v4046
    %6668 = vmatprep.subr.bf16.mxu0 %v4061
    %6669 = vmatpush1.bf16.msra.mxu0 %v4060
    %6670 = vmatprep.subr.bf16.mxu0 %v4075
    %6671 = vmatpush1.bf16.msra.mxu0 %v4074
    %6672 = vmatprep.subr.bf16.mxu0 %v4089
    %6673 = vmatpush1.bf16.msra.mxu0 %v4088
    %6674 = vmatprep.mubr.bf16.mxu0 %v1158
    %6675 = vmatmul.mubr.bf16.gmra.mrb[0].mxu0 %v1144
    %v6676 = vpop.f32.mrb[0].mxu0
    %v6677 = vadd.f32 %v1101, %v6676
    %v6678 = vpop.f32.mrb[0].mxu0
    %v6679 = vadd.f32 %v1105, %v6678
    %v6680 = vpop.f32.mrb[0].mxu0
    %v6681 = vpop.f32.mrb[0].mxu0
    %6682 = vdwg.mxu0
    %6683 = vmatprep.subr.bf16.mxu0 %v4103
    %6684 = vmatpush1.bf16.msra.mxu0 %v4102
    %6685 = vmatprep.subr.bf16.mxu0 %v4117
    %6686 = vmatpush1.bf16.msra.mxu0 %v4116
    %6687 = vmatprep.subr.bf16.mxu0 %v4131
    %6688 = vmatpush1.bf16.msra.mxu0 %v4130
    %6689 = vmatprep.subr.bf16.mxu0 %v4145
    %6690 = vmatpush1.bf16.msra.mxu0 %v4144
    %6691 = vmatprep.subr.bf16.mxu0 %v4159
    %6692 = vmatpush1.bf16.msra.mxu0 %v4158
    %6693 = vmatprep.subr.bf16.mxu0 %v4173
    %6694 = vmatpush1.bf16.msra.mxu0 %v4172
    %6695 = vmatprep.subr.bf16.mxu0 %v4187
    %6696 = vmatpush1.bf16.msra.mxu0 %v4186
    %6697 = vmatprep.subr.bf16.mxu0 %v4201
    %6698 = vmatpush1.bf16.msra.mxu0 %v4200
    %6699 = vmatprep.subr.bf16.mxu0 %v4215
    %6700 = vmatpush1.bf16.msra.mxu0 %v4214
    %6701 = vmatprep.subr.bf16.mxu0 %v4229
    %6702 = vmatpush1.bf16.msra.mxu0 %v4228
    %6703 = vmatprep.subr.bf16.mxu0 %v4243
    %6704 = vmatpush1.bf16.msra.mxu0 %v4242
    %6705 = vmatprep.subr.bf16.mxu0 %v4257
    %6706 = vmatpush1.bf16.msra.mxu0 %v4256
    %6707 = vmatprep.subr.bf16.mxu0 %v4271
    %6708 = vmatpush1.bf16.msra.mxu0 %v4270
    %6709 = vmatprep.subr.bf16.mxu0 %v4285
    %6710 = vmatpush1.bf16.msra.mxu0 %v4284
    %6711 = vmatprep.subr.bf16.mxu0 %v4299
    %6712 = vmatpush1.bf16.msra.mxu0 %v4298
    %6713 = vmatprep.subr.bf16.mxu0 %v4313
    %6714 = vmatpush1.bf16.msra.mxu0 %v4312
    %6715 = vmatprep.mubr.bf16.mxu0 %v1168
    %6716 = vmatmul.mubr.bf16.gmra.mrb[0].mxu0 %v1166
    %v6717 = vpop.f32.mrb[0].mxu0
    %v6718 = vadd.f32 %v6677, %v6717
    %v6719 = vpop.f32.mrb[0].mxu0
    %v6720 = vadd.f32 %v6679, %v6719
    %v6721 = vpop.f32.mrb[0].mxu0
    %v6722 = vpop.f32.mrb[0].mxu0
    %6723 = vdwg.mxu0
    %6724 = vmatprep.subr.bf16.mxu0 %v4327
    %6725 = vmatpush1.bf16.msra.mxu0 %v4326
    %6726 = vmatprep.subr.bf16.mxu0 %v4341
    %6727 = vmatpush1.bf16.msra.mxu0 %v4340
    %6728 = vmatprep.subr.bf16.mxu0 %v4355
    %6729 = vmatpush1.bf16.msra.mxu0 %v4354
    %6730 = vmatprep.subr.bf16.mxu0 %v4369
    %6731 = vmatpush1.bf16.msra.mxu0 %v4368
    %6732 = vmatprep.subr.bf16.mxu0 %v4383
    %6733 = vmatpush1.bf16.msra.mxu0 %v4382
    %6734 = vmatprep.subr.bf16.mxu0 %v4397
    %6735 = vmatpush1.bf16.msra.mxu0 %v4396
    %6736 = vmatprep.subr.bf16.mxu0 %v4411
    %6737 = vmatpush1.bf16.msra.mxu0 %v4410
    %6738 = vmatprep.subr.bf16.mxu0 %v4425
    %6739 = vmatpush1.bf16.msra.mxu0 %v4424
    %6740 = vmatprep.subr.bf16.mxu0 %v4439
    %6741 = vmatpush1.bf16.msra.mxu0 %v4438
    %6742 = vmatprep.subr.bf16.mxu0 %v4453
    %6743 = vmatpush1.bf16.msra.mxu0 %v4452
    %6744 = vmatprep.subr.bf16.mxu0 %v4467
    %6745 = vmatpush1.bf16.msra.mxu0 %v4466
    %6746 = vmatprep.subr.bf16.mxu0 %v4481
    %6747 = vmatpush1.bf16.msra.mxu0 %v4480
    %6748 = vmatprep.subr.bf16.mxu0 %v4495
    %6749 = vmatpush1.bf16.msra.mxu0 %v4494
    %6750 = vmatprep.subr.bf16.mxu0 %v4509
    %6751 = vmatpush1.bf16.msra.mxu0 %v4508
    %6752 = vmatprep.subr.bf16.mxu0 %v4523
    %6753 = vmatpush1.bf16.msra.mxu0 %v4522
    %6754 = vmatprep.subr.bf16.mxu0 %v4537
    %6755 = vmatpush1.bf16.msra.mxu0 %v4536
    %6756 = vmatprep.mubr.bf16.mxu0 %v1165
    %6757 = vmatmul.mubr.bf16.gmra.mrb[0].mxu0 %v1151
    %v6758 = vpop.f32.mrb[0].mxu0
    %v6759 = vadd.f32 %v6718, %v6758
    %v6760 = vpop.f32.mrb[0].mxu0
    %v6761 = vadd.f32 %v6720, %v6760
    %v6762 = vpop.f32.mrb[0].mxu0
    %v6763 = vpop.f32.mrb[0].mxu0
    %6764 = vdwg.mxu0
    %6765 = vmatprep.subr.bf16.mxu0 %v4551
    %6766 = vmatpush1.bf16.msra.mxu0 %v4550
    %6767 = vmatprep.subr.bf16.mxu0 %v4565
    %6768 = vmatpush1.bf16.msra.mxu0 %v4564
    %6769 = vmatprep.subr.bf16.mxu0 %v4579
    %6770 = vmatpush1.bf16.msra.mxu0 %v4578
    %6771 = vmatprep.subr.bf16.mxu0 %v4593
    %6772 = vmatpush1.bf16.msra.mxu0 %v4592
    %6773 = vmatprep.subr.bf16.mxu0 %v4607
    %6774 = vmatpush1.bf16.msra.mxu0 %v4606
    %6775 = vmatprep.subr.bf16.mxu0 %v4621
    %6776 = vmatpush1.bf16.msra.mxu0 %v4620
    %6777 = vmatprep.subr.bf16.mxu0 %v4635
    %6778 = vmatpush1.bf16.msra.mxu0 %v4634
    %6779 = vmatprep.subr.bf16.mxu0 %v4649
    %6780 = vmatpush1.bf16.msra.mxu0 %v4648
    %6781 = vmatprep.subr.bf16.mxu0 %v4663
    %6782 = vmatpush1.bf16.msra.mxu0 %v4662
    %6783 = vmatprep.subr.bf16.mxu0 %v4677
    %6784 = vmatpush1.bf16.msra.mxu0 %v4676
    %6785 = vmatprep.subr.bf16.mxu0 %v4691
    %6786 = vmatpush1.bf16.msra.mxu0 %v4690
    %6787 = vmatprep.subr.bf16.mxu0 %v4705
    %6788 = vmatpush1.bf16.msra.mxu0 %v4704
    %6789 = vmatprep.subr.bf16.mxu0 %v4719
    %6790 = vmatpush1.bf16.msra.mxu0 %v4718
    %6791 = vmatprep.subr.bf16.mxu0 %v4733
    %6792 = vmatpush1.bf16.msra.mxu0 %v4732
    %6793 = vmatprep.subr.bf16.mxu0 %v4747
    %6794 = vmatpush1.bf16.msra.mxu0 %v4746
    %6795 = vmatprep.subr.bf16.mxu0 %v4761
    %6796 = vmatpush1.bf16.msra.mxu0 %v4760
    %6797 = vmatprep.mubr.bf16.mxu0 %v1169
    %6798 = vmatmul.mubr.bf16.gmra.mrb[0].mxu0 %v1167
    %v6799 = vpop.f32.mrb[0].mxu0
    %v6800 = vadd.f32 %v6759, %v6799
    %v6801 = vpop.f32.mrb[0].mxu0
    %v6802 = vadd.f32 %v6761, %v6801
    %v6803 = vpop.f32.mrb[0].mxu0
    %v6804 = vpop.f32.mrb[0].mxu0
    %6805 = vdwg.mxu0
    %vm6806 = vcmp.ge.f32.partialorder %v5816, 0.0
    %vm6807 = vcmp.ge.f32.partialorder %v5818, 0.0
    %vm6808 = vcmp.ge.f32.partialorder %v5980, 0.0
    %vm6809 = vcmp.ge.f32.partialorder %v5982, 0.0
    %vm6810 = vcmp.ge.f32.partialorder %v6144, 0.0
    %vm6811 = vcmp.ge.f32.partialorder %v6146, 0.0
    %vm6812 = vcmp.ge.f32.partialorder %v6308, 0.0
    %vm6813 = vcmp.ge.f32.partialorder %v6310, 0.0
    %vm6814 = vcmp.ge.f32.partialorder %v6472, 0.0
    %vm6815 = vcmp.ge.f32.partialorder %v6474, 0.0
    %vm6816 = vcmp.ge.f32.partialorder %v6636, 0.0
    %vm6817 = vcmp.ge.f32.partialorder %v6638, 0.0
    %vm6818 = vcmp.ge.f32.partialorder %v6800, 0.0
    %vm6819 = vcmp.ge.f32.partialorder %v6802, 0.0
    %v6820 = vmul.f32 %v5816, 0.01
    %v6821 = vmul.f32 %v5818, 0.01
    %v6822 = vmul.f32 %v5980, 0.01
    %v6823 = vmul.f32 %v5982, 0.01
    %v6824 = vmul.f32 %v6144, 0.01
    %v6825 = vmul.f32 %v6146, 0.01
    %v6826 = vmul.f32 %v6308, 0.01
    %v6827 = vmul.f32 %v6310, 0.01
    %v6828 = vmul.f32 %v6472, 0.01
    %v6829 = vmul.f32 %v6474, 0.01
    %v6830 = vmul.f32 %v6636, 0.01
    %v6831 = vmul.f32 %v6638, 0.01
    %v6832 = vmul.f32 %v6800, 0.01
    %v6833 = vmul.f32 %v6802, 0.01
    %v6834 = vsel %vm6806, %v5816, %v6820
    %v6835 = vsel %vm6807, %v5818, %v6821
    %v6836 = vsel %vm6808, %v5980, %v6822
    %v6837 = vsel %vm6809, %v5982, %v6823
    %v6838 = vsel %vm6810, %v6144, %v6824
    %v6839 = vsel %vm6811, %v6146, %v6825
    %v6840 = vsel %vm6812, %v6308, %v6826
    %v6841 = vsel %vm6813, %v6310, %v6827
    %v6842 = vsel %vm6814, %v6472, %v6828
    %v6843 = vsel %vm6815, %v6474, %v6829
    %v6844 = vsel %vm6816, %v6636, %v6830
    %v6845 = vsel %vm6817, %v6638, %v6831
    %v6846 = vsel %vm6818, %v6800, %v6832
    %v6847 = vsel %vm6819, %v6802, %v6833
    %v6848 = vpack.c.bf16 %v6834, %v6834
    %v6849 = vpack.c.bf16 %v6835, %v6835
    %v6850 = vpack.c.bf16 %v6836, %v6836
    %v6851 = vpack.c.bf16 %v6837, %v6837
    %v6852 = vpack.c.bf16 %v6838, %v6838
    %v6853 = vpack.c.bf16 %v6839, %v6839
    %v6854 = vpack.c.bf16 %v6840, %v6840
    %v6855 = vpack.c.bf16 %v6841, %v6841
    %v6856 = vpack.c.bf16 %v6842, %v6842
    %v6857 = vpack.c.bf16 %v6843, %v6843
    %v6858 = vpack.c.bf16 %v6844, %v6844
    %v6859 = vpack.c.bf16 %v6845, %v6845
    %v6860 = vpack.c.bf16 %v6846, %v6846
    %v6861 = vpack.c.bf16 %v6847, %v6847
    %v6862 = vld [vmem:[#allocation10] sm:$0xff]
    %v6863 = vld [vmem:[#allocation10 + $0x8] sm:$0xff]
    %v6864 = vld [vmem:[#allocation10 + $0x10] sm:$0xff]
    %v6865 = vld [vmem:[#allocation10 + $0x18] sm:$0xff]
    %v6866 = vld [vmem:[#allocation10 + $0x20] sm:$0xff]
    %v6867 = vld [vmem:[#allocation10 + $0x28] sm:$0xff]
    %v6868 = vld [vmem:[#allocation10 + $0x30] sm:$0xff]
    %v6869 = vld [vmem:[#allocation10 + $0x38] sm:$0xff]
    %v6870 = vld [vmem:[#allocation10 + $0x40] sm:$0xff]
    %v6871 = vld [vmem:[#allocation10 + $0x48] sm:$0xff]
    %v6872 = vld [vmem:[#allocation10 + $0x50] sm:$0xff]
    %v6873 = vld [vmem:[#allocation10 + $0x58] sm:$0xff]
    %v6874 = vld [vmem:[#allocation10 + $0x60] sm:$0xff]
    %v6875 = vld [vmem:[#allocation10 + $0x68] sm:$0xff]
    %v6876 = vld [vmem:[#allocation10 + $0x70] sm:$0xff]
    %v6877 = vld [vmem:[#allocation10 + $0x78] sm:$0xff]
    %v6878 = vld [vmem:[#allocation10 + $0x80] sm:$0xff]
    %v6879 = vld [vmem:[#allocation10 + $0x88] sm:$0xff]
    %v6880 = vld [vmem:[#allocation10 + $0x90] sm:$0xff]
    %v6881 = vld [vmem:[#allocation10 + $0x98] sm:$0xff]
    %v6882 = vld [vmem:[#allocation10 + $0xa0] sm:$0xff]
    %v6883 = vld [vmem:[#allocation10 + $0xa8] sm:$0xff]
    %v6884 = vld [vmem:[#allocation10 + $0xb0] sm:$0xff]
    %v6885 = vld [vmem:[#allocation10 + $0xb8] sm:$0xff]
    %v6886 = vld [vmem:[#allocation10 + $0xc0] sm:$0xff]
    %v6887 = vld [vmem:[#allocation10 + $0xc8] sm:$0xff]
    %v6888 = vld [vmem:[#allocation10 + $0xd0] sm:$0xff]
    %v6889 = vld [vmem:[#allocation10 + $0xd8] sm:$0xff]
    %v6890 = vld [vmem:[#allocation10 + $0xe0] sm:$0xff]
    %v6891 = vld [vmem:[#allocation10 + $0xe8] sm:$0xff]
    %v6892 = vld [vmem:[#allocation10 + $0xf0] sm:$0xff]
    %v6893 = vld [vmem:[#allocation10 + $0xf8] sm:$0xff]
    %v6894 = vld [vmem:[#allocation10 + $0x100] sm:$0xff]
    %v6895 = vld [vmem:[#allocation10 + $0x108] sm:$0xff]
    %v6896 = vld [vmem:[#allocation10 + $0x110] sm:$0xff]
    %v6897 = vld [vmem:[#allocation10 + $0x118] sm:$0xff]
    %v6898 = vld [vmem:[#allocation10 + $0x120] sm:$0xff]
    %v6899 = vld [vmem:[#allocation10 + $0x128] sm:$0xff]
    %v6900 = vld [vmem:[#allocation10 + $0x130] sm:$0xff]
    %v6901 = vld [vmem:[#allocation10 + $0x138] sm:$0xff]
    %v6902 = vld [vmem:[#allocation10 + $0x140] sm:$0xff]
    %v6903 = vld [vmem:[#allocation10 + $0x148] sm:$0xff]
    %v6904 = vld [vmem:[#allocation10 + $0x150] sm:$0xff]
    %v6905 = vld [vmem:[#allocation10 + $0x158] sm:$0xff]
    %v6906 = vld [vmem:[#allocation10 + $0x160] sm:$0xff]
    %v6907 = vld [vmem:[#allocation10 + $0x168] sm:$0xff]
    %v6908 = vld [vmem:[#allocation10 + $0x170] sm:$0xff]
    %v6909 = vld [vmem:[#allocation10 + $0x178] sm:$0xff]
    %v6910 = vld [vmem:[#allocation10 + $0x180] sm:$0xff]
    %v6911 = vld [vmem:[#allocation10 + $0x188] sm:$0xff]
    %v6912 = vld [vmem:[#allocation10 + $0x190] sm:$0xff]
    %v6913 = vld [vmem:[#allocation10 + $0x198] sm:$0xff]
    %v6914 = vld [vmem:[#allocation10 + $0x1a0] sm:$0xff]
    %v6915 = vld [vmem:[#allocation10 + $0x1a8] sm:$0xff]
    %v6916 = vld [vmem:[#allocation10 + $0x1b0] sm:$0xff]
    %v6917 = vld [vmem:[#allocation10 + $0x1b8] sm:$0xff]
    %v6918 = vld [vmem:[#allocation10 + $0x1c0] sm:$0xff]
    %v6919 = vld [vmem:[#allocation10 + $0x1c8] sm:$0xff]
    %v6920 = vld [vmem:[#allocation10 + $0x1d0] sm:$0xff]
    %v6921 = vld [vmem:[#allocation10 + $0x1d8] sm:$0xff]
    %v6922 = vld [vmem:[#allocation10 + $0x1e0] sm:$0xff]
    %v6923 = vld [vmem:[#allocation10 + $0x1e8] sm:$0xff]
    %v6924 = vld [vmem:[#allocation10 + $0x1f0] sm:$0xff]
    %v6925 = vld [vmem:[#allocation10 + $0x1f8] sm:$0xff]
    %v6926 = vld [vmem:[#allocation10 + $0x200] sm:$0xff]
    %v6927 = vld [vmem:[#allocation10 + $0x208] sm:$0xff]
    %v6928 = vld [vmem:[#allocation10 + $0x210] sm:$0xff]
    %v6929 = vld [vmem:[#allocation10 + $0x218] sm:$0xff]
    %v6930 = vld [vmem:[#allocation10 + $0x220] sm:$0xff]
    %v6931 = vld [vmem:[#allocation10 + $0x228] sm:$0xff]
    %v6932 = vld [vmem:[#allocation10 + $0x230] sm:$0xff]
    %v6933 = vld [vmem:[#allocation10 + $0x238] sm:$0xff]
    %v6934 = vld [vmem:[#allocation10 + $0x240] sm:$0xff]
    %v6935 = vld [vmem:[#allocation10 + $0x248] sm:$0xff]
    %v6936 = vld [vmem:[#allocation10 + $0x250] sm:$0xff]
    %v6937 = vld [vmem:[#allocation10 + $0x258] sm:$0xff]
    %v6938 = vld [vmem:[#allocation10 + $0x260] sm:$0xff]
    %v6939 = vld [vmem:[#allocation10 + $0x268] sm:$0xff]
    %v6940 = vld [vmem:[#allocation10 + $0x270] sm:$0xff]
    %v6941 = vld [vmem:[#allocation10 + $0x278] sm:$0xff]
    %v6942 = vld [vmem:[#allocation10 + $0x280] sm:$0xff]
    %v6943 = vld [vmem:[#allocation10 + $0x288] sm:$0xff]
    %v6944 = vld [vmem:[#allocation10 + $0x290] sm:$0xff]
    %v6945 = vld [vmem:[#allocation10 + $0x298] sm:$0xff]
    %v6946 = vld [vmem:[#allocation10 + $0x2a0] sm:$0xff]
    %v6947 = vld [vmem:[#allocation10 + $0x2a8] sm:$0xff]
    %v6948 = vld [vmem:[#allocation10 + $0x2b0] sm:$0xff]
    %v6949 = vld [vmem:[#allocation10 + $0x2b8] sm:$0xff]
    %v6950 = vld [vmem:[#allocation10 + $0x2c0] sm:$0xff]
    %v6951 = vld [vmem:[#allocation10 + $0x2c8] sm:$0xff]
    %v6952 = vld [vmem:[#allocation10 + $0x2d0] sm:$0xff]
    %v6953 = vld [vmem:[#allocation10 + $0x2d8] sm:$0xff]
    %v6954 = vld [vmem:[#allocation10 + $0x2e0] sm:$0xff]
    %v6955 = vld [vmem:[#allocation10 + $0x2e8] sm:$0xff]
    %v6956 = vld [vmem:[#allocation10 + $0x2f0] sm:$0xff]
    %v6957 = vld [vmem:[#allocation10 + $0x2f8] sm:$0xff]
    %v6958 = vld [vmem:[#allocation10 + $0x300] sm:$0xff]
    %v6959 = vld [vmem:[#allocation10 + $0x308] sm:$0xff]
    %v6960 = vld [vmem:[#allocation10 + $0x310] sm:$0xff]
    %v6961 = vld [vmem:[#allocation10 + $0x318] sm:$0xff]
    %v6962 = vld [vmem:[#allocation10 + $0x320] sm:$0xff]
    %v6963 = vld [vmem:[#allocation10 + $0x328] sm:$0xff]
    %v6964 = vld [vmem:[#allocation10 + $0x330] sm:$0xff]
    %v6965 = vld [vmem:[#allocation10 + $0x338] sm:$0xff]
    %v6966 = vld [vmem:[#allocation10 + $0x340] sm:$0xff]
    %v6967 = vld [vmem:[#allocation10 + $0x348] sm:$0xff]
    %v6968 = vld [vmem:[#allocation10 + $0x350] sm:$0xff]
    %v6969 = vld [vmem:[#allocation10 + $0x358] sm:$0xff]
    %v6970 = vld [vmem:[#allocation10 + $0x360] sm:$0xff]
    %v6971 = vld [vmem:[#allocation10 + $0x368] sm:$0xff]
    %v6972 = vld [vmem:[#allocation10 + $0x370] sm:$0xff]
    %v6973 = vld [vmem:[#allocation10 + $0x378] sm:$0xff]
    %v6974 = vld [vmem:[#allocation10 + $0x380] sm:$0xff]
    %v6975 = vld [vmem:[#allocation10 + $0x388] sm:$0xff]
    %v6976 = vld [vmem:[#allocation10 + $0x390] sm:$0xff]
    %v6977 = vld [vmem:[#allocation10 + $0x398] sm:$0xff]
    %v6978 = vld [vmem:[#allocation10 + $0x3a0] sm:$0xff]
    %v6979 = vld [vmem:[#allocation10 + $0x3a8] sm:$0xff]
    %v6980 = vld [vmem:[#allocation10 + $0x3b0] sm:$0xff]
    %v6981 = vld [vmem:[#allocation10 + $0x3b8] sm:$0xff]
    %v6982 = vld [vmem:[#allocation10 + $0x3c0] sm:$0xff]
    %v6983 = vld [vmem:[#allocation10 + $0x3c8] sm:$0xff]
    %v6984 = vld [vmem:[#allocation10 + $0x3d0] sm:$0xff]
    %v6985 = vld [vmem:[#allocation10 + $0x3d8] sm:$0xff]
    %v6986 = vld [vmem:[#allocation10 + $0x3e0] sm:$0xff]
    %v6987 = vld [vmem:[#allocation10 + $0x3e8] sm:$0xff]
    %v6988 = vld [vmem:[#allocation10 + $0x3f0] sm:$0xff]
    %v6989 = vld [vmem:[#allocation10 + $0x3f8] sm:$0xff]
    %v6990 = vld [vmem:[#allocation10 + $0x400] sm:$0xff]
    %v6991 = vld [vmem:[#allocation10 + $0x408] sm:$0xff]
    %v6992 = vld [vmem:[#allocation10 + $0x410] sm:$0xff]
    %v6993 = vld [vmem:[#allocation10 + $0x418] sm:$0xff]
    %v6994 = vld [vmem:[#allocation10 + $0x420] sm:$0xff]
    %v6995 = vld [vmem:[#allocation10 + $0x428] sm:$0xff]
    %v6996 = vld [vmem:[#allocation10 + $0x430] sm:$0xff]
    %v6997 = vld [vmem:[#allocation10 + $0x438] sm:$0xff]
    %v6998 = vld [vmem:[#allocation10 + $0x440] sm:$0xff]
    %v6999 = vld [vmem:[#allocation10 + $0x448] sm:$0xff]
    %v7000 = vld [vmem:[#allocation10 + $0x450] sm:$0xff]
    %v7001 = vld [vmem:[#allocation10 + $0x458] sm:$0xff]
    %v7002 = vld [vmem:[#allocation10 + $0x460] sm:$0xff]
    %v7003 = vld [vmem:[#allocation10 + $0x468] sm:$0xff]
    %v7004 = vld [vmem:[#allocation10 + $0x470] sm:$0xff]
    %v7005 = vld [vmem:[#allocation10 + $0x478] sm:$0xff]
    %v7006 = vld [vmem:[#allocation10 + $0x480] sm:$0xff]
    %v7007 = vld [vmem:[#allocation10 + $0x488] sm:$0xff]
    %v7008 = vld [vmem:[#allocation10 + $0x490] sm:$0xff]
    %v7009 = vld [vmem:[#allocation10 + $0x498] sm:$0xff]
    %v7010 = vld [vmem:[#allocation10 + $0x4a0] sm:$0xff]
    %v7011 = vld [vmem:[#allocation10 + $0x4a8] sm:$0xff]
    %v7012 = vld [vmem:[#allocation10 + $0x4b0] sm:$0xff]
    %v7013 = vld [vmem:[#allocation10 + $0x4b8] sm:$0xff]
    %v7014 = vld [vmem:[#allocation10 + $0x4c0] sm:$0xff]
    %v7015 = vld [vmem:[#allocation10 + $0x4c8] sm:$0xff]
    %v7016 = vld [vmem:[#allocation10 + $0x4d0] sm:$0xff]
    %v7017 = vld [vmem:[#allocation10 + $0x4d8] sm:$0xff]
    %v7018 = vld [vmem:[#allocation10 + $0x4e0] sm:$0xff]
    %v7019 = vld [vmem:[#allocation10 + $0x4e8] sm:$0xff]
    %v7020 = vld [vmem:[#allocation10 + $0x4f0] sm:$0xff]
    %v7021 = vld [vmem:[#allocation10 + $0x4f8] sm:$0xff]
    %v7022 = vld [vmem:[#allocation10 + $0x500] sm:$0xff]
    %v7023 = vld [vmem:[#allocation10 + $0x508] sm:$0xff]
    %v7024 = vld [vmem:[#allocation10 + $0x510] sm:$0xff]
    %v7025 = vld [vmem:[#allocation10 + $0x518] sm:$0xff]
    %v7026 = vld [vmem:[#allocation10 + $0x520] sm:$0xff]
    %v7027 = vld [vmem:[#allocation10 + $0x528] sm:$0xff]
    %v7028 = vld [vmem:[#allocation10 + $0x530] sm:$0xff]
    %v7029 = vld [vmem:[#allocation10 + $0x538] sm:$0xff]
    %v7030 = vld [vmem:[#allocation10 + $0x540] sm:$0xff]
    %v7031 = vld [vmem:[#allocation10 + $0x548] sm:$0xff]
    %v7032 = vld [vmem:[#allocation10 + $0x550] sm:$0xff]
    %v7033 = vld [vmem:[#allocation10 + $0x558] sm:$0xff]
    %v7034 = vld [vmem:[#allocation10 + $0x560] sm:$0xff]
    %v7035 = vld [vmem:[#allocation10 + $0x568] sm:$0xff]
    %v7036 = vld [vmem:[#allocation10 + $0x570] sm:$0xff]
    %v7037 = vld [vmem:[#allocation10 + $0x578] sm:$0xff]
    %v7038 = vld [vmem:[#allocation10 + $0x580] sm:$0xff]
    %v7039 = vld [vmem:[#allocation10 + $0x588] sm:$0xff]
    %v7040 = vld [vmem:[#allocation10 + $0x590] sm:$0xff]
    %v7041 = vld [vmem:[#allocation10 + $0x598] sm:$0xff]
    %v7042 = vld [vmem:[#allocation10 + $0x5a0] sm:$0xff]
    %v7043 = vld [vmem:[#allocation10 + $0x5a8] sm:$0xff]
    %v7044 = vld [vmem:[#allocation10 + $0x5b0] sm:$0xff]
    %v7045 = vld [vmem:[#allocation10 + $0x5b8] sm:$0xff]
    %v7046 = vld [vmem:[#allocation10 + $0x5c0] sm:$0xff]
    %v7047 = vld [vmem:[#allocation10 + $0x5c8] sm:$0xff]
    %v7048 = vld [vmem:[#allocation10 + $0x5d0] sm:$0xff]
    %v7049 = vld [vmem:[#allocation10 + $0x5d8] sm:$0xff]
    %v7050 = vld [vmem:[#allocation10 + $0x5e0] sm:$0xff]
    %v7051 = vld [vmem:[#allocation10 + $0x5e8] sm:$0xff]
    %v7052 = vld [vmem:[#allocation10 + $0x5f0] sm:$0xff]
    %v7053 = vld [vmem:[#allocation10 + $0x5f8] sm:$0xff]
    %v7054 = vld [vmem:[#allocation10 + $0x600] sm:$0xff]
    %v7055 = vld [vmem:[#allocation10 + $0x608] sm:$0xff]
    %v7056 = vld [vmem:[#allocation10 + $0x610] sm:$0xff]
    %v7057 = vld [vmem:[#allocation10 + $0x618] sm:$0xff]
    %v7058 = vld [vmem:[#allocation10 + $0x620] sm:$0xff]
    %v7059 = vld [vmem:[#allocation10 + $0x628] sm:$0xff]
    %v7060 = vld [vmem:[#allocation10 + $0x630] sm:$0xff]
    %v7061 = vld [vmem:[#allocation10 + $0x638] sm:$0xff]
    %v7062 = vld [vmem:[#allocation10 + $0x640] sm:$0xff]
    %v7063 = vld [vmem:[#allocation10 + $0x648] sm:$0xff]
    %v7064 = vld [vmem:[#allocation10 + $0x650] sm:$0xff]
    %v7065 = vld [vmem:[#allocation10 + $0x658] sm:$0xff]
    %v7066 = vld [vmem:[#allocation10 + $0x660] sm:$0xff]
    %v7067 = vld [vmem:[#allocation10 + $0x668] sm:$0xff]
    %v7068 = vld [vmem:[#allocation10 + $0x670] sm:$0xff]
    %v7069 = vld [vmem:[#allocation10 + $0x678] sm:$0xff]
    %v7070 = vld [vmem:[#allocation10 + $0x680] sm:$0xff]
    %v7071 = vld [vmem:[#allocation10 + $0x688] sm:$0xff]
    %v7072 = vld [vmem:[#allocation10 + $0x690] sm:$0xff]
    %v7073 = vld [vmem:[#allocation10 + $0x698] sm:$0xff]
    %v7074 = vld [vmem:[#allocation10 + $0x6a0] sm:$0xff]
    %v7075 = vld [vmem:[#allocation10 + $0x6a8] sm:$0xff]
    %v7076 = vld [vmem:[#allocation10 + $0x6b0] sm:$0xff]
    %v7077 = vld [vmem:[#allocation10 + $0x6b8] sm:$0xff]
    %v7078 = vld [vmem:[#allocation10 + $0x6c0] sm:$0xff]
    %v7079 = vld [vmem:[#allocation10 + $0x6c8] sm:$0xff]
    %v7080 = vld [vmem:[#allocation10 + $0x6d0] sm:$0xff]
    %v7081 = vld [vmem:[#allocation10 + $0x6d8] sm:$0xff]
    %v7082 = vld [vmem:[#allocation10 + $0x6e0] sm:$0xff]
    %v7083 = vld [vmem:[#allocation10 + $0x6e8] sm:$0xff]
    %v7084 = vld [vmem:[#allocation10 + $0x6f0] sm:$0xff]
    %v7085 = vld [vmem:[#allocation10 + $0x6f8] sm:$0xff]
    %v7086 = vld [vmem:[#allocation10 + $0x700] sm:$0xff]
    %v7087 = vld [vmem:[#allocation10 + $0x708] sm:$0xff]
    %v7088 = vld [vmem:[#allocation10 + $0x710] sm:$0xff]
    %v7089 = vld [vmem:[#allocation10 + $0x718] sm:$0xff]
    %v7090 = vld [vmem:[#allocation10 + $0x720] sm:$0xff]
    %v7091 = vld [vmem:[#allocation10 + $0x728] sm:$0xff]
    %v7092 = vld [vmem:[#allocation10 + $0x730] sm:$0xff]
    %v7093 = vld [vmem:[#allocation10 + $0x738] sm:$0xff]
    %v7094 = vld [vmem:[#allocation10 + $0x740] sm:$0xff]
    %v7095 = vld [vmem:[#allocation10 + $0x748] sm:$0xff]
    %v7096 = vld [vmem:[#allocation10 + $0x750] sm:$0xff]
    %v7097 = vld [vmem:[#allocation10 + $0x758] sm:$0xff]
    %v7098 = vld [vmem:[#allocation10 + $0x760] sm:$0xff]
    %v7099 = vld [vmem:[#allocation10 + $0x768] sm:$0xff]
    %v7100 = vld [vmem:[#allocation10 + $0x770] sm:$0xff]
    %v7101 = vld [vmem:[#allocation10 + $0x778] sm:$0xff]
    %v7102 = vld [vmem:[#allocation10 + $0x780] sm:$0xff]
    %v7103 = vld [vmem:[#allocation10 + $0x788] sm:$0xff]
    %v7104 = vld [vmem:[#allocation10 + $0x790] sm:$0xff]
    %v7105 = vld [vmem:[#allocation10 + $0x798] sm:$0xff]
    %v7106 = vld [vmem:[#allocation10 + $0x7a0] sm:$0xff]
    %v7107 = vld [vmem:[#allocation10 + $0x7a8] sm:$0xff]
    %v7108 = vld [vmem:[#allocation10 + $0x7b0] sm:$0xff]
    %v7109 = vld [vmem:[#allocation10 + $0x7b8] sm:$0xff]
    %v7110 = vld [vmem:[#allocation10 + $0x7c0] sm:$0xff]
    %v7111 = vld [vmem:[#allocation10 + $0x7c8] sm:$0xff]
    %v7112 = vld [vmem:[#allocation10 + $0x7d0] sm:$0xff]
    %v7113 = vld [vmem:[#allocation10 + $0x7d8] sm:$0xff]
    %v7114 = vld [vmem:[#allocation10 + $0x7e0] sm:$0xff]
    %v7115 = vld [vmem:[#allocation10 + $0x7e8] sm:$0xff]
    %v7116 = vld [vmem:[#allocation10 + $0x7f0] sm:$0xff]
    %v7117 = vld [vmem:[#allocation10 + $0x7f8] sm:$0xff]
    %v7118 = vld [vmem:[#allocation10 + $0x800] sm:$0xff]
    %v7119 = vld [vmem:[#allocation10 + $0x808] sm:$0xff]
    %v7120 = vld [vmem:[#allocation10 + $0x810] sm:$0xff]
    %v7121 = vld [vmem:[#allocation10 + $0x818] sm:$0xff]
    %v7122 = vld [vmem:[#allocation10 + $0x820] sm:$0xff]
    %v7123 = vld [vmem:[#allocation10 + $0x828] sm:$0xff]
    %v7124 = vld [vmem:[#allocation10 + $0x830] sm:$0xff]
    %v7125 = vld [vmem:[#allocation10 + $0x838] sm:$0xff]
    %v7126 = vld [vmem:[#allocation10 + $0x840] sm:$0xff]
    %v7127 = vld [vmem:[#allocation10 + $0x848] sm:$0xff]
    %v7128 = vld [vmem:[#allocation10 + $0x850] sm:$0xff]
    %v7129 = vld [vmem:[#allocation10 + $0x858] sm:$0xff]
    %v7130 = vld [vmem:[#allocation10 + $0x860] sm:$0xff]
    %v7131 = vld [vmem:[#allocation10 + $0x868] sm:$0xff]
    %v7132 = vld [vmem:[#allocation10 + $0x870] sm:$0xff]
    %v7133 = vld [vmem:[#allocation10 + $0x878] sm:$0xff]
    %v7134 = vld [vmem:[#allocation10 + $0x880] sm:$0xff]
    %v7135 = vld [vmem:[#allocation10 + $0x888] sm:$0xff]
    %v7136 = vld [vmem:[#allocation10 + $0x890] sm:$0xff]
    %v7137 = vld [vmem:[#allocation10 + $0x898] sm:$0xff]
    %v7138 = vld [vmem:[#allocation10 + $0x8a0] sm:$0xff]
    %v7139 = vld [vmem:[#allocation10 + $0x8a8] sm:$0xff]
    %v7140 = vld [vmem:[#allocation10 + $0x8b0] sm:$0xff]
    %v7141 = vld [vmem:[#allocation10 + $0x8b8] sm:$0xff]
    %v7142 = vld [vmem:[#allocation10 + $0x8c0] sm:$0xff]
    %v7143 = vld [vmem:[#allocation10 + $0x8c8] sm:$0xff]
    %v7144 = vld [vmem:[#allocation10 + $0x8d0] sm:$0xff]
    %v7145 = vld [vmem:[#allocation10 + $0x8d8] sm:$0xff]
    %v7146 = vld [vmem:[#allocation10 + $0x8e0] sm:$0xff]
    %v7147 = vld [vmem:[#allocation10 + $0x8e8] sm:$0xff]
    %v7148 = vld [vmem:[#allocation10 + $0x8f0] sm:$0xff]
    %v7149 = vld [vmem:[#allocation10 + $0x8f8] sm:$0xff]
    %v7150 = vld [vmem:[#allocation10 + $0x900] sm:$0xff]
    %v7151 = vld [vmem:[#allocation10 + $0x908] sm:$0xff]
    %v7152 = vld [vmem:[#allocation10 + $0x910] sm:$0xff]
    %v7153 = vld [vmem:[#allocation10 + $0x918] sm:$0xff]
    %v7154 = vld [vmem:[#allocation10 + $0x920] sm:$0xff]
    %v7155 = vld [vmem:[#allocation10 + $0x928] sm:$0xff]
    %v7156 = vld [vmem:[#allocation10 + $0x930] sm:$0xff]
    %v7157 = vld [vmem:[#allocation10 + $0x938] sm:$0xff]
    %v7158 = vld [vmem:[#allocation10 + $0x940] sm:$0xff]
    %v7159 = vld [vmem:[#allocation10 + $0x948] sm:$0xff]
    %v7160 = vld [vmem:[#allocation10 + $0x950] sm:$0xff]
    %v7161 = vld [vmem:[#allocation10 + $0x958] sm:$0xff]
    %v7162 = vld [vmem:[#allocation10 + $0x960] sm:$0xff]
    %v7163 = vld [vmem:[#allocation10 + $0x968] sm:$0xff]
    %v7164 = vld [vmem:[#allocation10 + $0x970] sm:$0xff]
    %v7165 = vld [vmem:[#allocation10 + $0x978] sm:$0xff]
    %v7166 = vld [vmem:[#allocation10 + $0x980] sm:$0xff]
    %v7167 = vld [vmem:[#allocation10 + $0x988] sm:$0xff]
    %v7168 = vld [vmem:[#allocation10 + $0x990] sm:$0xff]
    %v7169 = vld [vmem:[#allocation10 + $0x998] sm:$0xff]
    %v7170 = vld [vmem:[#allocation10 + $0x9a0] sm:$0xff]
    %v7171 = vld [vmem:[#allocation10 + $0x9a8] sm:$0xff]
    %v7172 = vld [vmem:[#allocation10 + $0x9b0] sm:$0xff]
    %v7173 = vld [vmem:[#allocation10 + $0x9b8] sm:$0xff]
    %v7174 = vld [vmem:[#allocation10 + $0x9c0] sm:$0xff]
    %v7175 = vld [vmem:[#allocation10 + $0x9c8] sm:$0xff]
    %v7176 = vld [vmem:[#allocation10 + $0x9d0] sm:$0xff]
    %v7177 = vld [vmem:[#allocation10 + $0x9d8] sm:$0xff]
    %v7178 = vld [vmem:[#allocation10 + $0x9e0] sm:$0xff]
    %v7179 = vld [vmem:[#allocation10 + $0x9e8] sm:$0xff]
    %v7180 = vld [vmem:[#allocation10 + $0x9f0] sm:$0xff]
    %v7181 = vld [vmem:[#allocation10 + $0x9f8] sm:$0xff]
    %v7182 = vld [vmem:[#allocation10 + $0xa00] sm:$0xff]
    %v7183 = vld [vmem:[#allocation10 + $0xa08] sm:$0xff]
    %v7184 = vld [vmem:[#allocation10 + $0xa10] sm:$0xff]
    %v7185 = vld [vmem:[#allocation10 + $0xa18] sm:$0xff]
    %v7186 = vld [vmem:[#allocation10 + $0xa20] sm:$0xff]
    %v7187 = vld [vmem:[#allocation10 + $0xa28] sm:$0xff]
    %v7188 = vld [vmem:[#allocation10 + $0xa30] sm:$0xff]
    %v7189 = vld [vmem:[#allocation10 + $0xa38] sm:$0xff]
    %v7190 = vld [vmem:[#allocation10 + $0xa40] sm:$0xff]
    %v7191 = vld [vmem:[#allocation10 + $0xa48] sm:$0xff]
    %v7192 = vld [vmem:[#allocation10 + $0xa50] sm:$0xff]
    %v7193 = vld [vmem:[#allocation10 + $0xa58] sm:$0xff]
    %v7194 = vld [vmem:[#allocation10 + $0xa60] sm:$0xff]
    %v7195 = vld [vmem:[#allocation10 + $0xa68] sm:$0xff]
    %v7196 = vld [vmem:[#allocation10 + $0xa70] sm:$0xff]
    %v7197 = vld [vmem:[#allocation10 + $0xa78] sm:$0xff]
    %v7198 = vld [vmem:[#allocation10 + $0xa80] sm:$0xff]
    %v7199 = vld [vmem:[#allocation10 + $0xa88] sm:$0xff]
    %v7200 = vld [vmem:[#allocation10 + $0xa90] sm:$0xff]
    %v7201 = vld [vmem:[#allocation10 + $0xa98] sm:$0xff]
    %v7202 = vld [vmem:[#allocation10 + $0xaa0] sm:$0xff]
    %v7203 = vld [vmem:[#allocation10 + $0xaa8] sm:$0xff]
    %v7204 = vld [vmem:[#allocation10 + $0xab0] sm:$0xff]
    %v7205 = vld [vmem:[#allocation10 + $0xab8] sm:$0xff]
    %v7206 = vld [vmem:[#allocation10 + $0xac0] sm:$0xff]
    %v7207 = vld [vmem:[#allocation10 + $0xac8] sm:$0xff]
    %v7208 = vld [vmem:[#allocation10 + $0xad0] sm:$0xff]
    %v7209 = vld [vmem:[#allocation10 + $0xad8] sm:$0xff]
    %v7210 = vld [vmem:[#allocation10 + $0xae0] sm:$0xff]
    %v7211 = vld [vmem:[#allocation10 + $0xae8] sm:$0xff]
    %v7212 = vld [vmem:[#allocation10 + $0xaf0] sm:$0xff]
    %v7213 = vld [vmem:[#allocation10 + $0xaf8] sm:$0xff]
    %v7214 = vld [vmem:[#allocation10 + $0xb00] sm:$0xff]
    %v7215 = vld [vmem:[#allocation10 + $0xb08] sm:$0xff]
    %v7216 = vld [vmem:[#allocation10 + $0xb10] sm:$0xff]
    %v7217 = vld [vmem:[#allocation10 + $0xb18] sm:$0xff]
    %v7218 = vld [vmem:[#allocation10 + $0xb20] sm:$0xff]
    %v7219 = vld [vmem:[#allocation10 + $0xb28] sm:$0xff]
    %v7220 = vld [vmem:[#allocation10 + $0xb30] sm:$0xff]
    %v7221 = vld [vmem:[#allocation10 + $0xb38] sm:$0xff]
    %v7222 = vld [vmem:[#allocation10 + $0xb40] sm:$0xff]
    %v7223 = vld [vmem:[#allocation10 + $0xb48] sm:$0xff]
    %v7224 = vld [vmem:[#allocation10 + $0xb50] sm:$0xff]
    %v7225 = vld [vmem:[#allocation10 + $0xb58] sm:$0xff]
    %v7226 = vld [vmem:[#allocation10 + $0xb60] sm:$0xff]
    %v7227 = vld [vmem:[#allocation10 + $0xb68] sm:$0xff]
    %v7228 = vld [vmem:[#allocation10 + $0xb70] sm:$0xff]
    %v7229 = vld [vmem:[#allocation10 + $0xb78] sm:$0xff]
    %v7230 = vld [vmem:[#allocation10 + $0xb80] sm:$0xff]
    %v7231 = vld [vmem:[#allocation10 + $0xb88] sm:$0xff]
    %v7232 = vld [vmem:[#allocation10 + $0xb90] sm:$0xff]
    %v7233 = vld [vmem:[#allocation10 + $0xb98] sm:$0xff]
    %v7234 = vld [vmem:[#allocation10 + $0xba0] sm:$0xff]
    %v7235 = vld [vmem:[#allocation10 + $0xba8] sm:$0xff]
    %v7236 = vld [vmem:[#allocation10 + $0xbb0] sm:$0xff]
    %v7237 = vld [vmem:[#allocation10 + $0xbb8] sm:$0xff]
    %v7238 = vld [vmem:[#allocation10 + $0xbc0] sm:$0xff]
    %v7239 = vld [vmem:[#allocation10 + $0xbc8] sm:$0xff]
    %v7240 = vld [vmem:[#allocation10 + $0xbd0] sm:$0xff]
    %v7241 = vld [vmem:[#allocation10 + $0xbd8] sm:$0xff]
    %v7242 = vld [vmem:[#allocation10 + $0xbe0] sm:$0xff]
    %v7243 = vld [vmem:[#allocation10 + $0xbe8] sm:$0xff]
    %v7244 = vld [vmem:[#allocation10 + $0xbf0] sm:$0xff]
    %v7245 = vld [vmem:[#allocation10 + $0xbf8] sm:$0xff]
    %v7246 = vld [vmem:[#allocation10 + $0xc00] sm:$0xff]
    %v7247 = vld [vmem:[#allocation10 + $0xc08] sm:$0xff]
    %v7248 = vld [vmem:[#allocation10 + $0xc10] sm:$0xff]
    %v7249 = vld [vmem:[#allocation10 + $0xc18] sm:$0xff]
    %v7250 = vld [vmem:[#allocation10 + $0xc20] sm:$0xff]
    %v7251 = vld [vmem:[#allocation10 + $0xc28] sm:$0xff]
    %v7252 = vld [vmem:[#allocation10 + $0xc30] sm:$0xff]
    %v7253 = vld [vmem:[#allocation10 + $0xc38] sm:$0xff]
    %v7254 = vld [vmem:[#allocation10 + $0xc40] sm:$0xff]
    %v7255 = vld [vmem:[#allocation10 + $0xc48] sm:$0xff]
    %v7256 = vld [vmem:[#allocation10 + $0xc50] sm:$0xff]
    %v7257 = vld [vmem:[#allocation10 + $0xc58] sm:$0xff]
    %v7258 = vld [vmem:[#allocation10 + $0xc60] sm:$0xff]
    %v7259 = vld [vmem:[#allocation10 + $0xc68] sm:$0xff]
    %v7260 = vld [vmem:[#allocation10 + $0xc70] sm:$0xff]
    %v7261 = vld [vmem:[#allocation10 + $0xc78] sm:$0xff]
    %v7262 = vld [vmem:[#allocation10 + $0xc80] sm:$0xff]
    %v7263 = vld [vmem:[#allocation10 + $0xc88] sm:$0xff]
    %v7264 = vld [vmem:[#allocation10 + $0xc90] sm:$0xff]
    %v7265 = vld [vmem:[#allocation10 + $0xc98] sm:$0xff]
    %v7266 = vld [vmem:[#allocation10 + $0xca0] sm:$0xff]
    %v7267 = vld [vmem:[#allocation10 + $0xca8] sm:$0xff]
    %v7268 = vld [vmem:[#allocation10 + $0xcb0] sm:$0xff]
    %v7269 = vld [vmem:[#allocation10 + $0xcb8] sm:$0xff]
    %v7270 = vld [vmem:[#allocation10 + $0xcc0] sm:$0xff]
    %v7271 = vld [vmem:[#allocation10 + $0xcc8] sm:$0xff]
    %v7272 = vld [vmem:[#allocation10 + $0xcd0] sm:$0xff]
    %v7273 = vld [vmem:[#allocation10 + $0xcd8] sm:$0xff]
    %v7274 = vld [vmem:[#allocation10 + $0xce0] sm:$0xff]
    %v7275 = vld [vmem:[#allocation10 + $0xce8] sm:$0xff]
    %v7276 = vld [vmem:[#allocation10 + $0xcf0] sm:$0xff]
    %v7277 = vld [vmem:[#allocation10 + $0xcf8] sm:$0xff]
    %v7278 = vld [vmem:[#allocation10 + $0xd00] sm:$0xff]
    %v7279 = vld [vmem:[#allocation10 + $0xd08] sm:$0xff]
    %v7280 = vld [vmem:[#allocation10 + $0xd10] sm:$0xff]
    %v7281 = vld [vmem:[#allocation10 + $0xd18] sm:$0xff]
    %v7282 = vld [vmem:[#allocation10 + $0xd20] sm:$0xff]
    %v7283 = vld [vmem:[#allocation10 + $0xd28] sm:$0xff]
    %v7284 = vld [vmem:[#allocation10 + $0xd30] sm:$0xff]
    %v7285 = vld [vmem:[#allocation10 + $0xd38] sm:$0xff]
    %v7286 = vld [vmem:[#allocation10 + $0xd40] sm:$0xff]
    %v7287 = vld [vmem:[#allocation10 + $0xd48] sm:$0xff]
    %v7288 = vld [vmem:[#allocation10 + $0xd50] sm:$0xff]
    %v7289 = vld [vmem:[#allocation10 + $0xd58] sm:$0xff]
    %v7290 = vld [vmem:[#allocation10 + $0xd60] sm:$0xff]
    %v7291 = vld [vmem:[#allocation10 + $0xd68] sm:$0xff]
    %v7292 = vld [vmem:[#allocation10 + $0xd70] sm:$0xff]
    %v7293 = vld [vmem:[#allocation10 + $0xd78] sm:$0xff]
    %v7294 = vld [vmem:[#allocation10 + $0xd80] sm:$0xff]
    %v7295 = vld [vmem:[#allocation10 + $0xd88] sm:$0xff]
    %v7296 = vld [vmem:[#allocation10 + $0xd90] sm:$0xff]
    %v7297 = vld [vmem:[#allocation10 + $0xd98] sm:$0xff]
    %v7298 = vld [vmem:[#allocation10 + $0xda0] sm:$0xff]
    %v7299 = vld [vmem:[#allocation10 + $0xda8] sm:$0xff]
    %v7300 = vld [vmem:[#allocation10 + $0xdb0] sm:$0xff]
    %v7301 = vld [vmem:[#allocation10 + $0xdb8] sm:$0xff]
    %v7302 = vld [vmem:[#allocation10 + $0xdc0] sm:$0xff]
    %v7303 = vld [vmem:[#allocation10 + $0xdc8] sm:$0xff]
    %v7304 = vld [vmem:[#allocation10 + $0xdd0] sm:$0xff]
    %v7305 = vld [vmem:[#allocation10 + $0xdd8] sm:$0xff]
    %v7306 = vld [vmem:[#allocation10 + $0xde0] sm:$0xff]
    %v7307 = vld [vmem:[#allocation10 + $0xde8] sm:$0xff]
    %v7308 = vld [vmem:[#allocation10 + $0xdf0] sm:$0xff]
    %v7309 = vld [vmem:[#allocation10 + $0xdf8] sm:$0xff]
    %v7310 = vld [vmem:[#allocation10 + $0xe00] sm:$0xff]
    %v7311 = vld [vmem:[#allocation10 + $0xe08] sm:$0xff]
    %v7312 = vld [vmem:[#allocation10 + $0xe10] sm:$0xff]
    %v7313 = vld [vmem:[#allocation10 + $0xe18] sm:$0xff]
    %v7314 = vld [vmem:[#allocation10 + $0xe20] sm:$0xff]
    %v7315 = vld [vmem:[#allocation10 + $0xe28] sm:$0xff]
    %v7316 = vld [vmem:[#allocation10 + $0xe30] sm:$0xff]
    %v7317 = vld [vmem:[#allocation10 + $0xe38] sm:$0xff]
    %v7318 = vld [vmem:[#allocation10 + $0xe40] sm:$0xff]
    %v7319 = vld [vmem:[#allocation10 + $0xe48] sm:$0xff]
    %v7320 = vld [vmem:[#allocation10 + $0xe50] sm:$0xff]
    %v7321 = vld [vmem:[#allocation10 + $0xe58] sm:$0xff]
    %v7322 = vld [vmem:[#allocation10 + $0xe60] sm:$0xff]
    %v7323 = vld [vmem:[#allocation10 + $0xe68] sm:$0xff]
    %v7324 = vld [vmem:[#allocation10 + $0xe70] sm:$0xff]
    %v7325 = vld [vmem:[#allocation10 + $0xe78] sm:$0xff]
    %v7326 = vld [vmem:[#allocation10 + $0xe80] sm:$0xff]
    %v7327 = vld [vmem:[#allocation10 + $0xe88] sm:$0xff]
    %v7328 = vld [vmem:[#allocation10 + $0xe90] sm:$0xff]
    %v7329 = vld [vmem:[#allocation10 + $0xe98] sm:$0xff]
    %v7330 = vld [vmem:[#allocation10 + $0xea0] sm:$0xff]
    %v7331 = vld [vmem:[#allocation10 + $0xea8] sm:$0xff]
    %v7332 = vld [vmem:[#allocation10 + $0xeb0] sm:$0xff]
    %v7333 = vld [vmem:[#allocation10 + $0xeb8] sm:$0xff]
    %v7334 = vld [vmem:[#allocation10 + $0xec0] sm:$0xff]
    %v7335 = vld [vmem:[#allocation10 + $0xec8] sm:$0xff]
    %v7336 = vld [vmem:[#allocation10 + $0xed0] sm:$0xff]
    %v7337 = vld [vmem:[#allocation10 + $0xed8] sm:$0xff]
    %v7338 = vld [vmem:[#allocation10 + $0xee0] sm:$0xff]
    %v7339 = vld [vmem:[#allocation10 + $0xee8] sm:$0xff]
    %v7340 = vld [vmem:[#allocation10 + $0xef0] sm:$0xff]
    %v7341 = vld [vmem:[#allocation10 + $0xef8] sm:$0xff]
    %v7342 = vld [vmem:[#allocation10 + $0xf00] sm:$0xff]
    %v7343 = vld [vmem:[#allocation10 + $0xf08] sm:$0xff]
    %v7344 = vld [vmem:[#allocation10 + $0xf10] sm:$0xff]
    %v7345 = vld [vmem:[#allocation10 + $0xf18] sm:$0xff]
    %v7346 = vld [vmem:[#allocation10 + $0xf20] sm:$0xff]
    %v7347 = vld [vmem:[#allocation10 + $0xf28] sm:$0xff]
    %v7348 = vld [vmem:[#allocation10 + $0xf30] sm:$0xff]
    %v7349 = vld [vmem:[#allocation10 + $0xf38] sm:$0xff]
    %v7350 = vld [vmem:[#allocation10 + $0xf40] sm:$0xff]
    %v7351 = vld [vmem:[#allocation10 + $0xf48] sm:$0xff]
    %v7352 = vld [vmem:[#allocation10 + $0xf50] sm:$0xff]
    %v7353 = vld [vmem:[#allocation10 + $0xf58] sm:$0xff]
    %v7354 = vld [vmem:[#allocation10 + $0xf60] sm:$0xff]
    %v7355 = vld [vmem:[#allocation10 + $0xf68] sm:$0xff]
    %v7356 = vld [vmem:[#allocation10 + $0xf70] sm:$0xff]
    %v7357 = vld [vmem:[#allocation10 + $0xf78] sm:$0xff]
    %v7358 = vld [vmem:[#allocation10 + $0xf80] sm:$0xff]
    %v7359 = vld [vmem:[#allocation10 + $0xf88] sm:$0xff]
    %v7360 = vld [vmem:[#allocation10 + $0xf90] sm:$0xff]
    %v7361 = vld [vmem:[#allocation10 + $0xf98] sm:$0xff]
    %v7362 = vld [vmem:[#allocation10 + $0xfa0] sm:$0xff]
    %v7363 = vld [vmem:[#allocation10 + $0xfa8] sm:$0xff]
    %v7364 = vld [vmem:[#allocation10 + $0xfb0] sm:$0xff]
    %v7365 = vld [vmem:[#allocation10 + $0xfb8] sm:$0xff]
    %v7366 = vld [vmem:[#allocation10 + $0xfc0] sm:$0xff]
    %v7367 = vld [vmem:[#allocation10 + $0xfc8] sm:$0xff]
    %v7368 = vld [vmem:[#allocation10 + $0xfd0] sm:$0xff]
    %v7369 = vld [vmem:[#allocation10 + $0xfd8] sm:$0xff]
    %v7370 = vld [vmem:[#allocation10 + $0xfe0] sm:$0xff]
    %v7371 = vld [vmem:[#allocation10 + $0xfe8] sm:$0xff]
    %v7372 = vld [vmem:[#allocation10 + $0xff0] sm:$0xff]
    %v7373 = vld [vmem:[#allocation10 + $0xff8] sm:$0xff]
    %v7374 = vld [vmem:[#allocation10 + $0x1000] sm:$0xff]
    %v7375 = vld [vmem:[#allocation10 + $0x1008] sm:$0xff]
    %v7376 = vld [vmem:[#allocation10 + $0x1010] sm:$0xff]
    %v7377 = vld [vmem:[#allocation10 + $0x1018] sm:$0xff]
    %v7378 = vld [vmem:[#allocation10 + $0x1020] sm:$0xff]
    %v7379 = vld [vmem:[#allocation10 + $0x1028] sm:$0xff]
    %v7380 = vld [vmem:[#allocation10 + $0x1030] sm:$0xff]
    %v7381 = vld [vmem:[#allocation10 + $0x1038] sm:$0xff]
    %v7382 = vld [vmem:[#allocation10 + $0x1040] sm:$0xff]
    %v7383 = vld [vmem:[#allocation10 + $0x1048] sm:$0xff]
    %v7384 = vld [vmem:[#allocation10 + $0x1050] sm:$0xff]
    %v7385 = vld [vmem:[#allocation10 + $0x1058] sm:$0xff]
    %v7386 = vld [vmem:[#allocation10 + $0x1060] sm:$0xff]
    %v7387 = vld [vmem:[#allocation10 + $0x1068] sm:$0xff]
    %v7388 = vld [vmem:[#allocation10 + $0x1070] sm:$0xff]
    %v7389 = vld [vmem:[#allocation10 + $0x1078] sm:$0xff]
    %v7390 = vld [vmem:[#allocation10 + $0x1080] sm:$0xff]
    %v7391 = vld [vmem:[#allocation10 + $0x1088] sm:$0xff]
    %v7392 = vld [vmem:[#allocation10 + $0x1090] sm:$0xff]
    %v7393 = vld [vmem:[#allocation10 + $0x1098] sm:$0xff]
    %v7394 = vld [vmem:[#allocation10 + $0x10a0] sm:$0xff]
    %v7395 = vld [vmem:[#allocation10 + $0x10a8] sm:$0xff]
    %v7396 = vld [vmem:[#allocation10 + $0x10b0] sm:$0xff]
    %v7397 = vld [vmem:[#allocation10 + $0x10b8] sm:$0xff]
    %v7398 = vld [vmem:[#allocation10 + $0x10c0] sm:$0xff]
    %v7399 = vld [vmem:[#allocation10 + $0x10c8] sm:$0xff]
    %v7400 = vld [vmem:[#allocation10 + $0x10d0] sm:$0xff]
    %v7401 = vld [vmem:[#allocation10 + $0x10d8] sm:$0xff]
    %v7402 = vld [vmem:[#allocation10 + $0x10e0] sm:$0xff]
    %v7403 = vld [vmem:[#allocation10 + $0x10e8] sm:$0xff]
    %v7404 = vld [vmem:[#allocation10 + $0x10f0] sm:$0xff]
    %v7405 = vld [vmem:[#allocation10 + $0x10f8] sm:$0xff]
    %v7406 = vld [vmem:[#allocation10 + $0x1100] sm:$0xff]
    %v7407 = vld [vmem:[#allocation10 + $0x1108] sm:$0xff]
    %v7408 = vld [vmem:[#allocation10 + $0x1110] sm:$0xff]
    %v7409 = vld [vmem:[#allocation10 + $0x1118] sm:$0xff]
    %v7410 = vld [vmem:[#allocation10 + $0x1120] sm:$0xff]
    %v7411 = vld [vmem:[#allocation10 + $0x1128] sm:$0xff]
    %v7412 = vld [vmem:[#allocation10 + $0x1130] sm:$0xff]
    %v7413 = vld [vmem:[#allocation10 + $0x1138] sm:$0xff]
    %v7414 = vld [vmem:[#allocation10 + $0x1140] sm:$0xff]
    %v7415 = vld [vmem:[#allocation10 + $0x1148] sm:$0xff]
    %v7416 = vld [vmem:[#allocation10 + $0x1150] sm:$0xff]
    %v7417 = vld [vmem:[#allocation10 + $0x1158] sm:$0xff]
    %v7418 = vld [vmem:[#allocation10 + $0x1160] sm:$0xff]
    %v7419 = vld [vmem:[#allocation10 + $0x1168] sm:$0xff]
    %v7420 = vld [vmem:[#allocation10 + $0x1170] sm:$0xff]
    %v7421 = vld [vmem:[#allocation10 + $0x1178] sm:$0xff]
    %v7422 = vld [vmem:[#allocation10 + $0x1180] sm:$0xff]
    %v7423 = vld [vmem:[#allocation10 + $0x1188] sm:$0xff]
    %v7424 = vld [vmem:[#allocation10 + $0x1190] sm:$0xff]
    %v7425 = vld [vmem:[#allocation10 + $0x1198] sm:$0xff]
    %v7426 = vld [vmem:[#allocation10 + $0x11a0] sm:$0xff]
    %v7427 = vld [vmem:[#allocation10 + $0x11a8] sm:$0xff]
    %v7428 = vld [vmem:[#allocation10 + $0x11b0] sm:$0xff]
    %v7429 = vld [vmem:[#allocation10 + $0x11b8] sm:$0xff]
    %v7430 = vld [vmem:[#allocation10 + $0x11c0] sm:$0xff]
    %v7431 = vld [vmem:[#allocation10 + $0x11c8] sm:$0xff]
    %v7432 = vld [vmem:[#allocation10 + $0x11d0] sm:$0xff]
    %v7433 = vld [vmem:[#allocation10 + $0x11d8] sm:$0xff]
    %v7434 = vld [vmem:[#allocation10 + $0x11e0] sm:$0xff]
    %v7435 = vld [vmem:[#allocation10 + $0x11e8] sm:$0xff]
    %v7436 = vld [vmem:[#allocation10 + $0x11f0] sm:$0xff]
    %v7437 = vld [vmem:[#allocation10 + $0x11f8] sm:$0xff]
    %v7438 = vld [vmem:[#allocation10 + $0x1200] sm:$0xff]
    %v7439 = vld [vmem:[#allocation10 + $0x1208] sm:$0xff]
    %v7440 = vld [vmem:[#allocation10 + $0x1210] sm:$0xff]
    %v7441 = vld [vmem:[#allocation10 + $0x1218] sm:$0xff]
    %v7442 = vld [vmem:[#allocation10 + $0x1220] sm:$0xff]
    %v7443 = vld [vmem:[#allocation10 + $0x1228] sm:$0xff]
    %v7444 = vld [vmem:[#allocation10 + $0x1230] sm:$0xff]
    %v7445 = vld [vmem:[#allocation10 + $0x1238] sm:$0xff]
    %v7446 = vld [vmem:[#allocation10 + $0x1240] sm:$0xff]
    %v7447 = vld [vmem:[#allocation10 + $0x1248] sm:$0xff]
    %v7448 = vld [vmem:[#allocation10 + $0x1250] sm:$0xff]
    %v7449 = vld [vmem:[#allocation10 + $0x1258] sm:$0xff]
    %v7450 = vld [vmem:[#allocation10 + $0x1260] sm:$0xff]
    %v7451 = vld [vmem:[#allocation10 + $0x1268] sm:$0xff]
    %v7452 = vld [vmem:[#allocation10 + $0x1270] sm:$0xff]
    %v7453 = vld [vmem:[#allocation10 + $0x1278] sm:$0xff]
    %v7454 = vld [vmem:[#allocation10 + $0x1280] sm:$0xff]
    %v7455 = vld [vmem:[#allocation10 + $0x1288] sm:$0xff]
    %v7456 = vld [vmem:[#allocation10 + $0x1290] sm:$0xff]
    %v7457 = vld [vmem:[#allocation10 + $0x1298] sm:$0xff]
    %v7458 = vld [vmem:[#allocation10 + $0x12a0] sm:$0xff]
    %v7459 = vld [vmem:[#allocation10 + $0x12a8] sm:$0xff]
    %v7460 = vld [vmem:[#allocation10 + $0x12b0] sm:$0xff]
    %v7461 = vld [vmem:[#allocation10 + $0x12b8] sm:$0xff]
    %v7462 = vld [vmem:[#allocation10 + $0x12c0] sm:$0xff]
    %v7463 = vld [vmem:[#allocation10 + $0x12c8] sm:$0xff]
    %v7464 = vld [vmem:[#allocation10 + $0x12d0] sm:$0xff]
    %v7465 = vld [vmem:[#allocation10 + $0x12d8] sm:$0xff]
    %v7466 = vld [vmem:[#allocation10 + $0x12e0] sm:$0xff]
    %v7467 = vld [vmem:[#allocation10 + $0x12e8] sm:$0xff]
    %v7468 = vld [vmem:[#allocation10 + $0x12f0] sm:$0xff]
    %v7469 = vld [vmem:[#allocation10 + $0x12f8] sm:$0xff]
    %v7470 = vld [vmem:[#allocation10 + $0x1300] sm:$0xff]
    %v7471 = vld [vmem:[#allocation10 + $0x1308] sm:$0xff]
    %v7472 = vld [vmem:[#allocation10 + $0x1310] sm:$0xff]
    %v7473 = vld [vmem:[#allocation10 + $0x1318] sm:$0xff]
    %v7474 = vld [vmem:[#allocation10 + $0x1320] sm:$0xff]
    %v7475 = vld [vmem:[#allocation10 + $0x1328] sm:$0xff]
    %v7476 = vld [vmem:[#allocation10 + $0x1330] sm:$0xff]
    %v7477 = vld [vmem:[#allocation10 + $0x1338] sm:$0xff]
    %v7478 = vld [vmem:[#allocation10 + $0x1340] sm:$0xff]
    %v7479 = vld [vmem:[#allocation10 + $0x1348] sm:$0xff]
    %v7480 = vld [vmem:[#allocation10 + $0x1350] sm:$0xff]
    %v7481 = vld [vmem:[#allocation10 + $0x1358] sm:$0xff]
    %v7482 = vld [vmem:[#allocation10 + $0x1360] sm:$0xff]
    %v7483 = vld [vmem:[#allocation10 + $0x1368] sm:$0xff]
    %v7484 = vld [vmem:[#allocation10 + $0x1370] sm:$0xff]
    %v7485 = vld [vmem:[#allocation10 + $0x1378] sm:$0xff]
    %v7486 = vld [vmem:[#allocation10 + $0x1380] sm:$0xff]
    %v7487 = vld [vmem:[#allocation10 + $0x1388] sm:$0xff]
    %v7488 = vld [vmem:[#allocation10 + $0x1390] sm:$0xff]
    %v7489 = vld [vmem:[#allocation10 + $0x1398] sm:$0xff]
    %v7490 = vld [vmem:[#allocation10 + $0x13a0] sm:$0xff]
    %v7491 = vld [vmem:[#allocation10 + $0x13a8] sm:$0xff]
    %v7492 = vld [vmem:[#allocation10 + $0x13b0] sm:$0xff]
    %v7493 = vld [vmem:[#allocation10 + $0x13b8] sm:$0xff]
    %v7494 = vld [vmem:[#allocation10 + $0x13c0] sm:$0xff]
    %v7495 = vld [vmem:[#allocation10 + $0x13c8] sm:$0xff]
    %v7496 = vld [vmem:[#allocation10 + $0x13d0] sm:$0xff]
    %v7497 = vld [vmem:[#allocation10 + $0x13d8] sm:$0xff]
    %v7498 = vld [vmem:[#allocation10 + $0x13e0] sm:$0xff]
    %v7499 = vld [vmem:[#allocation10 + $0x13e8] sm:$0xff]
    %v7500 = vld [vmem:[#allocation10 + $0x13f0] sm:$0xff]
    %v7501 = vld [vmem:[#allocation10 + $0x13f8] sm:$0xff]
    %v7502 = vld [vmem:[#allocation10 + $0x1400] sm:$0xff]
    %v7503 = vld [vmem:[#allocation10 + $0x1408] sm:$0xff]
    %v7504 = vld [vmem:[#allocation10 + $0x1410] sm:$0xff]
    %v7505 = vld [vmem:[#allocation10 + $0x1418] sm:$0xff]
    %v7506 = vld [vmem:[#allocation10 + $0x1420] sm:$0xff]
    %v7507 = vld [vmem:[#allocation10 + $0x1428] sm:$0xff]
    %v7508 = vld [vmem:[#allocation10 + $0x1430] sm:$0xff]
    %v7509 = vld [vmem:[#allocation10 + $0x1438] sm:$0xff]
    %v7510 = vld [vmem:[#allocation10 + $0x1440] sm:$0xff]
    %v7511 = vld [vmem:[#allocation10 + $0x1448] sm:$0xff]
    %v7512 = vld [vmem:[#allocation10 + $0x1450] sm:$0xff]
    %v7513 = vld [vmem:[#allocation10 + $0x1458] sm:$0xff]
    %v7514 = vld [vmem:[#allocation10 + $0x1460] sm:$0xff]
    %v7515 = vld [vmem:[#allocation10 + $0x1468] sm:$0xff]
    %v7516 = vld [vmem:[#allocation10 + $0x1470] sm:$0xff]
    %v7517 = vld [vmem:[#allocation10 + $0x1478] sm:$0xff]
    %v7518 = vld [vmem:[#allocation10 + $0x1480] sm:$0xff]
    %v7519 = vld [vmem:[#allocation10 + $0x1488] sm:$0xff]
    %v7520 = vld [vmem:[#allocation10 + $0x1490] sm:$0xff]
    %v7521 = vld [vmem:[#allocation10 + $0x1498] sm:$0xff]
    %v7522 = vld [vmem:[#allocation10 + $0x14a0] sm:$0xff]
    %v7523 = vld [vmem:[#allocation10 + $0x14a8] sm:$0xff]
    %v7524 = vld [vmem:[#allocation10 + $0x14b0] sm:$0xff]
    %v7525 = vld [vmem:[#allocation10 + $0x14b8] sm:$0xff]
    %v7526 = vld [vmem:[#allocation10 + $0x14c0] sm:$0xff]
    %v7527 = vld [vmem:[#allocation10 + $0x14c8] sm:$0xff]
    %v7528 = vld [vmem:[#allocation10 + $0x14d0] sm:$0xff]
    %v7529 = vld [vmem:[#allocation10 + $0x14d8] sm:$0xff]
    %v7530 = vld [vmem:[#allocation10 + $0x14e0] sm:$0xff]
    %v7531 = vld [vmem:[#allocation10 + $0x14e8] sm:$0xff]
    %v7532 = vld [vmem:[#allocation10 + $0x14f0] sm:$0xff]
    %v7533 = vld [vmem:[#allocation10 + $0x14f8] sm:$0xff]
    %v7534 = vld [vmem:[#allocation10 + $0x1500] sm:$0xff]
    %v7535 = vld [vmem:[#allocation10 + $0x1508] sm:$0xff]
    %v7536 = vld [vmem:[#allocation10 + $0x1510] sm:$0xff]
    %v7537 = vld [vmem:[#allocation10 + $0x1518] sm:$0xff]
    %v7538 = vld [vmem:[#allocation10 + $0x1520] sm:$0xff]
    %v7539 = vld [vmem:[#allocation10 + $0x1528] sm:$0xff]
    %v7540 = vld [vmem:[#allocation10 + $0x1530] sm:$0xff]
    %v7541 = vld [vmem:[#allocation10 + $0x1538] sm:$0xff]
    %v7542 = vld [vmem:[#allocation10 + $0x1540] sm:$0xff]
    %v7543 = vld [vmem:[#allocation10 + $0x1548] sm:$0xff]
    %v7544 = vld [vmem:[#allocation10 + $0x1550] sm:$0xff]
    %v7545 = vld [vmem:[#allocation10 + $0x1558] sm:$0xff]
    %v7546 = vld [vmem:[#allocation10 + $0x1560] sm:$0xff]
    %v7547 = vld [vmem:[#allocation10 + $0x1568] sm:$0xff]
    %v7548 = vld [vmem:[#allocation10 + $0x1570] sm:$0xff]
    %v7549 = vld [vmem:[#allocation10 + $0x1578] sm:$0xff]
    %v7550 = vld [vmem:[#allocation10 + $0x1580] sm:$0xff]
    %v7551 = vld [vmem:[#allocation10 + $0x1588] sm:$0xff]
    %v7552 = vld [vmem:[#allocation10 + $0x1590] sm:$0xff]
    %v7553 = vld [vmem:[#allocation10 + $0x1598] sm:$0xff]
    %v7554 = vld [vmem:[#allocation10 + $0x15a0] sm:$0xff]
    %v7555 = vld [vmem:[#allocation10 + $0x15a8] sm:$0xff]
    %v7556 = vld [vmem:[#allocation10 + $0x15b0] sm:$0xff]
    %v7557 = vld [vmem:[#allocation10 + $0x15b8] sm:$0xff]
    %v7558 = vld [vmem:[#allocation10 + $0x15c0] sm:$0xff]
    %v7559 = vld [vmem:[#allocation10 + $0x15c8] sm:$0xff]
    %v7560 = vld [vmem:[#allocation10 + $0x15d0] sm:$0xff]
    %v7561 = vld [vmem:[#allocation10 + $0x15d8] sm:$0xff]
    %v7562 = vld [vmem:[#allocation10 + $0x15e0] sm:$0xff]
    %v7563 = vld [vmem:[#allocation10 + $0x15e8] sm:$0xff]
    %v7564 = vld [vmem:[#allocation10 + $0x15f0] sm:$0xff]
    %v7565 = vld [vmem:[#allocation10 + $0x15f8] sm:$0xff]
    %v7566 = vld [vmem:[#allocation10 + $0x1600] sm:$0xff]
    %v7567 = vld [vmem:[#allocation10 + $0x1608] sm:$0xff]
    %v7568 = vld [vmem:[#allocation10 + $0x1610] sm:$0xff]
    %v7569 = vld [vmem:[#allocation10 + $0x1618] sm:$0xff]
    %v7570 = vld [vmem:[#allocation10 + $0x1620] sm:$0xff]
    %v7571 = vld [vmem:[#allocation10 + $0x1628] sm:$0xff]
    %v7572 = vld [vmem:[#allocation10 + $0x1630] sm:$0xff]
    %v7573 = vld [vmem:[#allocation10 + $0x1638] sm:$0xff]
    %v7574 = vld [vmem:[#allocation10 + $0x1640] sm:$0xff]
    %v7575 = vld [vmem:[#allocation10 + $0x1648] sm:$0xff]
    %v7576 = vld [vmem:[#allocation10 + $0x1650] sm:$0xff]
    %v7577 = vld [vmem:[#allocation10 + $0x1658] sm:$0xff]
    %v7578 = vld [vmem:[#allocation10 + $0x1660] sm:$0xff]
    %v7579 = vld [vmem:[#allocation10 + $0x1668] sm:$0xff]
    %v7580 = vld [vmem:[#allocation10 + $0x1670] sm:$0xff]
    %v7581 = vld [vmem:[#allocation10 + $0x1678] sm:$0xff]
    %v7582 = vld [vmem:[#allocation10 + $0x1680] sm:$0xff]
    %v7583 = vld [vmem:[#allocation10 + $0x1688] sm:$0xff]
    %v7584 = vld [vmem:[#allocation10 + $0x1690] sm:$0xff]
    %v7585 = vld [vmem:[#allocation10 + $0x1698] sm:$0xff]
    %v7586 = vld [vmem:[#allocation10 + $0x16a0] sm:$0xff]
    %v7587 = vld [vmem:[#allocation10 + $0x16a8] sm:$0xff]
    %v7588 = vld [vmem:[#allocation10 + $0x16b0] sm:$0xff]
    %v7589 = vld [vmem:[#allocation10 + $0x16b8] sm:$0xff]
    %v7590 = vld [vmem:[#allocation10 + $0x16c0] sm:$0xff]
    %v7591 = vld [vmem:[#allocation10 + $0x16c8] sm:$0xff]
    %v7592 = vld [vmem:[#allocation10 + $0x16d0] sm:$0xff]
    %v7593 = vld [vmem:[#allocation10 + $0x16d8] sm:$0xff]
    %v7594 = vld [vmem:[#allocation10 + $0x16e0] sm:$0xff]
    %v7595 = vld [vmem:[#allocation10 + $0x16e8] sm:$0xff]
    %v7596 = vld [vmem:[#allocation10 + $0x16f0] sm:$0xff]
    %v7597 = vld [vmem:[#allocation10 + $0x16f8] sm:$0xff]
    %v7598 = vld [vmem:[#allocation10 + $0x1700] sm:$0xff]
    %v7599 = vld [vmem:[#allocation10 + $0x1708] sm:$0xff]
    %v7600 = vld [vmem:[#allocation10 + $0x1710] sm:$0xff]
    %v7601 = vld [vmem:[#allocation10 + $0x1718] sm:$0xff]
    %v7602 = vld [vmem:[#allocation10 + $0x1720] sm:$0xff]
    %v7603 = vld [vmem:[#allocation10 + $0x1728] sm:$0xff]
    %v7604 = vld [vmem:[#allocation10 + $0x1730] sm:$0xff]
    %v7605 = vld [vmem:[#allocation10 + $0x1738] sm:$0xff]
    %v7606 = vld [vmem:[#allocation10 + $0x1740] sm:$0xff]
    %v7607 = vld [vmem:[#allocation10 + $0x1748] sm:$0xff]
    %v7608 = vld [vmem:[#allocation10 + $0x1750] sm:$0xff]
    %v7609 = vld [vmem:[#allocation10 + $0x1758] sm:$0xff]
    %v7610 = vld [vmem:[#allocation10 + $0x1760] sm:$0xff]
    %v7611 = vld [vmem:[#allocation10 + $0x1768] sm:$0xff]
    %v7612 = vld [vmem:[#allocation10 + $0x1770] sm:$0xff]
    %v7613 = vld [vmem:[#allocation10 + $0x1778] sm:$0xff]
    %v7614 = vld [vmem:[#allocation10 + $0x1780] sm:$0xff]
    %v7615 = vld [vmem:[#allocation10 + $0x1788] sm:$0xff]
    %v7616 = vld [vmem:[#allocation10 + $0x1790] sm:$0xff]
    %v7617 = vld [vmem:[#allocation10 + $0x1798] sm:$0xff]
    %v7618 = vld [vmem:[#allocation10 + $0x17a0] sm:$0xff]
    %v7619 = vld [vmem:[#allocation10 + $0x17a8] sm:$0xff]
    %v7620 = vld [vmem:[#allocation10 + $0x17b0] sm:$0xff]
    %v7621 = vld [vmem:[#allocation10 + $0x17b8] sm:$0xff]
    %v7622 = vld [vmem:[#allocation10 + $0x17c0] sm:$0xff]
    %v7623 = vld [vmem:[#allocation10 + $0x17c8] sm:$0xff]
    %v7624 = vld [vmem:[#allocation10 + $0x17d0] sm:$0xff]
    %v7625 = vld [vmem:[#allocation10 + $0x17d8] sm:$0xff]
    %v7626 = vld [vmem:[#allocation10 + $0x17e0] sm:$0xff]
    %v7627 = vld [vmem:[#allocation10 + $0x17e8] sm:$0xff]
    %v7628 = vld [vmem:[#allocation10 + $0x17f0] sm:$0xff]
    %v7629 = vld [vmem:[#allocation10 + $0x17f8] sm:$0xff]
    %v7630 = vld [vmem:[#allocation10 + $0x1800] sm:$0xff]
    %v7631 = vld [vmem:[#allocation10 + $0x1808] sm:$0xff]
    %v7632 = vld [vmem:[#allocation10 + $0x1810] sm:$0xff]
    %v7633 = vld [vmem:[#allocation10 + $0x1818] sm:$0xff]
    %v7634 = vld [vmem:[#allocation10 + $0x1820] sm:$0xff]
    %v7635 = vld [vmem:[#allocation10 + $0x1828] sm:$0xff]
    %v7636 = vld [vmem:[#allocation10 + $0x1830] sm:$0xff]
    %v7637 = vld [vmem:[#allocation10 + $0x1838] sm:$0xff]
    %v7638 = vld [vmem:[#allocation10 + $0x1840] sm:$0xff]
    %v7639 = vld [vmem:[#allocation10 + $0x1848] sm:$0xff]
    %v7640 = vld [vmem:[#allocation10 + $0x1850] sm:$0xff]
    %v7641 = vld [vmem:[#allocation10 + $0x1858] sm:$0xff]
    %v7642 = vld [vmem:[#allocation10 + $0x1860] sm:$0xff]
    %v7643 = vld [vmem:[#allocation10 + $0x1868] sm:$0xff]
    %v7644 = vld [vmem:[#allocation10 + $0x1870] sm:$0xff]
    %v7645 = vld [vmem:[#allocation10 + $0x1878] sm:$0xff]
    %v7646 = vld [vmem:[#allocation10 + $0x1880] sm:$0xff]
    %v7647 = vld [vmem:[#allocation10 + $0x1888] sm:$0xff]
    %v7648 = vld [vmem:[#allocation10 + $0x1890] sm:$0xff]
    %v7649 = vld [vmem:[#allocation10 + $0x1898] sm:$0xff]
    %v7650 = vld [vmem:[#allocation10 + $0x18a0] sm:$0xff]
    %v7651 = vld [vmem:[#allocation10 + $0x18a8] sm:$0xff]
    %v7652 = vld [vmem:[#allocation10 + $0x18b0] sm:$0xff]
    %v7653 = vld [vmem:[#allocation10 + $0x18b8] sm:$0xff]
    %v7654 = vld [vmem:[#allocation10 + $0x18c0] sm:$0xff]
    %v7655 = vld [vmem:[#allocation10 + $0x18c8] sm:$0xff]
    %v7656 = vld [vmem:[#allocation10 + $0x18d0] sm:$0xff]
    %v7657 = vld [vmem:[#allocation10 + $0x18d8] sm:$0xff]
    %v7658 = vld [vmem:[#allocation10 + $0x18e0] sm:$0xff]
    %v7659 = vld [vmem:[#allocation10 + $0x18e8] sm:$0xff]
    %v7660 = vld [vmem:[#allocation10 + $0x18f0] sm:$0xff]
    %v7661 = vld [vmem:[#allocation10 + $0x18f8] sm:$0xff]
    %v7662 = vld [vmem:[#allocation10 + $0x1900] sm:$0xff]
    %v7663 = vld [vmem:[#allocation10 + $0x1908] sm:$0xff]
    %v7664 = vld [vmem:[#allocation10 + $0x1910] sm:$0xff]
    %v7665 = vld [vmem:[#allocation10 + $0x1918] sm:$0xff]
    %v7666 = vld [vmem:[#allocation10 + $0x1920] sm:$0xff]
    %v7667 = vld [vmem:[#allocation10 + $0x1928] sm:$0xff]
    %v7668 = vld [vmem:[#allocation10 + $0x1930] sm:$0xff]
    %v7669 = vld [vmem:[#allocation10 + $0x1938] sm:$0xff]
    %v7670 = vld [vmem:[#allocation10 + $0x1940] sm:$0xff]
    %v7671 = vld [vmem:[#allocation10 + $0x1948] sm:$0xff]
    %v7672 = vld [vmem:[#allocation10 + $0x1950] sm:$0xff]
    %v7673 = vld [vmem:[#allocation10 + $0x1958] sm:$0xff]
    %v7674 = vld [vmem:[#allocation10 + $0x1960] sm:$0xff]
    %v7675 = vld [vmem:[#allocation10 + $0x1968] sm:$0xff]
    %v7676 = vld [vmem:[#allocation10 + $0x1970] sm:$0xff]
    %v7677 = vld [vmem:[#allocation10 + $0x1978] sm:$0xff]
    %v7678 = vld [vmem:[#allocation10 + $0x1980] sm:$0xff]
    %v7679 = vld [vmem:[#allocation10 + $0x1988] sm:$0xff]
    %v7680 = vld [vmem:[#allocation10 + $0x1990] sm:$0xff]
    %v7681 = vld [vmem:[#allocation10 + $0x1998] sm:$0xff]
    %v7682 = vld [vmem:[#allocation10 + $0x19a0] sm:$0xff]
    %v7683 = vld [vmem:[#allocation10 + $0x19a8] sm:$0xff]
    %v7684 = vld [vmem:[#allocation10 + $0x19b0] sm:$0xff]
    %v7685 = vld [vmem:[#allocation10 + $0x19b8] sm:$0xff]
    %v7686 = vld [vmem:[#allocation10 + $0x19c0] sm:$0xff]
    %v7687 = vld [vmem:[#allocation10 + $0x19c8] sm:$0xff]
    %v7688 = vld [vmem:[#allocation10 + $0x19d0] sm:$0xff]
    %v7689 = vld [vmem:[#allocation10 + $0x19d8] sm:$0xff]
    %v7690 = vld [vmem:[#allocation10 + $0x19e0] sm:$0xff]
    %v7691 = vld [vmem:[#allocation10 + $0x19e8] sm:$0xff]
    %v7692 = vld [vmem:[#allocation10 + $0x19f0] sm:$0xff]
    %v7693 = vld [vmem:[#allocation10 + $0x19f8] sm:$0xff]
    %v7694 = vld [vmem:[#allocation10 + $0x1a00] sm:$0xff]
    %v7695 = vld [vmem:[#allocation10 + $0x1a08] sm:$0xff]
    %v7696 = vld [vmem:[#allocation10 + $0x1a10] sm:$0xff]
    %v7697 = vld [vmem:[#allocation10 + $0x1a18] sm:$0xff]
    %v7698 = vld [vmem:[#allocation10 + $0x1a20] sm:$0xff]
    %v7699 = vld [vmem:[#allocation10 + $0x1a28] sm:$0xff]
    %v7700 = vld [vmem:[#allocation10 + $0x1a30] sm:$0xff]
    %v7701 = vld [vmem:[#allocation10 + $0x1a38] sm:$0xff]
    %v7702 = vld [vmem:[#allocation10 + $0x1a40] sm:$0xff]
    %v7703 = vld [vmem:[#allocation10 + $0x1a48] sm:$0xff]
    %v7704 = vld [vmem:[#allocation10 + $0x1a50] sm:$0xff]
    %v7705 = vld [vmem:[#allocation10 + $0x1a58] sm:$0xff]
    %v7706 = vld [vmem:[#allocation10 + $0x1a60] sm:$0xff]
    %v7707 = vld [vmem:[#allocation10 + $0x1a68] sm:$0xff]
    %v7708 = vld [vmem:[#allocation10 + $0x1a70] sm:$0xff]
    %v7709 = vld [vmem:[#allocation10 + $0x1a78] sm:$0xff]
    %v7710 = vld [vmem:[#allocation10 + $0x1a80] sm:$0xff]
    %v7711 = vld [vmem:[#allocation10 + $0x1a88] sm:$0xff]
    %v7712 = vld [vmem:[#allocation10 + $0x1a90] sm:$0xff]
    %v7713 = vld [vmem:[#allocation10 + $0x1a98] sm:$0xff]
    %v7714 = vld [vmem:[#allocation10 + $0x1aa0] sm:$0xff]
    %v7715 = vld [vmem:[#allocation10 + $0x1aa8] sm:$0xff]
    %v7716 = vld [vmem:[#allocation10 + $0x1ab0] sm:$0xff]
    %v7717 = vld [vmem:[#allocation10 + $0x1ab8] sm:$0xff]
    %v7718 = vld [vmem:[#allocation10 + $0x1ac0] sm:$0xff]
    %v7719 = vld [vmem:[#allocation10 + $0x1ac8] sm:$0xff]
    %v7720 = vld [vmem:[#allocation10 + $0x1ad0] sm:$0xff]
    %v7721 = vld [vmem:[#allocation10 + $0x1ad8] sm:$0xff]
    %v7722 = vld [vmem:[#allocation10 + $0x1ae0] sm:$0xff]
    %v7723 = vld [vmem:[#allocation10 + $0x1ae8] sm:$0xff]
    %v7724 = vld [vmem:[#allocation10 + $0x1af0] sm:$0xff]
    %v7725 = vld [vmem:[#allocation10 + $0x1af8] sm:$0xff]
    %v7726 = vld [vmem:[#allocation10 + $0x1b00] sm:$0xff]
    %v7727 = vld [vmem:[#allocation10 + $0x1b08] sm:$0xff]
    %v7728 = vld [vmem:[#allocation10 + $0x1b10] sm:$0xff]
    %v7729 = vld [vmem:[#allocation10 + $0x1b18] sm:$0xff]
    %v7730 = vld [vmem:[#allocation10 + $0x1b20] sm:$0xff]
    %v7731 = vld [vmem:[#allocation10 + $0x1b28] sm:$0xff]
    %v7732 = vld [vmem:[#allocation10 + $0x1b30] sm:$0xff]
    %v7733 = vld [vmem:[#allocation10 + $0x1b38] sm:$0xff]
    %v7734 = vld [vmem:[#allocation10 + $0x1b40] sm:$0xff]
    %v7735 = vld [vmem:[#allocation10 + $0x1b48] sm:$0xff]
    %v7736 = vld [vmem:[#allocation10 + $0x1b50] sm:$0xff]
    %v7737 = vld [vmem:[#allocation10 + $0x1b58] sm:$0xff]
    %v7738 = vld [vmem:[#allocation10 + $0x1b60] sm:$0xff]
    %v7739 = vld [vmem:[#allocation10 + $0x1b68] sm:$0xff]
    %v7740 = vld [vmem:[#allocation10 + $0x1b70] sm:$0xff]
    %v7741 = vld [vmem:[#allocation10 + $0x1b78] sm:$0xff]
    %v7742 = vld [vmem:[#allocation10 + $0x1b80] sm:$0xff]
    %v7743 = vld [vmem:[#allocation10 + $0x1b88] sm:$0xff]
    %v7744 = vld [vmem:[#allocation10 + $0x1b90] sm:$0xff]
    %v7745 = vld [vmem:[#allocation10 + $0x1b98] sm:$0xff]
    %v7746 = vld [vmem:[#allocation10 + $0x1ba0] sm:$0xff]
    %v7747 = vld [vmem:[#allocation10 + $0x1ba8] sm:$0xff]
    %v7748 = vld [vmem:[#allocation10 + $0x1bb0] sm:$0xff]
    %v7749 = vld [vmem:[#allocation10 + $0x1bb8] sm:$0xff]
    %v7750 = vld [vmem:[#allocation10 + $0x1bc0] sm:$0xff]
    %v7751 = vld [vmem:[#allocation10 + $0x1bc8] sm:$0xff]
    %v7752 = vld [vmem:[#allocation10 + $0x1bd0] sm:$0xff]
    %v7753 = vld [vmem:[#allocation10 + $0x1bd8] sm:$0xff]
    %v7754 = vld [vmem:[#allocation10 + $0x1be0] sm:$0xff]
    %v7755 = vld [vmem:[#allocation10 + $0x1be8] sm:$0xff]
    %v7756 = vld [vmem:[#allocation10 + $0x1bf0] sm:$0xff]
    %v7757 = vld [vmem:[#allocation10 + $0x1bf8] sm:$0xff]
    %v7758 = vld [vmem:[#allocation11] sm:$0xff]
    %v7760 = vlaneseq
    %v7761 = vshrl.u32 %v7760, 7
    %v7762 = vsub.s32 0, %v7761
    %v7763 = vrot.slane %v7758, %v7762
    %v7764 = vlaneseq
    %v7765 = vshrl.u32 %v7764, 7
    %v7766 = vsub.s32 1, %v7765
    %v7767 = vrot.slane %v7758, %v7766
    %v7768 = vlaneseq
    %v7769 = vshrl.u32 %v7768, 7
    %v7770 = vsub.s32 2, %v7769
    %v7771 = vrot.slane %v7758, %v7770
    %v7772 = vlaneseq
    %v7773 = vshrl.u32 %v7772, 7
    %v7774 = vsub.s32 3, %v7773
    %v7775 = vrot.slane %v7758, %v7774
    %v7776 = vlaneseq
    %v7777 = vshrl.u32 %v7776, 7
    %v7778 = vsub.s32 4, %v7777
    %v7779 = vrot.slane %v7758, %v7778
    %v7780 = vlaneseq
    %v7781 = vshrl.u32 %v7780, 7
    %v7782 = vsub.s32 5, %v7781
    %v7783 = vrot.slane %v7758, %v7782
    %v7784 = vlaneseq
    %v7785 = vshrl.u32 %v7784, 7
    %v7786 = vsub.s32 6, %v7785
    %v7787 = vrot.slane %v7758, %v7786
    %v7788 = vlaneseq
    %v7789 = vshrl.u32 %v7788, 7
    %v7790 = vsub.s32 7, %v7789
    %v7791 = vrot.slane %v7758, %v7790
    %v8696 = vunpack.c.l.b16 %v6862
    %v8697 = vunpack.c.h.b16 %v6862
    %v8698 = vunpack.c.l.b16 %v6863
    %v8699 = vunpack.c.h.b16 %v6863
    %v8700 = vunpack.c.l.b16 %v6864
    %v8701 = vunpack.c.h.b16 %v6864
    %v8702 = vunpack.c.l.b16 %v6865
    %v8703 = vunpack.c.h.b16 %v6865
    %v8704 = vunpack.c.l.b16 %v6866
    %v8705 = vunpack.c.h.b16 %v6866
    %v8706 = vunpack.c.l.b16 %v6867
    %v8707 = vunpack.c.h.b16 %v6867
    %v8708 = vunpack.c.l.b16 %v6868
    %v8709 = vunpack.c.h.b16 %v6868
    %v8710 = vunpack.c.l.b16 %v6869
    %v8711 = vunpack.c.h.b16 %v6869
    %v8712 = vunpack.c.l.b16 %v6870
    %v8713 = vunpack.c.h.b16 %v6870
    %v8714 = vunpack.c.l.b16 %v6871
    %v8715 = vunpack.c.h.b16 %v6871
    %v8716 = vunpack.c.l.b16 %v6872
    %v8717 = vunpack.c.h.b16 %v6872
    %v8718 = vunpack.c.l.b16 %v6873
    %v8719 = vunpack.c.h.b16 %v6873
    %v8720 = vunpack.c.l.b16 %v6874
    %v8721 = vunpack.c.h.b16 %v6874
    %v8722 = vunpack.c.l.b16 %v6875
    %v8723 = vunpack.c.h.b16 %v6875
    %v8724 = vunpack.c.l.b16 %v6876
    %v8725 = vunpack.c.h.b16 %v6876
    %v8726 = vunpack.c.l.b16 %v6877
    %v8727 = vunpack.c.h.b16 %v6877
    %v8728 = vunpack.c.l.b16 %v6878
    %v8729 = vunpack.c.h.b16 %v6878
    %v8730 = vunpack.c.l.b16 %v6879
    %v8731 = vunpack.c.h.b16 %v6879
    %v8732 = vunpack.c.l.b16 %v6880
    %v8733 = vunpack.c.h.b16 %v6880
    %v8734 = vunpack.c.l.b16 %v6881
    %v8735 = vunpack.c.h.b16 %v6881
    %v8736 = vunpack.c.l.b16 %v6882
    %v8737 = vunpack.c.h.b16 %v6882
    %v8738 = vunpack.c.l.b16 %v6883
    %v8739 = vunpack.c.h.b16 %v6883
    %v8740 = vunpack.c.l.b16 %v6884
    %v8741 = vunpack.c.h.b16 %v6884
    %v8742 = vunpack.c.l.b16 %v6885
    %v8743 = vunpack.c.h.b16 %v6885
    %v8744 = vunpack.c.l.b16 %v6886
    %v8745 = vunpack.c.h.b16 %v6886
    %v8746 = vunpack.c.l.b16 %v6887
    %v8747 = vunpack.c.h.b16 %v6887
    %v8748 = vunpack.c.l.b16 %v6888
    %v8749 = vunpack.c.h.b16 %v6888
    %v8750 = vunpack.c.l.b16 %v6889
    %v8751 = vunpack.c.h.b16 %v6889
    %v8752 = vunpack.c.l.b16 %v6890
    %v8753 = vunpack.c.h.b16 %v6890
    %v8754 = vunpack.c.l.b16 %v6891
    %v8755 = vunpack.c.h.b16 %v6891
    %v8756 = vunpack.c.l.b16 %v6892
    %v8757 = vunpack.c.h.b16 %v6892
    %v8758 = vunpack.c.l.b16 %v6893
    %v8759 = vunpack.c.h.b16 %v6893
    %v8760 = vunpack.c.l.b16 %v6894
    %v8761 = vunpack.c.h.b16 %v6894
    %v8762 = vunpack.c.l.b16 %v6895
    %v8763 = vunpack.c.h.b16 %v6895
    %v8764 = vunpack.c.l.b16 %v6896
    %v8765 = vunpack.c.h.b16 %v6896
    %v8766 = vunpack.c.l.b16 %v6897
    %v8767 = vunpack.c.h.b16 %v6897
    %v8768 = vunpack.c.l.b16 %v6898
    %v8769 = vunpack.c.h.b16 %v6898
    %v8770 = vunpack.c.l.b16 %v6899
    %v8771 = vunpack.c.h.b16 %v6899
    %v8772 = vunpack.c.l.b16 %v6900
    %v8773 = vunpack.c.h.b16 %v6900
    %v8774 = vunpack.c.l.b16 %v6901
    %v8775 = vunpack.c.h.b16 %v6901
    %v8776 = vunpack.c.l.b16 %v6902
    %v8777 = vunpack.c.h.b16 %v6902
    %v8778 = vunpack.c.l.b16 %v6903
    %v8779 = vunpack.c.h.b16 %v6903
    %v8780 = vunpack.c.l.b16 %v6904
    %v8781 = vunpack.c.h.b16 %v6904
    %v8782 = vunpack.c.l.b16 %v6905
    %v8783 = vunpack.c.h.b16 %v6905
    %v8784 = vunpack.c.l.b16 %v6906
    %v8785 = vunpack.c.h.b16 %v6906
    %v8786 = vunpack.c.l.b16 %v6907
    %v8787 = vunpack.c.h.b16 %v6907
    %v8788 = vunpack.c.l.b16 %v6908
    %v8789 = vunpack.c.h.b16 %v6908
    %v8790 = vunpack.c.l.b16 %v6909
    %v8791 = vunpack.c.h.b16 %v6909
    %v8792 = vunpack.c.l.b16 %v6910
    %v8793 = vunpack.c.h.b16 %v6910
    %v8794 = vunpack.c.l.b16 %v6911
    %v8795 = vunpack.c.h.b16 %v6911
    %v8796 = vunpack.c.l.b16 %v6912
    %v8797 = vunpack.c.h.b16 %v6912
    %v8798 = vunpack.c.l.b16 %v6913
    %v8799 = vunpack.c.h.b16 %v6913
    %v8800 = vunpack.c.l.b16 %v6914
    %v8801 = vunpack.c.h.b16 %v6914
    %v8802 = vunpack.c.l.b16 %v6915
    %v8803 = vunpack.c.h.b16 %v6915
    %v8804 = vunpack.c.l.b16 %v6916
    %v8805 = vunpack.c.h.b16 %v6916
    %v8806 = vunpack.c.l.b16 %v6917
    %v8807 = vunpack.c.h.b16 %v6917
    %v8808 = vunpack.c.l.b16 %v6918
    %v8809 = vunpack.c.h.b16 %v6918
    %v8810 = vunpack.c.l.b16 %v6919
    %v8811 = vunpack.c.h.b16 %v6919
    %v8812 = vunpack.c.l.b16 %v6920
    %v8813 = vunpack.c.h.b16 %v6920
    %v8814 = vunpack.c.l.b16 %v6921
    %v8815 = vunpack.c.h.b16 %v6921
    %v8816 = vunpack.c.l.b16 %v6922
    %v8817 = vunpack.c.h.b16 %v6922
    %v8818 = vunpack.c.l.b16 %v6923
    %v8819 = vunpack.c.h.b16 %v6923
    %v8820 = vunpack.c.l.b16 %v6924
    %v8821 = vunpack.c.h.b16 %v6924
    %v8822 = vunpack.c.l.b16 %v6925
    %v8823 = vunpack.c.h.b16 %v6925
    %v8824 = vunpack.c.l.b16 %v6926
    %v8825 = vunpack.c.h.b16 %v6926
    %v8826 = vunpack.c.l.b16 %v6927
    %v8827 = vunpack.c.h.b16 %v6927
    %v8828 = vunpack.c.l.b16 %v6928
    %v8829 = vunpack.c.h.b16 %v6928
    %v8830 = vunpack.c.l.b16 %v6929
    %v8831 = vunpack.c.h.b16 %v6929
    %v8832 = vunpack.c.l.b16 %v6930
    %v8833 = vunpack.c.h.b16 %v6930
    %v8834 = vunpack.c.l.b16 %v6931
    %v8835 = vunpack.c.h.b16 %v6931
    %v8836 = vunpack.c.l.b16 %v6932
    %v8837 = vunpack.c.h.b16 %v6932
    %v8838 = vunpack.c.l.b16 %v6933
    %v8839 = vunpack.c.h.b16 %v6933
    %v8840 = vunpack.c.l.b16 %v6934
    %v8841 = vunpack.c.h.b16 %v6934
    %v8842 = vunpack.c.l.b16 %v6935
    %v8843 = vunpack.c.h.b16 %v6935
    %v8844 = vunpack.c.l.b16 %v6936
    %v8845 = vunpack.c.h.b16 %v6936
    %v8846 = vunpack.c.l.b16 %v6937
    %v8847 = vunpack.c.h.b16 %v6937
    %v8848 = vunpack.c.l.b16 %v6938
    %v8849 = vunpack.c.h.b16 %v6938
    %v8850 = vunpack.c.l.b16 %v6939
    %v8851 = vunpack.c.h.b16 %v6939
    %v8852 = vunpack.c.l.b16 %v6940
    %v8853 = vunpack.c.h.b16 %v6940
    %v8854 = vunpack.c.l.b16 %v6941
    %v8855 = vunpack.c.h.b16 %v6941
    %v8856 = vunpack.c.l.b16 %v6942
    %v8857 = vunpack.c.h.b16 %v6942
    %v8858 = vunpack.c.l.b16 %v6943
    %v8859 = vunpack.c.h.b16 %v6943
    %v8860 = vunpack.c.l.b16 %v6944
    %v8861 = vunpack.c.h.b16 %v6944
    %v8862 = vunpack.c.l.b16 %v6945
    %v8863 = vunpack.c.h.b16 %v6945
    %v8864 = vunpack.c.l.b16 %v6946
    %v8865 = vunpack.c.h.b16 %v6946
    %v8866 = vunpack.c.l.b16 %v6947
    %v8867 = vunpack.c.h.b16 %v6947
    %v8868 = vunpack.c.l.b16 %v6948
    %v8869 = vunpack.c.h.b16 %v6948
    %v8870 = vunpack.c.l.b16 %v6949
    %v8871 = vunpack.c.h.b16 %v6949
    %v8872 = vunpack.c.l.b16 %v6950
    %v8873 = vunpack.c.h.b16 %v6950
    %v8874 = vunpack.c.l.b16 %v6951
    %v8875 = vunpack.c.h.b16 %v6951
    %v8876 = vunpack.c.l.b16 %v6952
    %v8877 = vunpack.c.h.b16 %v6952
    %v8878 = vunpack.c.l.b16 %v6953
    %v8879 = vunpack.c.h.b16 %v6953
    %v8880 = vunpack.c.l.b16 %v6954
    %v8881 = vunpack.c.h.b16 %v6954
    %v8882 = vunpack.c.l.b16 %v6955
    %v8883 = vunpack.c.h.b16 %v6955
    %v8884 = vunpack.c.l.b16 %v6956
    %v8885 = vunpack.c.h.b16 %v6956
    %v8886 = vunpack.c.l.b16 %v6957
    %v8887 = vunpack.c.h.b16 %v6957
    %v8888 = vunpack.c.l.b16 %v6958
    %v8889 = vunpack.c.h.b16 %v6958
    %v8890 = vunpack.c.l.b16 %v6959
    %v8891 = vunpack.c.h.b16 %v6959
    %v8892 = vunpack.c.l.b16 %v6960
    %v8893 = vunpack.c.h.b16 %v6960
    %v8894 = vunpack.c.l.b16 %v6961
    %v8895 = vunpack.c.h.b16 %v6961
    %v8896 = vunpack.c.l.b16 %v6962
    %v8897 = vunpack.c.h.b16 %v6962
    %v8898 = vunpack.c.l.b16 %v6963
    %v8899 = vunpack.c.h.b16 %v6963
    %v8900 = vunpack.c.l.b16 %v6964
    %v8901 = vunpack.c.h.b16 %v6964
    %v8902 = vunpack.c.l.b16 %v6965
    %v8903 = vunpack.c.h.b16 %v6965
    %v8904 = vunpack.c.l.b16 %v6966
    %v8905 = vunpack.c.h.b16 %v6966
    %v8906 = vunpack.c.l.b16 %v6967
    %v8907 = vunpack.c.h.b16 %v6967
    %v8908 = vunpack.c.l.b16 %v6968
    %v8909 = vunpack.c.h.b16 %v6968
    %v8910 = vunpack.c.l.b16 %v6969
    %v8911 = vunpack.c.h.b16 %v6969
    %v8912 = vunpack.c.l.b16 %v6970
    %v8913 = vunpack.c.h.b16 %v6970
    %v8914 = vunpack.c.l.b16 %v6971
    %v8915 = vunpack.c.h.b16 %v6971
    %v8916 = vunpack.c.l.b16 %v6972
    %v8917 = vunpack.c.h.b16 %v6972
    %v8918 = vunpack.c.l.b16 %v6973
    %v8919 = vunpack.c.h.b16 %v6973
    %v8920 = vunpack.c.l.b16 %v6974
    %v8921 = vunpack.c.h.b16 %v6974
    %v8922 = vunpack.c.l.b16 %v6975
    %v8923 = vunpack.c.h.b16 %v6975
    %v8924 = vunpack.c.l.b16 %v6976
    %v8925 = vunpack.c.h.b16 %v6976
    %v8926 = vunpack.c.l.b16 %v6977
    %v8927 = vunpack.c.h.b16 %v6977
    %v8928 = vunpack.c.l.b16 %v6978
    %v8929 = vunpack.c.h.b16 %v6978
    %v8930 = vunpack.c.l.b16 %v6979
    %v8931 = vunpack.c.h.b16 %v6979
    %v8932 = vunpack.c.l.b16 %v6980
    %v8933 = vunpack.c.h.b16 %v6980
    %v8934 = vunpack.c.l.b16 %v6981
    %v8935 = vunpack.c.h.b16 %v6981
    %v8936 = vunpack.c.l.b16 %v6982
    %v8937 = vunpack.c.h.b16 %v6982
    %v8938 = vunpack.c.l.b16 %v6983
    %v8939 = vunpack.c.h.b16 %v6983
    %v8940 = vunpack.c.l.b16 %v6984
    %v8941 = vunpack.c.h.b16 %v6984
    %v8942 = vunpack.c.l.b16 %v6985
    %v8943 = vunpack.c.h.b16 %v6985
    %v8944 = vunpack.c.l.b16 %v6986
    %v8945 = vunpack.c.h.b16 %v6986
    %v8946 = vunpack.c.l.b16 %v6987
    %v8947 = vunpack.c.h.b16 %v6987
    %v8948 = vunpack.c.l.b16 %v6988
    %v8949 = vunpack.c.h.b16 %v6988
    %v8950 = vunpack.c.l.b16 %v6989
    %v8951 = vunpack.c.h.b16 %v6989
    %v8952 = vunpack.c.l.b16 %v6990
    %v8953 = vunpack.c.h.b16 %v6990
    %v8954 = vunpack.c.l.b16 %v6991
    %v8955 = vunpack.c.h.b16 %v6991
    %v8956 = vunpack.c.l.b16 %v6992
    %v8957 = vunpack.c.h.b16 %v6992
    %v8958 = vunpack.c.l.b16 %v6993
    %v8959 = vunpack.c.h.b16 %v6993
    %v8960 = vunpack.c.l.b16 %v6994
    %v8961 = vunpack.c.h.b16 %v6994
    %v8962 = vunpack.c.l.b16 %v6995
    %v8963 = vunpack.c.h.b16 %v6995
    %v8964 = vunpack.c.l.b16 %v6996
    %v8965 = vunpack.c.h.b16 %v6996
    %v8966 = vunpack.c.l.b16 %v6997
    %v8967 = vunpack.c.h.b16 %v6997
    %v8968 = vunpack.c.l.b16 %v6998
    %v8969 = vunpack.c.h.b16 %v6998
    %v8970 = vunpack.c.l.b16 %v6999
    %v8971 = vunpack.c.h.b16 %v6999
    %v8972 = vunpack.c.l.b16 %v7000
    %v8973 = vunpack.c.h.b16 %v7000
    %v8974 = vunpack.c.l.b16 %v7001
    %v8975 = vunpack.c.h.b16 %v7001
    %v8976 = vunpack.c.l.b16 %v7002
    %v8977 = vunpack.c.h.b16 %v7002
    %v8978 = vunpack.c.l.b16 %v7003
    %v8979 = vunpack.c.h.b16 %v7003
    %v8980 = vunpack.c.l.b16 %v7004
    %v8981 = vunpack.c.h.b16 %v7004
    %v8982 = vunpack.c.l.b16 %v7005
    %v8983 = vunpack.c.h.b16 %v7005
    %v8984 = vunpack.c.l.b16 %v7006
    %v8985 = vunpack.c.h.b16 %v7006
    %v8986 = vunpack.c.l.b16 %v7007
    %v8987 = vunpack.c.h.b16 %v7007
    %v8988 = vunpack.c.l.b16 %v7008
    %v8989 = vunpack.c.h.b16 %v7008
    %v8990 = vunpack.c.l.b16 %v7009
    %v8991 = vunpack.c.h.b16 %v7009
    %v8992 = vunpack.c.l.b16 %v7010
    %v8993 = vunpack.c.h.b16 %v7010
    %v8994 = vunpack.c.l.b16 %v7011
    %v8995 = vunpack.c.h.b16 %v7011
    %v8996 = vunpack.c.l.b16 %v7012
    %v8997 = vunpack.c.h.b16 %v7012
    %v8998 = vunpack.c.l.b16 %v7013
    %v8999 = vunpack.c.h.b16 %v7013
    %v9000 = vunpack.c.l.b16 %v7014
    %v9001 = vunpack.c.h.b16 %v7014
    %v9002 = vunpack.c.l.b16 %v7015
    %v9003 = vunpack.c.h.b16 %v7015
    %v9004 = vunpack.c.l.b16 %v7016
    %v9005 = vunpack.c.h.b16 %v7016
    %v9006 = vunpack.c.l.b16 %v7017
    %v9007 = vunpack.c.h.b16 %v7017
    %v9008 = vunpack.c.l.b16 %v7018
    %v9009 = vunpack.c.h.b16 %v7018
    %v9010 = vunpack.c.l.b16 %v7019
    %v9011 = vunpack.c.h.b16 %v7019
    %v9012 = vunpack.c.l.b16 %v7020
    %v9013 = vunpack.c.h.b16 %v7020
    %v9014 = vunpack.c.l.b16 %v7021
    %v9015 = vunpack.c.h.b16 %v7021
    %v9016 = vunpack.c.l.b16 %v7022
    %v9017 = vunpack.c.h.b16 %v7022
    %v9018 = vunpack.c.l.b16 %v7023
    %v9019 = vunpack.c.h.b16 %v7023
    %v9020 = vunpack.c.l.b16 %v7024
    %v9021 = vunpack.c.h.b16 %v7024
    %v9022 = vunpack.c.l.b16 %v7025
    %v9023 = vunpack.c.h.b16 %v7025
    %v9024 = vunpack.c.l.b16 %v7026
    %v9025 = vunpack.c.h.b16 %v7026
    %v9026 = vunpack.c.l.b16 %v7027
    %v9027 = vunpack.c.h.b16 %v7027
    %v9028 = vunpack.c.l.b16 %v7028
    %v9029 = vunpack.c.h.b16 %v7028
    %v9030 = vunpack.c.l.b16 %v7029
    %v9031 = vunpack.c.h.b16 %v7029
    %v9032 = vunpack.c.l.b16 %v7030
    %v9033 = vunpack.c.h.b16 %v7030
    %v9034 = vunpack.c.l.b16 %v7031
    %v9035 = vunpack.c.h.b16 %v7031
    %v9036 = vunpack.c.l.b16 %v7032
    %v9037 = vunpack.c.h.b16 %v7032
    %v9038 = vunpack.c.l.b16 %v7033
    %v9039 = vunpack.c.h.b16 %v7033
    %v9040 = vunpack.c.l.b16 %v7034
    %v9041 = vunpack.c.h.b16 %v7034
    %v9042 = vunpack.c.l.b16 %v7035
    %v9043 = vunpack.c.h.b16 %v7035
    %v9044 = vunpack.c.l.b16 %v7036
    %v9045 = vunpack.c.h.b16 %v7036
    %v9046 = vunpack.c.l.b16 %v7037
    %v9047 = vunpack.c.h.b16 %v7037
    %v9048 = vunpack.c.l.b16 %v7038
    %v9049 = vunpack.c.h.b16 %v7038
    %v9050 = vunpack.c.l.b16 %v7039
    %v9051 = vunpack.c.h.b16 %v7039
    %v9052 = vunpack.c.l.b16 %v7040
    %v9053 = vunpack.c.h.b16 %v7040
    %v9054 = vunpack.c.l.b16 %v7041
    %v9055 = vunpack.c.h.b16 %v7041
    %v9056 = vunpack.c.l.b16 %v7042
    %v9057 = vunpack.c.h.b16 %v7042
    %v9058 = vunpack.c.l.b16 %v7043
    %v9059 = vunpack.c.h.b16 %v7043
    %v9060 = vunpack.c.l.b16 %v7044
    %v9061 = vunpack.c.h.b16 %v7044
    %v9062 = vunpack.c.l.b16 %v7045
    %v9063 = vunpack.c.h.b16 %v7045
    %v9064 = vunpack.c.l.b16 %v7046
    %v9065 = vunpack.c.h.b16 %v7046
    %v9066 = vunpack.c.l.b16 %v7047
    %v9067 = vunpack.c.h.b16 %v7047
    %v9068 = vunpack.c.l.b16 %v7048
    %v9069 = vunpack.c.h.b16 %v7048
    %v9070 = vunpack.c.l.b16 %v7049
    %v9071 = vunpack.c.h.b16 %v7049
    %v9072 = vunpack.c.l.b16 %v7050
    %v9073 = vunpack.c.h.b16 %v7050
    %v9074 = vunpack.c.l.b16 %v7051
    %v9075 = vunpack.c.h.b16 %v7051
    %v9076 = vunpack.c.l.b16 %v7052
    %v9077 = vunpack.c.h.b16 %v7052
    %v9078 = vunpack.c.l.b16 %v7053
    %v9079 = vunpack.c.h.b16 %v7053
    %v9080 = vunpack.c.l.b16 %v7054
    %v9081 = vunpack.c.h.b16 %v7054
    %v9082 = vunpack.c.l.b16 %v7055
    %v9083 = vunpack.c.h.b16 %v7055
    %v9084 = vunpack.c.l.b16 %v7056
    %v9085 = vunpack.c.h.b16 %v7056
    %v9086 = vunpack.c.l.b16 %v7057
    %v9087 = vunpack.c.h.b16 %v7057
    %v9088 = vunpack.c.l.b16 %v7058
    %v9089 = vunpack.c.h.b16 %v7058
    %v9090 = vunpack.c.l.b16 %v7059
    %v9091 = vunpack.c.h.b16 %v7059
    %v9092 = vunpack.c.l.b16 %v7060
    %v9093 = vunpack.c.h.b16 %v7060
    %v9094 = vunpack.c.l.b16 %v7061
    %v9095 = vunpack.c.h.b16 %v7061
    %v9096 = vunpack.c.l.b16 %v7062
    %v9097 = vunpack.c.h.b16 %v7062
    %v9098 = vunpack.c.l.b16 %v7063
    %v9099 = vunpack.c.h.b16 %v7063
    %v9100 = vunpack.c.l.b16 %v7064
    %v9101 = vunpack.c.h.b16 %v7064
    %v9102 = vunpack.c.l.b16 %v7065
    %v9103 = vunpack.c.h.b16 %v7065
    %v9104 = vunpack.c.l.b16 %v7066
    %v9105 = vunpack.c.h.b16 %v7066
    %v9106 = vunpack.c.l.b16 %v7067
    %v9107 = vunpack.c.h.b16 %v7067
    %v9108 = vunpack.c.l.b16 %v7068
    %v9109 = vunpack.c.h.b16 %v7068
    %v9110 = vunpack.c.l.b16 %v7069
    %v9111 = vunpack.c.h.b16 %v7069
    %v9112 = vunpack.c.l.b16 %v7070
    %v9113 = vunpack.c.h.b16 %v7070
    %v9114 = vunpack.c.l.b16 %v7071
    %v9115 = vunpack.c.h.b16 %v7071
    %v9116 = vunpack.c.l.b16 %v7072
    %v9117 = vunpack.c.h.b16 %v7072
    %v9118 = vunpack.c.l.b16 %v7073
    %v9119 = vunpack.c.h.b16 %v7073
    %v9120 = vunpack.c.l.b16 %v7074
    %v9121 = vunpack.c.h.b16 %v7074
    %v9122 = vunpack.c.l.b16 %v7075
    %v9123 = vunpack.c.h.b16 %v7075
    %v9124 = vunpack.c.l.b16 %v7076
    %v9125 = vunpack.c.h.b16 %v7076
    %v9126 = vunpack.c.l.b16 %v7077
    %v9127 = vunpack.c.h.b16 %v7077
    %v9128 = vunpack.c.l.b16 %v7078
    %v9129 = vunpack.c.h.b16 %v7078
    %v9130 = vunpack.c.l.b16 %v7079
    %v9131 = vunpack.c.h.b16 %v7079
    %v9132 = vunpack.c.l.b16 %v7080
    %v9133 = vunpack.c.h.b16 %v7080
    %v9134 = vunpack.c.l.b16 %v7081
    %v9135 = vunpack.c.h.b16 %v7081
    %v9136 = vunpack.c.l.b16 %v7082
    %v9137 = vunpack.c.h.b16 %v7082
    %v9138 = vunpack.c.l.b16 %v7083
    %v9139 = vunpack.c.h.b16 %v7083
    %v9140 = vunpack.c.l.b16 %v7084
    %v9141 = vunpack.c.h.b16 %v7084
    %v9142 = vunpack.c.l.b16 %v7085
    %v9143 = vunpack.c.h.b16 %v7085
    %v9144 = vunpack.c.l.b16 %v7086
    %v9145 = vunpack.c.h.b16 %v7086
    %v9146 = vunpack.c.l.b16 %v7087
    %v9147 = vunpack.c.h.b16 %v7087
    %v9148 = vunpack.c.l.b16 %v7088
    %v9149 = vunpack.c.h.b16 %v7088
    %v9150 = vunpack.c.l.b16 %v7089
    %v9151 = vunpack.c.h.b16 %v7089
    %v9152 = vunpack.c.l.b16 %v7090
    %v9153 = vunpack.c.h.b16 %v7090
    %v9154 = vunpack.c.l.b16 %v7091
    %v9155 = vunpack.c.h.b16 %v7091
    %v9156 = vunpack.c.l.b16 %v7092
    %v9157 = vunpack.c.h.b16 %v7092
    %v9158 = vunpack.c.l.b16 %v7093
    %v9159 = vunpack.c.h.b16 %v7093
    %v9160 = vunpack.c.l.b16 %v7094
    %v9161 = vunpack.c.h.b16 %v7094
    %v9162 = vunpack.c.l.b16 %v7095
    %v9163 = vunpack.c.h.b16 %v7095
    %v9164 = vunpack.c.l.b16 %v7096
    %v9165 = vunpack.c.h.b16 %v7096
    %v9166 = vunpack.c.l.b16 %v7097
    %v9167 = vunpack.c.h.b16 %v7097
    %v9168 = vunpack.c.l.b16 %v7098
    %v9169 = vunpack.c.h.b16 %v7098
    %v9170 = vunpack.c.l.b16 %v7099
    %v9171 = vunpack.c.h.b16 %v7099
    %v9172 = vunpack.c.l.b16 %v7100
    %v9173 = vunpack.c.h.b16 %v7100
    %v9174 = vunpack.c.l.b16 %v7101
    %v9175 = vunpack.c.h.b16 %v7101
    %v9176 = vunpack.c.l.b16 %v7102
    %v9177 = vunpack.c.h.b16 %v7102
    %v9178 = vunpack.c.l.b16 %v7103
    %v9179 = vunpack.c.h.b16 %v7103
    %v9180 = vunpack.c.l.b16 %v7104
    %v9181 = vunpack.c.h.b16 %v7104
    %v9182 = vunpack.c.l.b16 %v7105
    %v9183 = vunpack.c.h.b16 %v7105
    %v9184 = vunpack.c.l.b16 %v7106
    %v9185 = vunpack.c.h.b16 %v7106
    %v9186 = vunpack.c.l.b16 %v7107
    %v9187 = vunpack.c.h.b16 %v7107
    %v9188 = vunpack.c.l.b16 %v7108
    %v9189 = vunpack.c.h.b16 %v7108
    %v9190 = vunpack.c.l.b16 %v7109
    %v9191 = vunpack.c.h.b16 %v7109
    %v9192 = vunpack.c.l.b16 %v7110
    %v9193 = vunpack.c.h.b16 %v7110
    %v9194 = vunpack.c.l.b16 %v7111
    %v9195 = vunpack.c.h.b16 %v7111
    %v9196 = vunpack.c.l.b16 %v7112
    %v9197 = vunpack.c.h.b16 %v7112
    %v9198 = vunpack.c.l.b16 %v7113
    %v9199 = vunpack.c.h.b16 %v7113
    %v9200 = vunpack.c.l.b16 %v7114
    %v9201 = vunpack.c.h.b16 %v7114
    %v9202 = vunpack.c.l.b16 %v7115
    %v9203 = vunpack.c.h.b16 %v7115
    %v9204 = vunpack.c.l.b16 %v7116
    %v9205 = vunpack.c.h.b16 %v7116
    %v9206 = vunpack.c.l.b16 %v7117
    %v9207 = vunpack.c.h.b16 %v7117
    %v9208 = vunpack.c.l.b16 %v7118
    %v9209 = vunpack.c.h.b16 %v7118
    %v9210 = vunpack.c.l.b16 %v7119
    %v9211 = vunpack.c.h.b16 %v7119
    %v9212 = vunpack.c.l.b16 %v7120
    %v9213 = vunpack.c.h.b16 %v7120
    %v9214 = vunpack.c.l.b16 %v7121
    %v9215 = vunpack.c.h.b16 %v7121
    %v9216 = vunpack.c.l.b16 %v7122
    %v9217 = vunpack.c.h.b16 %v7122
    %v9218 = vunpack.c.l.b16 %v7123
    %v9219 = vunpack.c.h.b16 %v7123
    %v9220 = vunpack.c.l.b16 %v7124
    %v9221 = vunpack.c.h.b16 %v7124
    %v9222 = vunpack.c.l.b16 %v7125
    %v9223 = vunpack.c.h.b16 %v7125
    %v9224 = vunpack.c.l.b16 %v7126
    %v9225 = vunpack.c.h.b16 %v7126
    %v9226 = vunpack.c.l.b16 %v7127
    %v9227 = vunpack.c.h.b16 %v7127
    %v9228 = vunpack.c.l.b16 %v7128
    %v9229 = vunpack.c.h.b16 %v7128
    %v9230 = vunpack.c.l.b16 %v7129
    %v9231 = vunpack.c.h.b16 %v7129
    %v9232 = vunpack.c.l.b16 %v7130
    %v9233 = vunpack.c.h.b16 %v7130
    %v9234 = vunpack.c.l.b16 %v7131
    %v9235 = vunpack.c.h.b16 %v7131
    %v9236 = vunpack.c.l.b16 %v7132
    %v9237 = vunpack.c.h.b16 %v7132
    %v9238 = vunpack.c.l.b16 %v7133
    %v9239 = vunpack.c.h.b16 %v7133
    %v9240 = vunpack.c.l.b16 %v7134
    %v9241 = vunpack.c.h.b16 %v7134
    %v9242 = vunpack.c.l.b16 %v7135
    %v9243 = vunpack.c.h.b16 %v7135
    %v9244 = vunpack.c.l.b16 %v7136
    %v9245 = vunpack.c.h.b16 %v7136
    %v9246 = vunpack.c.l.b16 %v7137
    %v9247 = vunpack.c.h.b16 %v7137
    %v9248 = vunpack.c.l.b16 %v7138
    %v9249 = vunpack.c.h.b16 %v7138
    %v9250 = vunpack.c.l.b16 %v7139
    %v9251 = vunpack.c.h.b16 %v7139
    %v9252 = vunpack.c.l.b16 %v7140
    %v9253 = vunpack.c.h.b16 %v7140
    %v9254 = vunpack.c.l.b16 %v7141
    %v9255 = vunpack.c.h.b16 %v7141
    %v9256 = vunpack.c.l.b16 %v7142
    %v9257 = vunpack.c.h.b16 %v7142
    %v9258 = vunpack.c.l.b16 %v7143
    %v9259 = vunpack.c.h.b16 %v7143
    %v9260 = vunpack.c.l.b16 %v7144
    %v9261 = vunpack.c.h.b16 %v7144
    %v9262 = vunpack.c.l.b16 %v7145
    %v9263 = vunpack.c.h.b16 %v7145
    %v9264 = vunpack.c.l.b16 %v7146
    %v9265 = vunpack.c.h.b16 %v7146
    %v9266 = vunpack.c.l.b16 %v7147
    %v9267 = vunpack.c.h.b16 %v7147
    %v9268 = vunpack.c.l.b16 %v7148
    %v9269 = vunpack.c.h.b16 %v7148
    %v9270 = vunpack.c.l.b16 %v7149
    %v9271 = vunpack.c.h.b16 %v7149
    %v9272 = vunpack.c.l.b16 %v7150
    %v9273 = vunpack.c.h.b16 %v7150
    %v9274 = vunpack.c.l.b16 %v7151
    %v9275 = vunpack.c.h.b16 %v7151
    %v9276 = vunpack.c.l.b16 %v7152
    %v9277 = vunpack.c.h.b16 %v7152
    %v9278 = vunpack.c.l.b16 %v7153
    %v9279 = vunpack.c.h.b16 %v7153
    %v9280 = vunpack.c.l.b16 %v7154
    %v9281 = vunpack.c.h.b16 %v7154
    %v9282 = vunpack.c.l.b16 %v7155
    %v9283 = vunpack.c.h.b16 %v7155
    %v9284 = vunpack.c.l.b16 %v7156
    %v9285 = vunpack.c.h.b16 %v7156
    %v9286 = vunpack.c.l.b16 %v7157
    %v9287 = vunpack.c.h.b16 %v7157
    %v9288 = vunpack.c.l.b16 %v7158
    %v9289 = vunpack.c.h.b16 %v7158
    %v9290 = vunpack.c.l.b16 %v7159
    %v9291 = vunpack.c.h.b16 %v7159
    %v9292 = vunpack.c.l.b16 %v7160
    %v9293 = vunpack.c.h.b16 %v7160
    %v9294 = vunpack.c.l.b16 %v7161
    %v9295 = vunpack.c.h.b16 %v7161
    %v9296 = vunpack.c.l.b16 %v7162
    %v9297 = vunpack.c.h.b16 %v7162
    %v9298 = vunpack.c.l.b16 %v7163
    %v9299 = vunpack.c.h.b16 %v7163
    %v9300 = vunpack.c.l.b16 %v7164
    %v9301 = vunpack.c.h.b16 %v7164
    %v9302 = vunpack.c.l.b16 %v7165
    %v9303 = vunpack.c.h.b16 %v7165
    %v9304 = vunpack.c.l.b16 %v7166
    %v9305 = vunpack.c.h.b16 %v7166
    %v9306 = vunpack.c.l.b16 %v7167
    %v9307 = vunpack.c.h.b16 %v7167
    %v9308 = vunpack.c.l.b16 %v7168
    %v9309 = vunpack.c.h.b16 %v7168
    %v9310 = vunpack.c.l.b16 %v7169
    %v9311 = vunpack.c.h.b16 %v7169
    %v9312 = vunpack.c.l.b16 %v7170
    %v9313 = vunpack.c.h.b16 %v7170
    %v9314 = vunpack.c.l.b16 %v7171
    %v9315 = vunpack.c.h.b16 %v7171
    %v9316 = vunpack.c.l.b16 %v7172
    %v9317 = vunpack.c.h.b16 %v7172
    %v9318 = vunpack.c.l.b16 %v7173
    %v9319 = vunpack.c.h.b16 %v7173
    %v9320 = vunpack.c.l.b16 %v7174
    %v9321 = vunpack.c.h.b16 %v7174
    %v9322 = vunpack.c.l.b16 %v7175
    %v9323 = vunpack.c.h.b16 %v7175
    %v9324 = vunpack.c.l.b16 %v7176
    %v9325 = vunpack.c.h.b16 %v7176
    %v9326 = vunpack.c.l.b16 %v7177
    %v9327 = vunpack.c.h.b16 %v7177
    %v9328 = vunpack.c.l.b16 %v7178
    %v9329 = vunpack.c.h.b16 %v7178
    %v9330 = vunpack.c.l.b16 %v7179
    %v9331 = vunpack.c.h.b16 %v7179
    %v9332 = vunpack.c.l.b16 %v7180
    %v9333 = vunpack.c.h.b16 %v7180
    %v9334 = vunpack.c.l.b16 %v7181
    %v9335 = vunpack.c.h.b16 %v7181
    %v9336 = vunpack.c.l.b16 %v7182
    %v9337 = vunpack.c.h.b16 %v7182
    %v9338 = vunpack.c.l.b16 %v7183
    %v9339 = vunpack.c.h.b16 %v7183
    %v9340 = vunpack.c.l.b16 %v7184
    %v9341 = vunpack.c.h.b16 %v7184
    %v9342 = vunpack.c.l.b16 %v7185
    %v9343 = vunpack.c.h.b16 %v7185
    %v9344 = vunpack.c.l.b16 %v7186
    %v9345 = vunpack.c.h.b16 %v7186
    %v9346 = vunpack.c.l.b16 %v7187
    %v9347 = vunpack.c.h.b16 %v7187
    %v9348 = vunpack.c.l.b16 %v7188
    %v9349 = vunpack.c.h.b16 %v7188
    %v9350 = vunpack.c.l.b16 %v7189
    %v9351 = vunpack.c.h.b16 %v7189
    %v9352 = vunpack.c.l.b16 %v7190
    %v9353 = vunpack.c.h.b16 %v7190
    %v9354 = vunpack.c.l.b16 %v7191
    %v9355 = vunpack.c.h.b16 %v7191
    %v9356 = vunpack.c.l.b16 %v7192
    %v9357 = vunpack.c.h.b16 %v7192
    %v9358 = vunpack.c.l.b16 %v7193
    %v9359 = vunpack.c.h.b16 %v7193
    %v9360 = vunpack.c.l.b16 %v7194
    %v9361 = vunpack.c.h.b16 %v7194
    %v9362 = vunpack.c.l.b16 %v7195
    %v9363 = vunpack.c.h.b16 %v7195
    %v9364 = vunpack.c.l.b16 %v7196
    %v9365 = vunpack.c.h.b16 %v7196
    %v9366 = vunpack.c.l.b16 %v7197
    %v9367 = vunpack.c.h.b16 %v7197
    %v9368 = vunpack.c.l.b16 %v7198
    %v9369 = vunpack.c.h.b16 %v7198
    %v9370 = vunpack.c.l.b16 %v7199
    %v9371 = vunpack.c.h.b16 %v7199
    %v9372 = vunpack.c.l.b16 %v7200
    %v9373 = vunpack.c.h.b16 %v7200
    %v9374 = vunpack.c.l.b16 %v7201
    %v9375 = vunpack.c.h.b16 %v7201
    %v9376 = vunpack.c.l.b16 %v7202
    %v9377 = vunpack.c.h.b16 %v7202
    %v9378 = vunpack.c.l.b16 %v7203
    %v9379 = vunpack.c.h.b16 %v7203
    %v9380 = vunpack.c.l.b16 %v7204
    %v9381 = vunpack.c.h.b16 %v7204
    %v9382 = vunpack.c.l.b16 %v7205
    %v9383 = vunpack.c.h.b16 %v7205
    %v9384 = vunpack.c.l.b16 %v7206
    %v9385 = vunpack.c.h.b16 %v7206
    %v9386 = vunpack.c.l.b16 %v7207
    %v9387 = vunpack.c.h.b16 %v7207
    %v9388 = vunpack.c.l.b16 %v7208
    %v9389 = vunpack.c.h.b16 %v7208
    %v9390 = vunpack.c.l.b16 %v7209
    %v9391 = vunpack.c.h.b16 %v7209
    %v9392 = vunpack.c.l.b16 %v7210
    %v9393 = vunpack.c.h.b16 %v7210
    %v9394 = vunpack.c.l.b16 %v7211
    %v9395 = vunpack.c.h.b16 %v7211
    %v9396 = vunpack.c.l.b16 %v7212
    %v9397 = vunpack.c.h.b16 %v7212
    %v9398 = vunpack.c.l.b16 %v7213
    %v9399 = vunpack.c.h.b16 %v7213
    %v9400 = vunpack.c.l.b16 %v7214
    %v9401 = vunpack.c.h.b16 %v7214
    %v9402 = vunpack.c.l.b16 %v7215
    %v9403 = vunpack.c.h.b16 %v7215
    %v9404 = vunpack.c.l.b16 %v7216
    %v9405 = vunpack.c.h.b16 %v7216
    %v9406 = vunpack.c.l.b16 %v7217
    %v9407 = vunpack.c.h.b16 %v7217
    %v9408 = vunpack.c.l.b16 %v7218
    %v9409 = vunpack.c.h.b16 %v7218
    %v9410 = vunpack.c.l.b16 %v7219
    %v9411 = vunpack.c.h.b16 %v7219
    %v9412 = vunpack.c.l.b16 %v7220
    %v9413 = vunpack.c.h.b16 %v7220
    %v9414 = vunpack.c.l.b16 %v7221
    %v9415 = vunpack.c.h.b16 %v7221
    %v9416 = vunpack.c.l.b16 %v7222
    %v9417 = vunpack.c.h.b16 %v7222
    %v9418 = vunpack.c.l.b16 %v7223
    %v9419 = vunpack.c.h.b16 %v7223
    %v9420 = vunpack.c.l.b16 %v7224
    %v9421 = vunpack.c.h.b16 %v7224
    %v9422 = vunpack.c.l.b16 %v7225
    %v9423 = vunpack.c.h.b16 %v7225
    %v9424 = vunpack.c.l.b16 %v7226
    %v9425 = vunpack.c.h.b16 %v7226
    %v9426 = vunpack.c.l.b16 %v7227
    %v9427 = vunpack.c.h.b16 %v7227
    %v9428 = vunpack.c.l.b16 %v7228
    %v9429 = vunpack.c.h.b16 %v7228
    %v9430 = vunpack.c.l.b16 %v7229
    %v9431 = vunpack.c.h.b16 %v7229
    %v9432 = vunpack.c.l.b16 %v7230
    %v9433 = vunpack.c.h.b16 %v7230
    %v9434 = vunpack.c.l.b16 %v7231
    %v9435 = vunpack.c.h.b16 %v7231
    %v9436 = vunpack.c.l.b16 %v7232
    %v9437 = vunpack.c.h.b16 %v7232
    %v9438 = vunpack.c.l.b16 %v7233
    %v9439 = vunpack.c.h.b16 %v7233
    %v9440 = vunpack.c.l.b16 %v7234
    %v9441 = vunpack.c.h.b16 %v7234
    %v9442 = vunpack.c.l.b16 %v7235
    %v9443 = vunpack.c.h.b16 %v7235
    %v9444 = vunpack.c.l.b16 %v7236
    %v9445 = vunpack.c.h.b16 %v7236
    %v9446 = vunpack.c.l.b16 %v7237
    %v9447 = vunpack.c.h.b16 %v7237
    %v9448 = vunpack.c.l.b16 %v7238
    %v9449 = vunpack.c.h.b16 %v7238
    %v9450 = vunpack.c.l.b16 %v7239
    %v9451 = vunpack.c.h.b16 %v7239
    %v9452 = vunpack.c.l.b16 %v7240
    %v9453 = vunpack.c.h.b16 %v7240
    %v9454 = vunpack.c.l.b16 %v7241
    %v9455 = vunpack.c.h.b16 %v7241
    %v9456 = vunpack.c.l.b16 %v7242
    %v9457 = vunpack.c.h.b16 %v7242
    %v9458 = vunpack.c.l.b16 %v7243
    %v9459 = vunpack.c.h.b16 %v7243
    %v9460 = vunpack.c.l.b16 %v7244
    %v9461 = vunpack.c.h.b16 %v7244
    %v9462 = vunpack.c.l.b16 %v7245
    %v9463 = vunpack.c.h.b16 %v7245
    %v9464 = vunpack.c.l.b16 %v7246
    %v9465 = vunpack.c.h.b16 %v7246
    %v9466 = vunpack.c.l.b16 %v7247
    %v9467 = vunpack.c.h.b16 %v7247
    %v9468 = vunpack.c.l.b16 %v7248
    %v9469 = vunpack.c.h.b16 %v7248
    %v9470 = vunpack.c.l.b16 %v7249
    %v9471 = vunpack.c.h.b16 %v7249
    %v9472 = vunpack.c.l.b16 %v7250
    %v9473 = vunpack.c.h.b16 %v7250
    %v9474 = vunpack.c.l.b16 %v7251
    %v9475 = vunpack.c.h.b16 %v7251
    %v9476 = vunpack.c.l.b16 %v7252
    %v9477 = vunpack.c.h.b16 %v7252
    %v9478 = vunpack.c.l.b16 %v7253
    %v9479 = vunpack.c.h.b16 %v7253
    %v9480 = vunpack.c.l.b16 %v7254
    %v9481 = vunpack.c.h.b16 %v7254
    %v9482 = vunpack.c.l.b16 %v7255
    %v9483 = vunpack.c.h.b16 %v7255
    %v9484 = vunpack.c.l.b16 %v7256
    %v9485 = vunpack.c.h.b16 %v7256
    %v9486 = vunpack.c.l.b16 %v7257
    %v9487 = vunpack.c.h.b16 %v7257
    %v9488 = vunpack.c.l.b16 %v7258
    %v9489 = vunpack.c.h.b16 %v7258
    %v9490 = vunpack.c.l.b16 %v7259
    %v9491 = vunpack.c.h.b16 %v7259
    %v9492 = vunpack.c.l.b16 %v7260
    %v9493 = vunpack.c.h.b16 %v7260
    %v9494 = vunpack.c.l.b16 %v7261
    %v9495 = vunpack.c.h.b16 %v7261
    %v9496 = vunpack.c.l.b16 %v7262
    %v9497 = vunpack.c.h.b16 %v7262
    %v9498 = vunpack.c.l.b16 %v7263
    %v9499 = vunpack.c.h.b16 %v7263
    %v9500 = vunpack.c.l.b16 %v7264
    %v9501 = vunpack.c.h.b16 %v7264
    %v9502 = vunpack.c.l.b16 %v7265
    %v9503 = vunpack.c.h.b16 %v7265
    %v9504 = vunpack.c.l.b16 %v7266
    %v9505 = vunpack.c.h.b16 %v7266
    %v9506 = vunpack.c.l.b16 %v7267
    %v9507 = vunpack.c.h.b16 %v7267
    %v9508 = vunpack.c.l.b16 %v7268
    %v9509 = vunpack.c.h.b16 %v7268
    %v9510 = vunpack.c.l.b16 %v7269
    %v9511 = vunpack.c.h.b16 %v7269
    %v9512 = vunpack.c.l.b16 %v7270
    %v9513 = vunpack.c.h.b16 %v7270
    %v9514 = vunpack.c.l.b16 %v7271
    %v9515 = vunpack.c.h.b16 %v7271
    %v9516 = vunpack.c.l.b16 %v7272
    %v9517 = vunpack.c.h.b16 %v7272
    %v9518 = vunpack.c.l.b16 %v7273
    %v9519 = vunpack.c.h.b16 %v7273
    %v9520 = vunpack.c.l.b16 %v7274
    %v9521 = vunpack.c.h.b16 %v7274
    %v9522 = vunpack.c.l.b16 %v7275
    %v9523 = vunpack.c.h.b16 %v7275
    %v9524 = vunpack.c.l.b16 %v7276
    %v9525 = vunpack.c.h.b16 %v7276
    %v9526 = vunpack.c.l.b16 %v7277
    %v9527 = vunpack.c.h.b16 %v7277
    %v9528 = vunpack.c.l.b16 %v7278
    %v9529 = vunpack.c.h.b16 %v7278
    %v9530 = vunpack.c.l.b16 %v7279
    %v9531 = vunpack.c.h.b16 %v7279
    %v9532 = vunpack.c.l.b16 %v7280
    %v9533 = vunpack.c.h.b16 %v7280
    %v9534 = vunpack.c.l.b16 %v7281
    %v9535 = vunpack.c.h.b16 %v7281
    %v9536 = vunpack.c.l.b16 %v7282
    %v9537 = vunpack.c.h.b16 %v7282
    %v9538 = vunpack.c.l.b16 %v7283
    %v9539 = vunpack.c.h.b16 %v7283
    %v9540 = vunpack.c.l.b16 %v7284
    %v9541 = vunpack.c.h.b16 %v7284
    %v9542 = vunpack.c.l.b16 %v7285
    %v9543 = vunpack.c.h.b16 %v7285
    %v9544 = vunpack.c.l.b16 %v7286
    %v9545 = vunpack.c.h.b16 %v7286
    %v9546 = vunpack.c.l.b16 %v7287
    %v9547 = vunpack.c.h.b16 %v7287
    %v9548 = vunpack.c.l.b16 %v7288
    %v9549 = vunpack.c.h.b16 %v7288
    %v9550 = vunpack.c.l.b16 %v7289
    %v9551 = vunpack.c.h.b16 %v7289
    %v9552 = vunpack.c.l.b16 %v7290
    %v9553 = vunpack.c.h.b16 %v7290
    %v9554 = vunpack.c.l.b16 %v7291
    %v9555 = vunpack.c.h.b16 %v7291
    %v9556 = vunpack.c.l.b16 %v7292
    %v9557 = vunpack.c.h.b16 %v7292
    %v9558 = vunpack.c.l.b16 %v7293
    %v9559 = vunpack.c.h.b16 %v7293
    %v9560 = vunpack.c.l.b16 %v7294
    %v9561 = vunpack.c.h.b16 %v7294
    %v9562 = vunpack.c.l.b16 %v7295
    %v9563 = vunpack.c.h.b16 %v7295
    %v9564 = vunpack.c.l.b16 %v7296
    %v9565 = vunpack.c.h.b16 %v7296
    %v9566 = vunpack.c.l.b16 %v7297
    %v9567 = vunpack.c.h.b16 %v7297
    %v9568 = vunpack.c.l.b16 %v7298
    %v9569 = vunpack.c.h.b16 %v7298
    %v9570 = vunpack.c.l.b16 %v7299
    %v9571 = vunpack.c.h.b16 %v7299
    %v9572 = vunpack.c.l.b16 %v7300
    %v9573 = vunpack.c.h.b16 %v7300
    %v9574 = vunpack.c.l.b16 %v7301
    %v9575 = vunpack.c.h.b16 %v7301
    %v9576 = vunpack.c.l.b16 %v7302
    %v9577 = vunpack.c.h.b16 %v7302
    %v9578 = vunpack.c.l.b16 %v7303
    %v9579 = vunpack.c.h.b16 %v7303
    %v9580 = vunpack.c.l.b16 %v7304
    %v9581 = vunpack.c.h.b16 %v7304
    %v9582 = vunpack.c.l.b16 %v7305
    %v9583 = vunpack.c.h.b16 %v7305
    %v9584 = vunpack.c.l.b16 %v7306
    %v9585 = vunpack.c.h.b16 %v7306
    %v9586 = vunpack.c.l.b16 %v7307
    %v9587 = vunpack.c.h.b16 %v7307
    %v9588 = vunpack.c.l.b16 %v7308
    %v9589 = vunpack.c.h.b16 %v7308
    %v9590 = vunpack.c.l.b16 %v7309
    %v9591 = vunpack.c.h.b16 %v7309
    %v9592 = vunpack.c.l.b16 %v7310
    %v9593 = vunpack.c.h.b16 %v7310
    %v9594 = vunpack.c.l.b16 %v7311
    %v9595 = vunpack.c.h.b16 %v7311
    %v9596 = vunpack.c.l.b16 %v7312
    %v9597 = vunpack.c.h.b16 %v7312
    %v9598 = vunpack.c.l.b16 %v7313
    %v9599 = vunpack.c.h.b16 %v7313
    %v9600 = vunpack.c.l.b16 %v7314
    %v9601 = vunpack.c.h.b16 %v7314
    %v9602 = vunpack.c.l.b16 %v7315
    %v9603 = vunpack.c.h.b16 %v7315
    %v9604 = vunpack.c.l.b16 %v7316
    %v9605 = vunpack.c.h.b16 %v7316
    %v9606 = vunpack.c.l.b16 %v7317
    %v9607 = vunpack.c.h.b16 %v7317
    %v9608 = vunpack.c.l.b16 %v7318
    %v9609 = vunpack.c.h.b16 %v7318
    %v9610 = vunpack.c.l.b16 %v7319
    %v9611 = vunpack.c.h.b16 %v7319
    %v9612 = vunpack.c.l.b16 %v7320
    %v9613 = vunpack.c.h.b16 %v7320
    %v9614 = vunpack.c.l.b16 %v7321
    %v9615 = vunpack.c.h.b16 %v7321
    %v9616 = vunpack.c.l.b16 %v7322
    %v9617 = vunpack.c.h.b16 %v7322
    %v9618 = vunpack.c.l.b16 %v7323
    %v9619 = vunpack.c.h.b16 %v7323
    %v9620 = vunpack.c.l.b16 %v7324
    %v9621 = vunpack.c.h.b16 %v7324
    %v9622 = vunpack.c.l.b16 %v7325
    %v9623 = vunpack.c.h.b16 %v7325
    %v9624 = vunpack.c.l.b16 %v7326
    %v9625 = vunpack.c.h.b16 %v7326
    %v9626 = vunpack.c.l.b16 %v7327
    %v9627 = vunpack.c.h.b16 %v7327
    %v9628 = vunpack.c.l.b16 %v7328
    %v9629 = vunpack.c.h.b16 %v7328
    %v9630 = vunpack.c.l.b16 %v7329
    %v9631 = vunpack.c.h.b16 %v7329
    %v9632 = vunpack.c.l.b16 %v7330
    %v9633 = vunpack.c.h.b16 %v7330
    %v9634 = vunpack.c.l.b16 %v7331
    %v9635 = vunpack.c.h.b16 %v7331
    %v9636 = vunpack.c.l.b16 %v7332
    %v9637 = vunpack.c.h.b16 %v7332
    %v9638 = vunpack.c.l.b16 %v7333
    %v9639 = vunpack.c.h.b16 %v7333
    %v9640 = vunpack.c.l.b16 %v7334
    %v9641 = vunpack.c.h.b16 %v7334
    %v9642 = vunpack.c.l.b16 %v7335
    %v9643 = vunpack.c.h.b16 %v7335
    %v9644 = vunpack.c.l.b16 %v7336
    %v9645 = vunpack.c.h.b16 %v7336
    %v9646 = vunpack.c.l.b16 %v7337
    %v9647 = vunpack.c.h.b16 %v7337
    %v9648 = vunpack.c.l.b16 %v7338
    %v9649 = vunpack.c.h.b16 %v7338
    %v9650 = vunpack.c.l.b16 %v7339
    %v9651 = vunpack.c.h.b16 %v7339
    %v9652 = vunpack.c.l.b16 %v7340
    %v9653 = vunpack.c.h.b16 %v7340
    %v9654 = vunpack.c.l.b16 %v7341
    %v9655 = vunpack.c.h.b16 %v7341
    %v9656 = vunpack.c.l.b16 %v7342
    %v9657 = vunpack.c.h.b16 %v7342
    %v9658 = vunpack.c.l.b16 %v7343
    %v9659 = vunpack.c.h.b16 %v7343
    %v9660 = vunpack.c.l.b16 %v7344
    %v9661 = vunpack.c.h.b16 %v7344
    %v9662 = vunpack.c.l.b16 %v7345
    %v9663 = vunpack.c.h.b16 %v7345
    %v9664 = vunpack.c.l.b16 %v7346
    %v9665 = vunpack.c.h.b16 %v7346
    %v9666 = vunpack.c.l.b16 %v7347
    %v9667 = vunpack.c.h.b16 %v7347
    %v9668 = vunpack.c.l.b16 %v7348
    %v9669 = vunpack.c.h.b16 %v7348
    %v9670 = vunpack.c.l.b16 %v7349
    %v9671 = vunpack.c.h.b16 %v7349
    %v9672 = vunpack.c.l.b16 %v7350
    %v9673 = vunpack.c.h.b16 %v7350
    %v9674 = vunpack.c.l.b16 %v7351
    %v9675 = vunpack.c.h.b16 %v7351
    %v9676 = vunpack.c.l.b16 %v7352
    %v9677 = vunpack.c.h.b16 %v7352
    %v9678 = vunpack.c.l.b16 %v7353
    %v9679 = vunpack.c.h.b16 %v7353
    %v9680 = vunpack.c.l.b16 %v7354
    %v9681 = vunpack.c.h.b16 %v7354
    %v9682 = vunpack.c.l.b16 %v7355
    %v9683 = vunpack.c.h.b16 %v7355
    %v9684 = vunpack.c.l.b16 %v7356
    %v9685 = vunpack.c.h.b16 %v7356
    %v9686 = vunpack.c.l.b16 %v7357
    %v9687 = vunpack.c.h.b16 %v7357
    %v9688 = vunpack.c.l.b16 %v7358
    %v9689 = vunpack.c.h.b16 %v7358
    %v9690 = vunpack.c.l.b16 %v7359
    %v9691 = vunpack.c.h.b16 %v7359
    %v9692 = vunpack.c.l.b16 %v7360
    %v9693 = vunpack.c.h.b16 %v7360
    %v9694 = vunpack.c.l.b16 %v7361
    %v9695 = vunpack.c.h.b16 %v7361
    %v9696 = vunpack.c.l.b16 %v7362
    %v9697 = vunpack.c.h.b16 %v7362
    %v9698 = vunpack.c.l.b16 %v7363
    %v9699 = vunpack.c.h.b16 %v7363
    %v9700 = vunpack.c.l.b16 %v7364
    %v9701 = vunpack.c.h.b16 %v7364
    %v9702 = vunpack.c.l.b16 %v7365
    %v9703 = vunpack.c.h.b16 %v7365
    %v9704 = vunpack.c.l.b16 %v7366
    %v9705 = vunpack.c.h.b16 %v7366
    %v9706 = vunpack.c.l.b16 %v7367
    %v9707 = vunpack.c.h.b16 %v7367
    %v9708 = vunpack.c.l.b16 %v7368
    %v9709 = vunpack.c.h.b16 %v7368
    %v9710 = vunpack.c.l.b16 %v7369
    %v9711 = vunpack.c.h.b16 %v7369
    %v9712 = vunpack.c.l.b16 %v7370
    %v9713 = vunpack.c.h.b16 %v7370
    %v9714 = vunpack.c.l.b16 %v7371
    %v9715 = vunpack.c.h.b16 %v7371
    %v9716 = vunpack.c.l.b16 %v7372
    %v9717 = vunpack.c.h.b16 %v7372
    %v9718 = vunpack.c.l.b16 %v7373
    %v9719 = vunpack.c.h.b16 %v7373
    %v9720 = vunpack.c.l.b16 %v7374
    %v9721 = vunpack.c.h.b16 %v7374
    %v9722 = vunpack.c.l.b16 %v7375
    %v9723 = vunpack.c.h.b16 %v7375
    %v9724 = vunpack.c.l.b16 %v7376
    %v9725 = vunpack.c.h.b16 %v7376
    %v9726 = vunpack.c.l.b16 %v7377
    %v9727 = vunpack.c.h.b16 %v7377
    %v9728 = vunpack.c.l.b16 %v7378
    %v9729 = vunpack.c.h.b16 %v7378
    %v9730 = vunpack.c.l.b16 %v7379
    %v9731 = vunpack.c.h.b16 %v7379
    %v9732 = vunpack.c.l.b16 %v7380
    %v9733 = vunpack.c.h.b16 %v7380
    %v9734 = vunpack.c.l.b16 %v7381
    %v9735 = vunpack.c.h.b16 %v7381
    %v9736 = vunpack.c.l.b16 %v7382
    %v9737 = vunpack.c.h.b16 %v7382
    %v9738 = vunpack.c.l.b16 %v7383
    %v9739 = vunpack.c.h.b16 %v7383
    %v9740 = vunpack.c.l.b16 %v7384
    %v9741 = vunpack.c.h.b16 %v7384
    %v9742 = vunpack.c.l.b16 %v7385
    %v9743 = vunpack.c.h.b16 %v7385
    %v9744 = vunpack.c.l.b16 %v7386
    %v9745 = vunpack.c.h.b16 %v7386
    %v9746 = vunpack.c.l.b16 %v7387
    %v9747 = vunpack.c.h.b16 %v7387
    %v9748 = vunpack.c.l.b16 %v7388
    %v9749 = vunpack.c.h.b16 %v7388
    %v9750 = vunpack.c.l.b16 %v7389
    %v9751 = vunpack.c.h.b16 %v7389
    %v9752 = vunpack.c.l.b16 %v7390
    %v9753 = vunpack.c.h.b16 %v7390
    %v9754 = vunpack.c.l.b16 %v7391
    %v9755 = vunpack.c.h.b16 %v7391
    %v9756 = vunpack.c.l.b16 %v7392
    %v9757 = vunpack.c.h.b16 %v7392
    %v9758 = vunpack.c.l.b16 %v7393
    %v9759 = vunpack.c.h.b16 %v7393
    %v9760 = vunpack.c.l.b16 %v7394
    %v9761 = vunpack.c.h.b16 %v7394
    %v9762 = vunpack.c.l.b16 %v7395
    %v9763 = vunpack.c.h.b16 %v7395
    %v9764 = vunpack.c.l.b16 %v7396
    %v9765 = vunpack.c.h.b16 %v7396
    %v9766 = vunpack.c.l.b16 %v7397
    %v9767 = vunpack.c.h.b16 %v7397
    %v9768 = vunpack.c.l.b16 %v7398
    %v9769 = vunpack.c.h.b16 %v7398
    %v9770 = vunpack.c.l.b16 %v7399
    %v9771 = vunpack.c.h.b16 %v7399
    %v9772 = vunpack.c.l.b16 %v7400
    %v9773 = vunpack.c.h.b16 %v7400
    %v9774 = vunpack.c.l.b16 %v7401
    %v9775 = vunpack.c.h.b16 %v7401
    %v9776 = vunpack.c.l.b16 %v7402
    %v9777 = vunpack.c.h.b16 %v7402
    %v9778 = vunpack.c.l.b16 %v7403
    %v9779 = vunpack.c.h.b16 %v7403
    %v9780 = vunpack.c.l.b16 %v7404
    %v9781 = vunpack.c.h.b16 %v7404
    %v9782 = vunpack.c.l.b16 %v7405
    %v9783 = vunpack.c.h.b16 %v7405
    %v9784 = vunpack.c.l.b16 %v7406
    %v9785 = vunpack.c.h.b16 %v7406
    %v9786 = vunpack.c.l.b16 %v7407
    %v9787 = vunpack.c.h.b16 %v7407
    %v9788 = vunpack.c.l.b16 %v7408
    %v9789 = vunpack.c.h.b16 %v7408
    %v9790 = vunpack.c.l.b16 %v7409
    %v9791 = vunpack.c.h.b16 %v7409
    %v9792 = vunpack.c.l.b16 %v7410
    %v9793 = vunpack.c.h.b16 %v7410
    %v9794 = vunpack.c.l.b16 %v7411
    %v9795 = vunpack.c.h.b16 %v7411
    %v9796 = vunpack.c.l.b16 %v7412
    %v9797 = vunpack.c.h.b16 %v7412
    %v9798 = vunpack.c.l.b16 %v7413
    %v9799 = vunpack.c.h.b16 %v7413
    %v9800 = vunpack.c.l.b16 %v7414
    %v9801 = vunpack.c.h.b16 %v7414
    %v9802 = vunpack.c.l.b16 %v7415
    %v9803 = vunpack.c.h.b16 %v7415
    %v9804 = vunpack.c.l.b16 %v7416
    %v9805 = vunpack.c.h.b16 %v7416
    %v9806 = vunpack.c.l.b16 %v7417
    %v9807 = vunpack.c.h.b16 %v7417
    %v9808 = vunpack.c.l.b16 %v7418
    %v9809 = vunpack.c.h.b16 %v7418
    %v9810 = vunpack.c.l.b16 %v7419
    %v9811 = vunpack.c.h.b16 %v7419
    %v9812 = vunpack.c.l.b16 %v7420
    %v9813 = vunpack.c.h.b16 %v7420
    %v9814 = vunpack.c.l.b16 %v7421
    %v9815 = vunpack.c.h.b16 %v7421
    %v9816 = vunpack.c.l.b16 %v7422
    %v9817 = vunpack.c.h.b16 %v7422
    %v9818 = vunpack.c.l.b16 %v7423
    %v9819 = vunpack.c.h.b16 %v7423
    %v9820 = vunpack.c.l.b16 %v7424
    %v9821 = vunpack.c.h.b16 %v7424
    %v9822 = vunpack.c.l.b16 %v7425
    %v9823 = vunpack.c.h.b16 %v7425
    %v9824 = vunpack.c.l.b16 %v7426
    %v9825 = vunpack.c.h.b16 %v7426
    %v9826 = vunpack.c.l.b16 %v7427
    %v9827 = vunpack.c.h.b16 %v7427
    %v9828 = vunpack.c.l.b16 %v7428
    %v9829 = vunpack.c.h.b16 %v7428
    %v9830 = vunpack.c.l.b16 %v7429
    %v9831 = vunpack.c.h.b16 %v7429
    %v9832 = vunpack.c.l.b16 %v7430
    %v9833 = vunpack.c.h.b16 %v7430
    %v9834 = vunpack.c.l.b16 %v7431
    %v9835 = vunpack.c.h.b16 %v7431
    %v9836 = vunpack.c.l.b16 %v7432
    %v9837 = vunpack.c.h.b16 %v7432
    %v9838 = vunpack.c.l.b16 %v7433
    %v9839 = vunpack.c.h.b16 %v7433
    %v9840 = vunpack.c.l.b16 %v7434
    %v9841 = vunpack.c.h.b16 %v7434
    %v9842 = vunpack.c.l.b16 %v7435
    %v9843 = vunpack.c.h.b16 %v7435
    %v9844 = vunpack.c.l.b16 %v7436
    %v9845 = vunpack.c.h.b16 %v7436
    %v9846 = vunpack.c.l.b16 %v7437
    %v9847 = vunpack.c.h.b16 %v7437
    %v9848 = vunpack.c.l.b16 %v7438
    %v9849 = vunpack.c.h.b16 %v7438
    %v9850 = vunpack.c.l.b16 %v7439
    %v9851 = vunpack.c.h.b16 %v7439
    %v9852 = vunpack.c.l.b16 %v7440
    %v9853 = vunpack.c.h.b16 %v7440
    %v9854 = vunpack.c.l.b16 %v7441
    %v9855 = vunpack.c.h.b16 %v7441
    %v9856 = vunpack.c.l.b16 %v7442
    %v9857 = vunpack.c.h.b16 %v7442
    %v9858 = vunpack.c.l.b16 %v7443
    %v9859 = vunpack.c.h.b16 %v7443
    %v9860 = vunpack.c.l.b16 %v7444
    %v9861 = vunpack.c.h.b16 %v7444
    %v9862 = vunpack.c.l.b16 %v7445
    %v9863 = vunpack.c.h.b16 %v7445
    %v9864 = vunpack.c.l.b16 %v7446
    %v9865 = vunpack.c.h.b16 %v7446
    %v9866 = vunpack.c.l.b16 %v7447
    %v9867 = vunpack.c.h.b16 %v7447
    %v9868 = vunpack.c.l.b16 %v7448
    %v9869 = vunpack.c.h.b16 %v7448
    %v9870 = vunpack.c.l.b16 %v7449
    %v9871 = vunpack.c.h.b16 %v7449
    %v9872 = vunpack.c.l.b16 %v7450
    %v9873 = vunpack.c.h.b16 %v7450
    %v9874 = vunpack.c.l.b16 %v7451
    %v9875 = vunpack.c.h.b16 %v7451
    %v9876 = vunpack.c.l.b16 %v7452
    %v9877 = vunpack.c.h.b16 %v7452
    %v9878 = vunpack.c.l.b16 %v7453
    %v9879 = vunpack.c.h.b16 %v7453
    %v9880 = vunpack.c.l.b16 %v7454
    %v9881 = vunpack.c.h.b16 %v7454
    %v9882 = vunpack.c.l.b16 %v7455
    %v9883 = vunpack.c.h.b16 %v7455
    %v9884 = vunpack.c.l.b16 %v7456
    %v9885 = vunpack.c.h.b16 %v7456
    %v9886 = vunpack.c.l.b16 %v7457
    %v9887 = vunpack.c.h.b16 %v7457
    %v9888 = vunpack.c.l.b16 %v7458
    %v9889 = vunpack.c.h.b16 %v7458
    %v9890 = vunpack.c.l.b16 %v7459
    %v9891 = vunpack.c.h.b16 %v7459
    %v9892 = vunpack.c.l.b16 %v7460
    %v9893 = vunpack.c.h.b16 %v7460
    %v9894 = vunpack.c.l.b16 %v7461
    %v9895 = vunpack.c.h.b16 %v7461
    %v9896 = vunpack.c.l.b16 %v7462
    %v9897 = vunpack.c.h.b16 %v7462
    %v9898 = vunpack.c.l.b16 %v7463
    %v9899 = vunpack.c.h.b16 %v7463
    %v9900 = vunpack.c.l.b16 %v7464
    %v9901 = vunpack.c.h.b16 %v7464
    %v9902 = vunpack.c.l.b16 %v7465
    %v9903 = vunpack.c.h.b16 %v7465
    %v9904 = vunpack.c.l.b16 %v7466
    %v9905 = vunpack.c.h.b16 %v7466
    %v9906 = vunpack.c.l.b16 %v7467
    %v9907 = vunpack.c.h.b16 %v7467
    %v9908 = vunpack.c.l.b16 %v7468
    %v9909 = vunpack.c.h.b16 %v7468
    %v9910 = vunpack.c.l.b16 %v7469
    %v9911 = vunpack.c.h.b16 %v7469
    %v9912 = vunpack.c.l.b16 %v7470
    %v9913 = vunpack.c.h.b16 %v7470
    %v9914 = vunpack.c.l.b16 %v7471
    %v9915 = vunpack.c.h.b16 %v7471
    %v9916 = vunpack.c.l.b16 %v7472
    %v9917 = vunpack.c.h.b16 %v7472
    %v9918 = vunpack.c.l.b16 %v7473
    %v9919 = vunpack.c.h.b16 %v7473
    %v9920 = vunpack.c.l.b16 %v7474
    %v9921 = vunpack.c.h.b16 %v7474
    %v9922 = vunpack.c.l.b16 %v7475
    %v9923 = vunpack.c.h.b16 %v7475
    %v9924 = vunpack.c.l.b16 %v7476
    %v9925 = vunpack.c.h.b16 %v7476
    %v9926 = vunpack.c.l.b16 %v7477
    %v9927 = vunpack.c.h.b16 %v7477
    %v9928 = vunpack.c.l.b16 %v7478
    %v9929 = vunpack.c.h.b16 %v7478
    %v9930 = vunpack.c.l.b16 %v7479
    %v9931 = vunpack.c.h.b16 %v7479
    %v9932 = vunpack.c.l.b16 %v7480
    %v9933 = vunpack.c.h.b16 %v7480
    %v9934 = vunpack.c.l.b16 %v7481
    %v9935 = vunpack.c.h.b16 %v7481
    %v9936 = vunpack.c.l.b16 %v7482
    %v9937 = vunpack.c.h.b16 %v7482
    %v9938 = vunpack.c.l.b16 %v7483
    %v9939 = vunpack.c.h.b16 %v7483
    %v9940 = vunpack.c.l.b16 %v7484
    %v9941 = vunpack.c.h.b16 %v7484
    %v9942 = vunpack.c.l.b16 %v7485
    %v9943 = vunpack.c.h.b16 %v7485
    %v9944 = vunpack.c.l.b16 %v7486
    %v9945 = vunpack.c.h.b16 %v7486
    %v9946 = vunpack.c.l.b16 %v7487
    %v9947 = vunpack.c.h.b16 %v7487
    %v9948 = vunpack.c.l.b16 %v7488
    %v9949 = vunpack.c.h.b16 %v7488
    %v9950 = vunpack.c.l.b16 %v7489
    %v9951 = vunpack.c.h.b16 %v7489
    %v9952 = vunpack.c.l.b16 %v7490
    %v9953 = vunpack.c.h.b16 %v7490
    %v9954 = vunpack.c.l.b16 %v7491
    %v9955 = vunpack.c.h.b16 %v7491
    %v9956 = vunpack.c.l.b16 %v7492
    %v9957 = vunpack.c.h.b16 %v7492
    %v9958 = vunpack.c.l.b16 %v7493
    %v9959 = vunpack.c.h.b16 %v7493
    %v9960 = vunpack.c.l.b16 %v7494
    %v9961 = vunpack.c.h.b16 %v7494
    %v9962 = vunpack.c.l.b16 %v7495
    %v9963 = vunpack.c.h.b16 %v7495
    %v9964 = vunpack.c.l.b16 %v7496
    %v9965 = vunpack.c.h.b16 %v7496
    %v9966 = vunpack.c.l.b16 %v7497
    %v9967 = vunpack.c.h.b16 %v7497
    %v9968 = vunpack.c.l.b16 %v7498
    %v9969 = vunpack.c.h.b16 %v7498
    %v9970 = vunpack.c.l.b16 %v7499
    %v9971 = vunpack.c.h.b16 %v7499
    %v9972 = vunpack.c.l.b16 %v7500
    %v9973 = vunpack.c.h.b16 %v7500
    %v9974 = vunpack.c.l.b16 %v7501
    %v9975 = vunpack.c.h.b16 %v7501
    %v9976 = vunpack.c.l.b16 %v7502
    %v9977 = vunpack.c.h.b16 %v7502
    %v9978 = vunpack.c.l.b16 %v7503
    %v9979 = vunpack.c.h.b16 %v7503
    %v9980 = vunpack.c.l.b16 %v7504
    %v9981 = vunpack.c.h.b16 %v7504
    %v9982 = vunpack.c.l.b16 %v7505
    %v9983 = vunpack.c.h.b16 %v7505
    %v9984 = vunpack.c.l.b16 %v7506
    %v9985 = vunpack.c.h.b16 %v7506
    %v9986 = vunpack.c.l.b16 %v7507
    %v9987 = vunpack.c.h.b16 %v7507
    %v9988 = vunpack.c.l.b16 %v7508
    %v9989 = vunpack.c.h.b16 %v7508
    %v9990 = vunpack.c.l.b16 %v7509
    %v9991 = vunpack.c.h.b16 %v7509
    %v9992 = vunpack.c.l.b16 %v7510
    %v9993 = vunpack.c.h.b16 %v7510
    %v9994 = vunpack.c.l.b16 %v7511
    %v9995 = vunpack.c.h.b16 %v7511
    %v9996 = vunpack.c.l.b16 %v7512
    %v9997 = vunpack.c.h.b16 %v7512
    %v9998 = vunpack.c.l.b16 %v7513
    %v9999 = vunpack.c.h.b16 %v7513
    %v10000 = vunpack.c.l.b16 %v7514
    %v10001 = vunpack.c.h.b16 %v7514
    %v10002 = vunpack.c.l.b16 %v7515
    %v10003 = vunpack.c.h.b16 %v7515
    %v10004 = vunpack.c.l.b16 %v7516
    %v10005 = vunpack.c.h.b16 %v7516
    %v10006 = vunpack.c.l.b16 %v7517
    %v10007 = vunpack.c.h.b16 %v7517
    %v10008 = vunpack.c.l.b16 %v7518
    %v10009 = vunpack.c.h.b16 %v7518
    %v10010 = vunpack.c.l.b16 %v7519
    %v10011 = vunpack.c.h.b16 %v7519
    %v10012 = vunpack.c.l.b16 %v7520
    %v10013 = vunpack.c.h.b16 %v7520
    %v10014 = vunpack.c.l.b16 %v7521
    %v10015 = vunpack.c.h.b16 %v7521
    %v10016 = vunpack.c.l.b16 %v7522
    %v10017 = vunpack.c.h.b16 %v7522
    %v10018 = vunpack.c.l.b16 %v7523
    %v10019 = vunpack.c.h.b16 %v7523
    %v10020 = vunpack.c.l.b16 %v7524
    %v10021 = vunpack.c.h.b16 %v7524
    %v10022 = vunpack.c.l.b16 %v7525
    %v10023 = vunpack.c.h.b16 %v7525
    %v10024 = vunpack.c.l.b16 %v7526
    %v10025 = vunpack.c.h.b16 %v7526
    %v10026 = vunpack.c.l.b16 %v7527
    %v10027 = vunpack.c.h.b16 %v7527
    %v10028 = vunpack.c.l.b16 %v7528
    %v10029 = vunpack.c.h.b16 %v7528
    %v10030 = vunpack.c.l.b16 %v7529
    %v10031 = vunpack.c.h.b16 %v7529
    %v10032 = vunpack.c.l.b16 %v7530
    %v10033 = vunpack.c.h.b16 %v7530
    %v10034 = vunpack.c.l.b16 %v7531
    %v10035 = vunpack.c.h.b16 %v7531
    %v10036 = vunpack.c.l.b16 %v7532
    %v10037 = vunpack.c.h.b16 %v7532
    %v10038 = vunpack.c.l.b16 %v7533
    %v10039 = vunpack.c.h.b16 %v7533
    %v10040 = vunpack.c.l.b16 %v7534
    %v10041 = vunpack.c.h.b16 %v7534
    %v10042 = vunpack.c.l.b16 %v7535
    %v10043 = vunpack.c.h.b16 %v7535
    %v10044 = vunpack.c.l.b16 %v7536
    %v10045 = vunpack.c.h.b16 %v7536
    %v10046 = vunpack.c.l.b16 %v7537
    %v10047 = vunpack.c.h.b16 %v7537
    %v10048 = vunpack.c.l.b16 %v7538
    %v10049 = vunpack.c.h.b16 %v7538
    %v10050 = vunpack.c.l.b16 %v7539
    %v10051 = vunpack.c.h.b16 %v7539
    %v10052 = vunpack.c.l.b16 %v7540
    %v10053 = vunpack.c.h.b16 %v7540
    %v10054 = vunpack.c.l.b16 %v7541
    %v10055 = vunpack.c.h.b16 %v7541
    %v10056 = vunpack.c.l.b16 %v7542
    %v10057 = vunpack.c.h.b16 %v7542
    %v10058 = vunpack.c.l.b16 %v7543
    %v10059 = vunpack.c.h.b16 %v7543
    %v10060 = vunpack.c.l.b16 %v7544
    %v10061 = vunpack.c.h.b16 %v7544
    %v10062 = vunpack.c.l.b16 %v7545
    %v10063 = vunpack.c.h.b16 %v7545
    %v10064 = vunpack.c.l.b16 %v7546
    %v10065 = vunpack.c.h.b16 %v7546
    %v10066 = vunpack.c.l.b16 %v7547
    %v10067 = vunpack.c.h.b16 %v7547
    %v10068 = vunpack.c.l.b16 %v7548
    %v10069 = vunpack.c.h.b16 %v7548
    %v10070 = vunpack.c.l.b16 %v7549
    %v10071 = vunpack.c.h.b16 %v7549
    %v10072 = vunpack.c.l.b16 %v7550
    %v10073 = vunpack.c.h.b16 %v7550
    %v10074 = vunpack.c.l.b16 %v7551
    %v10075 = vunpack.c.h.b16 %v7551
    %v10076 = vunpack.c.l.b16 %v7552
    %v10077 = vunpack.c.h.b16 %v7552
    %v10078 = vunpack.c.l.b16 %v7553
    %v10079 = vunpack.c.h.b16 %v7553
    %v10080 = vunpack.c.l.b16 %v7554
    %v10081 = vunpack.c.h.b16 %v7554
    %v10082 = vunpack.c.l.b16 %v7555
    %v10083 = vunpack.c.h.b16 %v7555
    %v10084 = vunpack.c.l.b16 %v7556
    %v10085 = vunpack.c.h.b16 %v7556
    %v10086 = vunpack.c.l.b16 %v7557
    %v10087 = vunpack.c.h.b16 %v7557
    %v10088 = vunpack.c.l.b16 %v7558
    %v10089 = vunpack.c.h.b16 %v7558
    %v10090 = vunpack.c.l.b16 %v7559
    %v10091 = vunpack.c.h.b16 %v7559
    %v10092 = vunpack.c.l.b16 %v7560
    %v10093 = vunpack.c.h.b16 %v7560
    %v10094 = vunpack.c.l.b16 %v7561
    %v10095 = vunpack.c.h.b16 %v7561
    %v10096 = vunpack.c.l.b16 %v7562
    %v10097 = vunpack.c.h.b16 %v7562
    %v10098 = vunpack.c.l.b16 %v7563
    %v10099 = vunpack.c.h.b16 %v7563
    %v10100 = vunpack.c.l.b16 %v7564
    %v10101 = vunpack.c.h.b16 %v7564
    %v10102 = vunpack.c.l.b16 %v7565
    %v10103 = vunpack.c.h.b16 %v7565
    %v10104 = vunpack.c.l.b16 %v7566
    %v10105 = vunpack.c.h.b16 %v7566
    %v10106 = vunpack.c.l.b16 %v7567
    %v10107 = vunpack.c.h.b16 %v7567
    %v10108 = vunpack.c.l.b16 %v7568
    %v10109 = vunpack.c.h.b16 %v7568
    %v10110 = vunpack.c.l.b16 %v7569
    %v10111 = vunpack.c.h.b16 %v7569
    %v10112 = vunpack.c.l.b16 %v7570
    %v10113 = vunpack.c.h.b16 %v7570
    %v10114 = vunpack.c.l.b16 %v7571
    %v10115 = vunpack.c.h.b16 %v7571
    %v10116 = vunpack.c.l.b16 %v7572
    %v10117 = vunpack.c.h.b16 %v7572
    %v10118 = vunpack.c.l.b16 %v7573
    %v10119 = vunpack.c.h.b16 %v7573
    %v10120 = vunpack.c.l.b16 %v7574
    %v10121 = vunpack.c.h.b16 %v7574
    %v10122 = vunpack.c.l.b16 %v7575
    %v10123 = vunpack.c.h.b16 %v7575
    %v10124 = vunpack.c.l.b16 %v7576
    %v10125 = vunpack.c.h.b16 %v7576
    %v10126 = vunpack.c.l.b16 %v7577
    %v10127 = vunpack.c.h.b16 %v7577
    %v10128 = vunpack.c.l.b16 %v7578
    %v10129 = vunpack.c.h.b16 %v7578
    %v10130 = vunpack.c.l.b16 %v7579
    %v10131 = vunpack.c.h.b16 %v7579
    %v10132 = vunpack.c.l.b16 %v7580
    %v10133 = vunpack.c.h.b16 %v7580
    %v10134 = vunpack.c.l.b16 %v7581
    %v10135 = vunpack.c.h.b16 %v7581
    %v10136 = vunpack.c.l.b16 %v7582
    %v10137 = vunpack.c.h.b16 %v7582
    %v10138 = vunpack.c.l.b16 %v7583
    %v10139 = vunpack.c.h.b16 %v7583
    %v10140 = vunpack.c.l.b16 %v7584
    %v10141 = vunpack.c.h.b16 %v7584
    %v10142 = vunpack.c.l.b16 %v7585
    %v10143 = vunpack.c.h.b16 %v7585
    %v10144 = vunpack.c.l.b16 %v7586
    %v10145 = vunpack.c.h.b16 %v7586
    %v10146 = vunpack.c.l.b16 %v7587
    %v10147 = vunpack.c.h.b16 %v7587
    %v10148 = vunpack.c.l.b16 %v7588
    %v10149 = vunpack.c.h.b16 %v7588
    %v10150 = vunpack.c.l.b16 %v7589
    %v10151 = vunpack.c.h.b16 %v7589
    %v10152 = vunpack.c.l.b16 %v7590
    %v10153 = vunpack.c.h.b16 %v7590
    %v10154 = vunpack.c.l.b16 %v7591
    %v10155 = vunpack.c.h.b16 %v7591
    %v10156 = vunpack.c.l.b16 %v7592
    %v10157 = vunpack.c.h.b16 %v7592
    %v10158 = vunpack.c.l.b16 %v7593
    %v10159 = vunpack.c.h.b16 %v7593
    %v10160 = vunpack.c.l.b16 %v7594
    %v10161 = vunpack.c.h.b16 %v7594
    %v10162 = vunpack.c.l.b16 %v7595
    %v10163 = vunpack.c.h.b16 %v7595
    %v10164 = vunpack.c.l.b16 %v7596
    %v10165 = vunpack.c.h.b16 %v7596
    %v10166 = vunpack.c.l.b16 %v7597
    %v10167 = vunpack.c.h.b16 %v7597
    %v10168 = vunpack.c.l.b16 %v7598
    %v10169 = vunpack.c.h.b16 %v7598
    %v10170 = vunpack.c.l.b16 %v7599
    %v10171 = vunpack.c.h.b16 %v7599
    %v10172 = vunpack.c.l.b16 %v7600
    %v10173 = vunpack.c.h.b16 %v7600
    %v10174 = vunpack.c.l.b16 %v7601
    %v10175 = vunpack.c.h.b16 %v7601
    %v10176 = vunpack.c.l.b16 %v7602
    %v10177 = vunpack.c.h.b16 %v7602
    %v10178 = vunpack.c.l.b16 %v7603
    %v10179 = vunpack.c.h.b16 %v7603
    %v10180 = vunpack.c.l.b16 %v7604
    %v10181 = vunpack.c.h.b16 %v7604
    %v10182 = vunpack.c.l.b16 %v7605
    %v10183 = vunpack.c.h.b16 %v7605
    %v10184 = vunpack.c.l.b16 %v7606
    %v10185 = vunpack.c.h.b16 %v7606
    %v10186 = vunpack.c.l.b16 %v7607
    %v10187 = vunpack.c.h.b16 %v7607
    %v10188 = vunpack.c.l.b16 %v7608
    %v10189 = vunpack.c.h.b16 %v7608
    %v10190 = vunpack.c.l.b16 %v7609
    %v10191 = vunpack.c.h.b16 %v7609
    %v10192 = vunpack.c.l.b16 %v7610
    %v10193 = vunpack.c.h.b16 %v7610
    %v10194 = vunpack.c.l.b16 %v7611
    %v10195 = vunpack.c.h.b16 %v7611
    %v10196 = vunpack.c.l.b16 %v7612
    %v10197 = vunpack.c.h.b16 %v7612
    %v10198 = vunpack.c.l.b16 %v7613
    %v10199 = vunpack.c.h.b16 %v7613
    %v10200 = vunpack.c.l.b16 %v7614
    %v10201 = vunpack.c.h.b16 %v7614
    %v10202 = vunpack.c.l.b16 %v7615
    %v10203 = vunpack.c.h.b16 %v7615
    %v10204 = vunpack.c.l.b16 %v7616
    %v10205 = vunpack.c.h.b16 %v7616
    %v10206 = vunpack.c.l.b16 %v7617
    %v10207 = vunpack.c.h.b16 %v7617
    %v10208 = vunpack.c.l.b16 %v7618
    %v10209 = vunpack.c.h.b16 %v7618
    %v10210 = vunpack.c.l.b16 %v7619
    %v10211 = vunpack.c.h.b16 %v7619
    %v10212 = vunpack.c.l.b16 %v7620
    %v10213 = vunpack.c.h.b16 %v7620
    %v10214 = vunpack.c.l.b16 %v7621
    %v10215 = vunpack.c.h.b16 %v7621
    %v10216 = vunpack.c.l.b16 %v7622
    %v10217 = vunpack.c.h.b16 %v7622
    %v10218 = vunpack.c.l.b16 %v7623
    %v10219 = vunpack.c.h.b16 %v7623
    %v10220 = vunpack.c.l.b16 %v7624
    %v10221 = vunpack.c.h.b16 %v7624
    %v10222 = vunpack.c.l.b16 %v7625
    %v10223 = vunpack.c.h.b16 %v7625
    %v10224 = vunpack.c.l.b16 %v7626
    %v10225 = vunpack.c.h.b16 %v7626
    %v10226 = vunpack.c.l.b16 %v7627
    %v10227 = vunpack.c.h.b16 %v7627
    %v10228 = vunpack.c.l.b16 %v7628
    %v10229 = vunpack.c.h.b16 %v7628
    %v10230 = vunpack.c.l.b16 %v7629
    %v10231 = vunpack.c.h.b16 %v7629
    %v10232 = vunpack.c.l.b16 %v7630
    %v10233 = vunpack.c.h.b16 %v7630
    %v10234 = vunpack.c.l.b16 %v7631
    %v10235 = vunpack.c.h.b16 %v7631
    %v10236 = vunpack.c.l.b16 %v7632
    %v10237 = vunpack.c.h.b16 %v7632
    %v10238 = vunpack.c.l.b16 %v7633
    %v10239 = vunpack.c.h.b16 %v7633
    %v10240 = vunpack.c.l.b16 %v7634
    %v10241 = vunpack.c.h.b16 %v7634
    %v10242 = vunpack.c.l.b16 %v7635
    %v10243 = vunpack.c.h.b16 %v7635
    %v10244 = vunpack.c.l.b16 %v7636
    %v10245 = vunpack.c.h.b16 %v7636
    %v10246 = vunpack.c.l.b16 %v7637
    %v10247 = vunpack.c.h.b16 %v7637
    %v10248 = vunpack.c.l.b16 %v7638
    %v10249 = vunpack.c.h.b16 %v7638
    %v10250 = vunpack.c.l.b16 %v7639
    %v10251 = vunpack.c.h.b16 %v7639
    %v10252 = vunpack.c.l.b16 %v7640
    %v10253 = vunpack.c.h.b16 %v7640
    %v10254 = vunpack.c.l.b16 %v7641
    %v10255 = vunpack.c.h.b16 %v7641
    %v10256 = vunpack.c.l.b16 %v7642
    %v10257 = vunpack.c.h.b16 %v7642
    %v10258 = vunpack.c.l.b16 %v7643
    %v10259 = vunpack.c.h.b16 %v7643
    %v10260 = vunpack.c.l.b16 %v7644
    %v10261 = vunpack.c.h.b16 %v7644
    %v10262 = vunpack.c.l.b16 %v7645
    %v10263 = vunpack.c.h.b16 %v7645
    %v10264 = vunpack.c.l.b16 %v7646
    %v10265 = vunpack.c.h.b16 %v7646
    %v10266 = vunpack.c.l.b16 %v7647
    %v10267 = vunpack.c.h.b16 %v7647
    %v10268 = vunpack.c.l.b16 %v7648
    %v10269 = vunpack.c.h.b16 %v7648
    %v10270 = vunpack.c.l.b16 %v7649
    %v10271 = vunpack.c.h.b16 %v7649
    %v10272 = vunpack.c.l.b16 %v7650
    %v10273 = vunpack.c.h.b16 %v7650
    %v10274 = vunpack.c.l.b16 %v7651
    %v10275 = vunpack.c.h.b16 %v7651
    %v10276 = vunpack.c.l.b16 %v7652
    %v10277 = vunpack.c.h.b16 %v7652
    %v10278 = vunpack.c.l.b16 %v7653
    %v10279 = vunpack.c.h.b16 %v7653
    %v10280 = vunpack.c.l.b16 %v7654
    %v10281 = vunpack.c.h.b16 %v7654
    %v10282 = vunpack.c.l.b16 %v7655
    %v10283 = vunpack.c.h.b16 %v7655
    %v10284 = vunpack.c.l.b16 %v7656
    %v10285 = vunpack.c.h.b16 %v7656
    %v10286 = vunpack.c.l.b16 %v7657
    %v10287 = vunpack.c.h.b16 %v7657
    %v10288 = vunpack.c.l.b16 %v7658
    %v10289 = vunpack.c.h.b16 %v7658
    %v10290 = vunpack.c.l.b16 %v7659
    %v10291 = vunpack.c.h.b16 %v7659
    %v10292 = vunpack.c.l.b16 %v7660
    %v10293 = vunpack.c.h.b16 %v7660
    %v10294 = vunpack.c.l.b16 %v7661
    %v10295 = vunpack.c.h.b16 %v7661
    %v10296 = vunpack.c.l.b16 %v7662
    %v10297 = vunpack.c.h.b16 %v7662
    %v10298 = vunpack.c.l.b16 %v7663
    %v10299 = vunpack.c.h.b16 %v7663
    %v10300 = vunpack.c.l.b16 %v7664
    %v10301 = vunpack.c.h.b16 %v7664
    %v10302 = vunpack.c.l.b16 %v7665
    %v10303 = vunpack.c.h.b16 %v7665
    %v10304 = vunpack.c.l.b16 %v7666
    %v10305 = vunpack.c.h.b16 %v7666
    %v10306 = vunpack.c.l.b16 %v7667
    %v10307 = vunpack.c.h.b16 %v7667
    %v10308 = vunpack.c.l.b16 %v7668
    %v10309 = vunpack.c.h.b16 %v7668
    %v10310 = vunpack.c.l.b16 %v7669
    %v10311 = vunpack.c.h.b16 %v7669
    %v10312 = vunpack.c.l.b16 %v7670
    %v10313 = vunpack.c.h.b16 %v7670
    %v10314 = vunpack.c.l.b16 %v7671
    %v10315 = vunpack.c.h.b16 %v7671
    %v10316 = vunpack.c.l.b16 %v7672
    %v10317 = vunpack.c.h.b16 %v7672
    %v10318 = vunpack.c.l.b16 %v7673
    %v10319 = vunpack.c.h.b16 %v7673
    %v10320 = vunpack.c.l.b16 %v7674
    %v10321 = vunpack.c.h.b16 %v7674
    %v10322 = vunpack.c.l.b16 %v7675
    %v10323 = vunpack.c.h.b16 %v7675
    %v10324 = vunpack.c.l.b16 %v7676
    %v10325 = vunpack.c.h.b16 %v7676
    %v10326 = vunpack.c.l.b16 %v7677
    %v10327 = vunpack.c.h.b16 %v7677
    %v10328 = vunpack.c.l.b16 %v7678
    %v10329 = vunpack.c.h.b16 %v7678
    %v10330 = vunpack.c.l.b16 %v7679
    %v10331 = vunpack.c.h.b16 %v7679
    %v10332 = vunpack.c.l.b16 %v7680
    %v10333 = vunpack.c.h.b16 %v7680
    %v10334 = vunpack.c.l.b16 %v7681
    %v10335 = vunpack.c.h.b16 %v7681
    %v10336 = vunpack.c.l.b16 %v7682
    %v10337 = vunpack.c.h.b16 %v7682
    %v10338 = vunpack.c.l.b16 %v7683
    %v10339 = vunpack.c.h.b16 %v7683
    %v10340 = vunpack.c.l.b16 %v7684
    %v10341 = vunpack.c.h.b16 %v7684
    %v10342 = vunpack.c.l.b16 %v7685
    %v10343 = vunpack.c.h.b16 %v7685
    %v10344 = vunpack.c.l.b16 %v7686
    %v10345 = vunpack.c.h.b16 %v7686
    %v10346 = vunpack.c.l.b16 %v7687
    %v10347 = vunpack.c.h.b16 %v7687
    %v10348 = vunpack.c.l.b16 %v7688
    %v10349 = vunpack.c.h.b16 %v7688
    %v10350 = vunpack.c.l.b16 %v7689
    %v10351 = vunpack.c.h.b16 %v7689
    %v10352 = vunpack.c.l.b16 %v7690
    %v10353 = vunpack.c.h.b16 %v7690
    %v10354 = vunpack.c.l.b16 %v7691
    %v10355 = vunpack.c.h.b16 %v7691
    %v10356 = vunpack.c.l.b16 %v7692
    %v10357 = vunpack.c.h.b16 %v7692
    %v10358 = vunpack.c.l.b16 %v7693
    %v10359 = vunpack.c.h.b16 %v7693
    %v10360 = vunpack.c.l.b16 %v7694
    %v10361 = vunpack.c.h.b16 %v7694
    %v10362 = vunpack.c.l.b16 %v7695
    %v10363 = vunpack.c.h.b16 %v7695
    %v10364 = vunpack.c.l.b16 %v7696
    %v10365 = vunpack.c.h.b16 %v7696
    %v10366 = vunpack.c.l.b16 %v7697
    %v10367 = vunpack.c.h.b16 %v7697
    %v10368 = vunpack.c.l.b16 %v7698
    %v10369 = vunpack.c.h.b16 %v7698
    %v10370 = vunpack.c.l.b16 %v7699
    %v10371 = vunpack.c.h.b16 %v7699
    %v10372 = vunpack.c.l.b16 %v7700
    %v10373 = vunpack.c.h.b16 %v7700
    %v10374 = vunpack.c.l.b16 %v7701
    %v10375 = vunpack.c.h.b16 %v7701
    %v10376 = vunpack.c.l.b16 %v7702
    %v10377 = vunpack.c.h.b16 %v7702
    %v10378 = vunpack.c.l.b16 %v7703
    %v10379 = vunpack.c.h.b16 %v7703
    %v10380 = vunpack.c.l.b16 %v7704
    %v10381 = vunpack.c.h.b16 %v7704
    %v10382 = vunpack.c.l.b16 %v7705
    %v10383 = vunpack.c.h.b16 %v7705
    %v10384 = vunpack.c.l.b16 %v7706
    %v10385 = vunpack.c.h.b16 %v7706
    %v10386 = vunpack.c.l.b16 %v7707
    %v10387 = vunpack.c.h.b16 %v7707
    %v10388 = vunpack.c.l.b16 %v7708
    %v10389 = vunpack.c.h.b16 %v7708
    %v10390 = vunpack.c.l.b16 %v7709
    %v10391 = vunpack.c.h.b16 %v7709
    %v10392 = vunpack.c.l.b16 %v7710
    %v10393 = vunpack.c.h.b16 %v7710
    %v10394 = vunpack.c.l.b16 %v7711
    %v10395 = vunpack.c.h.b16 %v7711
    %v10396 = vunpack.c.l.b16 %v7712
    %v10397 = vunpack.c.h.b16 %v7712
    %v10398 = vunpack.c.l.b16 %v7713
    %v10399 = vunpack.c.h.b16 %v7713
    %v10400 = vunpack.c.l.b16 %v7714
    %v10401 = vunpack.c.h.b16 %v7714
    %v10402 = vunpack.c.l.b16 %v7715
    %v10403 = vunpack.c.h.b16 %v7715
    %v10404 = vunpack.c.l.b16 %v7716
    %v10405 = vunpack.c.h.b16 %v7716
    %v10406 = vunpack.c.l.b16 %v7717
    %v10407 = vunpack.c.h.b16 %v7717
    %v10408 = vunpack.c.l.b16 %v7718
    %v10409 = vunpack.c.h.b16 %v7718
    %v10410 = vunpack.c.l.b16 %v7719
    %v10411 = vunpack.c.h.b16 %v7719
    %v10412 = vunpack.c.l.b16 %v7720
    %v10413 = vunpack.c.h.b16 %v7720
    %v10414 = vunpack.c.l.b16 %v7721
    %v10415 = vunpack.c.h.b16 %v7721
    %v10416 = vunpack.c.l.b16 %v7722
    %v10417 = vunpack.c.h.b16 %v7722
    %v10418 = vunpack.c.l.b16 %v7723
    %v10419 = vunpack.c.h.b16 %v7723
    %v10420 = vunpack.c.l.b16 %v7724
    %v10421 = vunpack.c.h.b16 %v7724
    %v10422 = vunpack.c.l.b16 %v7725
    %v10423 = vunpack.c.h.b16 %v7725
    %v10424 = vunpack.c.l.b16 %v7726
    %v10425 = vunpack.c.h.b16 %v7726
    %v10426 = vunpack.c.l.b16 %v7727
    %v10427 = vunpack.c.h.b16 %v7727
    %v10428 = vunpack.c.l.b16 %v7728
    %v10429 = vunpack.c.h.b16 %v7728
    %v10430 = vunpack.c.l.b16 %v7729
    %v10431 = vunpack.c.h.b16 %v7729
    %v10432 = vunpack.c.l.b16 %v7730
    %v10433 = vunpack.c.h.b16 %v7730
    %v10434 = vunpack.c.l.b16 %v7731
    %v10435 = vunpack.c.h.b16 %v7731
    %v10436 = vunpack.c.l.b16 %v7732
    %v10437 = vunpack.c.h.b16 %v7732
    %v10438 = vunpack.c.l.b16 %v7733
    %v10439 = vunpack.c.h.b16 %v7733
    %v10440 = vunpack.c.l.b16 %v7734
    %v10441 = vunpack.c.h.b16 %v7734
    %v10442 = vunpack.c.l.b16 %v7735
    %v10443 = vunpack.c.h.b16 %v7735
    %v10444 = vunpack.c.l.b16 %v7736
    %v10445 = vunpack.c.h.b16 %v7736
    %v10446 = vunpack.c.l.b16 %v7737
    %v10447 = vunpack.c.h.b16 %v7737
    %v10448 = vunpack.c.l.b16 %v7738
    %v10449 = vunpack.c.h.b16 %v7738
    %v10450 = vunpack.c.l.b16 %v7739
    %v10451 = vunpack.c.h.b16 %v7739
    %v10452 = vunpack.c.l.b16 %v7740
    %v10453 = vunpack.c.h.b16 %v7740
    %v10454 = vunpack.c.l.b16 %v7741
    %v10455 = vunpack.c.h.b16 %v7741
    %v10456 = vunpack.c.l.b16 %v7742
    %v10457 = vunpack.c.h.b16 %v7742
    %v10458 = vunpack.c.l.b16 %v7743
    %v10459 = vunpack.c.h.b16 %v7743
    %v10460 = vunpack.c.l.b16 %v7744
    %v10461 = vunpack.c.h.b16 %v7744
    %v10462 = vunpack.c.l.b16 %v7745
    %v10463 = vunpack.c.h.b16 %v7745
    %v10464 = vunpack.c.l.b16 %v7746
    %v10465 = vunpack.c.h.b16 %v7746
    %v10466 = vunpack.c.l.b16 %v7747
    %v10467 = vunpack.c.h.b16 %v7747
    %v10468 = vunpack.c.l.b16 %v7748
    %v10469 = vunpack.c.h.b16 %v7748
    %v10470 = vunpack.c.l.b16 %v7749
    %v10471 = vunpack.c.h.b16 %v7749
    %v10472 = vunpack.c.l.b16 %v7750
    %v10473 = vunpack.c.h.b16 %v7750
    %v10474 = vunpack.c.l.b16 %v7751
    %v10475 = vunpack.c.h.b16 %v7751
    %v10476 = vunpack.c.l.b16 %v7752
    %v10477 = vunpack.c.h.b16 %v7752
    %v10478 = vunpack.c.l.b16 %v7753
    %v10479 = vunpack.c.h.b16 %v7753
    %v10480 = vunpack.c.l.b16 %v7754
    %v10481 = vunpack.c.h.b16 %v7754
    %v10482 = vunpack.c.l.b16 %v7755
    %v10483 = vunpack.c.h.b16 %v7755
    %v10484 = vunpack.c.l.b16 %v7756
    %v10485 = vunpack.c.h.b16 %v7756
    %v10486 = vunpack.c.l.b16 %v7757
    %v10487 = vunpack.c.h.b16 %v7757
    %v10488 = vpack.c.b16 %v8704, %v8696
    %v10489 = vpack.c.b16 %v8705, %v8697
    %v10490 = vpack.c.b16 %v8706, %v8698
    %v10491 = vpack.c.b16 %v8707, %v8699
    %v10492 = vpack.c.b16 %v8708, %v8700
    %v10493 = vpack.c.b16 %v8709, %v8701
    %v10494 = vpack.c.b16 %v8710, %v8702
    %v10495 = vpack.c.b16 %v8711, %v8703
    %v10496 = vpack.c.b16 %v8720, %v8712
    %v10497 = vpack.c.b16 %v8721, %v8713
    %v10498 = vpack.c.b16 %v8722, %v8714
    %v10499 = vpack.c.b16 %v8723, %v8715
    %v10500 = vpack.c.b16 %v8724, %v8716
    %v10501 = vpack.c.b16 %v8725, %v8717
    %v10502 = vpack.c.b16 %v8726, %v8718
    %v10503 = vpack.c.b16 %v8727, %v8719
    %v10504 = vpack.c.b16 %v8736, %v8728
    %v10505 = vpack.c.b16 %v8737, %v8729
    %v10506 = vpack.c.b16 %v8738, %v8730
    %v10507 = vpack.c.b16 %v8739, %v8731
    %v10508 = vpack.c.b16 %v8740, %v8732
    %v10509 = vpack.c.b16 %v8741, %v8733
    %v10510 = vpack.c.b16 %v8742, %v8734
    %v10511 = vpack.c.b16 %v8743, %v8735
    %v10512 = vpack.c.b16 %v8752, %v8744
    %v10513 = vpack.c.b16 %v8753, %v8745
    %v10514 = vpack.c.b16 %v8754, %v8746
    %v10515 = vpack.c.b16 %v8755, %v8747
    %v10516 = vpack.c.b16 %v8756, %v8748
    %v10517 = vpack.c.b16 %v8757, %v8749
    %v10518 = vpack.c.b16 %v8758, %v8750
    %v10519 = vpack.c.b16 %v8759, %v8751
    %v10520 = vpack.c.b16 %v8768, %v8760
    %v10521 = vpack.c.b16 %v8769, %v8761
    %v10522 = vpack.c.b16 %v8770, %v8762
    %v10523 = vpack.c.b16 %v8771, %v8763
    %v10524 = vpack.c.b16 %v8772, %v8764
    %v10525 = vpack.c.b16 %v8773, %v8765
    %v10526 = vpack.c.b16 %v8774, %v8766
    %v10527 = vpack.c.b16 %v8775, %v8767
    %v10528 = vpack.c.b16 %v8784, %v8776
    %v10529 = vpack.c.b16 %v8785, %v8777
    %v10530 = vpack.c.b16 %v8786, %v8778
    %v10531 = vpack.c.b16 %v8787, %v8779
    %v10532 = vpack.c.b16 %v8788, %v8780
    %v10533 = vpack.c.b16 %v8789, %v8781
    %v10534 = vpack.c.b16 %v8790, %v8782
    %v10535 = vpack.c.b16 %v8791, %v8783
    %v10536 = vpack.c.b16 %v8800, %v8792
    %v10537 = vpack.c.b16 %v8801, %v8793
    %v10538 = vpack.c.b16 %v8802, %v8794
    %v10539 = vpack.c.b16 %v8803, %v8795
    %v10540 = vpack.c.b16 %v8804, %v8796
    %v10541 = vpack.c.b16 %v8805, %v8797
    %v10542 = vpack.c.b16 %v8806, %v8798
    %v10543 = vpack.c.b16 %v8807, %v8799
    %v10544 = vpack.c.b16 %v8816, %v8808
    %v10545 = vpack.c.b16 %v8817, %v8809
    %v10546 = vpack.c.b16 %v8818, %v8810
    %v10547 = vpack.c.b16 %v8819, %v8811
    %v10548 = vpack.c.b16 %v8820, %v8812
    %v10549 = vpack.c.b16 %v8821, %v8813
    %v10550 = vpack.c.b16 %v8822, %v8814
    %v10551 = vpack.c.b16 %v8823, %v8815
    %v10552 = vpack.c.b16 %v8832, %v8824
    %v10553 = vpack.c.b16 %v8833, %v8825
    %v10554 = vpack.c.b16 %v8834, %v8826
    %v10555 = vpack.c.b16 %v8835, %v8827
    %v10556 = vpack.c.b16 %v8836, %v8828
    %v10557 = vpack.c.b16 %v8837, %v8829
    %v10558 = vpack.c.b16 %v8838, %v8830
    %v10559 = vpack.c.b16 %v8839, %v8831
    %v10560 = vpack.c.b16 %v8848, %v8840
    %v10561 = vpack.c.b16 %v8849, %v8841
    %v10562 = vpack.c.b16 %v8850, %v8842
    %v10563 = vpack.c.b16 %v8851, %v8843
    %v10564 = vpack.c.b16 %v8852, %v8844
    %v10565 = vpack.c.b16 %v8853, %v8845
    %v10566 = vpack.c.b16 %v8854, %v8846
    %v10567 = vpack.c.b16 %v8855, %v8847
    %v10568 = vpack.c.b16 %v8864, %v8856
    %v10569 = vpack.c.b16 %v8865, %v8857
    %v10570 = vpack.c.b16 %v8866, %v8858
    %v10571 = vpack.c.b16 %v8867, %v8859
    %v10572 = vpack.c.b16 %v8868, %v8860
    %v10573 = vpack.c.b16 %v8869, %v8861
    %v10574 = vpack.c.b16 %v8870, %v8862
    %v10575 = vpack.c.b16 %v8871, %v8863
    %v10576 = vpack.c.b16 %v8880, %v8872
    %v10577 = vpack.c.b16 %v8881, %v8873
    %v10578 = vpack.c.b16 %v8882, %v8874
    %v10579 = vpack.c.b16 %v8883, %v8875
    %v10580 = vpack.c.b16 %v8884, %v8876
    %v10581 = vpack.c.b16 %v8885, %v8877
    %v10582 = vpack.c.b16 %v8886, %v8878
    %v10583 = vpack.c.b16 %v8887, %v8879
    %v10584 = vpack.c.b16 %v8896, %v8888
    %v10585 = vpack.c.b16 %v8897, %v8889
    %v10586 = vpack.c.b16 %v8898, %v8890
    %v10587 = vpack.c.b16 %v8899, %v8891
    %v10588 = vpack.c.b16 %v8900, %v8892
    %v10589 = vpack.c.b16 %v8901, %v8893
    %v10590 = vpack.c.b16 %v8902, %v8894
    %v10591 = vpack.c.b16 %v8903, %v8895
    %v10592 = vpack.c.b16 %v8912, %v8904
    %v10593 = vpack.c.b16 %v8913, %v8905
    %v10594 = vpack.c.b16 %v8914, %v8906
    %v10595 = vpack.c.b16 %v8915, %v8907
    %v10596 = vpack.c.b16 %v8916, %v8908
    %v10597 = vpack.c.b16 %v8917, %v8909
    %v10598 = vpack.c.b16 %v8918, %v8910
    %v10599 = vpack.c.b16 %v8919, %v8911
    %v10600 = vpack.c.b16 %v8928, %v8920
    %v10601 = vpack.c.b16 %v8929, %v8921
    %v10602 = vpack.c.b16 %v8930, %v8922
    %v10603 = vpack.c.b16 %v8931, %v8923
    %v10604 = vpack.c.b16 %v8932, %v8924
    %v10605 = vpack.c.b16 %v8933, %v8925
    %v10606 = vpack.c.b16 %v8934, %v8926
    %v10607 = vpack.c.b16 %v8935, %v8927
    %v10608 = vpack.c.b16 %v8944, %v8936
    %v10609 = vpack.c.b16 %v8945, %v8937
    %v10610 = vpack.c.b16 %v8946, %v8938
    %v10611 = vpack.c.b16 %v8947, %v8939
    %v10612 = vpack.c.b16 %v8948, %v8940
    %v10613 = vpack.c.b16 %v8949, %v8941
    %v10614 = vpack.c.b16 %v8950, %v8942
    %v10615 = vpack.c.b16 %v8951, %v8943
    %v10616 = vpack.c.b16 %v8960, %v8952
    %v10617 = vpack.c.b16 %v8961, %v8953
    %v10618 = vpack.c.b16 %v8962, %v8954
    %v10619 = vpack.c.b16 %v8963, %v8955
    %v10620 = vpack.c.b16 %v8964, %v8956
    %v10621 = vpack.c.b16 %v8965, %v8957
    %v10622 = vpack.c.b16 %v8966, %v8958
    %v10623 = vpack.c.b16 %v8967, %v8959
    %v10624 = vpack.c.b16 %v8976, %v8968
    %v10625 = vpack.c.b16 %v8977, %v8969
    %v10626 = vpack.c.b16 %v8978, %v8970
    %v10627 = vpack.c.b16 %v8979, %v8971
    %v10628 = vpack.c.b16 %v8980, %v8972
    %v10629 = vpack.c.b16 %v8981, %v8973
    %v10630 = vpack.c.b16 %v8982, %v8974
    %v10631 = vpack.c.b16 %v8983, %v8975
    %v10632 = vpack.c.b16 %v8992, %v8984
    %v10633 = vpack.c.b16 %v8993, %v8985
    %v10634 = vpack.c.b16 %v8994, %v8986
    %v10635 = vpack.c.b16 %v8995, %v8987
    %v10636 = vpack.c.b16 %v8996, %v8988
    %v10637 = vpack.c.b16 %v8997, %v8989
    %v10638 = vpack.c.b16 %v8998, %v8990
    %v10639 = vpack.c.b16 %v8999, %v8991
    %v10640 = vpack.c.b16 %v9008, %v9000
    %v10641 = vpack.c.b16 %v9009, %v9001
    %v10642 = vpack.c.b16 %v9010, %v9002
    %v10643 = vpack.c.b16 %v9011, %v9003
    %v10644 = vpack.c.b16 %v9012, %v9004
    %v10645 = vpack.c.b16 %v9013, %v9005
    %v10646 = vpack.c.b16 %v9014, %v9006
    %v10647 = vpack.c.b16 %v9015, %v9007
    %v10648 = vpack.c.b16 %v9024, %v9016
    %v10649 = vpack.c.b16 %v9025, %v9017
    %v10650 = vpack.c.b16 %v9026, %v9018
    %v10651 = vpack.c.b16 %v9027, %v9019
    %v10652 = vpack.c.b16 %v9028, %v9020
    %v10653 = vpack.c.b16 %v9029, %v9021
    %v10654 = vpack.c.b16 %v9030, %v9022
    %v10655 = vpack.c.b16 %v9031, %v9023
    %v10656 = vpack.c.b16 %v9040, %v9032
    %v10657 = vpack.c.b16 %v9041, %v9033
    %v10658 = vpack.c.b16 %v9042, %v9034
    %v10659 = vpack.c.b16 %v9043, %v9035
    %v10660 = vpack.c.b16 %v9044, %v9036
    %v10661 = vpack.c.b16 %v9045, %v9037
    %v10662 = vpack.c.b16 %v9046, %v9038
    %v10663 = vpack.c.b16 %v9047, %v9039
    %v10664 = vpack.c.b16 %v9056, %v9048
    %v10665 = vpack.c.b16 %v9057, %v9049
    %v10666 = vpack.c.b16 %v9058, %v9050
    %v10667 = vpack.c.b16 %v9059, %v9051
    %v10668 = vpack.c.b16 %v9060, %v9052
    %v10669 = vpack.c.b16 %v9061, %v9053
    %v10670 = vpack.c.b16 %v9062, %v9054
    %v10671 = vpack.c.b16 %v9063, %v9055
    %v10672 = vpack.c.b16 %v9072, %v9064
    %v10673 = vpack.c.b16 %v9073, %v9065
    %v10674 = vpack.c.b16 %v9074, %v9066
    %v10675 = vpack.c.b16 %v9075, %v9067
    %v10676 = vpack.c.b16 %v9076, %v9068
    %v10677 = vpack.c.b16 %v9077, %v9069
    %v10678 = vpack.c.b16 %v9078, %v9070
    %v10679 = vpack.c.b16 %v9079, %v9071
    %v10680 = vpack.c.b16 %v9088, %v9080
    %v10681 = vpack.c.b16 %v9089, %v9081
    %v10682 = vpack.c.b16 %v9090, %v9082
    %v10683 = vpack.c.b16 %v9091, %v9083
    %v10684 = vpack.c.b16 %v9092, %v9084
    %v10685 = vpack.c.b16 %v9093, %v9085
    %v10686 = vpack.c.b16 %v9094, %v9086
    %v10687 = vpack.c.b16 %v9095, %v9087
    %v10688 = vpack.c.b16 %v9104, %v9096
    %v10689 = vpack.c.b16 %v9105, %v9097
    %v10690 = vpack.c.b16 %v9106, %v9098
    %v10691 = vpack.c.b16 %v9107, %v9099
    %v10692 = vpack.c.b16 %v9108, %v9100
    %v10693 = vpack.c.b16 %v9109, %v9101
    %v10694 = vpack.c.b16 %v9110, %v9102
    %v10695 = vpack.c.b16 %v9111, %v9103
    %v10696 = vpack.c.b16 %v9120, %v9112
    %v10697 = vpack.c.b16 %v9121, %v9113
    %v10698 = vpack.c.b16 %v9122, %v9114
    %v10699 = vpack.c.b16 %v9123, %v9115
    %v10700 = vpack.c.b16 %v9124, %v9116
    %v10701 = vpack.c.b16 %v9125, %v9117
    %v10702 = vpack.c.b16 %v9126, %v9118
    %v10703 = vpack.c.b16 %v9127, %v9119
    %v10704 = vpack.c.b16 %v9136, %v9128
    %v10705 = vpack.c.b16 %v9137, %v9129
    %v10706 = vpack.c.b16 %v9138, %v9130
    %v10707 = vpack.c.b16 %v9139, %v9131
    %v10708 = vpack.c.b16 %v9140, %v9132
    %v10709 = vpack.c.b16 %v9141, %v9133
    %v10710 = vpack.c.b16 %v9142, %v9134
    %v10711 = vpack.c.b16 %v9143, %v9135
    %v10712 = vpack.c.b16 %v9152, %v9144
    %v10713 = vpack.c.b16 %v9153, %v9145
    %v10714 = vpack.c.b16 %v9154, %v9146
    %v10715 = vpack.c.b16 %v9155, %v9147
    %v10716 = vpack.c.b16 %v9156, %v9148
    %v10717 = vpack.c.b16 %v9157, %v9149
    %v10718 = vpack.c.b16 %v9158, %v9150
    %v10719 = vpack.c.b16 %v9159, %v9151
    %v10720 = vpack.c.b16 %v9168, %v9160
    %v10721 = vpack.c.b16 %v9169, %v9161
    %v10722 = vpack.c.b16 %v9170, %v9162
    %v10723 = vpack.c.b16 %v9171, %v9163
    %v10724 = vpack.c.b16 %v9172, %v9164
    %v10725 = vpack.c.b16 %v9173, %v9165
    %v10726 = vpack.c.b16 %v9174, %v9166
    %v10727 = vpack.c.b16 %v9175, %v9167
    %v10728 = vpack.c.b16 %v9184, %v9176
    %v10729 = vpack.c.b16 %v9185, %v9177
    %v10730 = vpack.c.b16 %v9186, %v9178
    %v10731 = vpack.c.b16 %v9187, %v9179
    %v10732 = vpack.c.b16 %v9188, %v9180
    %v10733 = vpack.c.b16 %v9189, %v9181
    %v10734 = vpack.c.b16 %v9190, %v9182
    %v10735 = vpack.c.b16 %v9191, %v9183
    %v10736 = vpack.c.b16 %v9200, %v9192
    %v10737 = vpack.c.b16 %v9201, %v9193
    %v10738 = vpack.c.b16 %v9202, %v9194
    %v10739 = vpack.c.b16 %v9203, %v9195
    %v10740 = vpack.c.b16 %v9204, %v9196
    %v10741 = vpack.c.b16 %v9205, %v9197
    %v10742 = vpack.c.b16 %v9206, %v9198
    %v10743 = vpack.c.b16 %v9207, %v9199
    %v10744 = vpack.c.b16 %v9216, %v9208
    %v10745 = vpack.c.b16 %v9217, %v9209
    %v10746 = vpack.c.b16 %v9218, %v9210
    %v10747 = vpack.c.b16 %v9219, %v9211
    %v10748 = vpack.c.b16 %v9220, %v9212
    %v10749 = vpack.c.b16 %v9221, %v9213
    %v10750 = vpack.c.b16 %v9222, %v9214
    %v10751 = vpack.c.b16 %v9223, %v9215
    %v10752 = vpack.c.b16 %v9232, %v9224
    %v10753 = vpack.c.b16 %v9233, %v9225
    %v10754 = vpack.c.b16 %v9234, %v9226
    %v10755 = vpack.c.b16 %v9235, %v9227
    %v10756 = vpack.c.b16 %v9236, %v9228
    %v10757 = vpack.c.b16 %v9237, %v9229
    %v10758 = vpack.c.b16 %v9238, %v9230
    %v10759 = vpack.c.b16 %v9239, %v9231
    %v10760 = vpack.c.b16 %v9248, %v9240
    %v10761 = vpack.c.b16 %v9249, %v9241
    %v10762 = vpack.c.b16 %v9250, %v9242
    %v10763 = vpack.c.b16 %v9251, %v9243
    %v10764 = vpack.c.b16 %v9252, %v9244
    %v10765 = vpack.c.b16 %v9253, %v9245
    %v10766 = vpack.c.b16 %v9254, %v9246
    %v10767 = vpack.c.b16 %v9255, %v9247
    %v10768 = vpack.c.b16 %v9264, %v9256
    %v10769 = vpack.c.b16 %v9265, %v9257
    %v10770 = vpack.c.b16 %v9266, %v9258
    %v10771 = vpack.c.b16 %v9267, %v9259
    %v10772 = vpack.c.b16 %v9268, %v9260
    %v10773 = vpack.c.b16 %v9269, %v9261
    %v10774 = vpack.c.b16 %v9270, %v9262
    %v10775 = vpack.c.b16 %v9271, %v9263
    %v10776 = vpack.c.b16 %v9280, %v9272
    %v10777 = vpack.c.b16 %v9281, %v9273
    %v10778 = vpack.c.b16 %v9282, %v9274
    %v10779 = vpack.c.b16 %v9283, %v9275
    %v10780 = vpack.c.b16 %v9284, %v9276
    %v10781 = vpack.c.b16 %v9285, %v9277
    %v10782 = vpack.c.b16 %v9286, %v9278
    %v10783 = vpack.c.b16 %v9287, %v9279
    %v10784 = vpack.c.b16 %v9296, %v9288
    %v10785 = vpack.c.b16 %v9297, %v9289
    %v10786 = vpack.c.b16 %v9298, %v9290
    %v10787 = vpack.c.b16 %v9299, %v9291
    %v10788 = vpack.c.b16 %v9300, %v9292
    %v10789 = vpack.c.b16 %v9301, %v9293
    %v10790 = vpack.c.b16 %v9302, %v9294
    %v10791 = vpack.c.b16 %v9303, %v9295
    %v10792 = vpack.c.b16 %v9312, %v9304
    %v10793 = vpack.c.b16 %v9313, %v9305
    %v10794 = vpack.c.b16 %v9314, %v9306
    %v10795 = vpack.c.b16 %v9315, %v9307
    %v10796 = vpack.c.b16 %v9316, %v9308
    %v10797 = vpack.c.b16 %v9317, %v9309
    %v10798 = vpack.c.b16 %v9318, %v9310
    %v10799 = vpack.c.b16 %v9319, %v9311
    %v10800 = vpack.c.b16 %v9328, %v9320
    %v10801 = vpack.c.b16 %v9329, %v9321
    %v10802 = vpack.c.b16 %v9330, %v9322
    %v10803 = vpack.c.b16 %v9331, %v9323
    %v10804 = vpack.c.b16 %v9332, %v9324
    %v10805 = vpack.c.b16 %v9333, %v9325
    %v10806 = vpack.c.b16 %v9334, %v9326
    %v10807 = vpack.c.b16 %v9335, %v9327
    %v10808 = vpack.c.b16 %v9344, %v9336
    %v10809 = vpack.c.b16 %v9345, %v9337
    %v10810 = vpack.c.b16 %v9346, %v9338
    %v10811 = vpack.c.b16 %v9347, %v9339
    %v10812 = vpack.c.b16 %v9348, %v9340
    %v10813 = vpack.c.b16 %v9349, %v9341
    %v10814 = vpack.c.b16 %v9350, %v9342
    %v10815 = vpack.c.b16 %v9351, %v9343
    %v10816 = vpack.c.b16 %v9360, %v9352
    %v10817 = vpack.c.b16 %v9361, %v9353
    %v10818 = vpack.c.b16 %v9362, %v9354
    %v10819 = vpack.c.b16 %v9363, %v9355
    %v10820 = vpack.c.b16 %v9364, %v9356
    %v10821 = vpack.c.b16 %v9365, %v9357
    %v10822 = vpack.c.b16 %v9366, %v9358
    %v10823 = vpack.c.b16 %v9367, %v9359
    %v10824 = vpack.c.b16 %v9376, %v9368
    %v10825 = vpack.c.b16 %v9377, %v9369
    %v10826 = vpack.c.b16 %v9378, %v9370
    %v10827 = vpack.c.b16 %v9379, %v9371
    %v10828 = vpack.c.b16 %v9380, %v9372
    %v10829 = vpack.c.b16 %v9381, %v9373
    %v10830 = vpack.c.b16 %v9382, %v9374
    %v10831 = vpack.c.b16 %v9383, %v9375
    %v10832 = vpack.c.b16 %v9392, %v9384
    %v10833 = vpack.c.b16 %v9393, %v9385
    %v10834 = vpack.c.b16 %v9394, %v9386
    %v10835 = vpack.c.b16 %v9395, %v9387
    %v10836 = vpack.c.b16 %v9396, %v9388
    %v10837 = vpack.c.b16 %v9397, %v9389
    %v10838 = vpack.c.b16 %v9398, %v9390
    %v10839 = vpack.c.b16 %v9399, %v9391
    %v10840 = vpack.c.b16 %v9408, %v9400
    %v10841 = vpack.c.b16 %v9409, %v9401
    %v10842 = vpack.c.b16 %v9410, %v9402
    %v10843 = vpack.c.b16 %v9411, %v9403
    %v10844 = vpack.c.b16 %v9412, %v9404
    %v10845 = vpack.c.b16 %v9413, %v9405
    %v10846 = vpack.c.b16 %v9414, %v9406
    %v10847 = vpack.c.b16 %v9415, %v9407
    %v10848 = vpack.c.b16 %v9424, %v9416
    %v10849 = vpack.c.b16 %v9425, %v9417
    %v10850 = vpack.c.b16 %v9426, %v9418
    %v10851 = vpack.c.b16 %v9427, %v9419
    %v10852 = vpack.c.b16 %v9428, %v9420
    %v10853 = vpack.c.b16 %v9429, %v9421
    %v10854 = vpack.c.b16 %v9430, %v9422
    %v10855 = vpack.c.b16 %v9431, %v9423
    %v10856 = vpack.c.b16 %v9440, %v9432
    %v10857 = vpack.c.b16 %v9441, %v9433
    %v10858 = vpack.c.b16 %v9442, %v9434
    %v10859 = vpack.c.b16 %v9443, %v9435
    %v10860 = vpack.c.b16 %v9444, %v9436
    %v10861 = vpack.c.b16 %v9445, %v9437
    %v10862 = vpack.c.b16 %v9446, %v9438
    %v10863 = vpack.c.b16 %v9447, %v9439
    %v10864 = vpack.c.b16 %v9456, %v9448
    %v10865 = vpack.c.b16 %v9457, %v9449
    %v10866 = vpack.c.b16 %v9458, %v9450
    %v10867 = vpack.c.b16 %v9459, %v9451
    %v10868 = vpack.c.b16 %v9460, %v9452
    %v10869 = vpack.c.b16 %v9461, %v9453
    %v10870 = vpack.c.b16 %v9462, %v9454
    %v10871 = vpack.c.b16 %v9463, %v9455
    %v10872 = vpack.c.b16 %v9472, %v9464
    %v10873 = vpack.c.b16 %v9473, %v9465
    %v10874 = vpack.c.b16 %v9474, %v9466
    %v10875 = vpack.c.b16 %v9475, %v9467
    %v10876 = vpack.c.b16 %v9476, %v9468
    %v10877 = vpack.c.b16 %v9477, %v9469
    %v10878 = vpack.c.b16 %v9478, %v9470
    %v10879 = vpack.c.b16 %v9479, %v9471
    %v10880 = vpack.c.b16 %v9488, %v9480
    %v10881 = vpack.c.b16 %v9489, %v9481
    %v10882 = vpack.c.b16 %v9490, %v9482
    %v10883 = vpack.c.b16 %v9491, %v9483
    %v10884 = vpack.c.b16 %v9492, %v9484
    %v10885 = vpack.c.b16 %v9493, %v9485
    %v10886 = vpack.c.b16 %v9494, %v9486
    %v10887 = vpack.c.b16 %v9495, %v9487
    %v10888 = vpack.c.b16 %v9504, %v9496
    %v10889 = vpack.c.b16 %v9505, %v9497
    %v10890 = vpack.c.b16 %v9506, %v9498
    %v10891 = vpack.c.b16 %v9507, %v9499
    %v10892 = vpack.c.b16 %v9508, %v9500
    %v10893 = vpack.c.b16 %v9509, %v9501
    %v10894 = vpack.c.b16 %v9510, %v9502
    %v10895 = vpack.c.b16 %v9511, %v9503
    %v10896 = vpack.c.b16 %v9520, %v9512
    %v10897 = vpack.c.b16 %v9521, %v9513
    %v10898 = vpack.c.b16 %v9522, %v9514
    %v10899 = vpack.c.b16 %v9523, %v9515
    %v10900 = vpack.c.b16 %v9524, %v9516
    %v10901 = vpack.c.b16 %v9525, %v9517
    %v10902 = vpack.c.b16 %v9526, %v9518
    %v10903 = vpack.c.b16 %v9527, %v9519
    %v10904 = vpack.c.b16 %v9536, %v9528
    %v10905 = vpack.c.b16 %v9537, %v9529
    %v10906 = vpack.c.b16 %v9538, %v9530
    %v10907 = vpack.c.b16 %v9539, %v9531
    %v10908 = vpack.c.b16 %v9540, %v9532
    %v10909 = vpack.c.b16 %v9541, %v9533
    %v10910 = vpack.c.b16 %v9542, %v9534
    %v10911 = vpack.c.b16 %v9543, %v9535
    %v10912 = vpack.c.b16 %v9552, %v9544
    %v10913 = vpack.c.b16 %v9553, %v9545
    %v10914 = vpack.c.b16 %v9554, %v9546
    %v10915 = vpack.c.b16 %v9555, %v9547
    %v10916 = vpack.c.b16 %v9556, %v9548
    %v10917 = vpack.c.b16 %v9557, %v9549
    %v10918 = vpack.c.b16 %v9558, %v9550
    %v10919 = vpack.c.b16 %v9559, %v9551
    %v10920 = vpack.c.b16 %v9568, %v9560
    %v10921 = vpack.c.b16 %v9569, %v9561
    %v10922 = vpack.c.b16 %v9570, %v9562
    %v10923 = vpack.c.b16 %v9571, %v9563
    %v10924 = vpack.c.b16 %v9572, %v9564
    %v10925 = vpack.c.b16 %v9573, %v9565
    %v10926 = vpack.c.b16 %v9574, %v9566
    %v10927 = vpack.c.b16 %v9575, %v9567
    %v10928 = vpack.c.b16 %v9584, %v9576
    %v10929 = vpack.c.b16 %v9585, %v9577
    %v10930 = vpack.c.b16 %v9586, %v9578
    %v10931 = vpack.c.b16 %v9587, %v9579
    %v10932 = vpack.c.b16 %v9588, %v9580
    %v10933 = vpack.c.b16 %v9589, %v9581
    %v10934 = vpack.c.b16 %v9590, %v9582
    %v10935 = vpack.c.b16 %v9591, %v9583
    %v10936 = vpack.c.b16 %v9600, %v9592
    %v10937 = vpack.c.b16 %v9601, %v9593
    %v10938 = vpack.c.b16 %v9602, %v9594
    %v10939 = vpack.c.b16 %v9603, %v9595
    %v10940 = vpack.c.b16 %v9604, %v9596
    %v10941 = vpack.c.b16 %v9605, %v9597
    %v10942 = vpack.c.b16 %v9606, %v9598
    %v10943 = vpack.c.b16 %v9607, %v9599
    %v10944 = vpack.c.b16 %v9616, %v9608
    %v10945 = vpack.c.b16 %v9617, %v9609
    %v10946 = vpack.c.b16 %v9618, %v9610
    %v10947 = vpack.c.b16 %v9619, %v9611
    %v10948 = vpack.c.b16 %v9620, %v9612
    %v10949 = vpack.c.b16 %v9621, %v9613
    %v10950 = vpack.c.b16 %v9622, %v9614
    %v10951 = vpack.c.b16 %v9623, %v9615
    %v10952 = vpack.c.b16 %v9632, %v9624
    %v10953 = vpack.c.b16 %v9633, %v9625
    %v10954 = vpack.c.b16 %v9634, %v9626
    %v10955 = vpack.c.b16 %v9635, %v9627
    %v10956 = vpack.c.b16 %v9636, %v9628
    %v10957 = vpack.c.b16 %v9637, %v9629
    %v10958 = vpack.c.b16 %v9638, %v9630
    %v10959 = vpack.c.b16 %v9639, %v9631
    %v10960 = vpack.c.b16 %v9648, %v9640
    %v10961 = vpack.c.b16 %v9649, %v9641
    %v10962 = vpack.c.b16 %v9650, %v9642
    %v10963 = vpack.c.b16 %v9651, %v9643
    %v10964 = vpack.c.b16 %v9652, %v9644
    %v10965 = vpack.c.b16 %v9653, %v9645
    %v10966 = vpack.c.b16 %v9654, %v9646
    %v10967 = vpack.c.b16 %v9655, %v9647
    %v10968 = vpack.c.b16 %v9664, %v9656
    %v10969 = vpack.c.b16 %v9665, %v9657
    %v10970 = vpack.c.b16 %v9666, %v9658
    %v10971 = vpack.c.b16 %v9667, %v9659
    %v10972 = vpack.c.b16 %v9668, %v9660
    %v10973 = vpack.c.b16 %v9669, %v9661
    %v10974 = vpack.c.b16 %v9670, %v9662
    %v10975 = vpack.c.b16 %v9671, %v9663
    %v10976 = vpack.c.b16 %v9680, %v9672
    %v10977 = vpack.c.b16 %v9681, %v9673
    %v10978 = vpack.c.b16 %v9682, %v9674
    %v10979 = vpack.c.b16 %v9683, %v9675
    %v10980 = vpack.c.b16 %v9684, %v9676
    %v10981 = vpack.c.b16 %v9685, %v9677
    %v10982 = vpack.c.b16 %v9686, %v9678
    %v10983 = vpack.c.b16 %v9687, %v9679
    %v10984 = vpack.c.b16 %v9696, %v9688
    %v10985 = vpack.c.b16 %v9697, %v9689
    %v10986 = vpack.c.b16 %v9698, %v9690
    %v10987 = vpack.c.b16 %v9699, %v9691
    %v10988 = vpack.c.b16 %v9700, %v9692
    %v10989 = vpack.c.b16 %v9701, %v9693
    %v10990 = vpack.c.b16 %v9702, %v9694
    %v10991 = vpack.c.b16 %v9703, %v9695
    %v10992 = vpack.c.b16 %v9712, %v9704
    %v10993 = vpack.c.b16 %v9713, %v9705
    %v10994 = vpack.c.b16 %v9714, %v9706
    %v10995 = vpack.c.b16 %v9715, %v9707
    %v10996 = vpack.c.b16 %v9716, %v9708
    %v10997 = vpack.c.b16 %v9717, %v9709
    %v10998 = vpack.c.b16 %v9718, %v9710
    %v10999 = vpack.c.b16 %v9719, %v9711
    %v11000 = vpack.c.b16 %v9728, %v9720
    %v11001 = vpack.c.b16 %v9729, %v9721
    %v11002 = vpack.c.b16 %v9730, %v9722
    %v11003 = vpack.c.b16 %v9731, %v9723
    %v11004 = vpack.c.b16 %v9732, %v9724
    %v11005 = vpack.c.b16 %v9733, %v9725
    %v11006 = vpack.c.b16 %v9734, %v9726
    %v11007 = vpack.c.b16 %v9735, %v9727
    %v11008 = vpack.c.b16 %v9744, %v9736
    %v11009 = vpack.c.b16 %v9745, %v9737
    %v11010 = vpack.c.b16 %v9746, %v9738
    %v11011 = vpack.c.b16 %v9747, %v9739
    %v11012 = vpack.c.b16 %v9748, %v9740
    %v11013 = vpack.c.b16 %v9749, %v9741
    %v11014 = vpack.c.b16 %v9750, %v9742
    %v11015 = vpack.c.b16 %v9751, %v9743
    %v11016 = vpack.c.b16 %v9760, %v9752
    %v11017 = vpack.c.b16 %v9761, %v9753
    %v11018 = vpack.c.b16 %v9762, %v9754
    %v11019 = vpack.c.b16 %v9763, %v9755
    %v11020 = vpack.c.b16 %v9764, %v9756
    %v11021 = vpack.c.b16 %v9765, %v9757
    %v11022 = vpack.c.b16 %v9766, %v9758
    %v11023 = vpack.c.b16 %v9767, %v9759
    %v11024 = vpack.c.b16 %v9776, %v9768
    %v11025 = vpack.c.b16 %v9777, %v9769
    %v11026 = vpack.c.b16 %v9778, %v9770
    %v11027 = vpack.c.b16 %v9779, %v9771
    %v11028 = vpack.c.b16 %v9780, %v9772
    %v11029 = vpack.c.b16 %v9781, %v9773
    %v11030 = vpack.c.b16 %v9782, %v9774
    %v11031 = vpack.c.b16 %v9783, %v9775
    %v11032 = vpack.c.b16 %v9792, %v9784
    %v11033 = vpack.c.b16 %v9793, %v9785
    %v11034 = vpack.c.b16 %v9794, %v9786
    %v11035 = vpack.c.b16 %v9795, %v9787
    %v11036 = vpack.c.b16 %v9796, %v9788
    %v11037 = vpack.c.b16 %v9797, %v9789
    %v11038 = vpack.c.b16 %v9798, %v9790
    %v11039 = vpack.c.b16 %v9799, %v9791
    %v11040 = vpack.c.b16 %v9808, %v9800
    %v11041 = vpack.c.b16 %v9809, %v9801
    %v11042 = vpack.c.b16 %v9810, %v9802
    %v11043 = vpack.c.b16 %v9811, %v9803
    %v11044 = vpack.c.b16 %v9812, %v9804
    %v11045 = vpack.c.b16 %v9813, %v9805
    %v11046 = vpack.c.b16 %v9814, %v9806
    %v11047 = vpack.c.b16 %v9815, %v9807
    %v11048 = vpack.c.b16 %v9824, %v9816
    %v11049 = vpack.c.b16 %v9825, %v9817
    %v11050 = vpack.c.b16 %v9826, %v9818
    %v11051 = vpack.c.b16 %v9827, %v9819
    %v11052 = vpack.c.b16 %v9828, %v9820
    %v11053 = vpack.c.b16 %v9829, %v9821
    %v11054 = vpack.c.b16 %v9830, %v9822
    %v11055 = vpack.c.b16 %v9831, %v9823
    %v11056 = vpack.c.b16 %v9840, %v9832
    %v11057 = vpack.c.b16 %v9841, %v9833
    %v11058 = vpack.c.b16 %v9842, %v9834
    %v11059 = vpack.c.b16 %v9843, %v9835
    %v11060 = vpack.c.b16 %v9844, %v9836
    %v11061 = vpack.c.b16 %v9845, %v9837
    %v11062 = vpack.c.b16 %v9846, %v9838
    %v11063 = vpack.c.b16 %v9847, %v9839
    %v11064 = vpack.c.b16 %v9856, %v9848
    %v11065 = vpack.c.b16 %v9857, %v9849
    %v11066 = vpack.c.b16 %v9858, %v9850
    %v11067 = vpack.c.b16 %v9859, %v9851
    %v11068 = vpack.c.b16 %v9860, %v9852
    %v11069 = vpack.c.b16 %v9861, %v9853
    %v11070 = vpack.c.b16 %v9862, %v9854
    %v11071 = vpack.c.b16 %v9863, %v9855
    %v11072 = vpack.c.b16 %v9872, %v9864
    %v11073 = vpack.c.b16 %v9873, %v9865
    %v11074 = vpack.c.b16 %v9874, %v9866
    %v11075 = vpack.c.b16 %v9875, %v9867
    %v11076 = vpack.c.b16 %v9876, %v9868
    %v11077 = vpack.c.b16 %v9877, %v9869
    %v11078 = vpack.c.b16 %v9878, %v9870
    %v11079 = vpack.c.b16 %v9879, %v9871
    %v11080 = vpack.c.b16 %v9888, %v9880
    %v11081 = vpack.c.b16 %v9889, %v9881
    %v11082 = vpack.c.b16 %v9890, %v9882
    %v11083 = vpack.c.b16 %v9891, %v9883
    %v11084 = vpack.c.b16 %v9892, %v9884
    %v11085 = vpack.c.b16 %v9893, %v9885
    %v11086 = vpack.c.b16 %v9894, %v9886
    %v11087 = vpack.c.b16 %v9895, %v9887
    %v11088 = vpack.c.b16 %v9904, %v9896
    %v11089 = vpack.c.b16 %v9905, %v9897
    %v11090 = vpack.c.b16 %v9906, %v9898
    %v11091 = vpack.c.b16 %v9907, %v9899
    %v11092 = vpack.c.b16 %v9908, %v9900
    %v11093 = vpack.c.b16 %v9909, %v9901
    %v11094 = vpack.c.b16 %v9910, %v9902
    %v11095 = vpack.c.b16 %v9911, %v9903
    %v11096 = vpack.c.b16 %v9920, %v9912
    %v11097 = vpack.c.b16 %v9921, %v9913
    %v11098 = vpack.c.b16 %v9922, %v9914
    %v11099 = vpack.c.b16 %v9923, %v9915
    %v11100 = vpack.c.b16 %v9924, %v9916
    %v11101 = vpack.c.b16 %v9925, %v9917
    %v11102 = vpack.c.b16 %v9926, %v9918
    %v11103 = vpack.c.b16 %v9927, %v9919
    %v11104 = vpack.c.b16 %v9936, %v9928
    %v11105 = vpack.c.b16 %v9937, %v9929
    %v11106 = vpack.c.b16 %v9938, %v9930
    %v11107 = vpack.c.b16 %v9939, %v9931
    %v11108 = vpack.c.b16 %v9940, %v9932
    %v11109 = vpack.c.b16 %v9941, %v9933
    %v11110 = vpack.c.b16 %v9942, %v9934
    %v11111 = vpack.c.b16 %v9943, %v9935
    %v11112 = vpack.c.b16 %v9952, %v9944
    %v11113 = vpack.c.b16 %v9953, %v9945
    %v11114 = vpack.c.b16 %v9954, %v9946
    %v11115 = vpack.c.b16 %v9955, %v9947
    %v11116 = vpack.c.b16 %v9956, %v9948
    %v11117 = vpack.c.b16 %v9957, %v9949
    %v11118 = vpack.c.b16 %v9958, %v9950
    %v11119 = vpack.c.b16 %v9959, %v9951
    %v11120 = vpack.c.b16 %v9968, %v9960
    %v11121 = vpack.c.b16 %v9969, %v9961
    %v11122 = vpack.c.b16 %v9970, %v9962
    %v11123 = vpack.c.b16 %v9971, %v9963
    %v11124 = vpack.c.b16 %v9972, %v9964
    %v11125 = vpack.c.b16 %v9973, %v9965
    %v11126 = vpack.c.b16 %v9974, %v9966
    %v11127 = vpack.c.b16 %v9975, %v9967
    %v11128 = vpack.c.b16 %v9984, %v9976
    %v11129 = vpack.c.b16 %v9985, %v9977
    %v11130 = vpack.c.b16 %v9986, %v9978
    %v11131 = vpack.c.b16 %v9987, %v9979
    %v11132 = vpack.c.b16 %v9988, %v9980
    %v11133 = vpack.c.b16 %v9989, %v9981
    %v11134 = vpack.c.b16 %v9990, %v9982
    %v11135 = vpack.c.b16 %v9991, %v9983
    %v11136 = vpack.c.b16 %v10000, %v9992
    %v11137 = vpack.c.b16 %v10001, %v9993
    %v11138 = vpack.c.b16 %v10002, %v9994
    %v11139 = vpack.c.b16 %v10003, %v9995
    %v11140 = vpack.c.b16 %v10004, %v9996
    %v11141 = vpack.c.b16 %v10005, %v9997
    %v11142 = vpack.c.b16 %v10006, %v9998
    %v11143 = vpack.c.b16 %v10007, %v9999
    %v11144 = vpack.c.b16 %v10016, %v10008
    %v11145 = vpack.c.b16 %v10017, %v10009
    %v11146 = vpack.c.b16 %v10018, %v10010
    %v11147 = vpack.c.b16 %v10019, %v10011
    %v11148 = vpack.c.b16 %v10020, %v10012
    %v11149 = vpack.c.b16 %v10021, %v10013
    %v11150 = vpack.c.b16 %v10022, %v10014
    %v11151 = vpack.c.b16 %v10023, %v10015
    %v11152 = vpack.c.b16 %v10032, %v10024
    %v11153 = vpack.c.b16 %v10033, %v10025
    %v11154 = vpack.c.b16 %v10034, %v10026
    %v11155 = vpack.c.b16 %v10035, %v10027
    %v11156 = vpack.c.b16 %v10036, %v10028
    %v11157 = vpack.c.b16 %v10037, %v10029
    %v11158 = vpack.c.b16 %v10038, %v10030
    %v11159 = vpack.c.b16 %v10039, %v10031
    %v11160 = vpack.c.b16 %v10048, %v10040
    %v11161 = vpack.c.b16 %v10049, %v10041
    %v11162 = vpack.c.b16 %v10050, %v10042
    %v11163 = vpack.c.b16 %v10051, %v10043
    %v11164 = vpack.c.b16 %v10052, %v10044
    %v11165 = vpack.c.b16 %v10053, %v10045
    %v11166 = vpack.c.b16 %v10054, %v10046
    %v11167 = vpack.c.b16 %v10055, %v10047
    %v11168 = vpack.c.b16 %v10064, %v10056
    %v11169 = vpack.c.b16 %v10065, %v10057
    %v11170 = vpack.c.b16 %v10066, %v10058
    %v11171 = vpack.c.b16 %v10067, %v10059
    %v11172 = vpack.c.b16 %v10068, %v10060
    %v11173 = vpack.c.b16 %v10069, %v10061
    %v11174 = vpack.c.b16 %v10070, %v10062
    %v11175 = vpack.c.b16 %v10071, %v10063
    %v11176 = vpack.c.b16 %v10080, %v10072
    %v11177 = vpack.c.b16 %v10081, %v10073
    %v11178 = vpack.c.b16 %v10082, %v10074
    %v11179 = vpack.c.b16 %v10083, %v10075
    %v11180 = vpack.c.b16 %v10084, %v10076
    %v11181 = vpack.c.b16 %v10085, %v10077
    %v11182 = vpack.c.b16 %v10086, %v10078
    %v11183 = vpack.c.b16 %v10087, %v10079
    %v11184 = vpack.c.b16 %v10096, %v10088
    %v11185 = vpack.c.b16 %v10097, %v10089
    %v11186 = vpack.c.b16 %v10098, %v10090
    %v11187 = vpack.c.b16 %v10099, %v10091
    %v11188 = vpack.c.b16 %v10100, %v10092
    %v11189 = vpack.c.b16 %v10101, %v10093
    %v11190 = vpack.c.b16 %v10102, %v10094
    %v11191 = vpack.c.b16 %v10103, %v10095
    %v11192 = vpack.c.b16 %v10112, %v10104
    %v11193 = vpack.c.b16 %v10113, %v10105
    %v11194 = vpack.c.b16 %v10114, %v10106
    %v11195 = vpack.c.b16 %v10115, %v10107
    %v11196 = vpack.c.b16 %v10116, %v10108
    %v11197 = vpack.c.b16 %v10117, %v10109
    %v11198 = vpack.c.b16 %v10118, %v10110
    %v11199 = vpack.c.b16 %v10119, %v10111
    %v11200 = vpack.c.b16 %v10128, %v10120
    %v11201 = vpack.c.b16 %v10129, %v10121
    %v11202 = vpack.c.b16 %v10130, %v10122
    %v11203 = vpack.c.b16 %v10131, %v10123
    %v11204 = vpack.c.b16 %v10132, %v10124
    %v11205 = vpack.c.b16 %v10133, %v10125
    %v11206 = vpack.c.b16 %v10134, %v10126
    %v11207 = vpack.c.b16 %v10135, %v10127
    %v11208 = vpack.c.b16 %v10144, %v10136
    %v11209 = vpack.c.b16 %v10145, %v10137
    %v11210 = vpack.c.b16 %v10146, %v10138
    %v11211 = vpack.c.b16 %v10147, %v10139
    %v11212 = vpack.c.b16 %v10148, %v10140
    %v11213 = vpack.c.b16 %v10149, %v10141
    %v11214 = vpack.c.b16 %v10150, %v10142
    %v11215 = vpack.c.b16 %v10151, %v10143
    %v11216 = vpack.c.b16 %v10160, %v10152
    %v11217 = vpack.c.b16 %v10161, %v10153
    %v11218 = vpack.c.b16 %v10162, %v10154
    %v11219 = vpack.c.b16 %v10163, %v10155
    %v11220 = vpack.c.b16 %v10164, %v10156
    %v11221 = vpack.c.b16 %v10165, %v10157
    %v11222 = vpack.c.b16 %v10166, %v10158
    %v11223 = vpack.c.b16 %v10167, %v10159
    %v11224 = vpack.c.b16 %v10176, %v10168
    %v11225 = vpack.c.b16 %v10177, %v10169
    %v11226 = vpack.c.b16 %v10178, %v10170
    %v11227 = vpack.c.b16 %v10179, %v10171
    %v11228 = vpack.c.b16 %v10180, %v10172
    %v11229 = vpack.c.b16 %v10181, %v10173
    %v11230 = vpack.c.b16 %v10182, %v10174
    %v11231 = vpack.c.b16 %v10183, %v10175
    %v11232 = vpack.c.b16 %v10192, %v10184
    %v11233 = vpack.c.b16 %v10193, %v10185
    %v11234 = vpack.c.b16 %v10194, %v10186
    %v11235 = vpack.c.b16 %v10195, %v10187
    %v11236 = vpack.c.b16 %v10196, %v10188
    %v11237 = vpack.c.b16 %v10197, %v10189
    %v11238 = vpack.c.b16 %v10198, %v10190
    %v11239 = vpack.c.b16 %v10199, %v10191
    %v11240 = vpack.c.b16 %v10208, %v10200
    %v11241 = vpack.c.b16 %v10209, %v10201
    %v11242 = vpack.c.b16 %v10210, %v10202
    %v11243 = vpack.c.b16 %v10211, %v10203
    %v11244 = vpack.c.b16 %v10212, %v10204
    %v11245 = vpack.c.b16 %v10213, %v10205
    %v11246 = vpack.c.b16 %v10214, %v10206
    %v11247 = vpack.c.b16 %v10215, %v10207
    %v11248 = vpack.c.b16 %v10224, %v10216
    %v11249 = vpack.c.b16 %v10225, %v10217
    %v11250 = vpack.c.b16 %v10226, %v10218
    %v11251 = vpack.c.b16 %v10227, %v10219
    %v11252 = vpack.c.b16 %v10228, %v10220
    %v11253 = vpack.c.b16 %v10229, %v10221
    %v11254 = vpack.c.b16 %v10230, %v10222
    %v11255 = vpack.c.b16 %v10231, %v10223
    %v11256 = vpack.c.b16 %v10240, %v10232
    %v11257 = vpack.c.b16 %v10241, %v10233
    %v11258 = vpack.c.b16 %v10242, %v10234
    %v11259 = vpack.c.b16 %v10243, %v10235
    %v11260 = vpack.c.b16 %v10244, %v10236
    %v11261 = vpack.c.b16 %v10245, %v10237
    %v11262 = vpack.c.b16 %v10246, %v10238
    %v11263 = vpack.c.b16 %v10247, %v10239
    %v11264 = vpack.c.b16 %v10256, %v10248
    %v11265 = vpack.c.b16 %v10257, %v10249
    %v11266 = vpack.c.b16 %v10258, %v10250
    %v11267 = vpack.c.b16 %v10259, %v10251
    %v11268 = vpack.c.b16 %v10260, %v10252
    %v11269 = vpack.c.b16 %v10261, %v10253
    %v11270 = vpack.c.b16 %v10262, %v10254
    %v11271 = vpack.c.b16 %v10263, %v10255
    %v11272 = vpack.c.b16 %v10272, %v10264
    %v11273 = vpack.c.b16 %v10273, %v10265
    %v11274 = vpack.c.b16 %v10274, %v10266
    %v11275 = vpack.c.b16 %v10275, %v10267
    %v11276 = vpack.c.b16 %v10276, %v10268
    %v11277 = vpack.c.b16 %v10277, %v10269
    %v11278 = vpack.c.b16 %v10278, %v10270
    %v11279 = vpack.c.b16 %v10279, %v10271
    %v11280 = vpack.c.b16 %v10288, %v10280
    %v11281 = vpack.c.b16 %v10289, %v10281
    %v11282 = vpack.c.b16 %v10290, %v10282
    %v11283 = vpack.c.b16 %v10291, %v10283
    %v11284 = vpack.c.b16 %v10292, %v10284
    %v11285 = vpack.c.b16 %v10293, %v10285
    %v11286 = vpack.c.b16 %v10294, %v10286
    %v11287 = vpack.c.b16 %v10295, %v10287
    %v11288 = vpack.c.b16 %v10304, %v10296
    %v11289 = vpack.c.b16 %v10305, %v10297
    %v11290 = vpack.c.b16 %v10306, %v10298
    %v11291 = vpack.c.b16 %v10307, %v10299
    %v11292 = vpack.c.b16 %v10308, %v10300
    %v11293 = vpack.c.b16 %v10309, %v10301
    %v11294 = vpack.c.b16 %v10310, %v10302
    %v11295 = vpack.c.b16 %v10311, %v10303
    %v11296 = vpack.c.b16 %v10320, %v10312
    %v11297 = vpack.c.b16 %v10321, %v10313
    %v11298 = vpack.c.b16 %v10322, %v10314
    %v11299 = vpack.c.b16 %v10323, %v10315
    %v11300 = vpack.c.b16 %v10324, %v10316
    %v11301 = vpack.c.b16 %v10325, %v10317
    %v11302 = vpack.c.b16 %v10326, %v10318
    %v11303 = vpack.c.b16 %v10327, %v10319
    %v11304 = vpack.c.b16 %v10336, %v10328
    %v11305 = vpack.c.b16 %v10337, %v10329
    %v11306 = vpack.c.b16 %v10338, %v10330
    %v11307 = vpack.c.b16 %v10339, %v10331
    %v11308 = vpack.c.b16 %v10340, %v10332
    %v11309 = vpack.c.b16 %v10341, %v10333
    %v11310 = vpack.c.b16 %v10342, %v10334
    %v11311 = vpack.c.b16 %v10343, %v10335
    %v11312 = vpack.c.b16 %v10352, %v10344
    %v11313 = vpack.c.b16 %v10353, %v10345
    %v11314 = vpack.c.b16 %v10354, %v10346
    %v11315 = vpack.c.b16 %v10355, %v10347
    %v11316 = vpack.c.b16 %v10356, %v10348
    %v11317 = vpack.c.b16 %v10357, %v10349
    %v11318 = vpack.c.b16 %v10358, %v10350
    %v11319 = vpack.c.b16 %v10359, %v10351
    %v11320 = vpack.c.b16 %v10368, %v10360
    %v11321 = vpack.c.b16 %v10369, %v10361
    %v11322 = vpack.c.b16 %v10370, %v10362
    %v11323 = vpack.c.b16 %v10371, %v10363
    %v11324 = vpack.c.b16 %v10372, %v10364
    %v11325 = vpack.c.b16 %v10373, %v10365
    %v11326 = vpack.c.b16 %v10374, %v10366
    %v11327 = vpack.c.b16 %v10375, %v10367
    %v11328 = vpack.c.b16 %v10384, %v10376
    %v11329 = vpack.c.b16 %v10385, %v10377
    %v11330 = vpack.c.b16 %v10386, %v10378
    %v11331 = vpack.c.b16 %v10387, %v10379
    %v11332 = vpack.c.b16 %v10388, %v10380
    %v11333 = vpack.c.b16 %v10389, %v10381
    %v11334 = vpack.c.b16 %v10390, %v10382
    %v11335 = vpack.c.b16 %v10391, %v10383
    %v11336 = vpack.c.b16 %v10400, %v10392
    %v11337 = vpack.c.b16 %v10401, %v10393
    %v11338 = vpack.c.b16 %v10402, %v10394
    %v11339 = vpack.c.b16 %v10403, %v10395
    %v11340 = vpack.c.b16 %v10404, %v10396
    %v11341 = vpack.c.b16 %v10405, %v10397
    %v11342 = vpack.c.b16 %v10406, %v10398
    %v11343 = vpack.c.b16 %v10407, %v10399
    %v11344 = vpack.c.b16 %v10416, %v10408
    %v11345 = vpack.c.b16 %v10417, %v10409
    %v11346 = vpack.c.b16 %v10418, %v10410
    %v11347 = vpack.c.b16 %v10419, %v10411
    %v11348 = vpack.c.b16 %v10420, %v10412
    %v11349 = vpack.c.b16 %v10421, %v10413
    %v11350 = vpack.c.b16 %v10422, %v10414
    %v11351 = vpack.c.b16 %v10423, %v10415
    %v11352 = vpack.c.b16 %v10432, %v10424
    %v11353 = vpack.c.b16 %v10433, %v10425
    %v11354 = vpack.c.b16 %v10434, %v10426
    %v11355 = vpack.c.b16 %v10435, %v10427
    %v11356 = vpack.c.b16 %v10436, %v10428
    %v11357 = vpack.c.b16 %v10437, %v10429
    %v11358 = vpack.c.b16 %v10438, %v10430
    %v11359 = vpack.c.b16 %v10439, %v10431
    %v11360 = vpack.c.b16 %v10448, %v10440
    %v11361 = vpack.c.b16 %v10449, %v10441
    %v11362 = vpack.c.b16 %v10450, %v10442
    %v11363 = vpack.c.b16 %v10451, %v10443
    %v11364 = vpack.c.b16 %v10452, %v10444
    %v11365 = vpack.c.b16 %v10453, %v10445
    %v11366 = vpack.c.b16 %v10454, %v10446
    %v11367 = vpack.c.b16 %v10455, %v10447
    %v11368 = vpack.c.b16 %v10464, %v10456
    %v11369 = vpack.c.b16 %v10465, %v10457
    %v11370 = vpack.c.b16 %v10466, %v10458
    %v11371 = vpack.c.b16 %v10467, %v10459
    %v11372 = vpack.c.b16 %v10468, %v10460
    %v11373 = vpack.c.b16 %v10469, %v10461
    %v11374 = vpack.c.b16 %v10470, %v10462
    %v11375 = vpack.c.b16 %v10471, %v10463
    %v11376 = vpack.c.b16 %v10480, %v10472
    %v11377 = vpack.c.b16 %v10481, %v10473
    %v11378 = vpack.c.b16 %v10482, %v10474
    %v11379 = vpack.c.b16 %v10483, %v10475
    %v11380 = vpack.c.b16 %v10484, %v10476
    %v11381 = vpack.c.b16 %v10485, %v10477
    %v11382 = vpack.c.b16 %v10486, %v10478
    %v11383 = vpack.c.b16 %v10487, %v10479
    %12280 = vmatprep.subr.bf16.mxu0 %v10489
    %12281 = vmatpush1.bf16.msra.mxu0 %v10488
    %12282 = vmatprep.subr.bf16.mxu0 %v10497
    %12283 = vmatpush1.bf16.msra.mxu0 %v10496
    %12284 = vmatprep.subr.bf16.mxu0 %v10505
    %12285 = vmatpush1.bf16.msra.mxu0 %v10504
    %12286 = vmatprep.subr.bf16.mxu0 %v10513
    %12287 = vmatpush1.bf16.msra.mxu0 %v10512
    %12288 = vmatprep.subr.bf16.mxu0 %v10521
    %12289 = vmatpush1.bf16.msra.mxu0 %v10520
    %12290 = vmatprep.subr.bf16.mxu0 %v10529
    %12291 = vmatpush1.bf16.msra.mxu0 %v10528
    %12292 = vmatprep.subr.bf16.mxu0 %v10537
    %12293 = vmatpush1.bf16.msra.mxu0 %v10536
    %12294 = vmatprep.subr.bf16.mxu0 %v10545
    %12295 = vmatpush1.bf16.msra.mxu0 %v10544
    %12296 = vmatprep.subr.bf16.mxu0 %v10553
    %12297 = vmatpush1.bf16.msra.mxu0 %v10552
    %12298 = vmatprep.subr.bf16.mxu0 %v10561
    %12299 = vmatpush1.bf16.msra.mxu0 %v10560
    %12300 = vmatprep.subr.bf16.mxu0 %v10569
    %12301 = vmatpush1.bf16.msra.mxu0 %v10568
    %12302 = vmatprep.subr.bf16.mxu0 %v10577
    %12303 = vmatpush1.bf16.msra.mxu0 %v10576
    %12304 = vmatprep.subr.bf16.mxu0 %v10585
    %12305 = vmatpush1.bf16.msra.mxu0 %v10584
    %12306 = vmatprep.subr.bf16.mxu0 %v10593
    %12307 = vmatpush1.bf16.msra.mxu0 %v10592
    %12308 = vmatprep.subr.bf16.mxu0 %v10601
    %12309 = vmatpush1.bf16.msra.mxu0 %v10600
    %12310 = vmatprep.subr.bf16.mxu0 %v10609
    %12311 = vmatpush1.bf16.msra.mxu0 %v10608
    %12312 = vmatprep.mubr.bf16.mxu0 %v6849
    %12313 = vmatmul.mubr.bf16.gmra.mrb[0].mxu0 %v6848
    %v12314 = vpop.f32.mrb[0].mxu0
    %v12315 = vadd.f32 %v7763, %v12314
    %v12316 = vpop.f32.mrb[0].mxu0
    %v12317 = vadd.f32 %v7767, %v12316
    %v12318 = vpop.f32.mrb[0].mxu0
    %v12319 = vpop.f32.mrb[0].mxu0
    %12320 = vdwg.mxu0
    %12321 = vmatprep.subr.bf16.mxu0 %v10617
    %12322 = vmatpush1.bf16.msra.mxu0 %v10616
    %12323 = vmatprep.subr.bf16.mxu0 %v10625
    %12324 = vmatpush1.bf16.msra.mxu0 %v10624
    %12325 = vmatprep.subr.bf16.mxu0 %v10633
    %12326 = vmatpush1.bf16.msra.mxu0 %v10632
    %12327 = vmatprep.subr.bf16.mxu0 %v10641
    %12328 = vmatpush1.bf16.msra.mxu0 %v10640
    %12329 = vmatprep.subr.bf16.mxu0 %v10649
    %12330 = vmatpush1.bf16.msra.mxu0 %v10648
    %12331 = vmatprep.subr.bf16.mxu0 %v10657
    %12332 = vmatpush1.bf16.msra.mxu0 %v10656
    %12333 = vmatprep.subr.bf16.mxu0 %v10665
    %12334 = vmatpush1.bf16.msra.mxu0 %v10664
    %12335 = vmatprep.subr.bf16.mxu0 %v10673
    %12336 = vmatpush1.bf16.msra.mxu0 %v10672
    %12337 = vmatprep.subr.bf16.mxu0 %v10681
    %12338 = vmatpush1.bf16.msra.mxu0 %v10680
    %12339 = vmatprep.subr.bf16.mxu0 %v10689
    %12340 = vmatpush1.bf16.msra.mxu0 %v10688
    %12341 = vmatprep.subr.bf16.mxu0 %v10697
    %12342 = vmatpush1.bf16.msra.mxu0 %v10696
    %12343 = vmatprep.subr.bf16.mxu0 %v10705
    %12344 = vmatpush1.bf16.msra.mxu0 %v10704
    %12345 = vmatprep.subr.bf16.mxu0 %v10713
    %12346 = vmatpush1.bf16.msra.mxu0 %v10712
    %12347 = vmatprep.subr.bf16.mxu0 %v10721
    %12348 = vmatpush1.bf16.msra.mxu0 %v10720
    %12349 = vmatprep.subr.bf16.mxu0 %v10729
    %12350 = vmatpush1.bf16.msra.mxu0 %v10728
    %12351 = vmatprep.subr.bf16.mxu0 %v10737
    %12352 = vmatpush1.bf16.msra.mxu0 %v10736
    %12353 = vmatprep.mubr.bf16.mxu0 %v6851
    %12354 = vmatmul.mubr.bf16.gmra.mrb[0].mxu0 %v6850
    %v12355 = vpop.f32.mrb[0].mxu0
    %v12356 = vadd.f32 %v12315, %v12355
    %v12357 = vpop.f32.mrb[0].mxu0
    %v12358 = vadd.f32 %v12317, %v12357
    %v12359 = vpop.f32.mrb[0].mxu0
    %v12360 = vpop.f32.mrb[0].mxu0
    %12361 = vdwg.mxu0
    %12362 = vmatprep.subr.bf16.mxu0 %v10745
    %12363 = vmatpush1.bf16.msra.mxu0 %v10744
    %12364 = vmatprep.subr.bf16.mxu0 %v10753
    %12365 = vmatpush1.bf16.msra.mxu0 %v10752
    %12366 = vmatprep.subr.bf16.mxu0 %v10761
    %12367 = vmatpush1.bf16.msra.mxu0 %v10760
    %12368 = vmatprep.subr.bf16.mxu0 %v10769
    %12369 = vmatpush1.bf16.msra.mxu0 %v10768
    %12370 = vmatprep.subr.bf16.mxu0 %v10777
    %12371 = vmatpush1.bf16.msra.mxu0 %v10776
    %12372 = vmatprep.subr.bf16.mxu0 %v10785
    %12373 = vmatpush1.bf16.msra.mxu0 %v10784
    %12374 = vmatprep.subr.bf16.mxu0 %v10793
    %12375 = vmatpush1.bf16.msra.mxu0 %v10792
    %12376 = vmatprep.subr.bf16.mxu0 %v10801
    %12377 = vmatpush1.bf16.msra.mxu0 %v10800
    %12378 = vmatprep.subr.bf16.mxu0 %v10809
    %12379 = vmatpush1.bf16.msra.mxu0 %v10808
    %12380 = vmatprep.subr.bf16.mxu0 %v10817
    %12381 = vmatpush1.bf16.msra.mxu0 %v10816
    %12382 = vmatprep.subr.bf16.mxu0 %v10825
    %12383 = vmatpush1.bf16.msra.mxu0 %v10824
    %12384 = vmatprep.subr.bf16.mxu0 %v10833
    %12385 = vmatpush1.bf16.msra.mxu0 %v10832
    %12386 = vmatprep.subr.bf16.mxu0 %v10841
    %12387 = vmatpush1.bf16.msra.mxu0 %v10840
    %12388 = vmatprep.subr.bf16.mxu0 %v10849
    %12389 = vmatpush1.bf16.msra.mxu0 %v10848
    %12390 = vmatprep.subr.bf16.mxu0 %v10857
    %12391 = vmatpush1.bf16.msra.mxu0 %v10856
    %12392 = vmatprep.subr.bf16.mxu0 %v10865
    %12393 = vmatpush1.bf16.msra.mxu0 %v10864
    %12394 = vmatprep.mubr.bf16.mxu0 %v6853
    %12395 = vmatmul.mubr.bf16.gmra.mrb[0].mxu0 %v6852
    %v12396 = vpop.f32.mrb[0].mxu0
    %v12397 = vadd.f32 %v12356, %v12396
    %v12398 = vpop.f32.mrb[0].mxu0
    %v12399 = vadd.f32 %v12358, %v12398
    %v12400 = vpop.f32.mrb[0].mxu0
    %v12401 = vpop.f32.mrb[0].mxu0
    %12402 = vdwg.mxu0
    %12403 = vmatprep.subr.bf16.mxu0 %v10873
    %12404 = vmatpush1.bf16.msra.mxu0 %v10872
    %12405 = vmatprep.subr.bf16.mxu0 %v10881
    %12406 = vmatpush1.bf16.msra.mxu0 %v10880
    %12407 = vmatprep.subr.bf16.mxu0 %v10889
    %12408 = vmatpush1.bf16.msra.mxu0 %v10888
    %12409 = vmatprep.subr.bf16.mxu0 %v10897
    %12410 = vmatpush1.bf16.msra.mxu0 %v10896
    %12411 = vmatprep.subr.bf16.mxu0 %v10905
    %12412 = vmatpush1.bf16.msra.mxu0 %v10904
    %12413 = vmatprep.subr.bf16.mxu0 %v10913
    %12414 = vmatpush1.bf16.msra.mxu0 %v10912
    %12415 = vmatprep.subr.bf16.mxu0 %v10921
    %12416 = vmatpush1.bf16.msra.mxu0 %v10920
    %12417 = vmatprep.subr.bf16.mxu0 %v10929
    %12418 = vmatpush1.bf16.msra.mxu0 %v10928
    %12419 = vmatprep.subr.bf16.mxu0 %v10937
    %12420 = vmatpush1.bf16.msra.mxu0 %v10936
    %12421 = vmatprep.subr.bf16.mxu0 %v10945
    %12422 = vmatpush1.bf16.msra.mxu0 %v10944
    %12423 = vmatprep.subr.bf16.mxu0 %v10953
    %12424 = vmatpush1.bf16.msra.mxu0 %v10952
    %12425 = vmatprep.subr.bf16.mxu0 %v10961
    %12426 = vmatpush1.bf16.msra.mxu0 %v10960
    %12427 = vmatprep.subr.bf16.mxu0 %v10969
    %12428 = vmatpush1.bf16.msra.mxu0 %v10968
    %12429 = vmatprep.subr.bf16.mxu0 %v10977
    %12430 = vmatpush1.bf16.msra.mxu0 %v10976
    %12431 = vmatprep.subr.bf16.mxu0 %v10985
    %12432 = vmatpush1.bf16.msra.mxu0 %v10984
    %12433 = vmatprep.subr.bf16.mxu0 %v10993
    %12434 = vmatpush1.bf16.msra.mxu0 %v10992
    %12435 = vmatprep.mubr.bf16.mxu0 %v6855
    %12436 = vmatmul.mubr.bf16.gmra.mrb[0].mxu0 %v6854
    %v12437 = vpop.f32.mrb[0].mxu0
    %v12438 = vadd.f32 %v12397, %v12437
    %v12439 = vpop.f32.mrb[0].mxu0
    %v12440 = vadd.f32 %v12399, %v12439
    %v12441 = vpop.f32.mrb[0].mxu0
    %v12442 = vpop.f32.mrb[0].mxu0
    %12443 = vdwg.mxu0
    %12444 = vmatprep.subr.bf16.mxu0 %v11001
    %12445 = vmatpush1.bf16.msra.mxu0 %v11000
    %12446 = vmatprep.subr.bf16.mxu0 %v11009
    %12447 = vmatpush1.bf16.msra.mxu0 %v11008
    %12448 = vmatprep.subr.bf16.mxu0 %v11017
    %12449 = vmatpush1.bf16.msra.mxu0 %v11016
    %12450 = vmatprep.subr.bf16.mxu0 %v11025
    %12451 = vmatpush1.bf16.msra.mxu0 %v11024
    %12452 = vmatprep.subr.bf16.mxu0 %v11033
    %12453 = vmatpush1.bf16.msra.mxu0 %v11032
    %12454 = vmatprep.subr.bf16.mxu0 %v11041
    %12455 = vmatpush1.bf16.msra.mxu0 %v11040
    %12456 = vmatprep.subr.bf16.mxu0 %v11049
    %12457 = vmatpush1.bf16.msra.mxu0 %v11048
    %12458 = vmatprep.subr.bf16.mxu0 %v11057
    %12459 = vmatpush1.bf16.msra.mxu0 %v11056
    %12460 = vmatprep.subr.bf16.mxu0 %v11065
    %12461 = vmatpush1.bf16.msra.mxu0 %v11064
    %12462 = vmatprep.subr.bf16.mxu0 %v11073
    %12463 = vmatpush1.bf16.msra.mxu0 %v11072
    %12464 = vmatprep.subr.bf16.mxu0 %v11081
    %12465 = vmatpush1.bf16.msra.mxu0 %v11080
    %12466 = vmatprep.subr.bf16.mxu0 %v11089
    %12467 = vmatpush1.bf16.msra.mxu0 %v11088
    %12468 = vmatprep.subr.bf16.mxu0 %v11097
    %12469 = vmatpush1.bf16.msra.mxu0 %v11096
    %12470 = vmatprep.subr.bf16.mxu0 %v11105
    %12471 = vmatpush1.bf16.msra.mxu0 %v11104
    %12472 = vmatprep.subr.bf16.mxu0 %v11113
    %12473 = vmatpush1.bf16.msra.mxu0 %v11112
    %12474 = vmatprep.subr.bf16.mxu0 %v11121
    %12475 = vmatpush1.bf16.msra.mxu0 %v11120
    %12476 = vmatprep.mubr.bf16.mxu0 %v6857
    %12477 = vmatmul.mubr.bf16.gmra.mrb[0].mxu0 %v6856
    %v12478 = vpop.f32.mrb[0].mxu0
    %v12479 = vadd.f32 %v12438, %v12478
    %v12480 = vpop.f32.mrb[0].mxu0
    %v12481 = vadd.f32 %v12440, %v12480
    %v12482 = vpop.f32.mrb[0].mxu0
    %v12483 = vpop.f32.mrb[0].mxu0
    %12484 = vdwg.mxu0
    %12485 = vmatprep.subr.bf16.mxu0 %v11129
    %12486 = vmatpush1.bf16.msra.mxu0 %v11128
    %12487 = vmatprep.subr.bf16.mxu0 %v11137
    %12488 = vmatpush1.bf16.msra.mxu0 %v11136
    %12489 = vmatprep.subr.bf16.mxu0 %v11145
    %12490 = vmatpush1.bf16.msra.mxu0 %v11144
    %12491 = vmatprep.subr.bf16.mxu0 %v11153
    %12492 = vmatpush1.bf16.msra.mxu0 %v11152
    %12493 = vmatprep.subr.bf16.mxu0 %v11161
    %12494 = vmatpush1.bf16.msra.mxu0 %v11160
    %12495 = vmatprep.subr.bf16.mxu0 %v11169
    %12496 = vmatpush1.bf16.msra.mxu0 %v11168
    %12497 = vmatprep.subr.bf16.mxu0 %v11177
    %12498 = vmatpush1.bf16.msra.mxu0 %v11176
    %12499 = vmatprep.subr.bf16.mxu0 %v11185
    %12500 = vmatpush1.bf16.msra.mxu0 %v11184
    %12501 = vmatprep.subr.bf16.mxu0 %v11193
    %12502 = vmatpush1.bf16.msra.mxu0 %v11192
    %12503 = vmatprep.subr.bf16.mxu0 %v11201
    %12504 = vmatpush1.bf16.msra.mxu0 %v11200
    %12505 = vmatprep.subr.bf16.mxu0 %v11209
    %12506 = vmatpush1.bf16.msra.mxu0 %v11208
    %12507 = vmatprep.subr.bf16.mxu0 %v11217
    %12508 = vmatpush1.bf16.msra.mxu0 %v11216
    %12509 = vmatprep.subr.bf16.mxu0 %v11225
    %12510 = vmatpush1.bf16.msra.mxu0 %v11224
    %12511 = vmatprep.subr.bf16.mxu0 %v11233
    %12512 = vmatpush1.bf16.msra.mxu0 %v11232
    %12513 = vmatprep.subr.bf16.mxu0 %v11241
    %12514 = vmatpush1.bf16.msra.mxu0 %v11240
    %12515 = vmatprep.subr.bf16.mxu0 %v11249
    %12516 = vmatpush1.bf16.msra.mxu0 %v11248
    %12517 = vmatprep.mubr.bf16.mxu0 %v6859
    %12518 = vmatmul.mubr.bf16.gmra.mrb[0].mxu0 %v6858
    %v12519 = vpop.f32.mrb[0].mxu0
    %v12520 = vadd.f32 %v12479, %v12519
    %v12521 = vpop.f32.mrb[0].mxu0
    %v12522 = vadd.f32 %v12481, %v12521
    %v12523 = vpop.f32.mrb[0].mxu0
    %v12524 = vpop.f32.mrb[0].mxu0
    %12525 = vdwg.mxu0
    %12526 = vmatprep.subr.bf16.mxu0 %v11257
    %12527 = vmatpush1.bf16.msra.mxu0 %v11256
    %12528 = vmatprep.subr.bf16.mxu0 %v11265
    %12529 = vmatpush1.bf16.msra.mxu0 %v11264
    %12530 = vmatprep.subr.bf16.mxu0 %v11273
    %12531 = vmatpush1.bf16.msra.mxu0 %v11272
    %12532 = vmatprep.subr.bf16.mxu0 %v11281
    %12533 = vmatpush1.bf16.msra.mxu0 %v11280
    %12534 = vmatprep.subr.bf16.mxu0 %v11289
    %12535 = vmatpush1.bf16.msra.mxu0 %v11288
    %12536 = vmatprep.subr.bf16.mxu0 %v11297
    %12537 = vmatpush1.bf16.msra.mxu0 %v11296
    %12538 = vmatprep.subr.bf16.mxu0 %v11305
    %12539 = vmatpush1.bf16.msra.mxu0 %v11304
    %12540 = vmatprep.subr.bf16.mxu0 %v11313
    %12541 = vmatpush1.bf16.msra.mxu0 %v11312
    %12542 = vmatprep.subr.bf16.mxu0 %v11321
    %12543 = vmatpush1.bf16.msra.mxu0 %v11320
    %12544 = vmatprep.subr.bf16.mxu0 %v11329
    %12545 = vmatpush1.bf16.msra.mxu0 %v11328
    %12546 = vmatprep.subr.bf16.mxu0 %v11337
    %12547 = vmatpush1.bf16.msra.mxu0 %v11336
    %12548 = vmatprep.subr.bf16.mxu0 %v11345
    %12549 = vmatpush1.bf16.msra.mxu0 %v11344
    %12550 = vmatprep.subr.bf16.mxu0 %v11353
    %12551 = vmatpush1.bf16.msra.mxu0 %v11352
    %12552 = vmatprep.subr.bf16.mxu0 %v11361
    %12553 = vmatpush1.bf16.msra.mxu0 %v11360
    %12554 = vmatprep.subr.bf16.mxu0 %v11369
    %12555 = vmatpush1.bf16.msra.mxu0 %v11368
    %12556 = vmatprep.subr.bf16.mxu0 %v11377
    %12557 = vmatpush1.bf16.msra.mxu0 %v11376
    %12558 = vmatprep.mubr.bf16.mxu0 %v6861
    %12559 = vmatmul.mubr.bf16.gmra.mrb[0].mxu0 %v6860
    %v12560 = vpop.f32.mrb[0].mxu0
    %v12561 = vadd.f32 %v12520, %v12560
    %v12562 = vpop.f32.mrb[0].mxu0
    %v12563 = vadd.f32 %v12522, %v12562
    %v12564 = vpop.f32.mrb[0].mxu0
    %v12565 = vpop.f32.mrb[0].mxu0
    %12566 = vdwg.mxu0
    %12567 = vmatprep.subr.bf16.mxu0 %v10491
    %12568 = vmatpush1.bf16.msra.mxu0 %v10490
    %12569 = vmatprep.subr.bf16.mxu0 %v10499
    %12570 = vmatpush1.bf16.msra.mxu0 %v10498
    %12571 = vmatprep.subr.bf16.mxu0 %v10507
    %12572 = vmatpush1.bf16.msra.mxu0 %v10506
    %12573 = vmatprep.subr.bf16.mxu0 %v10515
    %12574 = vmatpush1.bf16.msra.mxu0 %v10514
    %12575 = vmatprep.subr.bf16.mxu0 %v10523
    %12576 = vmatpush1.bf16.msra.mxu0 %v10522
    %12577 = vmatprep.subr.bf16.mxu0 %v10531
    %12578 = vmatpush1.bf16.msra.mxu0 %v10530
    %12579 = vmatprep.subr.bf16.mxu0 %v10539
    %12580 = vmatpush1.bf16.msra.mxu0 %v10538
    %12581 = vmatprep.subr.bf16.mxu0 %v10547
    %12582 = vmatpush1.bf16.msra.mxu0 %v10546
    %12583 = vmatprep.subr.bf16.mxu0 %v10555
    %12584 = vmatpush1.bf16.msra.mxu0 %v10554
    %12585 = vmatprep.subr.bf16.mxu0 %v10563
    %12586 = vmatpush1.bf16.msra.mxu0 %v10562
    %12587 = vmatprep.subr.bf16.mxu0 %v10571
    %12588 = vmatpush1.bf16.msra.mxu0 %v10570
    %12589 = vmatprep.subr.bf16.mxu0 %v10579
    %12590 = vmatpush1.bf16.msra.mxu0 %v10578
    %12591 = vmatprep.subr.bf16.mxu0 %v10587
    %12592 = vmatpush1.bf16.msra.mxu0 %v10586
    %12593 = vmatprep.subr.bf16.mxu0 %v10595
    %12594 = vmatpush1.bf16.msra.mxu0 %v10594
    %12595 = vmatprep.subr.bf16.mxu0 %v10603
    %12596 = vmatpush1.bf16.msra.mxu0 %v10602
    %12597 = vmatprep.subr.bf16.mxu0 %v10611
    %12598 = vmatpush1.bf16.msra.mxu0 %v10610
    %12599 = vmatprep.mubr.bf16.mxu0 %v6849
    %12600 = vmatmul.mubr.bf16.gmra.mrb[0].mxu0 %v6848
    %v12601 = vpop.f32.mrb[0].mxu0
    %v12602 = vadd.f32 %v7771, %v12601
    %v12603 = vpop.f32.mrb[0].mxu0
    %v12604 = vadd.f32 %v7775, %v12603
    %v12605 = vpop.f32.mrb[0].mxu0
    %v12606 = vpop.f32.mrb[0].mxu0
    %12607 = vdwg.mxu0
    %12608 = vmatprep.subr.bf16.mxu0 %v10619
    %12609 = vmatpush1.bf16.msra.mxu0 %v10618
    %12610 = vmatprep.subr.bf16.mxu0 %v10627
    %12611 = vmatpush1.bf16.msra.mxu0 %v10626
    %12612 = vmatprep.subr.bf16.mxu0 %v10635
    %12613 = vmatpush1.bf16.msra.mxu0 %v10634
    %12614 = vmatprep.subr.bf16.mxu0 %v10643
    %12615 = vmatpush1.bf16.msra.mxu0 %v10642
    %12616 = vmatprep.subr.bf16.mxu0 %v10651
    %12617 = vmatpush1.bf16.msra.mxu0 %v10650
    %12618 = vmatprep.subr.bf16.mxu0 %v10659
    %12619 = vmatpush1.bf16.msra.mxu0 %v10658
    %12620 = vmatprep.subr.bf16.mxu0 %v10667
    %12621 = vmatpush1.bf16.msra.mxu0 %v10666
    %12622 = vmatprep.subr.bf16.mxu0 %v10675
    %12623 = vmatpush1.bf16.msra.mxu0 %v10674
    %12624 = vmatprep.subr.bf16.mxu0 %v10683
    %12625 = vmatpush1.bf16.msra.mxu0 %v10682
    %12626 = vmatprep.subr.bf16.mxu0 %v10691
    %12627 = vmatpush1.bf16.msra.mxu0 %v10690
    %12628 = vmatprep.subr.bf16.mxu0 %v10699
    %12629 = vmatpush1.bf16.msra.mxu0 %v10698
    %12630 = vmatprep.subr.bf16.mxu0 %v10707
    %12631 = vmatpush1.bf16.msra.mxu0 %v10706
    %12632 = vmatprep.subr.bf16.mxu0 %v10715
    %12633 = vmatpush1.bf16.msra.mxu0 %v10714
    %12634 = vmatprep.subr.bf16.mxu0 %v10723
    %12635 = vmatpush1.bf16.msra.mxu0 %v10722
    %12636 = vmatprep.subr.bf16.mxu0 %v10731
    %12637 = vmatpush1.bf16.msra.mxu0 %v10730
    %12638 = vmatprep.subr.bf16.mxu0 %v10739
    %12639 = vmatpush1.bf16.msra.mxu0 %v10738
    %12640 = vmatprep.mubr.bf16.mxu0 %v6851
    %12641 = vmatmul.mubr.bf16.gmra.mrb[0].mxu0 %v6850
    %v12642 = vpop.f32.mrb[0].mxu0
    %v12643 = vadd.f32 %v12602, %v12642
    %v12644 = vpop.f32.mrb[0].mxu0
    %v12645 = vadd.f32 %v12604, %v12644
    %v12646 = vpop.f32.mrb[0].mxu0
    %v12647 = vpop.f32.mrb[0].mxu0
    %12648 = vdwg.mxu0
    %12649 = vmatprep.subr.bf16.mxu0 %v10747
    %12650 = vmatpush1.bf16.msra.mxu0 %v10746
    %12651 = vmatprep.subr.bf16.mxu0 %v10755
    %12652 = vmatpush1.bf16.msra.mxu0 %v10754
    %12653 = vmatprep.subr.bf16.mxu0 %v10763
    %12654 = vmatpush1.bf16.msra.mxu0 %v10762
    %12655 = vmatprep.subr.bf16.mxu0 %v10771
    %12656 = vmatpush1.bf16.msra.mxu0 %v10770
    %12657 = vmatprep.subr.bf16.mxu0 %v10779
    %12658 = vmatpush1.bf16.msra.mxu0 %v10778
    %12659 = vmatprep.subr.bf16.mxu0 %v10787
    %12660 = vmatpush1.bf16.msra.mxu0 %v10786
    %12661 = vmatprep.subr.bf16.mxu0 %v10795
    %12662 = vmatpush1.bf16.msra.mxu0 %v10794
    %12663 = vmatprep.subr.bf16.mxu0 %v10803
    %12664 = vmatpush1.bf16.msra.mxu0 %v10802
    %12665 = vmatprep.subr.bf16.mxu0 %v10811
    %12666 = vmatpush1.bf16.msra.mxu0 %v10810
    %12667 = vmatprep.subr.bf16.mxu0 %v10819
    %12668 = vmatpush1.bf16.msra.mxu0 %v10818
    %12669 = vmatprep.subr.bf16.mxu0 %v10827
    %12670 = vmatpush1.bf16.msra.mxu0 %v10826
    %12671 = vmatprep.subr.bf16.mxu0 %v10835
    %12672 = vmatpush1.bf16.msra.mxu0 %v10834
    %12673 = vmatprep.subr.bf16.mxu0 %v10843
    %12674 = vmatpush1.bf16.msra.mxu0 %v10842
    %12675 = vmatprep.subr.bf16.mxu0 %v10851
    %12676 = vmatpush1.bf16.msra.mxu0 %v10850
    %12677 = vmatprep.subr.bf16.mxu0 %v10859
    %12678 = vmatpush1.bf16.msra.mxu0 %v10858
    %12679 = vmatprep.subr.bf16.mxu0 %v10867
    %12680 = vmatpush1.bf16.msra.mxu0 %v10866
    %12681 = vmatprep.mubr.bf16.mxu0 %v6853
    %12682 = vmatmul.mubr.bf16.gmra.mrb[0].mxu0 %v6852
    %v12683 = vpop.f32.mrb[0].mxu0
    %v12684 = vadd.f32 %v12643, %v12683
    %v12685 = vpop.f32.mrb[0].mxu0
    %v12686 = vadd.f32 %v12645, %v12685
    %v12687 = vpop.f32.mrb[0].mxu0
    %v12688 = vpop.f32.mrb[0].mxu0
    %12689 = vdwg.mxu0
    %12690 = vmatprep.subr.bf16.mxu0 %v10875
    %12691 = vmatpush1.bf16.msra.mxu0 %v10874
    %12692 = vmatprep.subr.bf16.mxu0 %v10883
    %12693 = vmatpush1.bf16.msra.mxu0 %v10882
    %12694 = vmatprep.subr.bf16.mxu0 %v10891
    %12695 = vmatpush1.bf16.msra.mxu0 %v10890
    %12696 = vmatprep.subr.bf16.mxu0 %v10899
    %12697 = vmatpush1.bf16.msra.mxu0 %v10898
    %12698 = vmatprep.subr.bf16.mxu0 %v10907
    %12699 = vmatpush1.bf16.msra.mxu0 %v10906
    %12700 = vmatprep.subr.bf16.mxu0 %v10915
    %12701 = vmatpush1.bf16.msra.mxu0 %v10914
    %12702 = vmatprep.subr.bf16.mxu0 %v10923
    %12703 = vmatpush1.bf16.msra.mxu0 %v10922
    %12704 = vmatprep.subr.bf16.mxu0 %v10931
    %12705 = vmatpush1.bf16.msra.mxu0 %v10930
    %12706 = vmatprep.subr.bf16.mxu0 %v10939
    %12707 = vmatpush1.bf16.msra.mxu0 %v10938
    %12708 = vmatprep.subr.bf16.mxu0 %v10947
    %12709 = vmatpush1.bf16.msra.mxu0 %v10946
    %12710 = vmatprep.subr.bf16.mxu0 %v10955
    %12711 = vmatpush1.bf16.msra.mxu0 %v10954
    %12712 = vmatprep.subr.bf16.mxu0 %v10963
    %12713 = vmatpush1.bf16.msra.mxu0 %v10962
    %12714 = vmatprep.subr.bf16.mxu0 %v10971
    %12715 = vmatpush1.bf16.msra.mxu0 %v10970
    %12716 = vmatprep.subr.bf16.mxu0 %v10979
    %12717 = vmatpush1.bf16.msra.mxu0 %v10978
    %12718 = vmatprep.subr.bf16.mxu0 %v10987
    %12719 = vmatpush1.bf16.msra.mxu0 %v10986
    %12720 = vmatprep.subr.bf16.mxu0 %v10995
    %12721 = vmatpush1.bf16.msra.mxu0 %v10994
    %12722 = vmatprep.mubr.bf16.mxu0 %v6855
    %12723 = vmatmul.mubr.bf16.gmra.mrb[0].mxu0 %v6854
    %v12724 = vpop.f32.mrb[0].mxu0
    %v12725 = vadd.f32 %v12684, %v12724
    %v12726 = vpop.f32.mrb[0].mxu0
    %v12727 = vadd.f32 %v12686, %v12726
    %v12728 = vpop.f32.mrb[0].mxu0
    %v12729 = vpop.f32.mrb[0].mxu0
    %12730 = vdwg.mxu0
    %12731 = vmatprep.subr.bf16.mxu0 %v11003
    %12732 = vmatpush1.bf16.msra.mxu0 %v11002
    %12733 = vmatprep.subr.bf16.mxu0 %v11011
    %12734 = vmatpush1.bf16.msra.mxu0 %v11010
    %12735 = vmatprep.subr.bf16.mxu0 %v11019
    %12736 = vmatpush1.bf16.msra.mxu0 %v11018
    %12737 = vmatprep.subr.bf16.mxu0 %v11027
    %12738 = vmatpush1.bf16.msra.mxu0 %v11026
    %12739 = vmatprep.subr.bf16.mxu0 %v11035
    %12740 = vmatpush1.bf16.msra.mxu0 %v11034
    %12741 = vmatprep.subr.bf16.mxu0 %v11043
    %12742 = vmatpush1.bf16.msra.mxu0 %v11042
    %12743 = vmatprep.subr.bf16.mxu0 %v11051
    %12744 = vmatpush1.bf16.msra.mxu0 %v11050
    %12745 = vmatprep.subr.bf16.mxu0 %v11059
    %12746 = vmatpush1.bf16.msra.mxu0 %v11058
    %12747 = vmatprep.subr.bf16.mxu0 %v11067
    %12748 = vmatpush1.bf16.msra.mxu0 %v11066
    %12749 = vmatprep.subr.bf16.mxu0 %v11075
    %12750 = vmatpush1.bf16.msra.mxu0 %v11074
    %12751 = vmatprep.subr.bf16.mxu0 %v11083
    %12752 = vmatpush1.bf16.msra.mxu0 %v11082
    %12753 = vmatprep.subr.bf16.mxu0 %v11091
    %12754 = vmatpush1.bf16.msra.mxu0 %v11090
    %12755 = vmatprep.subr.bf16.mxu0 %v11099
    %12756 = vmatpush1.bf16.msra.mxu0 %v11098
    %12757 = vmatprep.subr.bf16.mxu0 %v11107
    %12758 = vmatpush1.bf16.msra.mxu0 %v11106
    %12759 = vmatprep.subr.bf16.mxu0 %v11115
    %12760 = vmatpush1.bf16.msra.mxu0 %v11114
    %12761 = vmatprep.subr.bf16.mxu0 %v11123
    %12762 = vmatpush1.bf16.msra.mxu0 %v11122
    %12763 = vmatprep.mubr.bf16.mxu0 %v6857
    %12764 = vmatmul.mubr.bf16.gmra.mrb[0].mxu0 %v6856
    %v12765 = vpop.f32.mrb[0].mxu0
    %v12766 = vadd.f32 %v12725, %v12765
    %v12767 = vpop.f32.mrb[0].mxu0
    %v12768 = vadd.f32 %v12727, %v12767
    %v12769 = vpop.f32.mrb[0].mxu0
    %v12770 = vpop.f32.mrb[0].mxu0
    %12771 = vdwg.mxu0
    %12772 = vmatprep.subr.bf16.mxu0 %v11131
    %12773 = vmatpush1.bf16.msra.mxu0 %v11130
    %12774 = vmatprep.subr.bf16.mxu0 %v11139
    %12775 = vmatpush1.bf16.msra.mxu0 %v11138
    %12776 = vmatprep.subr.bf16.mxu0 %v11147
    %12777 = vmatpush1.bf16.msra.mxu0 %v11146
    %12778 = vmatprep.subr.bf16.mxu0 %v11155
    %12779 = vmatpush1.bf16.msra.mxu0 %v11154
    %12780 = vmatprep.subr.bf16.mxu0 %v11163
    %12781 = vmatpush1.bf16.msra.mxu0 %v11162
    %12782 = vmatprep.subr.bf16.mxu0 %v11171
    %12783 = vmatpush1.bf16.msra.mxu0 %v11170
    %12784 = vmatprep.subr.bf16.mxu0 %v11179
    %12785 = vmatpush1.bf16.msra.mxu0 %v11178
    %12786 = vmatprep.subr.bf16.mxu0 %v11187
    %12787 = vmatpush1.bf16.msra.mxu0 %v11186
    %12788 = vmatprep.subr.bf16.mxu0 %v11195
    %12789 = vmatpush1.bf16.msra.mxu0 %v11194
    %12790 = vmatprep.subr.bf16.mxu0 %v11203
    %12791 = vmatpush1.bf16.msra.mxu0 %v11202
    %12792 = vmatprep.subr.bf16.mxu0 %v11211
    %12793 = vmatpush1.bf16.msra.mxu0 %v11210
    %12794 = vmatprep.subr.bf16.mxu0 %v11219
    %12795 = vmatpush1.bf16.msra.mxu0 %v11218
    %12796 = vmatprep.subr.bf16.mxu0 %v11227
    %12797 = vmatpush1.bf16.msra.mxu0 %v11226
    %12798 = vmatprep.subr.bf16.mxu0 %v11235
    %12799 = vmatpush1.bf16.msra.mxu0 %v11234
    %12800 = vmatprep.subr.bf16.mxu0 %v11243
    %12801 = vmatpush1.bf16.msra.mxu0 %v11242
    %12802 = vmatprep.subr.bf16.mxu0 %v11251
    %12803 = vmatpush1.bf16.msra.mxu0 %v11250
    %12804 = vmatprep.mubr.bf16.mxu0 %v6859
    %12805 = vmatmul.mubr.bf16.gmra.mrb[0].mxu0 %v6858
    %v12806 = vpop.f32.mrb[0].mxu0
    %v12807 = vadd.f32 %v12766, %v12806
    %v12808 = vpop.f32.mrb[0].mxu0
    %v12809 = vadd.f32 %v12768, %v12808
    %v12810 = vpop.f32.mrb[0].mxu0
    %v12811 = vpop.f32.mrb[0].mxu0
    %12812 = vdwg.mxu0
    %12813 = vmatprep.subr.bf16.mxu0 %v11259
    %12814 = vmatpush1.bf16.msra.mxu0 %v11258
    %12815 = vmatprep.subr.bf16.mxu0 %v11267
    %12816 = vmatpush1.bf16.msra.mxu0 %v11266
    %12817 = vmatprep.subr.bf16.mxu0 %v11275
    %12818 = vmatpush1.bf16.msra.mxu0 %v11274
    %12819 = vmatprep.subr.bf16.mxu0 %v11283
    %12820 = vmatpush1.bf16.msra.mxu0 %v11282
    %12821 = vmatprep.subr.bf16.mxu0 %v11291
    %12822 = vmatpush1.bf16.msra.mxu0 %v11290
    %12823 = vmatprep.subr.bf16.mxu0 %v11299
    %12824 = vmatpush1.bf16.msra.mxu0 %v11298
    %12825 = vmatprep.subr.bf16.mxu0 %v11307
    %12826 = vmatpush1.bf16.msra.mxu0 %v11306
    %12827 = vmatprep.subr.bf16.mxu0 %v11315
    %12828 = vmatpush1.bf16.msra.mxu0 %v11314
    %12829 = vmatprep.subr.bf16.mxu0 %v11323
    %12830 = vmatpush1.bf16.msra.mxu0 %v11322
    %12831 = vmatprep.subr.bf16.mxu0 %v11331
    %12832 = vmatpush1.bf16.msra.mxu0 %v11330
    %12833 = vmatprep.subr.bf16.mxu0 %v11339
    %12834 = vmatpush1.bf16.msra.mxu0 %v11338
    %12835 = vmatprep.subr.bf16.mxu0 %v11347
    %12836 = vmatpush1.bf16.msra.mxu0 %v11346
    %12837 = vmatprep.subr.bf16.mxu0 %v11355
    %12838 = vmatpush1.bf16.msra.mxu0 %v11354
    %12839 = vmatprep.subr.bf16.mxu0 %v11363
    %12840 = vmatpush1.bf16.msra.mxu0 %v11362
    %12841 = vmatprep.subr.bf16.mxu0 %v11371
    %12842 = vmatpush1.bf16.msra.mxu0 %v11370
    %12843 = vmatprep.subr.bf16.mxu0 %v11379
    %12844 = vmatpush1.bf16.msra.mxu0 %v11378
    %12845 = vmatprep.mubr.bf16.mxu0 %v6861
    %12846 = vmatmul.mubr.bf16.gmra.mrb[0].mxu0 %v6860
    %v12847 = vpop.f32.mrb[0].mxu0
    %v12848 = vadd.f32 %v12807, %v12847
    %v12849 = vpop.f32.mrb[0].mxu0
    %v12850 = vadd.f32 %v12809, %v12849
    %v12851 = vpop.f32.mrb[0].mxu0
    %v12852 = vpop.f32.mrb[0].mxu0
    %12853 = vdwg.mxu0
    %12854 = vmatprep.subr.bf16.mxu0 %v10493
    %12855 = vmatpush1.bf16.msra.mxu0 %v10492
    %12856 = vmatprep.subr.bf16.mxu0 %v10501
    %12857 = vmatpush1.bf16.msra.mxu0 %v10500
    %12858 = vmatprep.subr.bf16.mxu0 %v10509
    %12859 = vmatpush1.bf16.msra.mxu0 %v10508
    %12860 = vmatprep.subr.bf16.mxu0 %v10517
    %12861 = vmatpush1.bf16.msra.mxu0 %v10516
    %12862 = vmatprep.subr.bf16.mxu0 %v10525
    %12863 = vmatpush1.bf16.msra.mxu0 %v10524
    %12864 = vmatprep.subr.bf16.mxu0 %v10533
    %12865 = vmatpush1.bf16.msra.mxu0 %v10532
    %12866 = vmatprep.subr.bf16.mxu0 %v10541
    %12867 = vmatpush1.bf16.msra.mxu0 %v10540
    %12868 = vmatprep.subr.bf16.mxu0 %v10549
    %12869 = vmatpush1.bf16.msra.mxu0 %v10548
    %12870 = vmatprep.subr.bf16.mxu0 %v10557
    %12871 = vmatpush1.bf16.msra.mxu0 %v10556
    %12872 = vmatprep.subr.bf16.mxu0 %v10565
    %12873 = vmatpush1.bf16.msra.mxu0 %v10564
    %12874 = vmatprep.subr.bf16.mxu0 %v10573
    %12875 = vmatpush1.bf16.msra.mxu0 %v10572
    %12876 = vmatprep.subr.bf16.mxu0 %v10581
    %12877 = vmatpush1.bf16.msra.mxu0 %v10580
    %12878 = vmatprep.subr.bf16.mxu0 %v10589
    %12879 = vmatpush1.bf16.msra.mxu0 %v10588
    %12880 = vmatprep.subr.bf16.mxu0 %v10597
    %12881 = vmatpush1.bf16.msra.mxu0 %v10596
    %12882 = vmatprep.subr.bf16.mxu0 %v10605
    %12883 = vmatpush1.bf16.msra.mxu0 %v10604
    %12884 = vmatprep.subr.bf16.mxu0 %v10613
    %12885 = vmatpush1.bf16.msra.mxu0 %v10612
    %12886 = vmatprep.mubr.bf16.mxu0 %v6849
    %12887 = vmatmul.mubr.bf16.gmra.mrb[0].mxu0 %v6848
    %v12888 = vpop.f32.mrb[0].mxu0
    %v12889 = vadd.f32 %v7779, %v12888
    %v12890 = vpop.f32.mrb[0].mxu0
    %v12891 = vadd.f32 %v7783, %v12890
    %v12892 = vpop.f32.mrb[0].mxu0
    %v12893 = vpop.f32.mrb[0].mxu0
    %12894 = vdwg.mxu0
    %12895 = vmatprep.subr.bf16.mxu0 %v10621
    %12896 = vmatpush1.bf16.msra.mxu0 %v10620
    %12897 = vmatprep.subr.bf16.mxu0 %v10629
    %12898 = vmatpush1.bf16.msra.mxu0 %v10628
    %12899 = vmatprep.subr.bf16.mxu0 %v10637
    %12900 = vmatpush1.bf16.msra.mxu0 %v10636
    %12901 = vmatprep.subr.bf16.mxu0 %v10645
    %12902 = vmatpush1.bf16.msra.mxu0 %v10644
    %12903 = vmatprep.subr.bf16.mxu0 %v10653
    %12904 = vmatpush1.bf16.msra.mxu0 %v10652
    %12905 = vmatprep.subr.bf16.mxu0 %v10661
    %12906 = vmatpush1.bf16.msra.mxu0 %v10660
    %12907 = vmatprep.subr.bf16.mxu0 %v10669
    %12908 = vmatpush1.bf16.msra.mxu0 %v10668
    %12909 = vmatprep.subr.bf16.mxu0 %v10677
    %12910 = vmatpush1.bf16.msra.mxu0 %v10676
    %12911 = vmatprep.subr.bf16.mxu0 %v10685
    %12912 = vmatpush1.bf16.msra.mxu0 %v10684
    %12913 = vmatprep.subr.bf16.mxu0 %v10693
    %12914 = vmatpush1.bf16.msra.mxu0 %v10692
    %12915 = vmatprep.subr.bf16.mxu0 %v10701
    %12916 = vmatpush1.bf16.msra.mxu0 %v10700
    %12917 = vmatprep.subr.bf16.mxu0 %v10709
    %12918 = vmatpush1.bf16.msra.mxu0 %v10708
    %12919 = vmatprep.subr.bf16.mxu0 %v10717
    %12920 = vmatpush1.bf16.msra.mxu0 %v10716
    %12921 = vmatprep.subr.bf16.mxu0 %v10725
    %12922 = vmatpush1.bf16.msra.mxu0 %v10724
    %12923 = vmatprep.subr.bf16.mxu0 %v10733
    %12924 = vmatpush1.bf16.msra.mxu0 %v10732
    %12925 = vmatprep.subr.bf16.mxu0 %v10741
    %12926 = vmatpush1.bf16.msra.mxu0 %v10740
    %12927 = vmatprep.mubr.bf16.mxu0 %v6851
    %12928 = vmatmul.mubr.bf16.gmra.mrb[0].mxu0 %v6850
    %v12929 = vpop.f32.mrb[0].mxu0
    %v12930 = vadd.f32 %v12889, %v12929
    %v12931 = vpop.f32.mrb[0].mxu0
    %v12932 = vadd.f32 %v12891, %v12931
    %v12933 = vpop.f32.mrb[0].mxu0
    %v12934 = vpop.f32.mrb[0].mxu0
    %12935 = vdwg.mxu0
    %12936 = vmatprep.subr.bf16.mxu0 %v10749
    %12937 = vmatpush1.bf16.msra.mxu0 %v10748
    %12938 = vmatprep.subr.bf16.mxu0 %v10757
    %12939 = vmatpush1.bf16.msra.mxu0 %v10756
    %12940 = vmatprep.subr.bf16.mxu0 %v10765
    %12941 = vmatpush1.bf16.msra.mxu0 %v10764
    %12942 = vmatprep.subr.bf16.mxu0 %v10773
    %12943 = vmatpush1.bf16.msra.mxu0 %v10772
    %12944 = vmatprep.subr.bf16.mxu0 %v10781
    %12945 = vmatpush1.bf16.msra.mxu0 %v10780
    %12946 = vmatprep.subr.bf16.mxu0 %v10789
    %12947 = vmatpush1.bf16.msra.mxu0 %v10788
    %12948 = vmatprep.subr.bf16.mxu0 %v10797
    %12949 = vmatpush1.bf16.msra.mxu0 %v10796
    %12950 = vmatprep.subr.bf16.mxu0 %v10805
    %12951 = vmatpush1.bf16.msra.mxu0 %v10804
    %12952 = vmatprep.subr.bf16.mxu0 %v10813
    %12953 = vmatpush1.bf16.msra.mxu0 %v10812
    %12954 = vmatprep.subr.bf16.mxu0 %v10821
    %12955 = vmatpush1.bf16.msra.mxu0 %v10820
    %12956 = vmatprep.subr.bf16.mxu0 %v10829
    %12957 = vmatpush1.bf16.msra.mxu0 %v10828
    %12958 = vmatprep.subr.bf16.mxu0 %v10837
    %12959 = vmatpush1.bf16.msra.mxu0 %v10836
    %12960 = vmatprep.subr.bf16.mxu0 %v10845
    %12961 = vmatpush1.bf16.msra.mxu0 %v10844
    %12962 = vmatprep.subr.bf16.mxu0 %v10853
    %12963 = vmatpush1.bf16.msra.mxu0 %v10852
    %12964 = vmatprep.subr.bf16.mxu0 %v10861
    %12965 = vmatpush1.bf16.msra.mxu0 %v10860
    %12966 = vmatprep.subr.bf16.mxu0 %v10869
    %12967 = vmatpush1.bf16.msra.mxu0 %v10868
    %12968 = vmatprep.mubr.bf16.mxu0 %v6853
    %12969 = vmatmul.mubr.bf16.gmra.mrb[0].mxu0 %v6852
    %v12970 = vpop.f32.mrb[0].mxu0
    %v12971 = vadd.f32 %v12930, %v12970
    %v12972 = vpop.f32.mrb[0].mxu0
    %v12973 = vadd.f32 %v12932, %v12972
    %v12974 = vpop.f32.mrb[0].mxu0
    %v12975 = vpop.f32.mrb[0].mxu0
    %12976 = vdwg.mxu0
    %12977 = vmatprep.subr.bf16.mxu0 %v10877
    %12978 = vmatpush1.bf16.msra.mxu0 %v10876
    %12979 = vmatprep.subr.bf16.mxu0 %v10885
    %12980 = vmatpush1.bf16.msra.mxu0 %v10884
    %12981 = vmatprep.subr.bf16.mxu0 %v10893
    %12982 = vmatpush1.bf16.msra.mxu0 %v10892
    %12983 = vmatprep.subr.bf16.mxu0 %v10901
    %12984 = vmatpush1.bf16.msra.mxu0 %v10900
    %12985 = vmatprep.subr.bf16.mxu0 %v10909
    %12986 = vmatpush1.bf16.msra.mxu0 %v10908
    %12987 = vmatprep.subr.bf16.mxu0 %v10917
    %12988 = vmatpush1.bf16.msra.mxu0 %v10916
    %12989 = vmatprep.subr.bf16.mxu0 %v10925
    %12990 = vmatpush1.bf16.msra.mxu0 %v10924
    %12991 = vmatprep.subr.bf16.mxu0 %v10933
    %12992 = vmatpush1.bf16.msra.mxu0 %v10932
    %12993 = vmatprep.subr.bf16.mxu0 %v10941
    %12994 = vmatpush1.bf16.msra.mxu0 %v10940
    %12995 = vmatprep.subr.bf16.mxu0 %v10949
    %12996 = vmatpush1.bf16.msra.mxu0 %v10948
    %12997 = vmatprep.subr.bf16.mxu0 %v10957
    %12998 = vmatpush1.bf16.msra.mxu0 %v10956
    %12999 = vmatprep.subr.bf16.mxu0 %v10965
    %13000 = vmatpush1.bf16.msra.mxu0 %v10964
    %13001 = vmatprep.subr.bf16.mxu0 %v10973
    %13002 = vmatpush1.bf16.msra.mxu0 %v10972
    %13003 = vmatprep.subr.bf16.mxu0 %v10981
    %13004 = vmatpush1.bf16.msra.mxu0 %v10980
    %13005 = vmatprep.subr.bf16.mxu0 %v10989
    %13006 = vmatpush1.bf16.msra.mxu0 %v10988
    %13007 = vmatprep.subr.bf16.mxu0 %v10997
    %13008 = vmatpush1.bf16.msra.mxu0 %v10996
    %13009 = vmatprep.mubr.bf16.mxu0 %v6855
    %13010 = vmatmul.mubr.bf16.gmra.mrb[0].mxu0 %v6854
    %v13011 = vpop.f32.mrb[0].mxu0
    %v13012 = vadd.f32 %v12971, %v13011
    %v13013 = vpop.f32.mrb[0].mxu0
    %v13014 = vadd.f32 %v12973, %v13013
    %v13015 = vpop.f32.mrb[0].mxu0
    %v13016 = vpop.f32.mrb[0].mxu0
    %13017 = vdwg.mxu0
    %13018 = vmatprep.subr.bf16.mxu0 %v11005
    %13019 = vmatpush1.bf16.msra.mxu0 %v11004
    %13020 = vmatprep.subr.bf16.mxu0 %v11013
    %13021 = vmatpush1.bf16.msra.mxu0 %v11012
    %13022 = vmatprep.subr.bf16.mxu0 %v11021
    %13023 = vmatpush1.bf16.msra.mxu0 %v11020
    %13024 = vmatprep.subr.bf16.mxu0 %v11029
    %13025 = vmatpush1.bf16.msra.mxu0 %v11028
    %13026 = vmatprep.subr.bf16.mxu0 %v11037
    %13027 = vmatpush1.bf16.msra.mxu0 %v11036
    %13028 = vmatprep.subr.bf16.mxu0 %v11045
    %13029 = vmatpush1.bf16.msra.mxu0 %v11044
    %13030 = vmatprep.subr.bf16.mxu0 %v11053
    %13031 = vmatpush1.bf16.msra.mxu0 %v11052
    %13032 = vmatprep.subr.bf16.mxu0 %v11061
    %13033 = vmatpush1.bf16.msra.mxu0 %v11060
    %13034 = vmatprep.subr.bf16.mxu0 %v11069
    %13035 = vmatpush1.bf16.msra.mxu0 %v11068
    %13036 = vmatprep.subr.bf16.mxu0 %v11077
    %13037 = vmatpush1.bf16.msra.mxu0 %v11076
    %13038 = vmatprep.subr.bf16.mxu0 %v11085
    %13039 = vmatpush1.bf16.msra.mxu0 %v11084
    %13040 = vmatprep.subr.bf16.mxu0 %v11093
    %13041 = vmatpush1.bf16.msra.mxu0 %v11092
    %13042 = vmatprep.subr.bf16.mxu0 %v11101
    %13043 = vmatpush1.bf16.msra.mxu0 %v11100
    %13044 = vmatprep.subr.bf16.mxu0 %v11109
    %13045 = vmatpush1.bf16.msra.mxu0 %v11108
    %13046 = vmatprep.subr.bf16.mxu0 %v11117
    %13047 = vmatpush1.bf16.msra.mxu0 %v11116
    %13048 = vmatprep.subr.bf16.mxu0 %v11125
    %13049 = vmatpush1.bf16.msra.mxu0 %v11124
    %13050 = vmatprep.mubr.bf16.mxu0 %v6857
    %13051 = vmatmul.mubr.bf16.gmra.mrb[0].mxu0 %v6856
    %v13052 = vpop.f32.mrb[0].mxu0
    %v13053 = vadd.f32 %v13012, %v13052
    %v13054 = vpop.f32.mrb[0].mxu0
    %v13055 = vadd.f32 %v13014, %v13054
    %v13056 = vpop.f32.mrb[0].mxu0
    %v13057 = vpop.f32.mrb[0].mxu0
    %13058 = vdwg.mxu0
    %13059 = vmatprep.subr.bf16.mxu0 %v11133
    %13060 = vmatpush1.bf16.msra.mxu0 %v11132
    %13061 = vmatprep.subr.bf16.mxu0 %v11141
    %13062 = vmatpush1.bf16.msra.mxu0 %v11140
    %13063 = vmatprep.subr.bf16.mxu0 %v11149
    %13064 = vmatpush1.bf16.msra.mxu0 %v11148
    %13065 = vmatprep.subr.bf16.mxu0 %v11157
    %13066 = vmatpush1.bf16.msra.mxu0 %v11156
    %13067 = vmatprep.subr.bf16.mxu0 %v11165
    %13068 = vmatpush1.bf16.msra.mxu0 %v11164
    %13069 = vmatprep.subr.bf16.mxu0 %v11173
    %13070 = vmatpush1.bf16.msra.mxu0 %v11172
    %13071 = vmatprep.subr.bf16.mxu0 %v11181
    %13072 = vmatpush1.bf16.msra.mxu0 %v11180
    %13073 = vmatprep.subr.bf16.mxu0 %v11189
    %13074 = vmatpush1.bf16.msra.mxu0 %v11188
    %13075 = vmatprep.subr.bf16.mxu0 %v11197
    %13076 = vmatpush1.bf16.msra.mxu0 %v11196
    %13077 = vmatprep.subr.bf16.mxu0 %v11205
    %13078 = vmatpush1.bf16.msra.mxu0 %v11204
    %13079 = vmatprep.subr.bf16.mxu0 %v11213
    %13080 = vmatpush1.bf16.msra.mxu0 %v11212
    %13081 = vmatprep.subr.bf16.mxu0 %v11221
    %13082 = vmatpush1.bf16.msra.mxu0 %v11220
    %13083 = vmatprep.subr.bf16.mxu0 %v11229
    %13084 = vmatpush1.bf16.msra.mxu0 %v11228
    %13085 = vmatprep.subr.bf16.mxu0 %v11237
    %13086 = vmatpush1.bf16.msra.mxu0 %v11236
    %13087 = vmatprep.subr.bf16.mxu0 %v11245
    %13088 = vmatpush1.bf16.msra.mxu0 %v11244
    %13089 = vmatprep.subr.bf16.mxu0 %v11253
    %13090 = vmatpush1.bf16.msra.mxu0 %v11252
    %13091 = vmatprep.mubr.bf16.mxu0 %v6859
    %13092 = vmatmul.mubr.bf16.gmra.mrb[0].mxu0 %v6858
    %v13093 = vpop.f32.mrb[0].mxu0
    %v13094 = vadd.f32 %v13053, %v13093
    %v13095 = vpop.f32.mrb[0].mxu0
    %v13096 = vadd.f32 %v13055, %v13095
    %v13097 = vpop.f32.mrb[0].mxu0
    %v13098 = vpop.f32.mrb[0].mxu0
    %13099 = vdwg.mxu0
    %13100 = vmatprep.subr.bf16.mxu0 %v11261
    %13101 = vmatpush1.bf16.msra.mxu0 %v11260
    %13102 = vmatprep.subr.bf16.mxu0 %v11269
    %13103 = vmatpush1.bf16.msra.mxu0 %v11268
    %13104 = vmatprep.subr.bf16.mxu0 %v11277
    %13105 = vmatpush1.bf16.msra.mxu0 %v11276
    %13106 = vmatprep.subr.bf16.mxu0 %v11285
    %13107 = vmatpush1.bf16.msra.mxu0 %v11284
    %13108 = vmatprep.subr.bf16.mxu0 %v11293
    %13109 = vmatpush1.bf16.msra.mxu0 %v11292
    %13110 = vmatprep.subr.bf16.mxu0 %v11301
    %13111 = vmatpush1.bf16.msra.mxu0 %v11300
    %13112 = vmatprep.subr.bf16.mxu0 %v11309
    %13113 = vmatpush1.bf16.msra.mxu0 %v11308
    %13114 = vmatprep.subr.bf16.mxu0 %v11317
    %13115 = vmatpush1.bf16.msra.mxu0 %v11316
    %13116 = vmatprep.subr.bf16.mxu0 %v11325
    %13117 = vmatpush1.bf16.msra.mxu0 %v11324
    %13118 = vmatprep.subr.bf16.mxu0 %v11333
    %13119 = vmatpush1.bf16.msra.mxu0 %v11332
    %13120 = vmatprep.subr.bf16.mxu0 %v11341
    %13121 = vmatpush1.bf16.msra.mxu0 %v11340
    %13122 = vmatprep.subr.bf16.mxu0 %v11349
    %13123 = vmatpush1.bf16.msra.mxu0 %v11348
    %13124 = vmatprep.subr.bf16.mxu0 %v11357
    %13125 = vmatpush1.bf16.msra.mxu0 %v11356
    %13126 = vmatprep.subr.bf16.mxu0 %v11365
    %13127 = vmatpush1.bf16.msra.mxu0 %v11364
    %13128 = vmatprep.subr.bf16.mxu0 %v11373
    %13129 = vmatpush1.bf16.msra.mxu0 %v11372
    %13130 = vmatprep.subr.bf16.mxu0 %v11381
    %13131 = vmatpush1.bf16.msra.mxu0 %v11380
    %13132 = vmatprep.mubr.bf16.mxu0 %v6861
    %13133 = vmatmul.mubr.bf16.gmra.mrb[0].mxu0 %v6860
    %v13134 = vpop.f32.mrb[0].mxu0
    %v13135 = vadd.f32 %v13094, %v13134
    %v13136 = vpop.f32.mrb[0].mxu0
    %v13137 = vadd.f32 %v13096, %v13136
    %v13138 = vpop.f32.mrb[0].mxu0
    %v13139 = vpop.f32.mrb[0].mxu0
    %13140 = vdwg.mxu0
    %13141 = vmatprep.subr.bf16.mxu0 %v10495
    %13142 = vmatpush1.bf16.msra.mxu0 %v10494
    %13143 = vmatprep.subr.bf16.mxu0 %v10503
    %13144 = vmatpush1.bf16.msra.mxu0 %v10502
    %13145 = vmatprep.subr.bf16.mxu0 %v10511
    %13146 = vmatpush1.bf16.msra.mxu0 %v10510
    %13147 = vmatprep.subr.bf16.mxu0 %v10519
    %13148 = vmatpush1.bf16.msra.mxu0 %v10518
    %13149 = vmatprep.subr.bf16.mxu0 %v10527
    %13150 = vmatpush1.bf16.msra.mxu0 %v10526
    %13151 = vmatprep.subr.bf16.mxu0 %v10535
    %13152 = vmatpush1.bf16.msra.mxu0 %v10534
    %13153 = vmatprep.subr.bf16.mxu0 %v10543
    %13154 = vmatpush1.bf16.msra.mxu0 %v10542
    %13155 = vmatprep.subr.bf16.mxu0 %v10551
    %13156 = vmatpush1.bf16.msra.mxu0 %v10550
    %13157 = vmatprep.subr.bf16.mxu0 %v10559
    %13158 = vmatpush1.bf16.msra.mxu0 %v10558
    %13159 = vmatprep.subr.bf16.mxu0 %v10567
    %13160 = vmatpush1.bf16.msra.mxu0 %v10566
    %13161 = vmatprep.subr.bf16.mxu0 %v10575
    %13162 = vmatpush1.bf16.msra.mxu0 %v10574
    %13163 = vmatprep.subr.bf16.mxu0 %v10583
    %13164 = vmatpush1.bf16.msra.mxu0 %v10582
    %13165 = vmatprep.subr.bf16.mxu0 %v10591
    %13166 = vmatpush1.bf16.msra.mxu0 %v10590
    %13167 = vmatprep.subr.bf16.mxu0 %v10599
    %13168 = vmatpush1.bf16.msra.mxu0 %v10598
    %13169 = vmatprep.subr.bf16.mxu0 %v10607
    %13170 = vmatpush1.bf16.msra.mxu0 %v10606
    %13171 = vmatprep.subr.bf16.mxu0 %v10615
    %13172 = vmatpush1.bf16.msra.mxu0 %v10614
    %13173 = vmatprep.mubr.bf16.mxu0 %v6849
    %13174 = vmatmul.mubr.bf16.gmra.mrb[0].mxu0 %v6848
    %v13175 = vpop.f32.mrb[0].mxu0
    %v13176 = vadd.f32 %v7787, %v13175
    %v13177 = vpop.f32.mrb[0].mxu0
    %v13178 = vadd.f32 %v7791, %v13177
    %v13179 = vpop.f32.mrb[0].mxu0
    %v13180 = vpop.f32.mrb[0].mxu0
    %13181 = vdwg.mxu0
    %13182 = vmatprep.subr.bf16.mxu0 %v10623
    %13183 = vmatpush1.bf16.msra.mxu0 %v10622
    %13184 = vmatprep.subr.bf16.mxu0 %v10631
    %13185 = vmatpush1.bf16.msra.mxu0 %v10630
    %13186 = vmatprep.subr.bf16.mxu0 %v10639
    %13187 = vmatpush1.bf16.msra.mxu0 %v10638
    %13188 = vmatprep.subr.bf16.mxu0 %v10647
    %13189 = vmatpush1.bf16.msra.mxu0 %v10646
    %13190 = vmatprep.subr.bf16.mxu0 %v10655
    %13191 = vmatpush1.bf16.msra.mxu0 %v10654
    %13192 = vmatprep.subr.bf16.mxu0 %v10663
    %13193 = vmatpush1.bf16.msra.mxu0 %v10662
    %13194 = vmatprep.subr.bf16.mxu0 %v10671
    %13195 = vmatpush1.bf16.msra.mxu0 %v10670
    %13196 = vmatprep.subr.bf16.mxu0 %v10679
    %13197 = vmatpush1.bf16.msra.mxu0 %v10678
    %13198 = vmatprep.subr.bf16.mxu0 %v10687
    %13199 = vmatpush1.bf16.msra.mxu0 %v10686
    %13200 = vmatprep.subr.bf16.mxu0 %v10695
    %13201 = vmatpush1.bf16.msra.mxu0 %v10694
    %13202 = vmatprep.subr.bf16.mxu0 %v10703
    %13203 = vmatpush1.bf16.msra.mxu0 %v10702
    %13204 = vmatprep.subr.bf16.mxu0 %v10711
    %13205 = vmatpush1.bf16.msra.mxu0 %v10710
    %13206 = vmatprep.subr.bf16.mxu0 %v10719
    %13207 = vmatpush1.bf16.msra.mxu0 %v10718
    %13208 = vmatprep.subr.bf16.mxu0 %v10727
    %13209 = vmatpush1.bf16.msra.mxu0 %v10726
    %13210 = vmatprep.subr.bf16.mxu0 %v10735
    %13211 = vmatpush1.bf16.msra.mxu0 %v10734
    %13212 = vmatprep.subr.bf16.mxu0 %v10743
    %13213 = vmatpush1.bf16.msra.mxu0 %v10742
    %13214 = vmatprep.mubr.bf16.mxu0 %v6851
    %13215 = vmatmul.mubr.bf16.gmra.mrb[0].mxu0 %v6850
    %v13216 = vpop.f32.mrb[0].mxu0
    %v13217 = vadd.f32 %v13176, %v13216
    %v13218 = vpop.f32.mrb[0].mxu0
    %v13219 = vadd.f32 %v13178, %v13218
    %v13220 = vpop.f32.mrb[0].mxu0
    %v13221 = vpop.f32.mrb[0].mxu0
    %13222 = vdwg.mxu0
    %13223 = vmatprep.subr.bf16.mxu0 %v10751
    %13224 = vmatpush1.bf16.msra.mxu0 %v10750
    %13225 = vmatprep.subr.bf16.mxu0 %v10759
    %13226 = vmatpush1.bf16.msra.mxu0 %v10758
    %13227 = vmatprep.subr.bf16.mxu0 %v10767
    %13228 = vmatpush1.bf16.msra.mxu0 %v10766
    %13229 = vmatprep.subr.bf16.mxu0 %v10775
    %13230 = vmatpush1.bf16.msra.mxu0 %v10774
    %13231 = vmatprep.subr.bf16.mxu0 %v10783
    %13232 = vmatpush1.bf16.msra.mxu0 %v10782
    %13233 = vmatprep.subr.bf16.mxu0 %v10791
    %13234 = vmatpush1.bf16.msra.mxu0 %v10790
    %13235 = vmatprep.subr.bf16.mxu0 %v10799
    %13236 = vmatpush1.bf16.msra.mxu0 %v10798
    %13237 = vmatprep.subr.bf16.mxu0 %v10807
    %13238 = vmatpush1.bf16.msra.mxu0 %v10806
    %13239 = vmatprep.subr.bf16.mxu0 %v10815
    %13240 = vmatpush1.bf16.msra.mxu0 %v10814
    %13241 = vmatprep.subr.bf16.mxu0 %v10823
    %13242 = vmatpush1.bf16.msra.mxu0 %v10822
    %13243 = vmatprep.subr.bf16.mxu0 %v10831
    %13244 = vmatpush1.bf16.msra.mxu0 %v10830
    %13245 = vmatprep.subr.bf16.mxu0 %v10839
    %13246 = vmatpush1.bf16.msra.mxu0 %v10838
    %13247 = vmatprep.subr.bf16.mxu0 %v10847
    %13248 = vmatpush1.bf16.msra.mxu0 %v10846
    %13249 = vmatprep.subr.bf16.mxu0 %v10855
    %13250 = vmatpush1.bf16.msra.mxu0 %v10854
    %13251 = vmatprep.subr.bf16.mxu0 %v10863
    %13252 = vmatpush1.bf16.msra.mxu0 %v10862
    %13253 = vmatprep.subr.bf16.mxu0 %v10871
    %13254 = vmatpush1.bf16.msra.mxu0 %v10870
    %13255 = vmatprep.mubr.bf16.mxu0 %v6853
    %13256 = vmatmul.mubr.bf16.gmra.mrb[0].mxu0 %v6852
    %v13257 = vpop.f32.mrb[0].mxu0
    %v13258 = vadd.f32 %v13217, %v13257
    %v13259 = vpop.f32.mrb[0].mxu0
    %v13260 = vadd.f32 %v13219, %v13259
    %v13261 = vpop.f32.mrb[0].mxu0
    %v13262 = vpop.f32.mrb[0].mxu0
    %13263 = vdwg.mxu0
    %13264 = vmatprep.subr.bf16.mxu0 %v10879
    %13265 = vmatpush1.bf16.msra.mxu0 %v10878
    %13266 = vmatprep.subr.bf16.mxu0 %v10887
    %13267 = vmatpush1.bf16.msra.mxu0 %v10886
    %13268 = vmatprep.subr.bf16.mxu0 %v10895
    %13269 = vmatpush1.bf16.msra.mxu0 %v10894
    %13270 = vmatprep.subr.bf16.mxu0 %v10903
    %13271 = vmatpush1.bf16.msra.mxu0 %v10902
    %13272 = vmatprep.subr.bf16.mxu0 %v10911
    %13273 = vmatpush1.bf16.msra.mxu0 %v10910
    %13274 = vmatprep.subr.bf16.mxu0 %v10919
    %13275 = vmatpush1.bf16.msra.mxu0 %v10918
    %13276 = vmatprep.subr.bf16.mxu0 %v10927
    %13277 = vmatpush1.bf16.msra.mxu0 %v10926
    %13278 = vmatprep.subr.bf16.mxu0 %v10935
    %13279 = vmatpush1.bf16.msra.mxu0 %v10934
    %13280 = vmatprep.subr.bf16.mxu0 %v10943
    %13281 = vmatpush1.bf16.msra.mxu0 %v10942
    %13282 = vmatprep.subr.bf16.mxu0 %v10951
    %13283 = vmatpush1.bf16.msra.mxu0 %v10950
    %13284 = vmatprep.subr.bf16.mxu0 %v10959
    %13285 = vmatpush1.bf16.msra.mxu0 %v10958
    %13286 = vmatprep.subr.bf16.mxu0 %v10967
    %13287 = vmatpush1.bf16.msra.mxu0 %v10966
    %13288 = vmatprep.subr.bf16.mxu0 %v10975
    %13289 = vmatpush1.bf16.msra.mxu0 %v10974
    %13290 = vmatprep.subr.bf16.mxu0 %v10983
    %13291 = vmatpush1.bf16.msra.mxu0 %v10982
    %13292 = vmatprep.subr.bf16.mxu0 %v10991
    %13293 = vmatpush1.bf16.msra.mxu0 %v10990
    %13294 = vmatprep.subr.bf16.mxu0 %v10999
    %13295 = vmatpush1.bf16.msra.mxu0 %v10998
    %13296 = vmatprep.mubr.bf16.mxu0 %v6855
    %13297 = vmatmul.mubr.bf16.gmra.mrb[0].mxu0 %v6854
    %v13298 = vpop.f32.mrb[0].mxu0
    %v13299 = vadd.f32 %v13258, %v13298
    %v13300 = vpop.f32.mrb[0].mxu0
    %v13301 = vadd.f32 %v13260, %v13300
    %v13302 = vpop.f32.mrb[0].mxu0
    %v13303 = vpop.f32.mrb[0].mxu0
    %13304 = vdwg.mxu0
    %13305 = vmatprep.subr.bf16.mxu0 %v11007
    %13306 = vmatpush1.bf16.msra.mxu0 %v11006
    %13307 = vmatprep.subr.bf16.mxu0 %v11015
    %13308 = vmatpush1.bf16.msra.mxu0 %v11014
    %13309 = vmatprep.subr.bf16.mxu0 %v11023
    %13310 = vmatpush1.bf16.msra.mxu0 %v11022
    %13311 = vmatprep.subr.bf16.mxu0 %v11031
    %13312 = vmatpush1.bf16.msra.mxu0 %v11030
    %13313 = vmatprep.subr.bf16.mxu0 %v11039
    %13314 = vmatpush1.bf16.msra.mxu0 %v11038
    %13315 = vmatprep.subr.bf16.mxu0 %v11047
    %13316 = vmatpush1.bf16.msra.mxu0 %v11046
    %13317 = vmatprep.subr.bf16.mxu0 %v11055
    %13318 = vmatpush1.bf16.msra.mxu0 %v11054
    %13319 = vmatprep.subr.bf16.mxu0 %v11063
    %13320 = vmatpush1.bf16.msra.mxu0 %v11062
    %13321 = vmatprep.subr.bf16.mxu0 %v11071
    %13322 = vmatpush1.bf16.msra.mxu0 %v11070
    %13323 = vmatprep.subr.bf16.mxu0 %v11079
    %13324 = vmatpush1.bf16.msra.mxu0 %v11078
    %13325 = vmatprep.subr.bf16.mxu0 %v11087
    %13326 = vmatpush1.bf16.msra.mxu0 %v11086
    %13327 = vmatprep.subr.bf16.mxu0 %v11095
    %13328 = vmatpush1.bf16.msra.mxu0 %v11094
    %13329 = vmatprep.subr.bf16.mxu0 %v11103
    %13330 = vmatpush1.bf16.msra.mxu0 %v11102
    %13331 = vmatprep.subr.bf16.mxu0 %v11111
    %13332 = vmatpush1.bf16.msra.mxu0 %v11110
    %13333 = vmatprep.subr.bf16.mxu0 %v11119
    %13334 = vmatpush1.bf16.msra.mxu0 %v11118
    %13335 = vmatprep.subr.bf16.mxu0 %v11127
    %13336 = vmatpush1.bf16.msra.mxu0 %v11126
    %13337 = vmatprep.mubr.bf16.mxu0 %v6857
    %13338 = vmatmul.mubr.bf16.gmra.mrb[0].mxu0 %v6856
    %v13339 = vpop.f32.mrb[0].mxu0
    %v13340 = vadd.f32 %v13299, %v13339
    %v13341 = vpop.f32.mrb[0].mxu0
    %v13342 = vadd.f32 %v13301, %v13341
    %v13343 = vpop.f32.mrb[0].mxu0
    %v13344 = vpop.f32.mrb[0].mxu0
    %13345 = vdwg.mxu0
    %13346 = vmatprep.subr.bf16.mxu0 %v11135
    %13347 = vmatpush1.bf16.msra.mxu0 %v11134
    %13348 = vmatprep.subr.bf16.mxu0 %v11143
    %13349 = vmatpush1.bf16.msra.mxu0 %v11142
    %13350 = vmatprep.subr.bf16.mxu0 %v11151
    %13351 = vmatpush1.bf16.msra.mxu0 %v11150
    %13352 = vmatprep.subr.bf16.mxu0 %v11159
    %13353 = vmatpush1.bf16.msra.mxu0 %v11158
    %13354 = vmatprep.subr.bf16.mxu0 %v11167
    %13355 = vmatpush1.bf16.msra.mxu0 %v11166
    %13356 = vmatprep.subr.bf16.mxu0 %v11175
    %13357 = vmatpush1.bf16.msra.mxu0 %v11174
    %13358 = vmatprep.subr.bf16.mxu0 %v11183
    %13359 = vmatpush1.bf16.msra.mxu0 %v11182
    %13360 = vmatprep.subr.bf16.mxu0 %v11191
    %13361 = vmatpush1.bf16.msra.mxu0 %v11190
    %13362 = vmatprep.subr.bf16.mxu0 %v11199
    %13363 = vmatpush1.bf16.msra.mxu0 %v11198
    %13364 = vmatprep.subr.bf16.mxu0 %v11207
    %13365 = vmatpush1.bf16.msra.mxu0 %v11206
    %13366 = vmatprep.subr.bf16.mxu0 %v11215
    %13367 = vmatpush1.bf16.msra.mxu0 %v11214
    %13368 = vmatprep.subr.bf16.mxu0 %v11223
    %13369 = vmatpush1.bf16.msra.mxu0 %v11222
    %13370 = vmatprep.subr.bf16.mxu0 %v11231
    %13371 = vmatpush1.bf16.msra.mxu0 %v11230
    %13372 = vmatprep.subr.bf16.mxu0 %v11239
    %13373 = vmatpush1.bf16.msra.mxu0 %v11238
    %13374 = vmatprep.subr.bf16.mxu0 %v11247
    %13375 = vmatpush1.bf16.msra.mxu0 %v11246
    %13376 = vmatprep.subr.bf16.mxu0 %v11255
    %13377 = vmatpush1.bf16.msra.mxu0 %v11254
    %13378 = vmatprep.mubr.bf16.mxu0 %v6859
    %13379 = vmatmul.mubr.bf16.gmra.mrb[0].mxu0 %v6858
    %v13380 = vpop.f32.mrb[0].mxu0
    %v13381 = vadd.f32 %v13340, %v13380
    %v13382 = vpop.f32.mrb[0].mxu0
    %v13383 = vadd.f32 %v13342, %v13382
    %v13384 = vpop.f32.mrb[0].mxu0
    %v13385 = vpop.f32.mrb[0].mxu0
    %13386 = vdwg.mxu0
    %13387 = vmatprep.subr.bf16.mxu0 %v11263
    %13388 = vmatpush1.bf16.msra.mxu0 %v11262
    %13389 = vmatprep.subr.bf16.mxu0 %v11271
    %13390 = vmatpush1.bf16.msra.mxu0 %v11270
    %13391 = vmatprep.subr.bf16.mxu0 %v11279
    %13392 = vmatpush1.bf16.msra.mxu0 %v11278
    %13393 = vmatprep.subr.bf16.mxu0 %v11287
    %13394 = vmatpush1.bf16.msra.mxu0 %v11286
    %13395 = vmatprep.subr.bf16.mxu0 %v11295
    %13396 = vmatpush1.bf16.msra.mxu0 %v11294
    %13397 = vmatprep.subr.bf16.mxu0 %v11303
    %13398 = vmatpush1.bf16.msra.mxu0 %v11302
    %13399 = vmatprep.subr.bf16.mxu0 %v11311
    %13400 = vmatpush1.bf16.msra.mxu0 %v11310
    %13401 = vmatprep.subr.bf16.mxu0 %v11319
    %13402 = vmatpush1.bf16.msra.mxu0 %v11318
    %13403 = vmatprep.subr.bf16.mxu0 %v11327
    %13404 = vmatpush1.bf16.msra.mxu0 %v11326
    %13405 = vmatprep.subr.bf16.mxu0 %v11335
    %13406 = vmatpush1.bf16.msra.mxu0 %v11334
    %13407 = vmatprep.subr.bf16.mxu0 %v11343
    %13408 = vmatpush1.bf16.msra.mxu0 %v11342
    %13409 = vmatprep.subr.bf16.mxu0 %v11351
    %13410 = vmatpush1.bf16.msra.mxu0 %v11350
    %13411 = vmatprep.subr.bf16.mxu0 %v11359
    %13412 = vmatpush1.bf16.msra.mxu0 %v11358
    %13413 = vmatprep.subr.bf16.mxu0 %v11367
    %13414 = vmatpush1.bf16.msra.mxu0 %v11366
    %13415 = vmatprep.subr.bf16.mxu0 %v11375
    %13416 = vmatpush1.bf16.msra.mxu0 %v11374
    %13417 = vmatprep.subr.bf16.mxu0 %v11383
    %13418 = vmatpush1.bf16.msra.mxu0 %v11382
    %13419 = vmatprep.mubr.bf16.mxu0 %v6861
    %13420 = vmatmul.mubr.bf16.gmra.mrb[0].mxu0 %v6860
    %v13421 = vpop.f32.mrb[0].mxu0
    %v13422 = vadd.f32 %v13381, %v13421
    %v13423 = vpop.f32.mrb[0].mxu0
    %v13424 = vadd.f32 %v13383, %v13423
    %v13425 = vpop.f32.mrb[0].mxu0
    %v13426 = vpop.f32.mrb[0].mxu0
    %13427 = vdwg.mxu0
    %vm13428 = vcmp.ge.f32.partialorder %v12561, 0.0
    %vm13429 = vcmp.ge.f32.partialorder %v12563, 0.0
    %vm13430 = vcmp.ge.f32.partialorder %v12848, 0.0
    %vm13431 = vcmp.ge.f32.partialorder %v12850, 0.0
    %vm13432 = vcmp.ge.f32.partialorder %v13135, 0.0
    %vm13433 = vcmp.ge.f32.partialorder %v13137, 0.0
    %vm13434 = vcmp.ge.f32.partialorder %v13422, 0.0
    %vm13435 = vcmp.ge.f32.partialorder %v13424, 0.0
    %v13436 = vmul.f32 %v12561, 0.01
    %v13437 = vmul.f32 %v12563, 0.01
    %v13438 = vmul.f32 %v12848, 0.01
    %v13439 = vmul.f32 %v12850, 0.01
    %v13440 = vmul.f32 %v13135, 0.01
    %v13441 = vmul.f32 %v13137, 0.01
    %v13442 = vmul.f32 %v13422, 0.01
    %v13443 = vmul.f32 %v13424, 0.01
    %v13444 = vsel %vm13428, %v12561, %v13436
    %v13445 = vsel %vm13429, %v12563, %v13437
    %v13446 = vsel %vm13430, %v12848, %v13438
    %v13447 = vsel %vm13431, %v12850, %v13439
    %v13448 = vsel %vm13432, %v13135, %v13440
    %v13449 = vsel %vm13433, %v13137, %v13441
    %v13450 = vsel %vm13434, %v13422, %v13442
    %v13451 = vsel %vm13435, %v13424, %v13443
    %v13452 = vpack.c.bf16 %v13444, %v13444
    %v13453 = vpack.c.bf16 %v13445, %v13445
    %v13454 = vpack.c.bf16 %v13446, %v13446
    %v13455 = vpack.c.bf16 %v13447, %v13447
    %v13456 = vpack.c.bf16 %v13448, %v13448
    %v13457 = vpack.c.bf16 %v13449, %v13449
    %v13458 = vpack.c.bf16 %v13450, %v13450
    %v13459 = vpack.c.bf16 %v13451, %v13451
    %v13460 = vld [vmem:[#allocation13] sm:$0xff]
    %v13461 = vld [vmem:[#allocation13 + $0x8] sm:$0xff]
    %v13462 = vld [vmem:[#allocation13 + $0x10] sm:$0xff]
    %v13463 = vld [vmem:[#allocation13 + $0x18] sm:$0xff]
    %v13464 = vld [vmem:[#allocation13 + $0x20] sm:$0xff]
    %v13465 = vld [vmem:[#allocation13 + $0x28] sm:$0xff]
    %v13466 = vld [vmem:[#allocation13 + $0x30] sm:$0xff]
    %v13467 = vld [vmem:[#allocation13 + $0x38] sm:$0xff]
    %v13468 = vld [vmem:[#allocation13 + $0x40] sm:$0xff]
    %v13469 = vld [vmem:[#allocation13 + $0x48] sm:$0xff]
    %v13470 = vld [vmem:[#allocation13 + $0x50] sm:$0xff]
    %v13471 = vld [vmem:[#allocation13 + $0x58] sm:$0xff]
    %v13472 = vld [vmem:[#allocation13 + $0x60] sm:$0xff]
    %v13473 = vld [vmem:[#allocation13 + $0x68] sm:$0xff]
    %v13474 = vld [vmem:[#allocation13 + $0x70] sm:$0xff]
    %v13475 = vld [vmem:[#allocation13 + $0x78] sm:$0xff]
    %v13476 = vld [vmem:[#allocation13 + $0x80] sm:$0xff]
    %v13477 = vld [vmem:[#allocation13 + $0x88] sm:$0xff]
    %v13478 = vld [vmem:[#allocation13 + $0x90] sm:$0xff]
    %v13479 = vld [vmem:[#allocation13 + $0x98] sm:$0xff]
    %v13480 = vld [vmem:[#allocation13 + $0xa0] sm:$0xff]
    %v13481 = vld [vmem:[#allocation13 + $0xa8] sm:$0xff]
    %v13482 = vld [vmem:[#allocation13 + $0xb0] sm:$0xff]
    %v13483 = vld [vmem:[#allocation13 + $0xb8] sm:$0xff]
    %v13484 = vld [vmem:[#allocation13 + $0xc0] sm:$0xff]
    %v13485 = vld [vmem:[#allocation13 + $0xc8] sm:$0xff]
    %v13486 = vld [vmem:[#allocation13 + $0xd0] sm:$0xff]
    %v13487 = vld [vmem:[#allocation13 + $0xd8] sm:$0xff]
    %v13488 = vld [vmem:[#allocation13 + $0xe0] sm:$0xff]
    %v13489 = vld [vmem:[#allocation13 + $0xe8] sm:$0xff]
    %v13490 = vld [vmem:[#allocation13 + $0xf0] sm:$0xff]
    %v13491 = vld [vmem:[#allocation13 + $0xf8] sm:$0xff]
    %v13492 = vld [vmem:[#allocation13 + $0x100] sm:$0xff]
    %v13493 = vld [vmem:[#allocation13 + $0x108] sm:$0xff]
    %v13494 = vld [vmem:[#allocation13 + $0x110] sm:$0xff]
    %v13495 = vld [vmem:[#allocation13 + $0x118] sm:$0xff]
    %v13496 = vld [vmem:[#allocation13 + $0x120] sm:$0xff]
    %v13497 = vld [vmem:[#allocation13 + $0x128] sm:$0xff]
    %v13498 = vld [vmem:[#allocation13 + $0x130] sm:$0xff]
    %v13499 = vld [vmem:[#allocation13 + $0x138] sm:$0xff]
    %v13500 = vld [vmem:[#allocation13 + $0x140] sm:$0xff]
    %v13501 = vld [vmem:[#allocation13 + $0x148] sm:$0xff]
    %v13502 = vld [vmem:[#allocation13 + $0x150] sm:$0xff]
    %v13503 = vld [vmem:[#allocation13 + $0x158] sm:$0xff]
    %v13504 = vld [vmem:[#allocation13 + $0x160] sm:$0xff]
    %v13505 = vld [vmem:[#allocation13 + $0x168] sm:$0xff]
    %v13506 = vld [vmem:[#allocation13 + $0x170] sm:$0xff]
    %v13507 = vld [vmem:[#allocation13 + $0x178] sm:$0xff]
    %v13508 = vld [vmem:[#allocation13 + $0x180] sm:$0xff]
    %v13509 = vld [vmem:[#allocation13 + $0x188] sm:$0xff]
    %v13510 = vld [vmem:[#allocation13 + $0x190] sm:$0xff]
    %v13511 = vld [vmem:[#allocation13 + $0x198] sm:$0xff]
    %v13512 = vld [vmem:[#allocation13 + $0x1a0] sm:$0xff]
    %v13513 = vld [vmem:[#allocation13 + $0x1a8] sm:$0xff]
    %v13514 = vld [vmem:[#allocation13 + $0x1b0] sm:$0xff]
    %v13515 = vld [vmem:[#allocation13 + $0x1b8] sm:$0xff]
    %v13516 = vld [vmem:[#allocation13 + $0x1c0] sm:$0xff]
    %v13517 = vld [vmem:[#allocation13 + $0x1c8] sm:$0xff]
    %v13518 = vld [vmem:[#allocation13 + $0x1d0] sm:$0xff]
    %v13519 = vld [vmem:[#allocation13 + $0x1d8] sm:$0xff]
    %v13520 = vld [vmem:[#allocation13 + $0x1e0] sm:$0xff]
    %v13521 = vld [vmem:[#allocation13 + $0x1e8] sm:$0xff]
    %v13522 = vld [vmem:[#allocation13 + $0x1f0] sm:$0xff]
    %v13523 = vld [vmem:[#allocation13 + $0x1f8] sm:$0xff]
    %v13524 = vld [vmem:[#allocation13 + $0x200] sm:$0xff]
    %v13525 = vld [vmem:[#allocation13 + $0x208] sm:$0xff]
    %v13526 = vld [vmem:[#allocation13 + $0x210] sm:$0xff]
    %v13527 = vld [vmem:[#allocation13 + $0x218] sm:$0xff]
    %v13528 = vld [vmem:[#allocation13 + $0x220] sm:$0xff]
    %v13529 = vld [vmem:[#allocation13 + $0x228] sm:$0xff]
    %v13530 = vld [vmem:[#allocation13 + $0x230] sm:$0xff]
    %v13531 = vld [vmem:[#allocation13 + $0x238] sm:$0xff]
    %v13532 = vld [vmem:[#allocation13 + $0x240] sm:$0xff]
    %v13533 = vld [vmem:[#allocation13 + $0x248] sm:$0xff]
    %v13534 = vld [vmem:[#allocation13 + $0x250] sm:$0xff]
    %v13535 = vld [vmem:[#allocation13 + $0x258] sm:$0xff]
    %v13536 = vld [vmem:[#allocation13 + $0x260] sm:$0xff]
    %v13537 = vld [vmem:[#allocation13 + $0x268] sm:$0xff]
    %v13538 = vld [vmem:[#allocation13 + $0x270] sm:$0xff]
    %v13539 = vld [vmem:[#allocation13 + $0x278] sm:$0xff]
    %v13540 = vld [vmem:[#allocation13 + $0x280] sm:$0xff]
    %v13541 = vld [vmem:[#allocation13 + $0x288] sm:$0xff]
    %v13542 = vld [vmem:[#allocation13 + $0x290] sm:$0xff]
    %v13543 = vld [vmem:[#allocation13 + $0x298] sm:$0xff]
    %v13544 = vld [vmem:[#allocation13 + $0x2a0] sm:$0xff]
    %v13545 = vld [vmem:[#allocation13 + $0x2a8] sm:$0xff]
    %v13546 = vld [vmem:[#allocation13 + $0x2b0] sm:$0xff]
    %v13547 = vld [vmem:[#allocation13 + $0x2b8] sm:$0xff]
    %v13548 = vld [vmem:[#allocation13 + $0x2c0] sm:$0xff]
    %v13549 = vld [vmem:[#allocation13 + $0x2c8] sm:$0xff]
    %v13550 = vld [vmem:[#allocation13 + $0x2d0] sm:$0xff]
    %v13551 = vld [vmem:[#allocation13 + $0x2d8] sm:$0xff]
    %v13552 = vld [vmem:[#allocation13 + $0x2e0] sm:$0xff]
    %v13553 = vld [vmem:[#allocation13 + $0x2e8] sm:$0xff]
    %v13554 = vld [vmem:[#allocation13 + $0x2f0] sm:$0xff]
    %v13555 = vld [vmem:[#allocation13 + $0x2f8] sm:$0xff]
    %v13556 = vld [vmem:[#allocation13 + $0x300] sm:$0xff]
    %v13557 = vld [vmem:[#allocation13 + $0x308] sm:$0xff]
    %v13558 = vld [vmem:[#allocation13 + $0x310] sm:$0xff]
    %v13559 = vld [vmem:[#allocation13 + $0x318] sm:$0xff]
    %v13560 = vld [vmem:[#allocation13 + $0x320] sm:$0xff]
    %v13561 = vld [vmem:[#allocation13 + $0x328] sm:$0xff]
    %v13562 = vld [vmem:[#allocation13 + $0x330] sm:$0xff]
    %v13563 = vld [vmem:[#allocation13 + $0x338] sm:$0xff]
    %v13564 = vld [vmem:[#allocation13 + $0x340] sm:$0xff]
    %v13565 = vld [vmem:[#allocation13 + $0x348] sm:$0xff]
    %v13566 = vld [vmem:[#allocation13 + $0x350] sm:$0xff]
    %v13567 = vld [vmem:[#allocation13 + $0x358] sm:$0xff]
    %v13568 = vld [vmem:[#allocation13 + $0x360] sm:$0xff]
    %v13569 = vld [vmem:[#allocation13 + $0x368] sm:$0xff]
    %v13570 = vld [vmem:[#allocation13 + $0x370] sm:$0xff]
    %v13571 = vld [vmem:[#allocation13 + $0x378] sm:$0xff]
    %v13572 = vld [vmem:[#allocation13 + $0x380] sm:$0xff]
    %v13573 = vld [vmem:[#allocation13 + $0x388] sm:$0xff]
    %v13574 = vld [vmem:[#allocation13 + $0x390] sm:$0xff]
    %v13575 = vld [vmem:[#allocation13 + $0x398] sm:$0xff]
    %v13576 = vld [vmem:[#allocation13 + $0x3a0] sm:$0xff]
    %v13577 = vld [vmem:[#allocation13 + $0x3a8] sm:$0xff]
    %v13578 = vld [vmem:[#allocation13 + $0x3b0] sm:$0xff]
    %v13579 = vld [vmem:[#allocation13 + $0x3b8] sm:$0xff]
    %v13580 = vld [vmem:[#allocation13 + $0x3c0] sm:$0xff]
    %v13581 = vld [vmem:[#allocation13 + $0x3c8] sm:$0xff]
    %v13582 = vld [vmem:[#allocation13 + $0x3d0] sm:$0xff]
    %v13583 = vld [vmem:[#allocation13 + $0x3d8] sm:$0xff]
    %v13584 = vld [vmem:[#allocation13 + $0x3e0] sm:$0xff]
    %v13585 = vld [vmem:[#allocation13 + $0x3e8] sm:$0xff]
    %v13586 = vld [vmem:[#allocation13 + $0x3f0] sm:$0xff]
    %v13587 = vld [vmem:[#allocation13 + $0x3f8] sm:$0xff]
    %v13588 = vld [vmem:[#allocation14] sm:$0x3]
    %v13590 = vlaneseq
    %v13591 = vshrl.u32 %v13590, 7
    %v13592 = vsub.s32 0, %v13591
    %v13593 = vrot.slane %v13588, %v13592
    %v13594 = vlaneseq
    %v13595 = vshrl.u32 %v13594, 7
    %v13596 = vsub.s32 1, %v13595
    %v13597 = vrot.slane %v13588, %v13596
    %v13728 = vunpack.c.l.b16 %v13460
    %v13729 = vunpack.c.h.b16 %v13460
    %v13730 = vunpack.c.l.b16 %v13461
    %v13731 = vunpack.c.h.b16 %v13461
    %v13732 = vunpack.c.l.b16 %v13462
    %v13733 = vunpack.c.h.b16 %v13462
    %v13734 = vunpack.c.l.b16 %v13463
    %v13735 = vunpack.c.h.b16 %v13463
    %v13736 = vunpack.c.l.b16 %v13464
    %v13737 = vunpack.c.h.b16 %v13464
    %v13738 = vunpack.c.l.b16 %v13465
    %v13739 = vunpack.c.h.b16 %v13465
    %v13740 = vunpack.c.l.b16 %v13466
    %v13741 = vunpack.c.h.b16 %v13466
    %v13742 = vunpack.c.l.b16 %v13467
    %v13743 = vunpack.c.h.b16 %v13467
    %v13744 = vunpack.c.l.b16 %v13468
    %v13745 = vunpack.c.h.b16 %v13468
    %v13746 = vunpack.c.l.b16 %v13469
    %v13747 = vunpack.c.h.b16 %v13469
    %v13748 = vunpack.c.l.b16 %v13470
    %v13749 = vunpack.c.h.b16 %v13470
    %v13750 = vunpack.c.l.b16 %v13471
    %v13751 = vunpack.c.h.b16 %v13471
    %v13752 = vunpack.c.l.b16 %v13472
    %v13753 = vunpack.c.h.b16 %v13472
    %v13754 = vunpack.c.l.b16 %v13473
    %v13755 = vunpack.c.h.b16 %v13473
    %v13756 = vunpack.c.l.b16 %v13474
    %v13757 = vunpack.c.h.b16 %v13474
    %v13758 = vunpack.c.l.b16 %v13475
    %v13759 = vunpack.c.h.b16 %v13475
    %v13760 = vunpack.c.l.b16 %v13476
    %v13761 = vunpack.c.h.b16 %v13476
    %v13762 = vunpack.c.l.b16 %v13477
    %v13763 = vunpack.c.h.b16 %v13477
    %v13764 = vunpack.c.l.b16 %v13478
    %v13765 = vunpack.c.h.b16 %v13478
    %v13766 = vunpack.c.l.b16 %v13479
    %v13767 = vunpack.c.h.b16 %v13479
    %v13768 = vunpack.c.l.b16 %v13480
    %v13769 = vunpack.c.h.b16 %v13480
    %v13770 = vunpack.c.l.b16 %v13481
    %v13771 = vunpack.c.h.b16 %v13481
    %v13772 = vunpack.c.l.b16 %v13482
    %v13773 = vunpack.c.h.b16 %v13482
    %v13774 = vunpack.c.l.b16 %v13483
    %v13775 = vunpack.c.h.b16 %v13483
    %v13776 = vunpack.c.l.b16 %v13484
    %v13777 = vunpack.c.h.b16 %v13484
    %v13778 = vunpack.c.l.b16 %v13485
    %v13779 = vunpack.c.h.b16 %v13485
    %v13780 = vunpack.c.l.b16 %v13486
    %v13781 = vunpack.c.h.b16 %v13486
    %v13782 = vunpack.c.l.b16 %v13487
    %v13783 = vunpack.c.h.b16 %v13487
    %v13784 = vunpack.c.l.b16 %v13488
    %v13785 = vunpack.c.h.b16 %v13488
    %v13786 = vunpack.c.l.b16 %v13489
    %v13787 = vunpack.c.h.b16 %v13489
    %v13788 = vunpack.c.l.b16 %v13490
    %v13789 = vunpack.c.h.b16 %v13490
    %v13790 = vunpack.c.l.b16 %v13491
    %v13791 = vunpack.c.h.b16 %v13491
    %v13792 = vunpack.c.l.b16 %v13492
    %v13793 = vunpack.c.h.b16 %v13492
    %v13794 = vunpack.c.l.b16 %v13493
    %v13795 = vunpack.c.h.b16 %v13493
    %v13796 = vunpack.c.l.b16 %v13494
    %v13797 = vunpack.c.h.b16 %v13494
    %v13798 = vunpack.c.l.b16 %v13495
    %v13799 = vunpack.c.h.b16 %v13495
    %v13800 = vunpack.c.l.b16 %v13496
    %v13801 = vunpack.c.h.b16 %v13496
    %v13802 = vunpack.c.l.b16 %v13497
    %v13803 = vunpack.c.h.b16 %v13497
    %v13804 = vunpack.c.l.b16 %v13498
    %v13805 = vunpack.c.h.b16 %v13498
    %v13806 = vunpack.c.l.b16 %v13499
    %v13807 = vunpack.c.h.b16 %v13499
    %v13808 = vunpack.c.l.b16 %v13500
    %v13809 = vunpack.c.h.b16 %v13500
    %v13810 = vunpack.c.l.b16 %v13501
    %v13811 = vunpack.c.h.b16 %v13501
    %v13812 = vunpack.c.l.b16 %v13502
    %v13813 = vunpack.c.h.b16 %v13502
    %v13814 = vunpack.c.l.b16 %v13503
    %v13815 = vunpack.c.h.b16 %v13503
    %v13816 = vunpack.c.l.b16 %v13504
    %v13817 = vunpack.c.h.b16 %v13504
    %v13818 = vunpack.c.l.b16 %v13505
    %v13819 = vunpack.c.h.b16 %v13505
    %v13820 = vunpack.c.l.b16 %v13506
    %v13821 = vunpack.c.h.b16 %v13506
    %v13822 = vunpack.c.l.b16 %v13507
    %v13823 = vunpack.c.h.b16 %v13507
    %v13824 = vunpack.c.l.b16 %v13508
    %v13825 = vunpack.c.h.b16 %v13508
    %v13826 = vunpack.c.l.b16 %v13509
    %v13827 = vunpack.c.h.b16 %v13509
    %v13828 = vunpack.c.l.b16 %v13510
    %v13829 = vunpack.c.h.b16 %v13510
    %v13830 = vunpack.c.l.b16 %v13511
    %v13831 = vunpack.c.h.b16 %v13511
    %v13832 = vunpack.c.l.b16 %v13512
    %v13833 = vunpack.c.h.b16 %v13512
    %v13834 = vunpack.c.l.b16 %v13513
    %v13835 = vunpack.c.h.b16 %v13513
    %v13836 = vunpack.c.l.b16 %v13514
    %v13837 = vunpack.c.h.b16 %v13514
    %v13838 = vunpack.c.l.b16 %v13515
    %v13839 = vunpack.c.h.b16 %v13515
    %v13840 = vunpack.c.l.b16 %v13516
    %v13841 = vunpack.c.h.b16 %v13516
    %v13842 = vunpack.c.l.b16 %v13517
    %v13843 = vunpack.c.h.b16 %v13517
    %v13844 = vunpack.c.l.b16 %v13518
    %v13845 = vunpack.c.h.b16 %v13518
    %v13846 = vunpack.c.l.b16 %v13519
    %v13847 = vunpack.c.h.b16 %v13519
    %v13848 = vunpack.c.l.b16 %v13520
    %v13849 = vunpack.c.h.b16 %v13520
    %v13850 = vunpack.c.l.b16 %v13521
    %v13851 = vunpack.c.h.b16 %v13521
    %v13852 = vunpack.c.l.b16 %v13522
    %v13853 = vunpack.c.h.b16 %v13522
    %v13854 = vunpack.c.l.b16 %v13523
    %v13855 = vunpack.c.h.b16 %v13523
    %v13856 = vunpack.c.l.b16 %v13524
    %v13857 = vunpack.c.h.b16 %v13524
    %v13858 = vunpack.c.l.b16 %v13525
    %v13859 = vunpack.c.h.b16 %v13525
    %v13860 = vunpack.c.l.b16 %v13526
    %v13861 = vunpack.c.h.b16 %v13526
    %v13862 = vunpack.c.l.b16 %v13527
    %v13863 = vunpack.c.h.b16 %v13527
    %v13864 = vunpack.c.l.b16 %v13528
    %v13865 = vunpack.c.h.b16 %v13528
    %v13866 = vunpack.c.l.b16 %v13529
    %v13867 = vunpack.c.h.b16 %v13529
    %v13868 = vunpack.c.l.b16 %v13530
    %v13869 = vunpack.c.h.b16 %v13530
    %v13870 = vunpack.c.l.b16 %v13531
    %v13871 = vunpack.c.h.b16 %v13531
    %v13872 = vunpack.c.l.b16 %v13532
    %v13873 = vunpack.c.h.b16 %v13532
    %v13874 = vunpack.c.l.b16 %v13533
    %v13875 = vunpack.c.h.b16 %v13533
    %v13876 = vunpack.c.l.b16 %v13534
    %v13877 = vunpack.c.h.b16 %v13534
    %v13878 = vunpack.c.l.b16 %v13535
    %v13879 = vunpack.c.h.b16 %v13535
    %v13880 = vunpack.c.l.b16 %v13536
    %v13881 = vunpack.c.h.b16 %v13536
    %v13882 = vunpack.c.l.b16 %v13537
    %v13883 = vunpack.c.h.b16 %v13537
    %v13884 = vunpack.c.l.b16 %v13538
    %v13885 = vunpack.c.h.b16 %v13538
    %v13886 = vunpack.c.l.b16 %v13539
    %v13887 = vunpack.c.h.b16 %v13539
    %v13888 = vunpack.c.l.b16 %v13540
    %v13889 = vunpack.c.h.b16 %v13540
    %v13890 = vunpack.c.l.b16 %v13541
    %v13891 = vunpack.c.h.b16 %v13541
    %v13892 = vunpack.c.l.b16 %v13542
    %v13893 = vunpack.c.h.b16 %v13542
    %v13894 = vunpack.c.l.b16 %v13543
    %v13895 = vunpack.c.h.b16 %v13543
    %v13896 = vunpack.c.l.b16 %v13544
    %v13897 = vunpack.c.h.b16 %v13544
    %v13898 = vunpack.c.l.b16 %v13545
    %v13899 = vunpack.c.h.b16 %v13545
    %v13900 = vunpack.c.l.b16 %v13546
    %v13901 = vunpack.c.h.b16 %v13546
    %v13902 = vunpack.c.l.b16 %v13547
    %v13903 = vunpack.c.h.b16 %v13547
    %v13904 = vunpack.c.l.b16 %v13548
    %v13905 = vunpack.c.h.b16 %v13548
    %v13906 = vunpack.c.l.b16 %v13549
    %v13907 = vunpack.c.h.b16 %v13549
    %v13908 = vunpack.c.l.b16 %v13550
    %v13909 = vunpack.c.h.b16 %v13550
    %v13910 = vunpack.c.l.b16 %v13551
    %v13911 = vunpack.c.h.b16 %v13551
    %v13912 = vunpack.c.l.b16 %v13552
    %v13913 = vunpack.c.h.b16 %v13552
    %v13914 = vunpack.c.l.b16 %v13553
    %v13915 = vunpack.c.h.b16 %v13553
    %v13916 = vunpack.c.l.b16 %v13554
    %v13917 = vunpack.c.h.b16 %v13554
    %v13918 = vunpack.c.l.b16 %v13555
    %v13919 = vunpack.c.h.b16 %v13555
    %v13920 = vunpack.c.l.b16 %v13556
    %v13921 = vunpack.c.h.b16 %v13556
    %v13922 = vunpack.c.l.b16 %v13557
    %v13923 = vunpack.c.h.b16 %v13557
    %v13924 = vunpack.c.l.b16 %v13558
    %v13925 = vunpack.c.h.b16 %v13558
    %v13926 = vunpack.c.l.b16 %v13559
    %v13927 = vunpack.c.h.b16 %v13559
    %v13928 = vunpack.c.l.b16 %v13560
    %v13929 = vunpack.c.h.b16 %v13560
    %v13930 = vunpack.c.l.b16 %v13561
    %v13931 = vunpack.c.h.b16 %v13561
    %v13932 = vunpack.c.l.b16 %v13562
    %v13933 = vunpack.c.h.b16 %v13562
    %v13934 = vunpack.c.l.b16 %v13563
    %v13935 = vunpack.c.h.b16 %v13563
    %v13936 = vunpack.c.l.b16 %v13564
    %v13937 = vunpack.c.h.b16 %v13564
    %v13938 = vunpack.c.l.b16 %v13565
    %v13939 = vunpack.c.h.b16 %v13565
    %v13940 = vunpack.c.l.b16 %v13566
    %v13941 = vunpack.c.h.b16 %v13566
    %v13942 = vunpack.c.l.b16 %v13567
    %v13943 = vunpack.c.h.b16 %v13567
    %v13944 = vunpack.c.l.b16 %v13568
    %v13945 = vunpack.c.h.b16 %v13568
    %v13946 = vunpack.c.l.b16 %v13569
    %v13947 = vunpack.c.h.b16 %v13569
    %v13948 = vunpack.c.l.b16 %v13570
    %v13949 = vunpack.c.h.b16 %v13570
    %v13950 = vunpack.c.l.b16 %v13571
    %v13951 = vunpack.c.h.b16 %v13571
    %v13952 = vunpack.c.l.b16 %v13572
    %v13953 = vunpack.c.h.b16 %v13572
    %v13954 = vunpack.c.l.b16 %v13573
    %v13955 = vunpack.c.h.b16 %v13573
    %v13956 = vunpack.c.l.b16 %v13574
    %v13957 = vunpack.c.h.b16 %v13574
    %v13958 = vunpack.c.l.b16 %v13575
    %v13959 = vunpack.c.h.b16 %v13575
    %v13960 = vunpack.c.l.b16 %v13576
    %v13961 = vunpack.c.h.b16 %v13576
    %v13962 = vunpack.c.l.b16 %v13577
    %v13963 = vunpack.c.h.b16 %v13577
    %v13964 = vunpack.c.l.b16 %v13578
    %v13965 = vunpack.c.h.b16 %v13578
    %v13966 = vunpack.c.l.b16 %v13579
    %v13967 = vunpack.c.h.b16 %v13579
    %v13968 = vunpack.c.l.b16 %v13580
    %v13969 = vunpack.c.h.b16 %v13580
    %v13970 = vunpack.c.l.b16 %v13581
    %v13971 = vunpack.c.h.b16 %v13581
    %v13972 = vunpack.c.l.b16 %v13582
    %v13973 = vunpack.c.h.b16 %v13582
    %v13974 = vunpack.c.l.b16 %v13583
    %v13975 = vunpack.c.h.b16 %v13583
    %v13976 = vunpack.c.l.b16 %v13584
    %v13977 = vunpack.c.h.b16 %v13584
    %v13978 = vunpack.c.l.b16 %v13585
    %v13979 = vunpack.c.h.b16 %v13585
    %v13980 = vunpack.c.l.b16 %v13586
    %v13981 = vunpack.c.h.b16 %v13586
    %v13982 = vunpack.c.l.b16 %v13587
    %v13983 = vunpack.c.h.b16 %v13587
    %v13984 = vpack.c.b16 %v13730, %v13728
    %v13985 = vpack.c.b16 %v13731, %v13729
    %v13986 = vpack.c.b16 %v13734, %v13732
    %v13987 = vpack.c.b16 %v13735, %v13733
    %v13988 = vpack.c.b16 %v13738, %v13736
    %v13989 = vpack.c.b16 %v13739, %v13737
    %v13990 = vpack.c.b16 %v13742, %v13740
    %v13991 = vpack.c.b16 %v13743, %v13741
    %v13992 = vpack.c.b16 %v13746, %v13744
    %v13993 = vpack.c.b16 %v13747, %v13745
    %v13994 = vpack.c.b16 %v13750, %v13748
    %v13995 = vpack.c.b16 %v13751, %v13749
    %v13996 = vpack.c.b16 %v13754, %v13752
    %v13997 = vpack.c.b16 %v13755, %v13753
    %v13998 = vpack.c.b16 %v13758, %v13756
    %v13999 = vpack.c.b16 %v13759, %v13757
    %v14000 = vpack.c.b16 %v13762, %v13760
    %v14001 = vpack.c.b16 %v13763, %v13761
    %v14002 = vpack.c.b16 %v13766, %v13764
    %v14003 = vpack.c.b16 %v13767, %v13765
    %v14004 = vpack.c.b16 %v13770, %v13768
    %v14005 = vpack.c.b16 %v13771, %v13769
    %v14006 = vpack.c.b16 %v13774, %v13772
    %v14007 = vpack.c.b16 %v13775, %v13773
    %v14008 = vpack.c.b16 %v13778, %v13776
    %v14009 = vpack.c.b16 %v13779, %v13777
    %v14010 = vpack.c.b16 %v13782, %v13780
    %v14011 = vpack.c.b16 %v13783, %v13781
    %v14012 = vpack.c.b16 %v13786, %v13784
    %v14013 = vpack.c.b16 %v13787, %v13785
    %v14014 = vpack.c.b16 %v13790, %v13788
    %v14015 = vpack.c.b16 %v13791, %v13789
    %v14016 = vpack.c.b16 %v13794, %v13792
    %v14017 = vpack.c.b16 %v13795, %v13793
    %v14018 = vpack.c.b16 %v13798, %v13796
    %v14019 = vpack.c.b16 %v13799, %v13797
    %v14020 = vpack.c.b16 %v13802, %v13800
    %v14021 = vpack.c.b16 %v13803, %v13801
    %v14022 = vpack.c.b16 %v13806, %v13804
    %v14023 = vpack.c.b16 %v13807, %v13805
    %v14024 = vpack.c.b16 %v13810, %v13808
    %v14025 = vpack.c.b16 %v13811, %v13809
    %v14026 = vpack.c.b16 %v13814, %v13812
    %v14027 = vpack.c.b16 %v13815, %v13813
    %v14028 = vpack.c.b16 %v13818, %v13816
    %v14029 = vpack.c.b16 %v13819, %v13817
    %v14030 = vpack.c.b16 %v13822, %v13820
    %v14031 = vpack.c.b16 %v13823, %v13821
    %v14032 = vpack.c.b16 %v13826, %v13824
    %v14033 = vpack.c.b16 %v13827, %v13825
    %v14034 = vpack.c.b16 %v13830, %v13828
    %v14035 = vpack.c.b16 %v13831, %v13829
    %v14036 = vpack.c.b16 %v13834, %v13832
    %v14037 = vpack.c.b16 %v13835, %v13833
    %v14038 = vpack.c.b16 %v13838, %v13836
    %v14039 = vpack.c.b16 %v13839, %v13837
    %v14040 = vpack.c.b16 %v13842, %v13840
    %v14041 = vpack.c.b16 %v13843, %v13841
    %v14042 = vpack.c.b16 %v13846, %v13844
    %v14043 = vpack.c.b16 %v13847, %v13845
    %v14044 = vpack.c.b16 %v13850, %v13848
    %v14045 = vpack.c.b16 %v13851, %v13849
    %v14046 = vpack.c.b16 %v13854, %v13852
    %v14047 = vpack.c.b16 %v13855, %v13853
    %v14048 = vpack.c.b16 %v13858, %v13856
    %v14049 = vpack.c.b16 %v13859, %v13857
    %v14050 = vpack.c.b16 %v13862, %v13860
    %v14051 = vpack.c.b16 %v13863, %v13861
    %v14052 = vpack.c.b16 %v13866, %v13864
    %v14053 = vpack.c.b16 %v13867, %v13865
    %v14054 = vpack.c.b16 %v13870, %v13868
    %v14055 = vpack.c.b16 %v13871, %v13869
    %v14056 = vpack.c.b16 %v13874, %v13872
    %v14057 = vpack.c.b16 %v13875, %v13873
    %v14058 = vpack.c.b16 %v13878, %v13876
    %v14059 = vpack.c.b16 %v13879, %v13877
    %v14060 = vpack.c.b16 %v13882, %v13880
    %v14061 = vpack.c.b16 %v13883, %v13881
    %v14062 = vpack.c.b16 %v13886, %v13884
    %v14063 = vpack.c.b16 %v13887, %v13885
    %v14064 = vpack.c.b16 %v13890, %v13888
    %v14065 = vpack.c.b16 %v13891, %v13889
    %v14066 = vpack.c.b16 %v13894, %v13892
    %v14067 = vpack.c.b16 %v13895, %v13893
    %v14068 = vpack.c.b16 %v13898, %v13896
    %v14069 = vpack.c.b16 %v13899, %v13897
    %v14070 = vpack.c.b16 %v13902, %v13900
    %v14071 = vpack.c.b16 %v13903, %v13901
    %v14072 = vpack.c.b16 %v13906, %v13904
    %v14073 = vpack.c.b16 %v13907, %v13905
    %v14074 = vpack.c.b16 %v13910, %v13908
    %v14075 = vpack.c.b16 %v13911, %v13909
    %v14076 = vpack.c.b16 %v13914, %v13912
    %v14077 = vpack.c.b16 %v13915, %v13913
    %v14078 = vpack.c.b16 %v13918, %v13916
    %v14079 = vpack.c.b16 %v13919, %v13917
    %v14080 = vpack.c.b16 %v13922, %v13920
    %v14081 = vpack.c.b16 %v13923, %v13921
    %v14082 = vpack.c.b16 %v13926, %v13924
    %v14083 = vpack.c.b16 %v13927, %v13925
    %v14084 = vpack.c.b16 %v13930, %v13928
    %v14085 = vpack.c.b16 %v13931, %v13929
    %v14086 = vpack.c.b16 %v13934, %v13932
    %v14087 = vpack.c.b16 %v13935, %v13933
    %v14088 = vpack.c.b16 %v13938, %v13936
    %v14089 = vpack.c.b16 %v13939, %v13937
    %v14090 = vpack.c.b16 %v13942, %v13940
    %v14091 = vpack.c.b16 %v13943, %v13941
    %v14092 = vpack.c.b16 %v13946, %v13944
    %v14093 = vpack.c.b16 %v13947, %v13945
    %v14094 = vpack.c.b16 %v13950, %v13948
    %v14095 = vpack.c.b16 %v13951, %v13949
    %v14096 = vpack.c.b16 %v13954, %v13952
    %v14097 = vpack.c.b16 %v13955, %v13953
    %v14098 = vpack.c.b16 %v13958, %v13956
    %v14099 = vpack.c.b16 %v13959, %v13957
    %v14100 = vpack.c.b16 %v13962, %v13960
    %v14101 = vpack.c.b16 %v13963, %v13961
    %v14102 = vpack.c.b16 %v13966, %v13964
    %v14103 = vpack.c.b16 %v13967, %v13965
    %v14104 = vpack.c.b16 %v13970, %v13968
    %v14105 = vpack.c.b16 %v13971, %v13969
    %v14106 = vpack.c.b16 %v13974, %v13972
    %v14107 = vpack.c.b16 %v13975, %v13973
    %v14108 = vpack.c.b16 %v13978, %v13976
    %v14109 = vpack.c.b16 %v13979, %v13977
    %v14110 = vpack.c.b16 %v13982, %v13980
    %v14111 = vpack.c.b16 %v13983, %v13981
    %14240 = vmatprep.subr.bf16.mxu0 %v13985
    %14241 = vmatpush1.bf16.msra.mxu0 %v13984
    %14242 = vmatprep.subr.bf16.mxu0 %v13987
    %14243 = vmatpush1.bf16.msra.mxu0 %v13986
    %14244 = vmatprep.subr.bf16.mxu0 %v13989
    %14245 = vmatpush1.bf16.msra.mxu0 %v13988
    %14246 = vmatprep.subr.bf16.mxu0 %v13991
    %14247 = vmatpush1.bf16.msra.mxu0 %v13990
    %14248 = vmatprep.subr.bf16.mxu0 %v13993
    %14249 = vmatpush1.bf16.msra.mxu0 %v13992
    %14250 = vmatprep.subr.bf16.mxu0 %v13995
    %14251 = vmatpush1.bf16.msra.mxu0 %v13994
    %14252 = vmatprep.subr.bf16.mxu0 %v13997
    %14253 = vmatpush1.bf16.msra.mxu0 %v13996
    %14254 = vmatprep.subr.bf16.mxu0 %v13999
    %14255 = vmatpush1.bf16.msra.mxu0 %v13998
    %14256 = vmatprep.subr.bf16.mxu0 %v14001
    %14257 = vmatpush1.bf16.msra.mxu0 %v14000
    %14258 = vmatprep.subr.bf16.mxu0 %v14003
    %14259 = vmatpush1.bf16.msra.mxu0 %v14002
    %14260 = vmatprep.subr.bf16.mxu0 %v14005
    %14261 = vmatpush1.bf16.msra.mxu0 %v14004
    %14262 = vmatprep.subr.bf16.mxu0 %v14007
    %14263 = vmatpush1.bf16.msra.mxu0 %v14006
    %14264 = vmatprep.subr.bf16.mxu0 %v14009
    %14265 = vmatpush1.bf16.msra.mxu0 %v14008
    %14266 = vmatprep.subr.bf16.mxu0 %v14011
    %14267 = vmatpush1.bf16.msra.mxu0 %v14010
    %14268 = vmatprep.subr.bf16.mxu0 %v14013
    %14269 = vmatpush1.bf16.msra.mxu0 %v14012
    %14270 = vmatprep.subr.bf16.mxu0 %v14015
    %14271 = vmatpush1.bf16.msra.mxu0 %v14014
    %14272 = vmatprep.mubr.bf16.mxu0 %v13453
    %14273 = vmatmul.mubr.bf16.gmra.mrb[0].mxu0 %v13452
    %v14274 = vpop.f32.mrb[0].mxu0
    %v14275 = vadd.f32 %v13593, %v14274
    %v14276 = vpop.f32.mrb[0].mxu0
    %v14277 = vadd.f32 %v13597, %v14276
    %v14278 = vpop.f32.mrb[0].mxu0
    %v14279 = vpop.f32.mrb[0].mxu0
    %14280 = vdwg.mxu0
    %14281 = vmatprep.subr.bf16.mxu0 %v14017
    %14282 = vmatpush1.bf16.msra.mxu0 %v14016
    %14283 = vmatprep.subr.bf16.mxu0 %v14019
    %14284 = vmatpush1.bf16.msra.mxu0 %v14018
    %14285 = vmatprep.subr.bf16.mxu0 %v14021
    %14286 = vmatpush1.bf16.msra.mxu0 %v14020
    %14287 = vmatprep.subr.bf16.mxu0 %v14023
    %14288 = vmatpush1.bf16.msra.mxu0 %v14022
    %14289 = vmatprep.subr.bf16.mxu0 %v14025
    %14290 = vmatpush1.bf16.msra.mxu0 %v14024
    %14291 = vmatprep.subr.bf16.mxu0 %v14027
    %14292 = vmatpush1.bf16.msra.mxu0 %v14026
    %14293 = vmatprep.subr.bf16.mxu0 %v14029
    %14294 = vmatpush1.bf16.msra.mxu0 %v14028
    %14295 = vmatprep.subr.bf16.mxu0 %v14031
    %14296 = vmatpush1.bf16.msra.mxu0 %v14030
    %14297 = vmatprep.subr.bf16.mxu0 %v14033
    %14298 = vmatpush1.bf16.msra.mxu0 %v14032
    %14299 = vmatprep.subr.bf16.mxu0 %v14035
    %14300 = vmatpush1.bf16.msra.mxu0 %v14034
    %14301 = vmatprep.subr.bf16.mxu0 %v14037
    %14302 = vmatpush1.bf16.msra.mxu0 %v14036
    %14303 = vmatprep.subr.bf16.mxu0 %v14039
    %14304 = vmatpush1.bf16.msra.mxu0 %v14038
    %14305 = vmatprep.subr.bf16.mxu0 %v14041
    %14306 = vmatpush1.bf16.msra.mxu0 %v14040
    %14307 = vmatprep.subr.bf16.mxu0 %v14043
    %14308 = vmatpush1.bf16.msra.mxu0 %v14042
    %14309 = vmatprep.subr.bf16.mxu0 %v14045
    %14310 = vmatpush1.bf16.msra.mxu0 %v14044
    %14311 = vmatprep.subr.bf16.mxu0 %v14047
    %14312 = vmatpush1.bf16.msra.mxu0 %v14046
    %14313 = vmatprep.mubr.bf16.mxu0 %v13455
    %14314 = vmatmul.mubr.bf16.gmra.mrb[0].mxu0 %v13454
    %v14315 = vpop.f32.mrb[0].mxu0
    %v14316 = vadd.f32 %v14275, %v14315
    %v14317 = vpop.f32.mrb[0].mxu0
    %v14318 = vadd.f32 %v14277, %v14317
    %v14319 = vpop.f32.mrb[0].mxu0
    %v14320 = vpop.f32.mrb[0].mxu0
    %14321 = vdwg.mxu0
    %14322 = vmatprep.subr.bf16.mxu0 %v14049
    %14323 = vmatpush1.bf16.msra.mxu0 %v14048
    %14324 = vmatprep.subr.bf16.mxu0 %v14051
    %14325 = vmatpush1.bf16.msra.mxu0 %v14050
    %14326 = vmatprep.subr.bf16.mxu0 %v14053
    %14327 = vmatpush1.bf16.msra.mxu0 %v14052
    %14328 = vmatprep.subr.bf16.mxu0 %v14055
    %14329 = vmatpush1.bf16.msra.mxu0 %v14054
    %14330 = vmatprep.subr.bf16.mxu0 %v14057
    %14331 = vmatpush1.bf16.msra.mxu0 %v14056
    %14332 = vmatprep.subr.bf16.mxu0 %v14059
    %14333 = vmatpush1.bf16.msra.mxu0 %v14058
    %14334 = vmatprep.subr.bf16.mxu0 %v14061
    %14335 = vmatpush1.bf16.msra.mxu0 %v14060
    %14336 = vmatprep.subr.bf16.mxu0 %v14063
    %14337 = vmatpush1.bf16.msra.mxu0 %v14062
    %14338 = vmatprep.subr.bf16.mxu0 %v14065
    %14339 = vmatpush1.bf16.msra.mxu0 %v14064
    %14340 = vmatprep.subr.bf16.mxu0 %v14067
    %14341 = vmatpush1.bf16.msra.mxu0 %v14066
    %14342 = vmatprep.subr.bf16.mxu0 %v14069
    %14343 = vmatpush1.bf16.msra.mxu0 %v14068
    %14344 = vmatprep.subr.bf16.mxu0 %v14071
    %14345 = vmatpush1.bf16.msra.mxu0 %v14070
    %14346 = vmatprep.subr.bf16.mxu0 %v14073
    %14347 = vmatpush1.bf16.msra.mxu0 %v14072
    %14348 = vmatprep.subr.bf16.mxu0 %v14075
    %14349 = vmatpush1.bf16.msra.mxu0 %v14074
    %14350 = vmatprep.subr.bf16.mxu0 %v14077
    %14351 = vmatpush1.bf16.msra.mxu0 %v14076
    %14352 = vmatprep.subr.bf16.mxu0 %v14079
    %14353 = vmatpush1.bf16.msra.mxu0 %v14078
    %14354 = vmatprep.mubr.bf16.mxu0 %v13457
    %14355 = vmatmul.mubr.bf16.gmra.mrb[0].mxu0 %v13456
    %v14356 = vpop.f32.mrb[0].mxu0
    %v14357 = vadd.f32 %v14316, %v14356
    %v14358 = vpop.f32.mrb[0].mxu0
    %v14359 = vadd.f32 %v14318, %v14358
    %v14360 = vpop.f32.mrb[0].mxu0
    %v14361 = vpop.f32.mrb[0].mxu0
    %14362 = vdwg.mxu0
    %14363 = vmatprep.subr.bf16.mxu0 %v14081
    %14364 = vmatpush1.bf16.msra.mxu0 %v14080
    %14365 = vmatprep.subr.bf16.mxu0 %v14083
    %14366 = vmatpush1.bf16.msra.mxu0 %v14082
    %14367 = vmatprep.subr.bf16.mxu0 %v14085
    %14368 = vmatpush1.bf16.msra.mxu0 %v14084
    %14369 = vmatprep.subr.bf16.mxu0 %v14087
    %14370 = vmatpush1.bf16.msra.mxu0 %v14086
    %14371 = vmatprep.subr.bf16.mxu0 %v14089
    %14372 = vmatpush1.bf16.msra.mxu0 %v14088
    %14373 = vmatprep.subr.bf16.mxu0 %v14091
    %14374 = vmatpush1.bf16.msra.mxu0 %v14090
    %14375 = vmatprep.subr.bf16.mxu0 %v14093
    %14376 = vmatpush1.bf16.msra.mxu0 %v14092
    %14377 = vmatprep.subr.bf16.mxu0 %v14095
    %14378 = vmatpush1.bf16.msra.mxu0 %v14094
    %14379 = vmatprep.subr.bf16.mxu0 %v14097
    %14380 = vmatpush1.bf16.msra.mxu0 %v14096
    %14381 = vmatprep.subr.bf16.mxu0 %v14099
    %14382 = vmatpush1.bf16.msra.mxu0 %v14098
    %14383 = vmatprep.subr.bf16.mxu0 %v14101
    %14384 = vmatpush1.bf16.msra.mxu0 %v14100
    %14385 = vmatprep.subr.bf16.mxu0 %v14103
    %14386 = vmatpush1.bf16.msra.mxu0 %v14102
    %14387 = vmatprep.subr.bf16.mxu0 %v14105
    %14388 = vmatpush1.bf16.msra.mxu0 %v14104
    %14389 = vmatprep.subr.bf16.mxu0 %v14107
    %14390 = vmatpush1.bf16.msra.mxu0 %v14106
    %14391 = vmatprep.subr.bf16.mxu0 %v14109
    %14392 = vmatpush1.bf16.msra.mxu0 %v14108
    %14393 = vmatprep.subr.bf16.mxu0 %v14111
    %14394 = vmatpush1.bf16.msra.mxu0 %v14110
    %14395 = vmatprep.mubr.bf16.mxu0 %v13459
    %14396 = vmatmul.mubr.bf16.gmra.mrb[0].mxu0 %v13458
    %v14397 = vpop.f32.mrb[0].mxu0
    %v14398 = vadd.f32 %v14357, %v14397
    %v14399 = vpop.f32.mrb[0].mxu0
    %v14400 = vadd.f32 %v14359, %v14399
    %v14401 = vpop.f32.mrb[0].mxu0
    %v14402 = vpop.f32.mrb[0].mxu0
    %14403 = vdwg.mxu0
    %v14404 = vmax.f32 %v14398, 0.0
    %v14405 = vmax.f32 %v14400, 0.0
    %v14406 = vld [vmem:[%s8] sm:$0xff]
    %v14407 = vld [vmem:[%s8 + $0x8] sm:$0xff]
    %v14408 = vld [vmem:[%s8 + $0x10] sm:$0xff]
    %v14409 = vld [vmem:[%s8 + $0x18] sm:$0xff]
    %v14410 = vld [vmem:[%s8 + $0x20] sm:$0xff]
    %v14411 = vld [vmem:[%s8 + $0x28] sm:$0xff]
    %v14412 = vld [vmem:[%s8 + $0x30] sm:$0xff]
    %v14413 = vld [vmem:[%s8 + $0x38] sm:$0xff]
    %v14414 = vld [vmem:[%s8 + $0x40] sm:$0xff]
    %v14415 = vld [vmem:[%s8 + $0x48] sm:$0xff]
    %v14416 = vld [vmem:[%s8 + $0x50] sm:$0xff]
    %v14417 = vld [vmem:[%s8 + $0x58] sm:$0xff]
    %v14418 = vld [vmem:[%s8 + $0x60] sm:$0xff]
    %v14419 = vld [vmem:[%s8 + $0x68] sm:$0xff]
    %v14420 = vld [vmem:[%s8 + $0x70] sm:$0xff]
    %v14421 = vld [vmem:[%s8 + $0x78] sm:$0xff]
    %v14422 = vld [vmem:[%s8 + $0x80] sm:$0xff]
    %v14423 = vld [vmem:[%s8 + $0x88] sm:$0xff]
    %v14424 = vld [vmem:[%s8 + $0x90] sm:$0xff]
    %v14425 = vld [vmem:[%s8 + $0x98] sm:$0xff]
    %v14426 = vld [vmem:[%s8 + $0xa0] sm:$0xff]
    %v14427 = vld [vmem:[%s8 + $0xa8] sm:$0xff]
    %v14428 = vld [vmem:[%s8 + $0xb0] sm:$0xff]
    %v14429 = vld [vmem:[%s8 + $0xb8] sm:$0xff]
    %v14430 = vld [vmem:[%s8 + $0xc0] sm:$0xff]
    %v14431 = vld [vmem:[%s8 + $0xc8] sm:$0xff]
    %v14432 = vld [vmem:[%s8 + $0xd0] sm:$0xff]
    %v14433 = vld [vmem:[%s8 + $0xd8] sm:$0xff]
    %v14434 = vld [vmem:[%s8 + $0xe0] sm:$0xff]
    %v14435 = vld [vmem:[%s8 + $0xe8] sm:$0xff]
    %v14436 = vld [vmem:[%s8 + $0xf0] sm:$0xff]
    %v14437 = vld [vmem:[%s8 + $0xf8] sm:$0xff]
    %v14438 = vld [vmem:[#allocation5] sm:$0x3]
    %v14439 = vld [vmem:[%s9] sm:$0x7f]
    %vm14440 = vcmask 56320
    %v14442 = vsel %vm14440, %v14438, 0
    %vm14444 = vcmask 1046528
    %v14446 = vsel %vm14444, %v14439, 0
    %14448 = vmatprep.subr.mxu0 0.0
    %14449 = vmatpush1.msra.mxu0 %v14446
    %14450 = vmatprep.subr.mxu0 0.0
    %14451 = vmatpush1.msra.mxu0 0.0
    %14452 = vmatprep.subr.mxu0 0.0
    %14453 = vmatpush1.msra.mxu0 0.0
    %14454 = vmatprep.subr.mxu0 0.0
    %14455 = vmatpush1.msra.mxu0 0.0
    %14456 = vmatprep.subr.mxu0 0.0
    %14457 = vmatpush1.msra.mxu0 0.0
    %14458 = vmatprep.subr.mxu0 0.0
    %14459 = vmatpush1.msra.mxu0 0.0
    %14460 = vmatprep.subr.mxu0 0.0
    %14461 = vmatpush1.msra.mxu0 0.0
    %14462 = vmatprep.subr.mxu0 0.0
    %14463 = vmatpush1.msra.mxu0 0.0
    %14464 = vmatprep.subr.mxu0 0.0
    %14465 = vmatpush1.msra.mxu0 0.0
    %14466 = vmatprep.subr.mxu0 0.0
    %14467 = vmatpush1.msra.mxu0 0.0
    %14468 = vmatprep.subr.mxu0 0.0
    %14469 = vmatpush1.msra.mxu0 0.0
    %14470 = vmatprep.subr.mxu0 0.0
    %14471 = vmatpush1.msra.mxu0 0.0
    %14472 = vmatprep.subr.mxu0 0.0
    %14473 = vmatpush1.msra.mxu0 0.0
    %14474 = vmatprep.subr.mxu0 0.0
    %14475 = vmatpush1.msra.mxu0 0.0
    %14476 = vmatprep.subr.mxu0 0.0
    %14477 = vmatpush1.msra.mxu0 0.0
    %14478 = vmatprep.subr.mxu0 0.0
    %14479 = vmatpush1.msra.mxu0 0.0
    %14480 = vmatprep.subr.mxu0 0.0
    %14481 = vmatpush1.msra.mxu0 0.0
    %14482 = vmatprep.subr.mxu0 0.0
    %14483 = vmatpush1.msra.mxu0 0.0
    %14484 = vmatprep.subr.mxu0 0.0
    %14485 = vmatpush1.msra.mxu0 0.0
    %14486 = vmatprep.subr.mxu0 0.0
    %14487 = vmatpush1.msra.mxu0 0.0
    %14488 = vmatprep.subr.mxu0 0.0
    %14489 = vmatpush1.msra.mxu0 0.0
    %14490 = vmatprep.subr.mxu0 0.0
    %14491 = vmatpush1.msra.mxu0 0.0
    %14492 = vmatprep.subr.mxu0 0.0
    %14493 = vmatpush1.msra.mxu0 0.0
    %14494 = vmatprep.subr.mxu0 0.0
    %14495 = vmatpush1.msra.mxu0 0.0
    %14496 = vmatprep.subr.mxu0 0.0
    %14497 = vmatpush1.msra.mxu0 0.0
    %14498 = vmatprep.subr.mxu0 0.0
    %14499 = vmatpush1.msra.mxu0 0.0
    %14500 = vmatprep.subr.mxu0 0.0
    %14501 = vmatpush1.msra.mxu0 0.0
    %14502 = vmatprep.subr.mxu0 0.0
    %14503 = vmatpush1.msra.mxu0 0.0
    %14504 = vmatprep.subr.mxu0 0.0
    %14505 = vmatpush1.msra.mxu0 0.0
    %14506 = vmatprep.subr.mxu0 0.0
    %14507 = vmatpush1.msra.mxu0 0.0
    %14508 = vmatprep.subr.mxu0 0.0
    %14509 = vmatpush1.msra.mxu0 0.0
    %14510 = vmatprep.subr.mxu0 0.0
    %14511 = vmatpush1.msra.mxu0 0.0
    %14512 = vmatprep.mubr.f32.mxu0 0.0
    %14513 = vmatmul.mubr.f32.gmra.mrb[0].mxu0 %v14442
    %v14514 = vpop.f32.mrb[0].mxu0
    %v14515 = vadd.f32 0.0, %v14514
    %v14516 = vpop.f32.mrb[0].mxu0
    %14517 = vdwg.mxu0
    %14518 = vmatprep.subr.mxu0 0.0
    %14519 = vmatpush1.msra.mxu0 %v14406
    %14520 = vmatprep.subr.mxu0 0.0
    %14521 = vmatpush1.msra.mxu0 %v14407
    %14522 = vmatprep.subr.mxu0 0.0
    %14523 = vmatpush1.msra.mxu0 %v14408
    %14524 = vmatprep.subr.mxu0 0.0
    %14525 = vmatpush1.msra.mxu0 %v14409
    %14526 = vmatprep.subr.mxu0 0.0
    %14527 = vmatpush1.msra.mxu0 %v14410
    %14528 = vmatprep.subr.mxu0 0.0
    %14529 = vmatpush1.msra.mxu0 %v14411
    %14530 = vmatprep.subr.mxu0 0.0
    %14531 = vmatpush1.msra.mxu0 %v14412
    %14532 = vmatprep.subr.mxu0 0.0
    %14533 = vmatpush1.msra.mxu0 %v14413
    %14534 = vmatprep.subr.mxu0 0.0
    %14535 = vmatpush1.msra.mxu0 %v14414
    %14536 = vmatprep.subr.mxu0 0.0
    %14537 = vmatpush1.msra.mxu0 %v14415
    %14538 = vmatprep.subr.mxu0 0.0
    %14539 = vmatpush1.msra.mxu0 %v14416
    %14540 = vmatprep.subr.mxu0 0.0
    %14541 = vmatpush1.msra.mxu0 %v14417
    %14542 = vmatprep.subr.mxu0 0.0
    %14543 = vmatpush1.msra.mxu0 %v14418
    %14544 = vmatprep.subr.mxu0 0.0
    %14545 = vmatpush1.msra.mxu0 %v14419
    %14546 = vmatprep.subr.mxu0 0.0
    %14547 = vmatpush1.msra.mxu0 %v14420
    %14548 = vmatprep.subr.mxu0 0.0
    %14549 = vmatpush1.msra.mxu0 %v14421
    %14550 = vmatprep.subr.mxu0 0.0
    %14551 = vmatpush1.msra.mxu0 %v14422
    %14552 = vmatprep.subr.mxu0 0.0
    %14553 = vmatpush1.msra.mxu0 %v14423
    %14554 = vmatprep.subr.mxu0 0.0
    %14555 = vmatpush1.msra.mxu0 %v14424
    %14556 = vmatprep.subr.mxu0 0.0
    %14557 = vmatpush1.msra.mxu0 %v14425
    %14558 = vmatprep.subr.mxu0 0.0
    %14559 = vmatpush1.msra.mxu0 %v14426
    %14560 = vmatprep.subr.mxu0 0.0
    %14561 = vmatpush1.msra.mxu0 %v14427
    %14562 = vmatprep.subr.mxu0 0.0
    %14563 = vmatpush1.msra.mxu0 %v14428
    %14564 = vmatprep.subr.mxu0 0.0
    %14565 = vmatpush1.msra.mxu0 %v14429
    %14566 = vmatprep.subr.mxu0 0.0
    %14567 = vmatpush1.msra.mxu0 %v14430
    %14568 = vmatprep.subr.mxu0 0.0
    %14569 = vmatpush1.msra.mxu0 %v14431
    %14570 = vmatprep.subr.mxu0 0.0
    %14571 = vmatpush1.msra.mxu0 %v14432
    %14572 = vmatprep.subr.mxu0 0.0
    %14573 = vmatpush1.msra.mxu0 %v14433
    %14574 = vmatprep.subr.mxu0 0.0
    %14575 = vmatpush1.msra.mxu0 %v14434
    %14576 = vmatprep.subr.mxu0 0.0
    %14577 = vmatpush1.msra.mxu0 %v14435
    %14578 = vmatprep.subr.mxu0 0.0
    %14579 = vmatpush1.msra.mxu0 %v14436
    %14580 = vmatprep.subr.mxu0 0.0
    %14581 = vmatpush1.msra.mxu0 %v14437
    %14582 = vmatprep.mubr.f32.mxu0 %v14405
    %14583 = vmatmul.mubr.f32.gmra.mrb[0].mxu0 %v14404
    %v14584 = vpop.f32.mrb[0].mxu0
    %v14585 = vadd.f32 %v14515, %v14584
    %v14586 = vpop.f32.mrb[0].mxu0
    %14587 = vdwg.mxu0
    %v14588 = vld [vmem:[#allocation16] sm:$0x1]
    %v14590 = vlaneseq
    %v14591 = vshrl.u32 %v14590, 7
    %v14592 = vsub.s32 0, %v14591
    %v14593 = vrot.slane %v14588, %v14592
    %v14595 = vadd.f32 %v14585, %v14593
    %vm14596 = vcmask 25600
    %14597 = vst.msk [vmem:[#allocation17] sm:$0x3] %vm14596, %v14595
    // Predicated region
    $region82: #{tpu_custom_call.1} parent=1 // pred_check
      _
    $region83: #{tpu_custom_call.1} parent=1 // pred_check_branch
      %14599 = sbr.rel (0) target = $region85
    $region84: #{tpu_custom_call.1} parent=1 // pred_region
      %s14601 = ssub.s32 32, 32
      %14602 = vsyncadd [#allocation4], %s14601
      %s14604 = sshll.u32 [#allocation17], 4
      %s14605 = int_to_ptr.vmem [resolvable:$true] %s14604
      %14607 = dma.vmem_to_hbm [thread:$0]  %s14605, 32, %s11, [#allocation4]
    $region85: #{tpu_custom_call.1} parent=1 // pred_fallthru
      _
    // Predicated region
    $region86: #{tpu_custom_call.1} parent=1 // pred_check
      _
    $region87: #{tpu_custom_call.1} parent=1 // pred_check_branch
      %14609 = sbr.rel (0) target = $region89
    $region88: #{tpu_custom_call.1} parent=1 // pred_region
      %14610 = dma.done [#allocation4], 32
    $region89: #{tpu_custom_call.1} parent=1 // pred_fallthru
      _
    %14611 = vsyncpa [#allocation3], 1
    %14612 = vsyncpa [#allocation6], 1
    %14613 = vsyncpa [#allocation9], 1
    %14614 = vsyncpa [#allocation12], 1
    %14615 = vsyncpa [#allocation15], 1
    %14616 = vsyncpa [#allocation4], 1

</llo_original>
